<compile_context>
chip_gen: v7x
topology: tpu7x:2x2x1
jax: 0.10.0
libtpu: 0.0.40
codegen_flags: <defaults>
</compile_context>

<pallas_src>
import functools

import jax
import jax.numpy as jnp
from jax.experimental import pallas as pl
from jax.experimental.pallas import tpu as pltpu

CFG = [16, "M", 32, "M", 64, "M", 128, "M", 512, "M"]
NUM_CLASSES = 10
IMG_SIZE = 32
FEATURE_DIM = 512          # img_size == 32 branch of the module
BN_EPS = 1e-5
LANE = 128                 # output-channel tiles padded to the lane width
SUBLANE = 16               # bf16 sublane packing; keep row offsets multiples of this
VMEM_LIMIT = 32 * 1024 * 1024


def _round_up(x, m):
    return ((x + m - 1) // m) * m


# ----------------------------------------------------------------------------
# Pallas kernels
# ----------------------------------------------------------------------------
def _conv3x3_kernel(p_ref, w_ref, s_ref, o_ref, *, wp, rows):
    """Fused Conv3x3 (BN pre-folded) + ReLU for one image / one Cout tile.

    p_ref : (1, (H+2)*Wp, 3*Cin)  width-im2col'd, height-padded activations (bf16)
    w_ref : (3, 3*Cin, TN)        per-dy weight slabs, BN scale folded in (bf16)
    s_ref : (1, TN)               folded bias/BN shift (f32)
    o_ref : (1, H*Wp, TN)         relu(sum_dy p_dy @ w_dy + s)  (bf16)

    The three dy taps are row-shifts by dy*Wp of the same VMEM block (Wp is a
    multiple of the bf16 sublane pack, so every slice is aligned), replacing a
    9x im2col materialization with in-kernel accumulation.
    """
    acc = jnp.dot(p_ref[0, pl.ds(0, rows), :], w_ref[0],
                  preferred_element_type=jnp.float32)
    acc = acc + jnp.dot(p_ref[0, pl.ds(wp, rows), :], w_ref[1],
                        preferred_element_type=jnp.float32)
    acc = acc + jnp.dot(p_ref[0, pl.ds(2 * wp, rows), :], w_ref[2],
                        preferred_element_type=jnp.float32)
    y = jnp.maximum(acc + s_ref[...], 0.0)
    o_ref[0] = y.astype(o_ref.dtype)


def _classifier_kernel(x_ref, w1_ref, b1_ref, w2_ref, b2_ref, w3_ref, b3_ref,
                       o_ref):
    """Fully fused classifier: Linear+ReLU, Linear+ReLU, Linear.

    All operands are VMEM-resident; intermediates never touch HBM.  Dropout is
    identity at inference time.  Accumulation in f32, inter-layer activations
    cast back to bf16 to feed the MXU.
    """
    h = jnp.dot(x_ref[...], w1_ref[...], preferred_element_type=jnp.float32)
    h = jnp.maximum(h + b1_ref[...], 0.0).astype(jnp.bfloat16)
    # nn.Dropout -> identity at inference time.
    h = jnp.dot(h, w2_ref[...], preferred_element_type=jnp.float32)
    h = jnp.maximum(h + b2_ref[...], 0.0).astype(jnp.bfloat16)
    # nn.Dropout -> identity at inference time.
    h = jnp.dot(h, w3_ref[...], preferred_element_type=jnp.float32)
    o_ref[...] = (h + b3_ref[...]).astype(o_ref.dtype)


# ----------------------------------------------------------------------------
# Pallas wrappers
# ----------------------------------------------------------------------------
def conv_bn_relu(x, w3, shift, cout):
    """Conv2d(3x3, pad=1) + folded BatchNorm(eval) + ReLU.

    x     : (N, H, W, Cin)  bf16 NHWC
    w3    : (3, 3*Cin, Coutp) bf16, BN scale folded, Cout padded to 128-multiple
    shift : (1, Coutp) f32
    Returns (N, H, W, cout) bf16.
    """
    n, h, w, cin = x.shape
    coutp = w3.shape[-1]
    wp = _round_up(w, SUBLANE)

    # Width-only im2col (3x activation bytes instead of 9x); dy handled in-kernel.
    xp = jnp.pad(x, ((0, 0), (1, 1), (1, 1), (0, 0)))
    p = jnp.concatenate([xp[:, :, dx:dx + w, :] for dx in range(3)], axis=-1)
    if wp != w:
        p = jnp.pad(p, ((0, 0), (0, 0), (0, wp - w), (0, 0)))
    p = p.reshape(n, (h + 2) * wp, 3 * cin)

    rows = h * wp
    tn = LANE
    n_ct = coutp // tn
    kernel = functools.partial(_conv3x3_kernel, wp=wp, rows=rows)

    flops = int(2 * n * rows * (9 * cin) * coutp)
    bytes_accessed = int(p.size * 2 * n_ct + w3.size * 2 * n
                         + shift.size * 4 * n + n * rows * coutp * 2)

    out = pl.pallas_call(
        kernel,
        out_shape=jax.ShapeDtypeStruct((n, rows, coutp), jnp.bfloat16),
        grid=(n, n_ct),
        in_specs=[
            pl.BlockSpec((1, (h + 2) * wp, 3 * cin), lambda i, j: (i, 0, 0)),
            pl.BlockSpec((3, 3 * cin, tn), lambda i, j: (0, 0, j)),
            pl.BlockSpec((1, tn), lambda i, j: (0, j)),
        ],
        out_specs=pl.BlockSpec((1, rows, tn), lambda i, j: (i, 0, j)),
        compiler_params=pltpu.CompilerParams(
            dimension_semantics=("parallel", "parallel"),
            vmem_limit_bytes=VMEM_LIMIT),
        cost_estimate=pl.CostEstimate(flops=flops, transcendentals=0,
                                      bytes_accessed=bytes_accessed),
    )(p, w3, shift)

    # Drop the padded width columns and padded output channels; this slice
    # fuses with the following reshape-max pool in XLA.
    return out.reshape(n, h, wp, coutp)[:, :, :w, :cout]


def classifier(x, lin_params):
    """Fused classifier1: Linear(512,256)+ReLU, Linear(256,256)+ReLU,
    Linear(256,num_classes).  x: (M, 512) bf16.  Returns (M, Np) f32 where
    Np is the lane-padded final width."""
    (w1, b1), (w2, b2), (w3, b3) = lin_params
    m, k = x.shape
    n1, n2, n3 = w1.shape[1], w2.shape[1], w3.shape[1]
    # The fused chain requires the intermediate widths to be exact (no lane
    # padding) so that layer i+1's K matches layer i's unpadded output width.
    assert w1.shape[0] == k and w2.shape[0] == n1 and w3.shape[0] == n2
    assert n1 % LANE == 0 and n2 % LANE == 0 and n3 % LANE == 0

    flops = int(2 * m * (k * n1 + n1 * n2 + n2 * n3))
    bytes_accessed = int(x.size * 2 + (w1.size + w2.size + w3.size) * 2
                         + (b1.size + b2.size + b3.size) * 4 + m * n3 * 4)

    return pl.pallas_call(
        _classifier_kernel,
        out_shape=jax.ShapeDtypeStruct((m, n3), jnp.float32),
        grid=(1,),
        in_specs=[
            pl.BlockSpec((m, k), lambda i: (0, 0)),
            pl.BlockSpec((k, n1), lambda i: (0, 0)),
            pl.BlockSpec((1, n1), lambda i: (0, 0)),
            pl.BlockSpec((n1, n2), lambda i: (0, 0)),
            pl.BlockSpec((1, n2), lambda i: (0, 0)),
            pl.BlockSpec((n2, n3), lambda i: (0, 0)),
            pl.BlockSpec((1, n3), lambda i: (0, 0)),
        ],
        out_specs=pl.BlockSpec((m, n3), lambda i: (0, 0)),
        compiler_params=pltpu.CompilerParams(vmem_limit_bytes=VMEM_LIMIT),
        cost_estimate=pl.CostEstimate(flops=flops, transcendentals=0,
                                      bytes_accessed=bytes_accessed),
    )(x, w1, b1, w2, b2, w3, b3)


def maxpool2x2(x):
    """2x2 stride-2 max pool on NHWC input.

    Plain XLA reshape-max by design: this tiny memory-bound elementwise max
    fuses with the preceding channel/width slice; a dedicated Pallas call only
    added strided-view HBM copies.
    """
    n, h, w, c = x.shape
    return x.reshape(n, h // 2, 2, w // 2, 2, c).max(axis=(2, 4))


# ----------------------------------------------------------------------------
# Parameters: torch-style init + one-time prep (fold / transpose / pad / cast)
# ----------------------------------------------------------------------------
def init_params(key, cfg, in_ch=3, num_classes=NUM_CLASSES,
                feature_dim=FEATURE_DIM):
    """Deterministic init matching VGG._initialize_weights (PyTorch layouts)."""
    params = {"convs": [], "linears": []}
    c = in_ch
    for v in cfg:
        if v == "M":
            continue
        key, k1 = jax.random.split(key)
        fan_out = 3 * 3 * v                      # kaiming_normal_, mode='fan_out'
        std = (2.0 / fan_out) ** 0.5
        w = jax.random.normal(k1, (v, c, 3, 3), jnp.float32) * std
        b = jnp.zeros((v,), jnp.float32)         # conv bias = 0
        gamma = jnp.ones((v,), jnp.float32)      # BN weight = 1
        beta = jnp.zeros((v,), jnp.float32)      # BN bias = 0
        mean = jnp.zeros((v,), jnp.float32)      # BN running_mean init
        var = jnp.ones((v,), jnp.float32)        # BN running_var init
        params["convs"].append((w, b, gamma, beta, mean, var))
        c = v
    for din, dout in [(feature_dim, 256), (256, 256), (256, num_classes)]:
        key, k1 = jax.random.split(key)
        w = jax.random.normal(k1, (dout, din), jnp.float32) * 0.01
        b = jnp.zeros((dout,), jnp.float32)
        params["linears"].append((w, b))
    return params


def prepare_params(params):
    """One-time prep (outside the jitted forward): fold BN into the conv
    weights/bias, transpose / lane-pad all weights, and cast to bf16."""
    prep = {"convs": [], "linears": []}
    for (w, b, gamma, beta, mean, var) in params["convs"]:
        cout, cin = int(w.shape[0]), int(w.shape[1])
        coutp = _round_up(cout, LANE)
        scale = gamma / jnp.sqrt(var + BN_EPS)
        shift = beta - mean * scale + b * scale
        # (Cout,Cin,kH,kW) -> (kH,kW,Cin,Cout) -> (3, 3*Cin, Cout) with BN scale
        # folded; per-dy slab k-index ordering is (dx, cin), matching the
        # width-im2col concat order in conv_bn_relu.
        w_hwio = jnp.transpose(w, (2, 3, 1, 0)) * scale[None, None, None, :]
        w3 = w_hwio.reshape(3, 3 * cin, cout)
        w3 = jnp.pad(w3, ((0, 0), (0, 0), (0, coutp - cout))).astype(jnp.bfloat16)
        shift = jnp.pad(shift, (0, coutp - cout)).reshape(1, coutp).astype(jnp.float32)
        prep["convs"].append((w3, shift))
    for (w, b) in params["linears"]:
        dout, din = int(w.shape[0]), int(w.shape[1])
        doutp = _round_up(dout, LANE)
        wt = jnp.pad(w.T, ((0, 0), (0, doutp - dout))).astype(jnp.bfloat16)
        bp = jnp.pad(b, (0, doutp - dout)).reshape(1, doutp).astype(jnp.float32)
        prep["linears"].append((wt, bp))
    return prep


# ----------------------------------------------------------------------------
# Forward pass
# ----------------------------------------------------------------------------
def vgg_forward(prep, x_nchw):
    """Equivalent of VGG.forward(x, y=None).  x_nchw: (N, 3, 32, 32)."""
    # TODO(synk): the y != None training branch (returning (x, y, x0, y0)) and
    # forward_f are not implemented; only the inference path is lowered here.
    x = jnp.transpose(x_nchw, (0, 2, 3, 1)).astype(jnp.bfloat16)   # NCHW -> NHWC
    conv_cout = [v for v in CFG if v != "M"]
    ci = 0
    for v in CFG:
        if v == "M":
            x = maxpool2x2(x)
        else:
            w3, shift = prep["convs"][ci]
            x = conv_bn_relu(x, w3, shift, conv_cout[ci])
            ci += 1
    n = x.shape[0]
    # x.view(N, -1) in PyTorch flattens NCHW order; here spatial is 1x1 so the
    # transpose is free and removed by XLA.
    x = jnp.transpose(x, (0, 3, 1, 2)).reshape(n, -1)
    # Fused classifier1 (3 linears + ReLUs + inference-time dropout) in one call.
    logits = classifier(x, prep["linears"])[:, :NUM_CLASSES]
    return logits


if __name__ == "__main__":
    key = jax.random.PRNGKey(0)
    k_param, k_input = jax.random.split(key)
    raw_params = init_params(k_param, CFG)
    prep = prepare_params(raw_params)          # one-time folding/layout, outside jit
    x = jax.random.normal(k_input, (2, 3, IMG_SIZE, IMG_SIZE), jnp.float32)

    logits = jax.jit(vgg_forward)(prep, x)
    logits = jax.block_until_ready(logits)

    assert logits.shape == (2, NUM_CLASSES), logits.shape
    assert logits.dtype == jnp.float32
    assert bool(jnp.all(jnp.isfinite(logits)))
    print("KERNEL_OK")
</pallas_src>

<mosaic_0001>
module attributes {stable_mosaic.version = 11 : i64} {
  func.func @_conv3x3_kernel(%arg0: i32, %arg1: i32, %arg2: memref<1x1088x9xbf16, #tpu.memory_space<vmem>>, %arg3: memref<3x9x128xbf16, #tpu.memory_space<vmem>>, %arg4: memref<1x128xf32, #tpu.memory_space<vmem>>, %arg5: memref<1x1024x128xbf16, #tpu.memory_space<vmem>>) attributes {dimension_semantics = [#tpu.dimension_semantics<parallel>, #tpu.dimension_semantics<parallel>], iteration_bounds = array<i64: 2, 1>, scalar_prefetch = 0 : i64, scratch_operands = 0 : i64, tpu.core_type = #tpu.core_type<tc>, window_params = [{transform_indices = @transform_0, window_bounds = array<i64: 1, 1088, 9>}, {transform_indices = @transform_1, window_bounds = array<i64: 3, 9, 128>}, {transform_indices = @transform_2, window_bounds = array<i64: 1, 128>}, {transform_indices = @transform_3, window_bounds = array<i64: 1, 1024, 128>}]} {
    %c0 = arith.constant 0 : index
    %c0_0 = arith.constant 0 : index
    %c0_1 = arith.constant 0 : index
    %0 = vector.load %arg2[%c0, %c0_0, %c0_1] : memref<1x1088x9xbf16, #tpu.memory_space<vmem>>, vector<1x1024x9xbf16>
    %1 = vector.shape_cast %0 : vector<1x1024x9xbf16> to vector<1024x9xbf16>
    %c0_2 = arith.constant 0 : index
    %c0_3 = arith.constant 0 : index
    %c0_4 = arith.constant 0 : index
    %2 = vector.load %arg3[%c0_2, %c0_3, %c0_4] : memref<3x9x128xbf16, #tpu.memory_space<vmem>>, vector<1x9x128xbf16>
    %3 = vector.shape_cast %2 : vector<1x9x128xbf16> to vector<9x128xbf16>
    %cst = arith.constant dense<0.000000e+00> : vector<1024x128xf32>
    %4 = tpu.matmul %1, %3, %cst {dimension_numbers = #tpu.dot_dimension_numbers<[1], [0], [0], [1], [0, 0, 1, 1], [], []>} : vector<1024x9xbf16>, vector<9x128xbf16>, vector<1024x128xf32> -> vector<1024x128xf32>
    %c0_5 = arith.constant 0 : index
    %c32 = arith.constant 32 : index
    %c0_6 = arith.constant 0 : index
    %5 = vector.load %arg2[%c0_5, %c32, %c0_6] : memref<1x1088x9xbf16, #tpu.memory_space<vmem>>, vector<1x1024x9xbf16>
    %6 = vector.shape_cast %5 : vector<1x1024x9xbf16> to vector<1024x9xbf16>
    %c1 = arith.constant 1 : index
    %c0_7 = arith.constant 0 : index
    %c0_8 = arith.constant 0 : index
    %7 = vector.load %arg3[%c1, %c0_7, %c0_8] : memref<3x9x128xbf16, #tpu.memory_space<vmem>>, vector<1x9x128xbf16>
    %8 = vector.shape_cast %7 : vector<1x9x128xbf16> to vector<9x128xbf16>
    %cst_9 = arith.constant dense<0.000000e+00> : vector<1024x128xf32>
    %9 = tpu.matmul %6, %8, %cst_9 {dimension_numbers = #tpu.dot_dimension_numbers<[1], [0], [0], [1], [0, 0, 1, 1], [], []>} : vector<1024x9xbf16>, vector<9x128xbf16>, vector<1024x128xf32> -> vector<1024x128xf32>
    %10 = arith.addf %4, %9 : vector<1024x128xf32>
    %c0_10 = arith.constant 0 : index
    %c64 = arith.constant 64 : index
    %c0_11 = arith.constant 0 : index
    %11 = vector.load %arg2[%c0_10, %c64, %c0_11] : memref<1x1088x9xbf16, #tpu.memory_space<vmem>>, vector<1x1024x9xbf16>
    %12 = vector.shape_cast %11 : vector<1x1024x9xbf16> to vector<1024x9xbf16>
    %c2 = arith.constant 2 : index
    %c0_12 = arith.constant 0 : index
    %c0_13 = arith.constant 0 : index
    %13 = vector.load %arg3[%c2, %c0_12, %c0_13] : memref<3x9x128xbf16, #tpu.memory_space<vmem>>, vector<1x9x128xbf16>
    %14 = vector.shape_cast %13 : vector<1x9x128xbf16> to vector<9x128xbf16>
    %cst_14 = arith.constant dense<0.000000e+00> : vector<1024x128xf32>
    %15 = tpu.matmul %12, %14, %cst_14 {dimension_numbers = #tpu.dot_dimension_numbers<[1], [0], [0], [1], [0, 0, 1, 1], [], []>} : vector<1024x9xbf16>, vector<9x128xbf16>, vector<1024x128xf32> -> vector<1024x128xf32>
    %16 = arith.addf %10, %15 : vector<1024x128xf32>
    %c0_15 = arith.constant 0 : index
    %c0_16 = arith.constant 0 : index
    %17 = vector.load %arg4[%c0_15, %c0_16] : memref<1x128xf32, #tpu.memory_space<vmem>>, vector<1x128xf32>
    %18 = vector.broadcast %17 : vector<1x128xf32> to vector<1024x128xf32>
    %19 = arith.addf %16, %18 : vector<1024x128xf32>
    %cst_17 = arith.constant 0.000000e+00 : f32
    %20 = vector.broadcast %cst_17 : f32 to vector<1024x128xf32>
    %21 = arith.maximumf %19, %20 : vector<1024x128xf32>
    %22 = arith.truncf %21 : vector<1024x128xf32> to vector<1024x128xbf16>
    %c0_18 = arith.constant 0 : index
    %c0_19 = arith.constant 0 : index
    %c0_20 = arith.constant 0 : index
    %23 = vector.load %arg5[%c0_18, %c0_19, %c0_20] : memref<1x1024x128xbf16, #tpu.memory_space<vmem>>, vector<1x1024x128xbf16>
    %24 = vector.shape_cast %23 : vector<1x1024x128xbf16> to vector<1024x128xbf16>
    %25 = vector.shape_cast %22 : vector<1024x128xbf16> to vector<1x1024x128xbf16>
    tpu.vector_store %arg5[%c0_18, %c0_19, %c0_20], %25 {strides = array<i32>} : memref<1x1024x128xbf16, #tpu.memory_space<vmem>>, vector<1x1024x128xbf16>,
    return
  }
  func.func @transform_0(%arg0: i32, %arg1: i32) -> (i32, i32, i32) {
    %c0_i32 = arith.constant 0 : i32
    %c0_i32_0 = arith.constant 0 : i32
    %c0_i32_1 = arith.constant 0 : i32
    return %arg0, %c0_i32, %c0_i32_0 : i32, i32, i32
  }
  func.func @transform_1(%arg0: i32, %arg1: i32) -> (i32, i32, i32) {
    %c0_i32 = arith.constant 0 : i32
    %c0_i32_0 = arith.constant 0 : i32
    %c0_i32_1 = arith.constant 0 : i32
    return %c0_i32, %c0_i32_0, %arg1 : i32, i32, i32
  }
  func.func @transform_2(%arg0: i32, %arg1: i32) -> (i32, i32) {
    %c0_i32 = arith.constant 0 : i32
    %c0_i32_0 = arith.constant 0 : i32
    return %c0_i32, %arg1 : i32, i32
  }
  func.func @transform_3(%arg0: i32, %arg1: i32) -> (i32, i32, i32) {
    %c0_i32 = arith.constant 0 : i32
    %c0_i32_0 = arith.constant 0 : i32
    return %arg0, %c0_i32, %arg1 : i32, i32, i32
  }
}

module attributes {stable_mosaic.version = 11 : i64} {
  func.func @_conv3x3_kernel(%arg0: i32, %arg1: i32, %arg2: memref<1x288x48xbf16, #tpu.memory_space<vmem>>, %arg3: memref<3x48x128xbf16, #tpu.memory_space<vmem>>, %arg4: memref<1x128xf32, #tpu.memory_space<vmem>>, %arg5: memref<1x256x128xbf16, #tpu.memory_space<vmem>>) attributes {dimension_semantics = [#tpu.dimension_semantics<parallel>, #tpu.dimension_semantics<parallel>], iteration_bounds = array<i64: 2, 1>, scalar_prefetch = 0 : i64, scratch_operands = 0 : i64, tpu.core_type = #tpu.core_type<tc>, window_params = [{transform_indices = @transform_0, window_bounds = array<i64: 1, 288, 48>}, {transform_indices = @transform_1, window_bounds = array<i64: 3, 48, 128>}, {transform_indices = @transform_2, window_bounds = array<i64: 1, 128>}, {transform_indices = @transform_3, window_bounds = array<i64: 1, 256, 128>}]} {
    %c0 = arith.constant 0 : index
    %c0_0 = arith.constant 0 : index
    %c0_1 = arith.constant 0 : index
    %0 = vector.load %arg2[%c0, %c0_0, %c0_1] : memref<1x288x48xbf16, #tpu.memory_space<vmem>>, vector<1x256x48xbf16>
    %1 = vector.shape_cast %0 : vector<1x256x48xbf16> to vector<256x48xbf16>
    %c0_2 = arith.constant 0 : index
    %c0_3 = arith.constant 0 : index
    %c0_4 = arith.constant 0 : index
    %2 = vector.load %arg3[%c0_2, %c0_3, %c0_4] : memref<3x48x128xbf16, #tpu.memory_space<vmem>>, vector<1x48x128xbf16>
    %3 = vector.shape_cast %2 : vector<1x48x128xbf16> to vector<48x128xbf16>
    %cst = arith.constant dense<0.000000e+00> : vector<256x128xf32>
    %4 = tpu.matmul %1, %3, %cst {dimension_numbers = #tpu.dot_dimension_numbers<[1], [0], [0], [1], [0, 0, 1, 1], [], []>} : vector<256x48xbf16>, vector<48x128xbf16>, vector<256x128xf32> -> vector<256x128xf32>
    %c0_5 = arith.constant 0 : index
    %c16 = arith.constant 16 : index
    %c0_6 = arith.constant 0 : index
    %5 = vector.load %arg2[%c0_5, %c16, %c0_6] : memref<1x288x48xbf16, #tpu.memory_space<vmem>>, vector<1x256x48xbf16>
    %6 = vector.shape_cast %5 : vector<1x256x48xbf16> to vector<256x48xbf16>
    %c1 = arith.constant 1 : index
    %c0_7 = arith.constant 0 : index
    %c0_8 = arith.constant 0 : index
    %7 = vector.load %arg3[%c1, %c0_7, %c0_8] : memref<3x48x128xbf16, #tpu.memory_space<vmem>>, vector<1x48x128xbf16>
    %8 = vector.shape_cast %7 : vector<1x48x128xbf16> to vector<48x128xbf16>
    %cst_9 = arith.constant dense<0.000000e+00> : vector<256x128xf32>
    %9 = tpu.matmul %6, %8, %cst_9 {dimension_numbers = #tpu.dot_dimension_numbers<[1], [0], [0], [1], [0, 0, 1, 1], [], []>} : vector<256x48xbf16>, vector<48x128xbf16>, vector<256x128xf32> -> vector<256x128xf32>
    %10 = arith.addf %4, %9 : vector<256x128xf32>
    %c0_10 = arith.constant 0 : index
    %c32 = arith.constant 32 : index
    %c0_11 = arith.constant 0 : index
    %11 = vector.load %arg2[%c0_10, %c32, %c0_11] : memref<1x288x48xbf16, #tpu.memory_space<vmem>>, vector<1x256x48xbf16>
    %12 = vector.shape_cast %11 : vector<1x256x48xbf16> to vector<256x48xbf16>
    %c2 = arith.constant 2 : index
    %c0_12 = arith.constant 0 : index
    %c0_13 = arith.constant 0 : index
    %13 = vector.load %arg3[%c2, %c0_12, %c0_13] : memref<3x48x128xbf16, #tpu.memory_space<vmem>>, vector<1x48x128xbf16>
    %14 = vector.shape_cast %13 : vector<1x48x128xbf16> to vector<48x128xbf16>
    %cst_14 = arith.constant dense<0.000000e+00> : vector<256x128xf32>
    %15 = tpu.matmul %12, %14, %cst_14 {dimension_numbers = #tpu.dot_dimension_numbers<[1], [0], [0], [1], [0, 0, 1, 1], [], []>} : vector<256x48xbf16>, vector<48x128xbf16>, vector<256x128xf32> -> vector<256x128xf32>
    %16 = arith.addf %10, %15 : vector<256x128xf32>
    %c0_15 = arith.constant 0 : index
    %c0_16 = arith.constant 0 : index
    %17 = vector.load %arg4[%c0_15, %c0_16] : memref<1x128xf32, #tpu.memory_space<vmem>>, vector<1x128xf32>
    %18 = vector.broadcast %17 : vector<1x128xf32> to vector<256x128xf32>
    %19 = arith.addf %16, %18 : vector<256x128xf32>
    %cst_17 = arith.constant 0.000000e+00 : f32
    %20 = vector.broadcast %cst_17 : f32 to vector<256x128xf32>
    %21 = arith.maximumf %19, %20 : vector<256x128xf32>
    %22 = arith.truncf %21 : vector<256x128xf32> to vector<256x128xbf16>
    %c0_18 = arith.constant 0 : index
    %c0_19 = arith.constant 0 : index
    %c0_20 = arith.constant 0 : index
    %23 = vector.load %arg5[%c0_18, %c0_19, %c0_20] : memref<1x256x128xbf16, #tpu.memory_space<vmem>>, vector<1x256x128xbf16>
    %24 = vector.shape_cast %23 : vector<1x256x128xbf16> to vector<256x128xbf16>
    %25 = vector.shape_cast %22 : vector<256x128xbf16> to vector<1x256x128xbf16>
    tpu.vector_store %arg5[%c0_18, %c0_19, %c0_20], %25 {strides = array<i32>} : memref<1x256x128xbf16, #tpu.memory_space<vmem>>, vector<1x256x128xbf16>,
    return
  }
  func.func @transform_0(%arg0: i32, %arg1: i32) -> (i32, i32, i32) {
    %c0_i32 = arith.constant 0 : i32
    %c0_i32_0 = arith.constant 0 : i32
    %c0_i32_1 = arith.constant 0 : i32
    return %arg0, %c0_i32, %c0_i32_0 : i32, i32, i32
  }
  func.func @transform_1(%arg0: i32, %arg1: i32) -> (i32, i32, i32) {
    %c0_i32 = arith.constant 0 : i32
    %c0_i32_0 = arith.constant 0 : i32
    %c0_i32_1 = arith.constant 0 : i32
    return %c0_i32, %c0_i32_0, %arg1 : i32, i32, i32
  }
  func.func @transform_2(%arg0: i32, %arg1: i32) -> (i32, i32) {
    %c0_i32 = arith.constant 0 : i32
    %c0_i32_0 = arith.constant 0 : i32
    return %c0_i32, %arg1 : i32, i32
  }
  func.func @transform_3(%arg0: i32, %arg1: i32) -> (i32, i32, i32) {
    %c0_i32 = arith.constant 0 : i32
    %c0_i32_0 = arith.constant 0 : i32
    return %arg0, %c0_i32, %arg1 : i32, i32, i32
  }
}

module attributes {stable_mosaic.version = 11 : i64} {
  func.func @_conv3x3_kernel(%arg0: i32, %arg1: i32, %arg2: memref<1x160x96xbf16, #tpu.memory_space<vmem>>, %arg3: memref<3x96x128xbf16, #tpu.memory_space<vmem>>, %arg4: memref<1x128xf32, #tpu.memory_space<vmem>>, %arg5: memref<1x128x128xbf16, #tpu.memory_space<vmem>>) attributes {dimension_semantics = [#tpu.dimension_semantics<parallel>, #tpu.dimension_semantics<parallel>], iteration_bounds = array<i64: 2, 1>, scalar_prefetch = 0 : i64, scratch_operands = 0 : i64, tpu.core_type = #tpu.core_type<tc>, window_params = [{transform_indices = @transform_0, window_bounds = array<i64: 1, 160, 96>}, {transform_indices = @transform_1, window_bounds = array<i64: 3, 96, 128>}, {transform_indices = @transform_2, window_bounds = array<i64: 1, 128>}, {transform_indices = @transform_3, window_bounds = array<i64: 1, 128, 128>}]} {
    %c0 = arith.constant 0 : index
    %c0_0 = arith.constant 0 : index
    %c0_1 = arith.constant 0 : index
    %0 = vector.load %arg2[%c0, %c0_0, %c0_1] : memref<1x160x96xbf16, #tpu.memory_space<vmem>>, vector<1x128x96xbf16>
    %1 = vector.shape_cast %0 : vector<1x128x96xbf16> to vector<128x96xbf16>
    %c0_2 = arith.constant 0 : index
    %c0_3 = arith.constant 0 : index
    %c0_4 = arith.constant 0 : index
    %2 = vector.load %arg3[%c0_2, %c0_3, %c0_4] : memref<3x96x128xbf16, #tpu.memory_space<vmem>>, vector<1x96x128xbf16>
    %3 = vector.shape_cast %2 : vector<1x96x128xbf16> to vector<96x128xbf16>
    %cst = arith.constant dense<0.000000e+00> : vector<128x128xf32>
    %4 = tpu.matmul %1, %3, %cst {dimension_numbers = #tpu.dot_dimension_numbers<[1], [0], [0], [1], [0, 0, 1, 1], [], []>} : vector<128x96xbf16>, vector<96x128xbf16>, vector<128x128xf32> -> vector<128x128xf32>
    %c0_5 = arith.constant 0 : index
    %c16 = arith.constant 16 : index
    %c0_6 = arith.constant 0 : index
    %5 = vector.load %arg2[%c0_5, %c16, %c0_6] : memref<1x160x96xbf16, #tpu.memory_space<vmem>>, vector<1x128x96xbf16>
    %6 = vector.shape_cast %5 : vector<1x128x96xbf16> to vector<128x96xbf16>
    %c1 = arith.constant 1 : index
    %c0_7 = arith.constant 0 : index
    %c0_8 = arith.constant 0 : index
    %7 = vector.load %arg3[%c1, %c0_7, %c0_8] : memref<3x96x128xbf16, #tpu.memory_space<vmem>>, vector<1x96x128xbf16>
    %8 = vector.shape_cast %7 : vector<1x96x128xbf16> to vector<96x128xbf16>
    %cst_9 = arith.constant dense<0.000000e+00> : vector<128x128xf32>
    %9 = tpu.matmul %6, %8, %cst_9 {dimension_numbers = #tpu.dot_dimension_numbers<[1], [0], [0], [1], [0, 0, 1, 1], [], []>} : vector<128x96xbf16>, vector<96x128xbf16>, vector<128x128xf32> -> vector<128x128xf32>
    %10 = arith.addf %4, %9 : vector<128x128xf32>
    %c0_10 = arith.constant 0 : index
    %c32 = arith.constant 32 : index
    %c0_11 = arith.constant 0 : index
    %11 = vector.load %arg2[%c0_10, %c32, %c0_11] : memref<1x160x96xbf16, #tpu.memory_space<vmem>>, vector<1x128x96xbf16>
    %12 = vector.shape_cast %11 : vector<1x128x96xbf16> to vector<128x96xbf16>
    %c2 = arith.constant 2 : index
    %c0_12 = arith.constant 0 : index
    %c0_13 = arith.constant 0 : index
    %13 = vector.load %arg3[%c2, %c0_12, %c0_13] : memref<3x96x128xbf16, #tpu.memory_space<vmem>>, vector<1x96x128xbf16>
    %14 = vector.shape_cast %13 : vector<1x96x128xbf16> to vector<96x128xbf16>
    %cst_14 = arith.constant dense<0.000000e+00> : vector<128x128xf32>
    %15 = tpu.matmul %12, %14, %cst_14 {dimension_numbers = #tpu.dot_dimension_numbers<[1], [0], [0], [1], [0, 0, 1, 1], [], []>} : vector<128x96xbf16>, vector<96x128xbf16>, vector<128x128xf32> -> vector<128x128xf32>
    %16 = arith.addf %10, %15 : vector<128x128xf32>
    %c0_15 = arith.constant 0 : index
    %c0_16 = arith.constant 0 : index
    %17 = vector.load %arg4[%c0_15, %c0_16] : memref<1x128xf32, #tpu.memory_space<vmem>>, vector<1x128xf32>
    %18 = vector.broadcast %17 : vector<1x128xf32> to vector<128x128xf32>
    %19 = arith.addf %16, %18 : vector<128x128xf32>
    %cst_17 = arith.constant 0.000000e+00 : f32
    %20 = vector.broadcast %cst_17 : f32 to vector<128x128xf32>
    %21 = arith.maximumf %19, %20 : vector<128x128xf32>
    %22 = arith.truncf %21 : vector<128x128xf32> to vector<128x128xbf16>
    %c0_18 = arith.constant 0 : index
    %c0_19 = arith.constant 0 : index
    %c0_20 = arith.constant 0 : index
    %23 = vector.load %arg5[%c0_18, %c0_19, %c0_20] : memref<1x128x128xbf16, #tpu.memory_space<vmem>>, vector<1x128x128xbf16>
    %24 = vector.shape_cast %23 : vector<1x128x128xbf16> to vector<128x128xbf16>
    %25 = vector.shape_cast %22 : vector<128x128xbf16> to vector<1x128x128xbf16>
    tpu.vector_store %arg5[%c0_18, %c0_19, %c0_20], %25 {strides = array<i32>} : memref<1x128x128xbf16, #tpu.memory_space<vmem>>, vector<1x128x128xbf16>,
    return
  }
  func.func @transform_0(%arg0: i32, %arg1: i32) -> (i32, i32, i32) {
    %c0_i32 = arith.constant 0 : i32
    %c0_i32_0 = arith.constant 0 : i32
    %c0_i32_1 = arith.constant 0 : i32
    return %arg0, %c0_i32, %c0_i32_0 : i32, i32, i32
  }
  func.func @transform_1(%arg0: i32, %arg1: i32) -> (i32, i32, i32) {
    %c0_i32 = arith.constant 0 : i32
    %c0_i32_0 = arith.constant 0 : i32
    %c0_i32_1 = arith.constant 0 : i32
    return %c0_i32, %c0_i32_0, %arg1 : i32, i32, i32
  }
  func.func @transform_2(%arg0: i32, %arg1: i32) -> (i32, i32) {
    %c0_i32 = arith.constant 0 : i32
    %c0_i32_0 = arith.constant 0 : i32
    return %c0_i32, %arg1 : i32, i32
  }
  func.func @transform_3(%arg0: i32, %arg1: i32) -> (i32, i32, i32) {
    %c0_i32 = arith.constant 0 : i32
    %c0_i32_0 = arith.constant 0 : i32
    return %arg0, %c0_i32, %arg1 : i32, i32, i32
  }
}

module attributes {stable_mosaic.version = 11 : i64} {
  func.func @_conv3x3_kernel(%arg0: i32, %arg1: i32, %arg2: memref<1x96x192xbf16, #tpu.memory_space<vmem>>, %arg3: memref<3x192x128xbf16, #tpu.memory_space<vmem>>, %arg4: memref<1x128xf32, #tpu.memory_space<vmem>>, %arg5: memref<1x64x128xbf16, #tpu.memory_space<vmem>>) attributes {dimension_semantics = [#tpu.dimension_semantics<parallel>, #tpu.dimension_semantics<parallel>], iteration_bounds = array<i64: 2, 1>, scalar_prefetch = 0 : i64, scratch_operands = 0 : i64, tpu.core_type = #tpu.core_type<tc>, window_params = [{transform_indices = @transform_0, window_bounds = array<i64: 1, 96, 192>}, {transform_indices = @transform_1, window_bounds = array<i64: 3, 192, 128>}, {transform_indices = @transform_2, window_bounds = array<i64: 1, 128>}, {transform_indices = @transform_3, window_bounds = array<i64: 1, 64, 128>}]} {
    %c0 = arith.constant 0 : index
    %c0_0 = arith.constant 0 : index
    %c0_1 = arith.constant 0 : index
    %0 = vector.load %arg2[%c0, %c0_0, %c0_1] : memref<1x96x192xbf16, #tpu.memory_space<vmem>>, vector<1x64x192xbf16>
    %1 = vector.shape_cast %0 : vector<1x64x192xbf16> to vector<64x192xbf16>
    %c0_2 = arith.constant 0 : index
    %c0_3 = arith.constant 0 : index
    %c0_4 = arith.constant 0 : index
    %2 = vector.load %arg3[%c0_2, %c0_3, %c0_4] : memref<3x192x128xbf16, #tpu.memory_space<vmem>>, vector<1x192x128xbf16>
    %3 = vector.shape_cast %2 : vector<1x192x128xbf16> to vector<192x128xbf16>
    %cst = arith.constant dense<0.000000e+00> : vector<64x128xf32>
    %4 = tpu.matmul %1, %3, %cst {dimension_numbers = #tpu.dot_dimension_numbers<[1], [0], [0], [1], [0, 0, 1, 1], [], []>} : vector<64x192xbf16>, vector<192x128xbf16>, vector<64x128xf32> -> vector<64x128xf32>
    %c0_5 = arith.constant 0 : index
    %c16 = arith.constant 16 : index
    %c0_6 = arith.constant 0 : index
    %5 = vector.load %arg2[%c0_5, %c16, %c0_6] : memref<1x96x192xbf16, #tpu.memory_space<vmem>>, vector<1x64x192xbf16>
    %6 = vector.shape_cast %5 : vector<1x64x192xbf16> to vector<64x192xbf16>
    %c1 = arith.constant 1 : index
    %c0_7 = arith.constant 0 : index
    %c0_8 = arith.constant 0 : index
    %7 = vector.load %arg3[%c1, %c0_7, %c0_8] : memref<3x192x128xbf16, #tpu.memory_space<vmem>>, vector<1x192x128xbf16>
    %8 = vector.shape_cast %7 : vector<1x192x128xbf16> to vector<192x128xbf16>
    %cst_9 = arith.constant dense<0.000000e+00> : vector<64x128xf32>
    %9 = tpu.matmul %6, %8, %cst_9 {dimension_numbers = #tpu.dot_dimension_numbers<[1], [0], [0], [1], [0, 0, 1, 1], [], []>} : vector<64x192xbf16>, vector<192x128xbf16>, vector<64x128xf32> -> vector<64x128xf32>
    %10 = arith.addf %4, %9 : vector<64x128xf32>
    %c0_10 = arith.constant 0 : index
    %c32 = arith.constant 32 : index
    %c0_11 = arith.constant 0 : index
    %11 = vector.load %arg2[%c0_10, %c32, %c0_11] : memref<1x96x192xbf16, #tpu.memory_space<vmem>>, vector<1x64x192xbf16>
    %12 = vector.shape_cast %11 : vector<1x64x192xbf16> to vector<64x192xbf16>
    %c2 = arith.constant 2 : index
    %c0_12 = arith.constant 0 : index
    %c0_13 = arith.constant 0 : index
    %13 = vector.load %arg3[%c2, %c0_12, %c0_13] : memref<3x192x128xbf16, #tpu.memory_space<vmem>>, vector<1x192x128xbf16>
    %14 = vector.shape_cast %13 : vector<1x192x128xbf16> to vector<192x128xbf16>
    %cst_14 = arith.constant dense<0.000000e+00> : vector<64x128xf32>
    %15 = tpu.matmul %12, %14, %cst_14 {dimension_numbers = #tpu.dot_dimension_numbers<[1], [0], [0], [1], [0, 0, 1, 1], [], []>} : vector<64x192xbf16>, vector<192x128xbf16>, vector<64x128xf32> -> vector<64x128xf32>
    %16 = arith.addf %10, %15 : vector<64x128xf32>
    %c0_15 = arith.constant 0 : index
    %c0_16 = arith.constant 0 : index
    %17 = vector.load %arg4[%c0_15, %c0_16] : memref<1x128xf32, #tpu.memory_space<vmem>>, vector<1x128xf32>
    %18 = vector.broadcast %17 : vector<1x128xf32> to vector<64x128xf32>
    %19 = arith.addf %16, %18 : vector<64x128xf32>
    %cst_17 = arith.constant 0.000000e+00 : f32
    %20 = vector.broadcast %cst_17 : f32 to vector<64x128xf32>
    %21 = arith.maximumf %19, %20 : vector<64x128xf32>
    %22 = arith.truncf %21 : vector<64x128xf32> to vector<64x128xbf16>
    %c0_18 = arith.constant 0 : index
    %c0_19 = arith.constant 0 : index
    %c0_20 = arith.constant 0 : index
    %23 = vector.load %arg5[%c0_18, %c0_19, %c0_20] : memref<1x64x128xbf16, #tpu.memory_space<vmem>>, vector<1x64x128xbf16>
    %24 = vector.shape_cast %23 : vector<1x64x128xbf16> to vector<64x128xbf16>
    %25 = vector.shape_cast %22 : vector<64x128xbf16> to vector<1x64x128xbf16>
    tpu.vector_store %arg5[%c0_18, %c0_19, %c0_20], %25 {strides = array<i32>} : memref<1x64x128xbf16, #tpu.memory_space<vmem>>, vector<1x64x128xbf16>,
    return
  }
  func.func @transform_0(%arg0: i32, %arg1: i32) -> (i32, i32, i32) {
    %c0_i32 = arith.constant 0 : i32
    %c0_i32_0 = arith.constant 0 : i32
    %c0_i32_1 = arith.constant 0 : i32
    return %arg0, %c0_i32, %c0_i32_0 : i32, i32, i32
  }
  func.func @transform_1(%arg0: i32, %arg1: i32) -> (i32, i32, i32) {
    %c0_i32 = arith.constant 0 : i32
    %c0_i32_0 = arith.constant 0 : i32
    %c0_i32_1 = arith.constant 0 : i32
    return %c0_i32, %c0_i32_0, %arg1 : i32, i32, i32
  }
  func.func @transform_2(%arg0: i32, %arg1: i32) -> (i32, i32) {
    %c0_i32 = arith.constant 0 : i32
    %c0_i32_0 = arith.constant 0 : i32
    return %c0_i32, %arg1 : i32, i32
  }
  func.func @transform_3(%arg0: i32, %arg1: i32) -> (i32, i32, i32) {
    %c0_i32 = arith.constant 0 : i32
    %c0_i32_0 = arith.constant 0 : i32
    return %arg0, %c0_i32, %arg1 : i32, i32, i32
  }
}

module attributes {stable_mosaic.version = 11 : i64} {
  func.func @_conv3x3_kernel(%arg0: i32, %arg1: i32, %arg2: memref<1x64x384xbf16, #tpu.memory_space<vmem>>, %arg3: memref<3x384x128xbf16, #tpu.memory_space<vmem>>, %arg4: memref<1x128xf32, #tpu.memory_space<vmem>>, %arg5: memref<1x32x128xbf16, #tpu.memory_space<vmem>>) attributes {dimension_semantics = [#tpu.dimension_semantics<parallel>, #tpu.dimension_semantics<parallel>], iteration_bounds = array<i64: 2, 4>, scalar_prefetch = 0 : i64, scratch_operands = 0 : i64, tpu.core_type = #tpu.core_type<tc>, window_params = [{transform_indices = @transform_0, window_bounds = array<i64: 1, 64, 384>}, {transform_indices = @transform_1, window_bounds = array<i64: 3, 384, 128>}, {transform_indices = @transform_2, window_bounds = array<i64: 1, 128>}, {transform_indices = @transform_3, window_bounds = array<i64: 1, 32, 128>}]} {
    %c0 = arith.constant 0 : index
    %c0_0 = arith.constant 0 : index
    %c0_1 = arith.constant 0 : index
    %0 = vector.load %arg2[%c0, %c0_0, %c0_1] : memref<1x64x384xbf16, #tpu.memory_space<vmem>>, vector<1x32x384xbf16>
    %1 = vector.shape_cast %0 : vector<1x32x384xbf16> to vector<32x384xbf16>
    %c0_2 = arith.constant 0 : index
    %c0_3 = arith.constant 0 : index
    %c0_4 = arith.constant 0 : index
    %2 = vector.load %arg3[%c0_2, %c0_3, %c0_4] : memref<3x384x128xbf16, #tpu.memory_space<vmem>>, vector<1x384x128xbf16>
    %3 = vector.shape_cast %2 : vector<1x384x128xbf16> to vector<384x128xbf16>
    %cst = arith.constant dense<0.000000e+00> : vector<32x128xf32>
    %4 = tpu.matmul %1, %3, %cst {dimension_numbers = #tpu.dot_dimension_numbers<[1], [0], [0], [1], [0, 0, 1, 1], [], []>} : vector<32x384xbf16>, vector<384x128xbf16>, vector<32x128xf32> -> vector<32x128xf32>
    %c0_5 = arith.constant 0 : index
    %c16 = arith.constant 16 : index
    %c0_6 = arith.constant 0 : index
    %5 = vector.load %arg2[%c0_5, %c16, %c0_6] : memref<1x64x384xbf16, #tpu.memory_space<vmem>>, vector<1x32x384xbf16>
    %6 = vector.shape_cast %5 : vector<1x32x384xbf16> to vector<32x384xbf16>
    %c1 = arith.constant 1 : index
    %c0_7 = arith.constant 0 : index
    %c0_8 = arith.constant 0 : index
    %7 = vector.load %arg3[%c1, %c0_7, %c0_8] : memref<3x384x128xbf16, #tpu.memory_space<vmem>>, vector<1x384x128xbf16>
    %8 = vector.shape_cast %7 : vector<1x384x128xbf16> to vector<384x128xbf16>
    %cst_9 = arith.constant dense<0.000000e+00> : vector<32x128xf32>
    %9 = tpu.matmul %6, %8, %cst_9 {dimension_numbers = #tpu.dot_dimension_numbers<[1], [0], [0], [1], [0, 0, 1, 1], [], []>} : vector<32x384xbf16>, vector<384x128xbf16>, vector<32x128xf32> -> vector<32x128xf32>
    %10 = arith.addf %4, %9 : vector<32x128xf32>
    %c0_10 = arith.constant 0 : index
    %c32 = arith.constant 32 : index
    %c0_11 = arith.constant 0 : index
    %11 = vector.load %arg2[%c0_10, %c32, %c0_11] : memref<1x64x384xbf16, #tpu.memory_space<vmem>>, vector<1x32x384xbf16>
    %12 = vector.shape_cast %11 : vector<1x32x384xbf16> to vector<32x384xbf16>
    %c2 = arith.constant 2 : index
    %c0_12 = arith.constant 0 : index
    %c0_13 = arith.constant 0 : index
    %13 = vector.load %arg3[%c2, %c0_12, %c0_13] : memref<3x384x128xbf16, #tpu.memory_space<vmem>>, vector<1x384x128xbf16>
    %14 = vector.shape_cast %13 : vector<1x384x128xbf16> to vector<384x128xbf16>
    %cst_14 = arith.constant dense<0.000000e+00> : vector<32x128xf32>
    %15 = tpu.matmul %12, %14, %cst_14 {dimension_numbers = #tpu.dot_dimension_numbers<[1], [0], [0], [1], [0, 0, 1, 1], [], []>} : vector<32x384xbf16>, vector<384x128xbf16>, vector<32x128xf32> -> vector<32x128xf32>
    %16 = arith.addf %10, %15 : vector<32x128xf32>
    %c0_15 = arith.constant 0 : index
    %c0_16 = arith.constant 0 : index
    %17 = vector.load %arg4[%c0_15, %c0_16] : memref<1x128xf32, #tpu.memory_space<vmem>>, vector<1x128xf32>
    %18 = vector.broadcast %17 : vector<1x128xf32> to vector<32x128xf32>
    %19 = arith.addf %16, %18 : vector<32x128xf32>
    %cst_17 = arith.constant 0.000000e+00 : f32
    %20 = vector.broadcast %cst_17 : f32 to vector<32x128xf32>
    %21 = arith.maximumf %19, %20 : vector<32x128xf32>
    %22 = arith.truncf %21 : vector<32x128xf32> to vector<32x128xbf16>
    %c0_18 = arith.constant 0 : index
    %c0_19 = arith.constant 0 : index
    %c0_20 = arith.constant 0 : index
    %23 = vector.load %arg5[%c0_18, %c0_19, %c0_20] : memref<1x32x128xbf16, #tpu.memory_space<vmem>>, vector<1x32x128xbf16>
    %24 = vector.shape_cast %23 : vector<1x32x128xbf16> to vector<32x128xbf16>
    %25 = vector.shape_cast %22 : vector<32x128xbf16> to vector<1x32x128xbf16>
    tpu.vector_store %arg5[%c0_18, %c0_19, %c0_20], %25 {strides = array<i32>} : memref<1x32x128xbf16, #tpu.memory_space<vmem>>, vector<1x32x128xbf16>,
    return
  }
  func.func @transform_0(%arg0: i32, %arg1: i32) -> (i32, i32, i32) {
    %c0_i32 = arith.constant 0 : i32
    %c0_i32_0 = arith.constant 0 : i32
    %c0_i32_1 = arith.constant 0 : i32
    return %arg0, %c0_i32, %c0_i32_0 : i32, i32, i32
  }
  func.func @transform_1(%arg0: i32, %arg1: i32) -> (i32, i32, i32) {
    %c0_i32 = arith.constant 0 : i32
    %c0_i32_0 = arith.constant 0 : i32
    %c0_i32_1 = arith.constant 0 : i32
    return %c0_i32, %c0_i32_0, %arg1 : i32, i32, i32
  }
  func.func @transform_2(%arg0: i32, %arg1: i32) -> (i32, i32) {
    %c0_i32 = arith.constant 0 : i32
    %c0_i32_0 = arith.constant 0 : i32
    return %c0_i32, %arg1 : i32, i32
  }
  func.func @transform_3(%arg0: i32, %arg1: i32) -> (i32, i32, i32) {
    %c0_i32 = arith.constant 0 : i32
    %c0_i32_0 = arith.constant 0 : i32
    return %arg0, %c0_i32, %arg1 : i32, i32, i32
  }
}

module attributes {stable_mosaic.version = 11 : i64} {
  func.func @_classifier_kernel(%arg0: i32, %arg1: memref<2x512xbf16, #tpu.memory_space<vmem>>, %arg2: memref<512x256xbf16, #tpu.memory_space<vmem>>, %arg3: memref<1x256xf32, #tpu.memory_space<vmem>>, %arg4: memref<256x256xbf16, #tpu.memory_space<vmem>>, %arg5: memref<1x256xf32, #tpu.memory_space<vmem>>, %arg6: memref<256x128xbf16, #tpu.memory_space<vmem>>, %arg7: memref<1x128xf32, #tpu.memory_space<vmem>>, %arg8: memref<2x128xf32, #tpu.memory_space<vmem>>) attributes {dimension_semantics = [#tpu.dimension_semantics<arbitrary>], iteration_bounds = array<i64: 1>, scalar_prefetch = 0 : i64, scratch_operands = 0 : i64, tpu.core_type = #tpu.core_type<tc>, window_params = [{pipeline_mode = #tpu.pipeline_mode<synchronous>, transform_indices = @transform_0, window_bounds = array<i64: 2, 512>}, {pipeline_mode = #tpu.pipeline_mode<synchronous>, transform_indices = @transform_1, window_bounds = array<i64: 512, 256>}, {pipeline_mode = #tpu.pipeline_mode<synchronous>, transform_indices = @transform_2, window_bounds = array<i64: 1, 256>}, {pipeline_mode = #tpu.pipeline_mode<synchronous>, transform_indices = @transform_3, window_bounds = array<i64: 256, 256>}, {pipeline_mode = #tpu.pipeline_mode<synchronous>, transform_indices = @transform_4, window_bounds = array<i64: 1, 256>}, {pipeline_mode = #tpu.pipeline_mode<synchronous>, transform_indices = @transform_5, window_bounds = array<i64: 256, 128>}, {pipeline_mode = #tpu.pipeline_mode<synchronous>, transform_indices = @transform_6, window_bounds = array<i64: 1, 128>}, {pipeline_mode = #tpu.pipeline_mode<synchronous>, transform_indices = @transform_7, window_bounds = array<i64: 2, 128>}]} {
    %c0 = arith.constant 0 : index
    %c0_0 = arith.constant 0 : index
    %0 = vector.load %arg1[%c0, %c0_0] : memref<2x512xbf16, #tpu.memory_space<vmem>>, vector<2x512xbf16>
    %c0_1 = arith.constant 0 : index
    %c0_2 = arith.constant 0 : index
    %1 = vector.load %arg2[%c0_1, %c0_2] : memref<512x256xbf16, #tpu.memory_space<vmem>>, vector<512x256xbf16>
    %cst = arith.constant dense<0.000000e+00> : vector<2x256xf32>
    %2 = tpu.matmul %0, %1, %cst {dimension_numbers = #tpu.dot_dimension_numbers<[1], [0], [0], [1], [0, 0, 1, 1], [], []>} : vector<2x512xbf16>, vector<512x256xbf16>, vector<2x256xf32> -> vector<2x256xf32>
    %c0_3 = arith.constant 0 : index
    %c0_4 = arith.constant 0 : index
    %3 = vector.load %arg3[%c0_3, %c0_4] : memref<1x256xf32, #tpu.memory_space<vmem>>, vector<1x256xf32>
    %4 = vector.broadcast %3 : vector<1x256xf32> to vector<2x256xf32>
    %5 = arith.addf %2, %4 : vector<2x256xf32>
    %cst_5 = arith.constant 0.000000e+00 : f32
    %6 = vector.broadcast %cst_5 : f32 to vector<2x256xf32>
    %7 = arith.maximumf %5, %6 : vector<2x256xf32>
    %8 = arith.truncf %7 : vector<2x256xf32> to vector<2x256xbf16>
    %c0_6 = arith.constant 0 : index
    %c0_7 = arith.constant 0 : index
    %9 = vector.load %arg4[%c0_6, %c0_7] : memref<256x256xbf16, #tpu.memory_space<vmem>>, vector<256x256xbf16>
    %cst_8 = arith.constant dense<0.000000e+00> : vector<2x256xf32>
    %10 = tpu.matmul %8, %9, %cst_8 {dimension_numbers = #tpu.dot_dimension_numbers<[1], [0], [0], [1], [0, 0, 1, 1], [], []>} : vector<2x256xbf16>, vector<256x256xbf16>, vector<2x256xf32> -> vector<2x256xf32>
    %c0_9 = arith.constant 0 : index
    %c0_10 = arith.constant 0 : index
    %11 = vector.load %arg5[%c0_9, %c0_10] : memref<1x256xf32, #tpu.memory_space<vmem>>, vector<1x256xf32>
    %12 = vector.broadcast %11 : vector<1x256xf32> to vector<2x256xf32>
    %13 = arith.addf %10, %12 : vector<2x256xf32>
    %cst_11 = arith.constant 0.000000e+00 : f32
    %14 = vector.broadcast %cst_11 : f32 to vector<2x256xf32>
    %15 = arith.maximumf %13, %14 : vector<2x256xf32>
    %16 = arith.truncf %15 : vector<2x256xf32> to vector<2x256xbf16>
    %c0_12 = arith.constant 0 : index
    %c0_13 = arith.constant 0 : index
    %17 = vector.load %arg6[%c0_12, %c0_13] : memref<256x128xbf16, #tpu.memory_space<vmem>>, vector<256x128xbf16>
    %cst_14 = arith.constant dense<0.000000e+00> : vector<2x128xf32>
    %18 = tpu.matmul %16, %17, %cst_14 {dimension_numbers = #tpu.dot_dimension_numbers<[1], [0], [0], [1], [0, 0, 1, 1], [], []>} : vector<2x256xbf16>, vector<256x128xbf16>, vector<2x128xf32> -> vector<2x128xf32>
    %c0_15 = arith.constant 0 : index
    %c0_16 = arith.constant 0 : index
    %19 = vector.load %arg7[%c0_15, %c0_16] : memref<1x128xf32, #tpu.memory_space<vmem>>, vector<1x128xf32>
    %20 = vector.broadcast %19 : vector<1x128xf32> to vector<2x128xf32>
    %21 = arith.addf %18, %20 : vector<2x128xf32>
    %c0_17 = arith.constant 0 : index
    %c0_18 = arith.constant 0 : index
    %22 = vector.load %arg8[%c0_17, %c0_18] : memref<2x128xf32, #tpu.memory_space<vmem>>, vector<2x128xf32>
    tpu.vector_store %arg8[%c0_17, %c0_18], %21 {strides = array<i32>} : memref<2x128xf32, #tpu.memory_space<vmem>>, vector<2x128xf32>,
    return
  }
  func.func @transform_0(%arg0: i32) -> (i32, i32) {
    %c0_i32 = arith.constant 0 : i32
    %c0_i32_0 = arith.constant 0 : i32
    %c0_i32_1 = arith.constant 0 : i32
    return %c0_i32, %c0_i32_0 : i32, i32
  }
  func.func @transform_1(%arg0: i32) -> (i32, i32) {
    %c0_i32 = arith.constant 0 : i32
    %c0_i32_0 = arith.constant 0 : i32
    %c0_i32_1 = arith.constant 0 : i32
    return %c0_i32, %c0_i32_0 : i32, i32
  }
  func.func @transform_2(%arg0: i32) -> (i32, i32) {
    %c0_i32 = arith.constant 0 : i32
    %c0_i32_0 = arith.constant 0 : i32
    %c0_i32_1 = arith.constant 0 : i32
    return %c0_i32, %c0_i32_0 : i32, i32
  }
  func.func @transform_3(%arg0: i32) -> (i32, i32) {
    %c0_i32 = arith.constant 0 : i32
    %c0_i32_0 = arith.constant 0 : i32
    %c0_i32_1 = arith.constant 0 : i32
    return %c0_i32, %c0_i32_0 : i32, i32
  }
  func.func @transform_4(%arg0: i32) -> (i32, i32) {
    %c0_i32 = arith.constant 0 : i32
    %c0_i32_0 = arith.constant 0 : i32
    %c0_i32_1 = arith.constant 0 : i32
    return %c0_i32, %c0_i32_0 : i32, i32
  }
  func.func @transform_5(%arg0: i32) -> (i32, i32) {
    %c0_i32 = arith.constant 0 : i32
    %c0_i32_0 = arith.constant 0 : i32
    %c0_i32_1 = arith.constant 0 : i32
    return %c0_i32, %c0_i32_0 : i32, i32
  }
  func.func @transform_6(%arg0: i32) -> (i32, i32) {
    %c0_i32 = arith.constant 0 : i32
    %c0_i32_0 = arith.constant 0 : i32
    %c0_i32_1 = arith.constant 0 : i32
    return %c0_i32, %c0_i32_0 : i32, i32
  }
  func.func @transform_7(%arg0: i32) -> (i32, i32) {
    %c0_i32 = arith.constant 0 : i32
    %c0_i32_0 = arith.constant 0 : i32
    %c0_i32_1 = arith.constant 0 : i32
    return %c0_i32, %c0_i32_0 : i32, i32
  }
}

</mosaic_0001>

<llo_original>
// kernel: vgg_forward.6
$region0: #{vgg_forward.6}
  #allocation0 [shape = 'u32[]', space=smem, size = 0x4, offset = 0x4, fixed_abs, tag = 'smem constant byte address 0x4 - core index']
  #allocation1 [shape = 'u32[144,128]{1,0:T(1,128)}', space=vmem, size = 0x12000, scoped, tag = 'internal scratch']
  %s0 = inlined_call_operand.vmem [shape: bf16[2,1088,9], index: 0, kind: input, shape index: {}]
  %s1 = inlined_call_operand.vmem [shape: bf16[3,9,128], index: 1, kind: input, shape index: {}]
  %s2 = inlined_call_operand.vmem [shape: f32[1,128], index: 2, kind: input, shape index: {}]
  %s3 = inlined_call_operand.vmem [shape: bf16[2,1024,128], index: 3, kind: output, shape index: {}]
  %s4 = sld [smem:[#allocation0]]
  $region45: #{vgg_forward.6} parent=0
    _
  %s6 = ssub.s32 1, %s4
  %s7 = scalar_select 0, %s6, %s4
  loop: start=0, step=1, limit=4
  $region2: #{vgg_forward.6} parent=0 // loop_pre_header
    _
  $region3: #{vgg_forward.6} parent=0 // loop_header
    %s9 = sphi 0, %s13
    %p10 = scmp.ge.s32.totalorder %s9, 4
    %s16 = sphi 0, %s28
    %s17 = sphi 0, %s24
    %s18 = sphi 0, %s16
    %s19 = sphi 0, %s17
    %s20 = sphi 0, %s18
    %s21 = sphi 0, %s19
    %s31 = sphi 0, %s33
    %s34 = sphi 0, %s31
    %s35 = sphi 0, %s34
    %s51 = sphi 0, %s35
    %s57 = sphi 0, %s59
    %s60 = sphi 0, %s57
    %s61 = sphi 0, %s60
    %s77 = sphi 0, %s61
    %s83 = sphi 0, %s85
    %s86 = sphi 0, %s83
    %s87 = sphi 0, %s86
    %s103 = sphi 0, %s87
    %s111 = sphi 0, %s113
    %s114 = sphi 0, %s111
    %s115 = sphi 0, %s114
    %s131 = sphi 0, %s115
  $region4: #{vgg_forward.6} parent=0 // loop_header_branch
    %12 = sbr.rel (%p10) target = $region8
  $region5: #{vgg_forward.6} parent=0 // loop_body
    %s14 = ssub.s32 %s9, 1
    %s15 = ssub.s32 %s9, 2
    %s22 = sadd.s32 1, %s17
    %p23 = scmp.ge.s32.totalorder %s22, 1
    %s24 = scalar_select %p23, 0, %s22
    %s25 = sadd.s32 1, %s16
    %s26 = scalar_select %p23, %s25, %s16
    %p27 = scmp.ge.s32.totalorder %s26, 2
    %s28 = scalar_select %p27, 0, %s26
    %s29 = ssub.s32 %s16, %s28
    %p30 = scmp.eq.s32.totalorder %s29, 0
    %s32 = sadd.s32 %s31, 1
    %s33 = scalar_select %p30, %s31, %s32
    %p36 = pneg %p30
    %p37 = scmp.eq.s32.totalorder %s9, 1
    %p38 = por %p36, %p37
    %p39 = scmp.ne.s32.totalorder %s31, %s34
    %p40 = scmp.eq.s32.totalorder %s9, 0
    %p41 = por %p39, %p40
    %p42 = scmp.ne.s32.totalorder %s31, %s34
    %p43 = scmp.eq.s32.totalorder %s14, 1
    %p44 = por %p42, %p43
    %p45 = scmp.ne.s32.totalorder %s34, %s35
    %p46 = scmp.eq.s32.totalorder %s14, 0
    %p47 = por %p45, %p46
    %p48 = scmp.ne.s32.totalorder %s34, %s35
    %p49 = scmp.eq.s32.totalorder %s15, 1
    %p50 = por %p48, %p49
    %p52 = scmp.ne.s32.totalorder %s35, %s51
    %p53 = scmp.eq.s32.totalorder %s15, 0
    %p54 = por %p52, %p53
    %s55 = ssub.s32 %s17, %s24
    %p56 = scmp.eq.s32.totalorder %s55, 0
    %s58 = sadd.s32 %s57, 1
    %s59 = scalar_select %p56, %s57, %s58
    %p62 = pneg %p56
    %p63 = scmp.eq.s32.totalorder %s9, 1
    %p64 = por %p62, %p63
    %p65 = scmp.ne.s32.totalorder %s57, %s60
    %p66 = scmp.eq.s32.totalorder %s9, 0
    %p67 = por %p65, %p66
    %p68 = scmp.ne.s32.totalorder %s57, %s60
    %p69 = scmp.eq.s32.totalorder %s14, 1
    %p70 = por %p68, %p69
    %p71 = scmp.ne.s32.totalorder %s60, %s61
    %p72 = scmp.eq.s32.totalorder %s14, 0
    %p73 = por %p71, %p72
    %p74 = scmp.ne.s32.totalorder %s60, %s61
    %p75 = scmp.eq.s32.totalorder %s15, 1
    %p76 = por %p74, %p75
    %p78 = scmp.ne.s32.totalorder %s61, %s77
    %p79 = scmp.eq.s32.totalorder %s15, 0
    %p80 = por %p78, %p79
    %s81 = ssub.s32 %s17, %s24
    %p82 = scmp.eq.s32.totalorder %s81, 0
    %s84 = sadd.s32 %s83, 1
    %s85 = scalar_select %p82, %s83, %s84
    %p88 = pneg %p82
    %p89 = scmp.eq.s32.totalorder %s9, 1
    %p90 = por %p88, %p89
    %p91 = scmp.ne.s32.totalorder %s83, %s86
    %p92 = scmp.eq.s32.totalorder %s9, 0
    %p93 = por %p91, %p92
    %p94 = scmp.ne.s32.totalorder %s83, %s86
    %p95 = scmp.eq.s32.totalorder %s14, 1
    %p96 = por %p94, %p95
    %p97 = scmp.ne.s32.totalorder %s86, %s87
    %p98 = scmp.eq.s32.totalorder %s14, 0
    %p99 = por %p97, %p98
    %p100 = scmp.ne.s32.totalorder %s86, %s87
    %p101 = scmp.eq.s32.totalorder %s15, 1
    %p102 = por %p100, %p101
    %p104 = scmp.ne.s32.totalorder %s87, %s103
    %p105 = scmp.eq.s32.totalorder %s15, 0
    %p106 = por %p104, %p105
    %s107 = ssub.s32 %s16, %s28
    %s108 = ssub.s32 %s17, %s24
    %s109 = sor.u32 %s107, %s108
    %p110 = scmp.eq.s32.totalorder %s109, 0
    %s112 = sadd.s32 %s111, 1
    %s113 = scalar_select %p110, %s111, %s112
    %p116 = pneg %p110
    %p117 = scmp.eq.s32.totalorder %s9, 1
    %p118 = por %p116, %p117
    %p119 = scmp.ne.s32.totalorder %s111, %s114
    %p120 = scmp.eq.s32.totalorder %s9, 0
    %p121 = por %p119, %p120
    %p122 = scmp.ne.s32.totalorder %s111, %s114
    %p123 = scmp.eq.s32.totalorder %s14, 1
    %p124 = por %p122, %p123
    %p125 = scmp.ne.s32.totalorder %s114, %s115
    %p126 = scmp.eq.s32.totalorder %s14, 0
    %p127 = por %p125, %p126
    %p128 = scmp.ne.s32.totalorder %s114, %s115
    %p129 = scmp.eq.s32.totalorder %s15, 1
    %p130 = por %p128, %p129
    %p132 = scmp.ne.s32.totalorder %s115, %s131
    %p133 = scmp.eq.s32.totalorder %s15, 0
    %p134 = por %p132, %p133
    %p135 = scmp.le.s32.totalorder 1, %s9
    %p136 = scmp.lt.s32.totalorder %s9, 3
    %p137 = pnand %p135, %p136
    %p138 = pneg %p137
    // Predicated region
    $region9: #{vgg_forward.6} parent=5 // pred_check
      _
    $region10: #{vgg_forward.6} parent=5 // pred_check_branch
      %140 = sbr.rel (%p137) target = $region12
    $region11: #{vgg_forward.6} parent=5 // pred_region
      %s141 = ssub.s32 %s9, 1
      // Predicated region
      $region13: #{vgg_forward.6} parent=11 // pred_check
        %p142 = pneg %p73
      $region14: #{vgg_forward.6} parent=11 // pred_check_branch
        %144 = sbr.rel (%p142) target = $region16
      $region15: #{vgg_forward.6} parent=11 // pred_region
        %p145 = scmp.lt.s32.totalorder %s19, 0
        %s146 = scalar_select %p145, %s19, 0
        %s147 = smul.addr %s146, 4
        %s148 = scalar_lea.vmem %s1, %s147
      $region16: #{vgg_forward.6} parent=11 // pred_fallthru
        _
      // Predicated region
      $region17: #{vgg_forward.6} parent=11 // pred_check
        %p149 = pneg %p99
      $region18: #{vgg_forward.6} parent=11 // pred_check_branch
        %151 = sbr.rel (%p149) target = $region20
      $region19: #{vgg_forward.6} parent=11 // pred_region
        %p152 = scmp.lt.s32.totalorder %s19, 0
        %s153 = scalar_select %p152, %s19, 0
        %s154 = scalar_lea.vmem %s2, %s153
      $region20: #{vgg_forward.6} parent=11 // pred_fallthru
        _
    $region12: #{vgg_forward.6} parent=5 // pred_fallthru
      _
    %p155 = scmp.lt.s32.totalorder %s9, 2
    // Predicated region
    $region21: #{vgg_forward.6} parent=5 // pred_check
      %p156 = pneg %p155
    $region22: #{vgg_forward.6} parent=5 // pred_check_branch
      %158 = sbr.rel (%p156) target = $region24
    $region23: #{vgg_forward.6} parent=5 // pred_region
      // Predicated region
      $region25: #{vgg_forward.6} parent=23 // pred_check
        %p159 = pneg %p41
      $region26: #{vgg_forward.6} parent=23 // pred_check_branch
        %161 = sbr.rel (%p159) target = $region28
      $region27: #{vgg_forward.6} parent=23 // pred_region
        %p162 = scmp.lt.s32.totalorder %s16, 1
        %s163 = scalar_select %p162, %s16, 1
        %s164 = smul.addr %s163, 136
        %s165 = smul.addr %s164, 4
        %s166 = scalar_lea.vmem %s0, %s165
      $region28: #{vgg_forward.6} parent=23 // pred_fallthru
        _
    $region24: #{vgg_forward.6} parent=5 // pred_fallthru
      _
    %p167 = scmp.le.s32.totalorder 1, %s9
    %p168 = scmp.lt.s32.totalorder %s9, 3
    %p169 = pnand %p167, %p168
    %p170 = pneg %p169
    // Predicated region
    $region29: #{vgg_forward.6} parent=5 // pred_check
      _
    $region30: #{vgg_forward.6} parent=5 // pred_check_branch
      %172 = sbr.rel (%p169) target = $region32
    $region31: #{vgg_forward.6} parent=5 // pred_region
      %s173 = ssub.s32 %s9, 1
      %p174 = scmp.lt.s32.totalorder %s18, 1
      %s175 = scalar_select %p174, %s18, 1
      %s176 = smul.addr %s175, 136
      %s177 = smul.addr %s176, 4
      %s178 = scalar_lea.vmem %s0, %s177
      %p179 = pneg %p47
      %p180 = pneg %p44
      %p181 = scmp.lt.s32.totalorder %s19, 0
      %s182 = scalar_select %p181, %s19, 0
      %s183 = smul.addr %s182, 4
      %s184 = scalar_lea.vmem %s1, %s183
      %p185 = pneg %p73
      %p186 = pneg %p70
      %p187 = scmp.lt.s32.totalorder %s19, 0
      %s188 = scalar_select %p187, %s19, 0
      %s189 = scalar_lea.vmem %s2, %s188
      %p190 = pneg %p99
      %p191 = pneg %p96
      %p192 = pneg %p127
      %p193 = pneg %p124
      %p194 = scmp.lt.s32.totalorder %s18, 1
      %s195 = scalar_select %p194, %s18, 1
      %p196 = scmp.lt.s32.totalorder %s19, 0
      %s197 = scalar_select %p196, %s19, 0
      %s198 = smul.addr %s195, 128
      %s199 = sadd.s32 %s197, %s198
      %s200 = smul.addr %s199, 4
      %s201 = scalar_lea.vmem %s3, %s200
      %p202 = scmp.lt.s32.totalorder %s18, 1
      %s203 = scalar_select %p202, %s18, 1
      %s204 = smul.addr %s203, 136
      %s205 = smul.addr %s204, 4
      %s206 = scalar_lea.vmem %s0, %s205
      %p207 = scmp.lt.s32.totalorder %s19, 0
      %s208 = scalar_select %p207, %s19, 0
      %s209 = smul.addr %s208, 4
      %s210 = scalar_lea.vmem %s1, %s209
      %p211 = scmp.lt.s32.totalorder %s19, 0
      %s212 = scalar_select %p211, %s19, 0
      %s213 = scalar_lea.vmem %s2, %s212
      %p214 = scmp.lt.s32.totalorder %s18, 1
      %s215 = scalar_select %p214, %s18, 1
      %p216 = scmp.lt.s32.totalorder %s19, 0
      %s217 = scalar_select %p216, %s19, 0
      %s218 = smul.addr %s215, 128
      %s219 = sadd.s32 %s217, %s218
      %s220 = smul.addr %s219, 4
      %s221 = scalar_lea.vmem %s3, %s220
      %v223 = vld [vmem:[%s206] sm:$0xf]
      %v224 = vld [vmem:[%s206 + $0x4] sm:$0xf]
      %v225 = vld [vmem:[%s206 + $0x8] sm:$0xf]
      %v226 = vld [vmem:[%s206 + $0xc] sm:$0xf]
      %v227 = vld [vmem:[%s206 + $0x10] sm:$0xf]
      %v228 = vld [vmem:[%s206 + $0x14] sm:$0xf]
      %v229 = vld [vmem:[%s206 + $0x18] sm:$0xf]
      %v230 = vld [vmem:[%s206 + $0x1c] sm:$0xf]
      %v231 = vld [vmem:[%s206 + $0x20] sm:$0xf]
      %v232 = vld [vmem:[%s206 + $0x24] sm:$0xf]
      %v233 = vld [vmem:[%s206 + $0x28] sm:$0xf]
      %v234 = vld [vmem:[%s206 + $0x2c] sm:$0xf]
      %v235 = vld [vmem:[%s206 + $0x30] sm:$0xf]
      %v236 = vld [vmem:[%s206 + $0x34] sm:$0xf]
      %v237 = vld [vmem:[%s206 + $0x38] sm:$0xf]
      %v238 = vld [vmem:[%s206 + $0x3c] sm:$0xf]
      %v239 = vld [vmem:[%s206 + $0x40] sm:$0xf]
      %v240 = vld [vmem:[%s206 + $0x44] sm:$0xf]
      %v241 = vld [vmem:[%s206 + $0x48] sm:$0xf]
      %v242 = vld [vmem:[%s206 + $0x4c] sm:$0xf]
      %v243 = vld [vmem:[%s206 + $0x50] sm:$0xf]
      %v244 = vld [vmem:[%s206 + $0x54] sm:$0xf]
      %v245 = vld [vmem:[%s206 + $0x58] sm:$0xf]
      %v246 = vld [vmem:[%s206 + $0x5c] sm:$0xf]
      %v247 = vld [vmem:[%s206 + $0x60] sm:$0xf]
      %v248 = vld [vmem:[%s206 + $0x64] sm:$0xf]
      %v249 = vld [vmem:[%s206 + $0x68] sm:$0xf]
      %v250 = vld [vmem:[%s206 + $0x6c] sm:$0xf]
      %v251 = vld [vmem:[%s206 + $0x70] sm:$0xf]
      %v252 = vld [vmem:[%s206 + $0x74] sm:$0xf]
      %v253 = vld [vmem:[%s206 + $0x78] sm:$0xf]
      %v254 = vld [vmem:[%s206 + $0x7c] sm:$0xf]
      %v255 = vld [vmem:[%s206 + $0x80] sm:$0xf]
      %v256 = vld [vmem:[%s206 + $0x84] sm:$0xf]
      %v257 = vld [vmem:[%s206 + $0x88] sm:$0xf]
      %v258 = vld [vmem:[%s206 + $0x8c] sm:$0xf]
      %v259 = vld [vmem:[%s206 + $0x90] sm:$0xf]
      %v260 = vld [vmem:[%s206 + $0x94] sm:$0xf]
      %v261 = vld [vmem:[%s206 + $0x98] sm:$0xf]
      %v262 = vld [vmem:[%s206 + $0x9c] sm:$0xf]
      %v263 = vld [vmem:[%s206 + $0xa0] sm:$0xf]
      %v264 = vld [vmem:[%s206 + $0xa4] sm:$0xf]
      %v265 = vld [vmem:[%s206 + $0xa8] sm:$0xf]
      %v266 = vld [vmem:[%s206 + $0xac] sm:$0xf]
      %v267 = vld [vmem:[%s206 + $0xb0] sm:$0xf]
      %v268 = vld [vmem:[%s206 + $0xb4] sm:$0xf]
      %v269 = vld [vmem:[%s206 + $0xb8] sm:$0xf]
      %v270 = vld [vmem:[%s206 + $0xbc] sm:$0xf]
      %v271 = vld [vmem:[%s206 + $0xc0] sm:$0xf]
      %v272 = vld [vmem:[%s206 + $0xc4] sm:$0xf]
      %v273 = vld [vmem:[%s206 + $0xc8] sm:$0xf]
      %v274 = vld [vmem:[%s206 + $0xcc] sm:$0xf]
      %v275 = vld [vmem:[%s206 + $0xd0] sm:$0xf]
      %v276 = vld [vmem:[%s206 + $0xd4] sm:$0xf]
      %v277 = vld [vmem:[%s206 + $0xd8] sm:$0xf]
      %v278 = vld [vmem:[%s206 + $0xdc] sm:$0xf]
      %v279 = vld [vmem:[%s206 + $0xe0] sm:$0xf]
      %v280 = vld [vmem:[%s206 + $0xe4] sm:$0xf]
      %v281 = vld [vmem:[%s206 + $0xe8] sm:$0xf]
      %v282 = vld [vmem:[%s206 + $0xec] sm:$0xf]
      %v283 = vld [vmem:[%s206 + $0xf0] sm:$0xf]
      %v284 = vld [vmem:[%s206 + $0xf4] sm:$0xf]
      %v285 = vld [vmem:[%s206 + $0xf8] sm:$0xf]
      %v286 = vld [vmem:[%s206 + $0xfc] sm:$0xf]
      %v287 = vld [vmem:[%s206 + $0x100] sm:$0xf]
      %v288 = vld [vmem:[%s206 + $0x104] sm:$0xf]
      %v289 = vld [vmem:[%s206 + $0x108] sm:$0xf]
      %v290 = vld [vmem:[%s206 + $0x10c] sm:$0xf]
      %v291 = vld [vmem:[%s206 + $0x110] sm:$0xf]
      %v292 = vld [vmem:[%s206 + $0x114] sm:$0xf]
      %v293 = vld [vmem:[%s206 + $0x118] sm:$0xf]
      %v294 = vld [vmem:[%s206 + $0x11c] sm:$0xf]
      %v295 = vld [vmem:[%s206 + $0x120] sm:$0xf]
      %v296 = vld [vmem:[%s206 + $0x124] sm:$0xf]
      %v297 = vld [vmem:[%s206 + $0x128] sm:$0xf]
      %v298 = vld [vmem:[%s206 + $0x12c] sm:$0xf]
      %v299 = vld [vmem:[%s206 + $0x130] sm:$0xf]
      %v300 = vld [vmem:[%s206 + $0x134] sm:$0xf]
      %v301 = vld [vmem:[%s206 + $0x138] sm:$0xf]
      %v302 = vld [vmem:[%s206 + $0x13c] sm:$0xf]
      %v303 = vld [vmem:[%s206 + $0x140] sm:$0xf]
      %v304 = vld [vmem:[%s206 + $0x144] sm:$0xf]
      %v305 = vld [vmem:[%s206 + $0x148] sm:$0xf]
      %v306 = vld [vmem:[%s206 + $0x14c] sm:$0xf]
      %v307 = vld [vmem:[%s206 + $0x150] sm:$0xf]
      %v308 = vld [vmem:[%s206 + $0x154] sm:$0xf]
      %v309 = vld [vmem:[%s206 + $0x158] sm:$0xf]
      %v310 = vld [vmem:[%s206 + $0x15c] sm:$0xf]
      %v311 = vld [vmem:[%s206 + $0x160] sm:$0xf]
      %v312 = vld [vmem:[%s206 + $0x164] sm:$0xf]
      %v313 = vld [vmem:[%s206 + $0x168] sm:$0xf]
      %v314 = vld [vmem:[%s206 + $0x16c] sm:$0xf]
      %v315 = vld [vmem:[%s206 + $0x170] sm:$0xf]
      %v316 = vld [vmem:[%s206 + $0x174] sm:$0xf]
      %v317 = vld [vmem:[%s206 + $0x178] sm:$0xf]
      %v318 = vld [vmem:[%s206 + $0x17c] sm:$0xf]
      %v319 = vld [vmem:[%s206 + $0x180] sm:$0xf]
      %v320 = vld [vmem:[%s206 + $0x184] sm:$0xf]
      %v321 = vld [vmem:[%s206 + $0x188] sm:$0xf]
      %v322 = vld [vmem:[%s206 + $0x18c] sm:$0xf]
      %v323 = vld [vmem:[%s206 + $0x190] sm:$0xf]
      %v324 = vld [vmem:[%s206 + $0x194] sm:$0xf]
      %v325 = vld [vmem:[%s206 + $0x198] sm:$0xf]
      %v326 = vld [vmem:[%s206 + $0x19c] sm:$0xf]
      %v327 = vld [vmem:[%s206 + $0x1a0] sm:$0xf]
      %v328 = vld [vmem:[%s206 + $0x1a4] sm:$0xf]
      %v329 = vld [vmem:[%s206 + $0x1a8] sm:$0xf]
      %v330 = vld [vmem:[%s206 + $0x1ac] sm:$0xf]
      %v331 = vld [vmem:[%s206 + $0x1b0] sm:$0xf]
      %v332 = vld [vmem:[%s206 + $0x1b4] sm:$0xf]
      %v333 = vld [vmem:[%s206 + $0x1b8] sm:$0xf]
      %v334 = vld [vmem:[%s206 + $0x1bc] sm:$0xf]
      %v335 = vld [vmem:[%s206 + $0x1c0] sm:$0xf]
      %v336 = vld [vmem:[%s206 + $0x1c4] sm:$0xf]
      %v337 = vld [vmem:[%s206 + $0x1c8] sm:$0xf]
      %v338 = vld [vmem:[%s206 + $0x1cc] sm:$0xf]
      %v339 = vld [vmem:[%s206 + $0x1d0] sm:$0xf]
      %v340 = vld [vmem:[%s206 + $0x1d4] sm:$0xf]
      %v341 = vld [vmem:[%s206 + $0x1d8] sm:$0xf]
      %v342 = vld [vmem:[%s206 + $0x1dc] sm:$0xf]
      %v343 = vld [vmem:[%s206 + $0x1e0] sm:$0xf]
      %v344 = vld [vmem:[%s206 + $0x1e4] sm:$0xf]
      %v345 = vld [vmem:[%s206 + $0x1e8] sm:$0xf]
      %v346 = vld [vmem:[%s206 + $0x1ec] sm:$0xf]
      %v347 = vld [vmem:[%s206 + $0x1f0] sm:$0xf]
      %v348 = vld [vmem:[%s206 + $0x1f4] sm:$0xf]
      %v349 = vld [vmem:[%s206 + $0x1f8] sm:$0xf]
      %v350 = vld [vmem:[%s206 + $0x1fc] sm:$0xf]
      %v351 = vld [vmem:[%s210] sm:$0xf]
      %v352 = vld [vmem:[%s210 + $0x4] sm:$0x1]
      %v353 = vld [vmem:[%s206 + $0x200] sm:$0xf]
      %v354 = vld [vmem:[%s206 + $0x204] sm:$0xf]
      %v355 = vld [vmem:[%s206 + $0x208] sm:$0xf]
      %v356 = vld [vmem:[%s206 + $0x20c] sm:$0xf]
      %s357 = scalar_lea.vmem %s210, 8
      %v358 = vld [vmem:[%s357] sm:$0xf]
      %v359 = vld [vmem:[%s357 + $0x4] sm:$0x1]
      %v488 = vunpack.c.l.b16 %v227
      %v489 = vunpack.c.l.b16 %v228
      %v490 = vunpack.c.l.b16 %v229
      %v491 = vunpack.c.l.b16 %v230
      %v492 = vunpack.c.l.b16 %v231
      %v493 = vunpack.c.l.b16 %v232
      %v494 = vunpack.c.l.b16 %v233
      %v495 = vunpack.c.l.b16 %v234
      %v496 = vunpack.c.l.b16 %v235
      %v497 = vunpack.c.l.b16 %v236
      %v498 = vunpack.c.l.b16 %v237
      %v499 = vunpack.c.l.b16 %v238
      %v500 = vunpack.c.l.b16 %v239
      %v501 = vunpack.c.l.b16 %v240
      %v502 = vunpack.c.l.b16 %v241
      %v503 = vunpack.c.l.b16 %v242
      %v504 = vunpack.c.l.b16 %v243
      %v505 = vunpack.c.l.b16 %v244
      %v506 = vunpack.c.l.b16 %v245
      %v507 = vunpack.c.l.b16 %v246
      %v508 = vunpack.c.l.b16 %v247
      %v509 = vunpack.c.l.b16 %v248
      %v510 = vunpack.c.l.b16 %v249
      %v511 = vunpack.c.l.b16 %v250
      %v512 = vunpack.c.l.b16 %v251
      %v513 = vunpack.c.l.b16 %v252
      %v514 = vunpack.c.l.b16 %v253
      %v515 = vunpack.c.l.b16 %v254
      %v516 = vunpack.c.l.b16 %v255
      %v517 = vunpack.c.l.b16 %v256
      %v518 = vunpack.c.l.b16 %v257
      %v519 = vunpack.c.l.b16 %v258
      %v520 = vunpack.c.l.b16 %v259
      %v521 = vunpack.c.l.b16 %v260
      %v522 = vunpack.c.l.b16 %v261
      %v523 = vunpack.c.l.b16 %v262
      %v524 = vunpack.c.l.b16 %v263
      %v525 = vunpack.c.l.b16 %v264
      %v526 = vunpack.c.l.b16 %v265
      %v527 = vunpack.c.l.b16 %v266
      %v528 = vunpack.c.l.b16 %v267
      %v529 = vunpack.c.l.b16 %v268
      %v530 = vunpack.c.l.b16 %v269
      %v531 = vunpack.c.l.b16 %v270
      %v532 = vunpack.c.l.b16 %v271
      %v533 = vunpack.c.l.b16 %v272
      %v534 = vunpack.c.l.b16 %v273
      %v535 = vunpack.c.l.b16 %v274
      %v536 = vunpack.c.l.b16 %v275
      %v537 = vunpack.c.l.b16 %v276
      %v538 = vunpack.c.l.b16 %v277
      %v539 = vunpack.c.l.b16 %v278
      %v540 = vunpack.c.l.b16 %v279
      %v541 = vunpack.c.l.b16 %v280
      %v542 = vunpack.c.l.b16 %v281
      %v543 = vunpack.c.l.b16 %v282
      %v544 = vunpack.c.l.b16 %v283
      %v545 = vunpack.c.l.b16 %v284
      %v546 = vunpack.c.l.b16 %v285
      %v547 = vunpack.c.l.b16 %v286
      %v548 = vunpack.c.l.b16 %v287
      %v549 = vunpack.c.l.b16 %v288
      %v550 = vunpack.c.l.b16 %v289
      %v551 = vunpack.c.l.b16 %v290
      %v552 = vunpack.c.l.b16 %v291
      %v553 = vunpack.c.l.b16 %v292
      %v554 = vunpack.c.l.b16 %v293
      %v555 = vunpack.c.l.b16 %v294
      %v556 = vunpack.c.l.b16 %v295
      %v557 = vunpack.c.l.b16 %v296
      %v558 = vunpack.c.l.b16 %v297
      %v559 = vunpack.c.l.b16 %v298
      %v560 = vunpack.c.l.b16 %v299
      %v561 = vunpack.c.l.b16 %v300
      %v562 = vunpack.c.l.b16 %v301
      %v563 = vunpack.c.l.b16 %v302
      %v564 = vunpack.c.l.b16 %v303
      %v565 = vunpack.c.l.b16 %v304
      %v566 = vunpack.c.l.b16 %v305
      %v567 = vunpack.c.l.b16 %v306
      %v568 = vunpack.c.l.b16 %v307
      %v569 = vunpack.c.l.b16 %v308
      %v570 = vunpack.c.l.b16 %v309
      %v571 = vunpack.c.l.b16 %v310
      %v572 = vunpack.c.l.b16 %v311
      %v573 = vunpack.c.l.b16 %v312
      %v574 = vunpack.c.l.b16 %v313
      %v575 = vunpack.c.l.b16 %v314
      %v576 = vunpack.c.l.b16 %v315
      %v577 = vunpack.c.l.b16 %v316
      %v578 = vunpack.c.l.b16 %v317
      %v579 = vunpack.c.l.b16 %v318
      %v580 = vunpack.c.l.b16 %v319
      %v581 = vunpack.c.l.b16 %v320
      %v582 = vunpack.c.l.b16 %v321
      %v583 = vunpack.c.l.b16 %v322
      %v584 = vunpack.c.l.b16 %v323
      %v585 = vunpack.c.l.b16 %v324
      %v586 = vunpack.c.l.b16 %v325
      %v587 = vunpack.c.l.b16 %v326
      %v588 = vunpack.c.l.b16 %v327
      %v589 = vunpack.c.l.b16 %v328
      %v590 = vunpack.c.l.b16 %v329
      %v591 = vunpack.c.l.b16 %v330
      %v592 = vunpack.c.l.b16 %v331
      %v593 = vunpack.c.l.b16 %v332
      %v594 = vunpack.c.l.b16 %v333
      %v595 = vunpack.c.l.b16 %v334
      %v596 = vunpack.c.l.b16 %v335
      %v597 = vunpack.c.l.b16 %v336
      %v598 = vunpack.c.l.b16 %v337
      %v599 = vunpack.c.l.b16 %v338
      %v600 = vunpack.c.l.b16 %v339
      %v601 = vunpack.c.l.b16 %v340
      %v602 = vunpack.c.l.b16 %v341
      %v603 = vunpack.c.l.b16 %v342
      %v604 = vunpack.c.l.b16 %v343
      %v605 = vunpack.c.l.b16 %v344
      %v606 = vunpack.c.l.b16 %v345
      %v607 = vunpack.c.l.b16 %v346
      %v608 = vunpack.c.l.b16 %v347
      %v609 = vunpack.c.l.b16 %v348
      %v610 = vunpack.c.l.b16 %v349
      %v611 = vunpack.c.l.b16 %v350
      %v612 = vunpack.c.l.b16 %v353
      %v613 = vunpack.c.l.b16 %v354
      %v614 = vunpack.c.l.b16 %v355
      %v615 = vunpack.c.l.b16 %v356
      %v616 = vpack.c.b16 %v489, %v488
      %v617 = vpack.c.b16 %v491, %v490
      %v618 = vpack.c.b16 %v493, %v492
      %v619 = vpack.c.b16 %v495, %v494
      %v620 = vpack.c.b16 %v497, %v496
      %v621 = vpack.c.b16 %v499, %v498
      %v622 = vpack.c.b16 %v501, %v500
      %v623 = vpack.c.b16 %v503, %v502
      %v624 = vpack.c.b16 %v505, %v504
      %v625 = vpack.c.b16 %v507, %v506
      %v626 = vpack.c.b16 %v509, %v508
      %v627 = vpack.c.b16 %v511, %v510
      %v628 = vpack.c.b16 %v513, %v512
      %v629 = vpack.c.b16 %v515, %v514
      %v630 = vpack.c.b16 %v517, %v516
      %v631 = vpack.c.b16 %v519, %v518
      %v632 = vpack.c.b16 %v521, %v520
      %v633 = vpack.c.b16 %v523, %v522
      %v634 = vpack.c.b16 %v525, %v524
      %v635 = vpack.c.b16 %v527, %v526
      %v636 = vpack.c.b16 %v529, %v528
      %v637 = vpack.c.b16 %v531, %v530
      %v638 = vpack.c.b16 %v533, %v532
      %v639 = vpack.c.b16 %v535, %v534
      %v640 = vpack.c.b16 %v537, %v536
      %v641 = vpack.c.b16 %v539, %v538
      %v642 = vpack.c.b16 %v541, %v540
      %v643 = vpack.c.b16 %v543, %v542
      %v644 = vpack.c.b16 %v545, %v544
      %v645 = vpack.c.b16 %v547, %v546
      %v646 = vpack.c.b16 %v549, %v548
      %v647 = vpack.c.b16 %v551, %v550
      %v648 = vpack.c.b16 %v553, %v552
      %v649 = vpack.c.b16 %v555, %v554
      %v650 = vpack.c.b16 %v557, %v556
      %v651 = vpack.c.b16 %v559, %v558
      %v652 = vpack.c.b16 %v561, %v560
      %v653 = vpack.c.b16 %v563, %v562
      %v654 = vpack.c.b16 %v565, %v564
      %v655 = vpack.c.b16 %v567, %v566
      %v656 = vpack.c.b16 %v569, %v568
      %v657 = vpack.c.b16 %v571, %v570
      %v658 = vpack.c.b16 %v573, %v572
      %v659 = vpack.c.b16 %v575, %v574
      %v660 = vpack.c.b16 %v577, %v576
      %v661 = vpack.c.b16 %v579, %v578
      %v662 = vpack.c.b16 %v581, %v580
      %v663 = vpack.c.b16 %v583, %v582
      %v664 = vpack.c.b16 %v585, %v584
      %v665 = vpack.c.b16 %v587, %v586
      %v666 = vpack.c.b16 %v589, %v588
      %v667 = vpack.c.b16 %v591, %v590
      %v668 = vpack.c.b16 %v593, %v592
      %v669 = vpack.c.b16 %v595, %v594
      %v670 = vpack.c.b16 %v597, %v596
      %v671 = vpack.c.b16 %v599, %v598
      %v672 = vpack.c.b16 %v601, %v600
      %v673 = vpack.c.b16 %v603, %v602
      %v674 = vpack.c.b16 %v605, %v604
      %v675 = vpack.c.b16 %v607, %v606
      %v676 = vpack.c.b16 %v609, %v608
      %v677 = vpack.c.b16 %v611, %v610
      %v678 = vpack.c.b16 %v613, %v612
      %v679 = vpack.c.b16 %v615, %v614
      %v682 = vunpack.c.l.b16 %v358
      %v683 = vunpack.c.l.b16 %v359
      %v684 = vpack.c.b16 %v683, %v682
      %vm685 = vcmask 72704
      %v687 = vsel %vm685, %v616, 0
      %v690 = vsel %vm685, %v617, 0
      %v693 = vsel %vm685, %v618, 0
      %v696 = vsel %vm685, %v619, 0
      %v699 = vsel %vm685, %v620, 0
      %v702 = vsel %vm685, %v621, 0
      %v705 = vsel %vm685, %v622, 0
      %v708 = vsel %vm685, %v623, 0
      %v711 = vsel %vm685, %v624, 0
      %v714 = vsel %vm685, %v625, 0
      %v717 = vsel %vm685, %v626, 0
      %v720 = vsel %vm685, %v627, 0
      %v723 = vsel %vm685, %v628, 0
      %v726 = vsel %vm685, %v629, 0
      %v729 = vsel %vm685, %v630, 0
      %v732 = vsel %vm685, %v631, 0
      %v735 = vsel %vm685, %v632, 0
      %v738 = vsel %vm685, %v633, 0
      %v741 = vsel %vm685, %v634, 0
      %v744 = vsel %vm685, %v635, 0
      %v747 = vsel %vm685, %v636, 0
      %v750 = vsel %vm685, %v637, 0
      %v753 = vsel %vm685, %v638, 0
      %v756 = vsel %vm685, %v639, 0
      %v759 = vsel %vm685, %v640, 0
      %v762 = vsel %vm685, %v641, 0
      %v765 = vsel %vm685, %v642, 0
      %v768 = vsel %vm685, %v643, 0
      %v771 = vsel %vm685, %v644, 0
      %v774 = vsel %vm685, %v645, 0
      %v777 = vsel %vm685, %v646, 0
      %v780 = vsel %vm685, %v647, 0
      %v783 = vsel %vm685, %v648, 0
      %v786 = vsel %vm685, %v649, 0
      %v789 = vsel %vm685, %v650, 0
      %v792 = vsel %vm685, %v651, 0
      %v795 = vsel %vm685, %v652, 0
      %v798 = vsel %vm685, %v653, 0
      %v801 = vsel %vm685, %v654, 0
      %v804 = vsel %vm685, %v655, 0
      %v807 = vsel %vm685, %v656, 0
      %v810 = vsel %vm685, %v657, 0
      %v813 = vsel %vm685, %v658, 0
      %v816 = vsel %vm685, %v659, 0
      %v819 = vsel %vm685, %v660, 0
      %v822 = vsel %vm685, %v661, 0
      %v825 = vsel %vm685, %v662, 0
      %v828 = vsel %vm685, %v663, 0
      %v831 = vsel %vm685, %v664, 0
      %v834 = vsel %vm685, %v665, 0
      %v837 = vsel %vm685, %v666, 0
      %v840 = vsel %vm685, %v667, 0
      %v843 = vsel %vm685, %v668, 0
      %v846 = vsel %vm685, %v669, 0
      %v849 = vsel %vm685, %v670, 0
      %v852 = vsel %vm685, %v671, 0
      %v855 = vsel %vm685, %v672, 0
      %v858 = vsel %vm685, %v673, 0
      %v861 = vsel %vm685, %v674, 0
      %v864 = vsel %vm685, %v675, 0
      %v867 = vsel %vm685, %v676, 0
      %v870 = vsel %vm685, %v677, 0
      %v873 = vsel %vm685, %v678, 0
      %v876 = vsel %vm685, %v679, 0
      %vm878 = vcmask 1043456
      %vm879 = vcmask 1044480
      %v880 = vsel %vm878, 4294967295, 65535
      %v881 = vsel %vm879, %v880, 0
      %v883 = vand.u32 %v684, %v881
      %885 = vmatprep.subr.bf16.mxu0 0
      %886 = vmatpush1.bf16.msra.mxu0 %v883
      %887 = vmatprep.subr.bf16.mxu0 0
      %888 = vmatpush1.bf16.msra.mxu0 0
      %889 = vmatprep.subr.bf16.mxu0 0
      %890 = vmatpush1.bf16.msra.mxu0 0
      %891 = vmatprep.subr.bf16.mxu0 0
      %892 = vmatpush1.bf16.msra.mxu0 0
      %893 = vmatprep.subr.bf16.mxu0 0
      %894 = vmatpush1.bf16.msra.mxu0 0
      %895 = vmatprep.subr.bf16.mxu0 0
      %896 = vmatpush1.bf16.msra.mxu0 0
      %897 = vmatprep.subr.bf16.mxu0 0
      %898 = vmatpush1.bf16.msra.mxu0 0
      %899 = vmatprep.subr.bf16.mxu0 0
      %900 = vmatpush1.bf16.msra.mxu0 0
      %901 = vmatprep.subr.bf16.mxu0 0
      %902 = vmatpush1.bf16.msra.mxu0 0
      %903 = vmatprep.subr.bf16.mxu0 0
      %904 = vmatpush1.bf16.msra.mxu0 0
      %905 = vmatprep.subr.bf16.mxu0 0
      %906 = vmatpush1.bf16.msra.mxu0 0
      %907 = vmatprep.subr.bf16.mxu0 0
      %908 = vmatpush1.bf16.msra.mxu0 0
      %909 = vmatprep.subr.bf16.mxu0 0
      %910 = vmatpush1.bf16.msra.mxu0 0
      %911 = vmatprep.subr.bf16.mxu0 0
      %912 = vmatpush1.bf16.msra.mxu0 0
      %913 = vmatprep.subr.bf16.mxu0 0
      %914 = vmatpush1.bf16.msra.mxu0 0
      %915 = vmatprep.subr.bf16.mxu0 0
      %916 = vmatpush1.bf16.msra.mxu0 0
      %917 = vmatprep.mubr.bf16.mxu0 0
      %918 = vmatmul.mubr.bf16.gmra.mrb[0].mxu0 %v687
      %v919 = vpop.f32.mrb[0].mxu0
      %v920 = vadd.f32 0.0, %v919
      %v921 = vpop.f32.mrb[0].mxu0
      %v922 = vpop.f32.mrb[0].mxu0
      %v923 = vadd.f32 0.0, %v922
      %v924 = vpop.f32.mrb[0].mxu0
      %925 = vmatprep.mubr.bf16.mxu0 0
      %926 = vmatmul.mubr.bf16.gmra.mrb[0].mxu0 %v690
      %v927 = vpop.f32.mrb[0].mxu0
      %v928 = vadd.f32 0.0, %v927
      %v929 = vpop.f32.mrb[0].mxu0
      %v930 = vpop.f32.mrb[0].mxu0
      %v931 = vadd.f32 0.0, %v930
      %v932 = vpop.f32.mrb[0].mxu0
      %933 = vmatprep.mubr.bf16.mxu0 0
      %934 = vmatmul.mubr.bf16.gmra.mrb[0].mxu0 %v693
      %v935 = vpop.f32.mrb[0].mxu0
      %v936 = vadd.f32 0.0, %v935
      %v937 = vpop.f32.mrb[0].mxu0
      %v938 = vpop.f32.mrb[0].mxu0
      %v939 = vadd.f32 0.0, %v938
      %v940 = vpop.f32.mrb[0].mxu0
      %941 = vmatprep.mubr.bf16.mxu0 0
      %942 = vmatmul.mubr.bf16.gmra.mrb[0].mxu0 %v696
      %v943 = vpop.f32.mrb[0].mxu0
      %v944 = vadd.f32 0.0, %v943
      %v945 = vpop.f32.mrb[0].mxu0
      %v946 = vpop.f32.mrb[0].mxu0
      %v947 = vadd.f32 0.0, %v946
      %v948 = vpop.f32.mrb[0].mxu0
      %949 = vmatprep.mubr.bf16.mxu0 0
      %950 = vmatmul.mubr.bf16.gmra.mrb[0].mxu0 %v699
      %v951 = vpop.f32.mrb[0].mxu0
      %v952 = vadd.f32 0.0, %v951
      %v953 = vpop.f32.mrb[0].mxu0
      %v954 = vpop.f32.mrb[0].mxu0
      %v955 = vadd.f32 0.0, %v954
      %v956 = vpop.f32.mrb[0].mxu0
      %957 = vmatprep.mubr.bf16.mxu0 0
      %958 = vmatmul.mubr.bf16.gmra.mrb[0].mxu0 %v702
      %v959 = vpop.f32.mrb[0].mxu0
      %v960 = vadd.f32 0.0, %v959
      %v961 = vpop.f32.mrb[0].mxu0
      %v962 = vpop.f32.mrb[0].mxu0
      %v963 = vadd.f32 0.0, %v962
      %v964 = vpop.f32.mrb[0].mxu0
      %965 = vmatprep.mubr.bf16.mxu0 0
      %966 = vmatmul.mubr.bf16.gmra.mrb[0].mxu0 %v705
      %v967 = vpop.f32.mrb[0].mxu0
      %v968 = vadd.f32 0.0, %v967
      %v969 = vpop.f32.mrb[0].mxu0
      %v970 = vpop.f32.mrb[0].mxu0
      %v971 = vadd.f32 0.0, %v970
      %v972 = vpop.f32.mrb[0].mxu0
      %973 = vmatprep.mubr.bf16.mxu0 0
      %974 = vmatmul.mubr.bf16.gmra.mrb[0].mxu0 %v708
      %v975 = vpop.f32.mrb[0].mxu0
      %v976 = vadd.f32 0.0, %v975
      %v977 = vpop.f32.mrb[0].mxu0
      %v978 = vpop.f32.mrb[0].mxu0
      %v979 = vadd.f32 0.0, %v978
      %v980 = vpop.f32.mrb[0].mxu0
      %981 = vmatprep.mubr.bf16.mxu0 0
      %982 = vmatmul.mubr.bf16.gmra.mrb[0].mxu0 %v711
      %v983 = vpop.f32.mrb[0].mxu0
      %v984 = vadd.f32 0.0, %v983
      %v985 = vpop.f32.mrb[0].mxu0
      %v986 = vpop.f32.mrb[0].mxu0
      %v987 = vadd.f32 0.0, %v986
      %v988 = vpop.f32.mrb[0].mxu0
      %989 = vmatprep.mubr.bf16.mxu0 0
      %990 = vmatmul.mubr.bf16.gmra.mrb[0].mxu0 %v714
      %v991 = vpop.f32.mrb[0].mxu0
      %v992 = vadd.f32 0.0, %v991
      %v993 = vpop.f32.mrb[0].mxu0
      %v994 = vpop.f32.mrb[0].mxu0
      %v995 = vadd.f32 0.0, %v994
      %v996 = vpop.f32.mrb[0].mxu0
      %997 = vmatprep.mubr.bf16.mxu0 0
      %998 = vmatmul.mubr.bf16.gmra.mrb[0].mxu0 %v717
      %v999 = vpop.f32.mrb[0].mxu0
      %v1000 = vadd.f32 0.0, %v999
      %v1001 = vpop.f32.mrb[0].mxu0
      %v1002 = vpop.f32.mrb[0].mxu0
      %v1003 = vadd.f32 0.0, %v1002
      %v1004 = vpop.f32.mrb[0].mxu0
      %1005 = vmatprep.mubr.bf16.mxu0 0
      %1006 = vmatmul.mubr.bf16.gmra.mrb[0].mxu0 %v720
      %v1007 = vpop.f32.mrb[0].mxu0
      %v1008 = vadd.f32 0.0, %v1007
      %v1009 = vpop.f32.mrb[0].mxu0
      %v1010 = vpop.f32.mrb[0].mxu0
      %v1011 = vadd.f32 0.0, %v1010
      %v1012 = vpop.f32.mrb[0].mxu0
      %1013 = vmatprep.mubr.bf16.mxu0 0
      %1014 = vmatmul.mubr.bf16.gmra.mrb[0].mxu0 %v723
      %v1015 = vpop.f32.mrb[0].mxu0
      %v1016 = vadd.f32 0.0, %v1015
      %v1017 = vpop.f32.mrb[0].mxu0
      %v1018 = vpop.f32.mrb[0].mxu0
      %v1019 = vadd.f32 0.0, %v1018
      %v1020 = vpop.f32.mrb[0].mxu0
      %1021 = vmatprep.mubr.bf16.mxu0 0
      %1022 = vmatmul.mubr.bf16.gmra.mrb[0].mxu0 %v726
      %v1023 = vpop.f32.mrb[0].mxu0
      %v1024 = vadd.f32 0.0, %v1023
      %v1025 = vpop.f32.mrb[0].mxu0
      %v1026 = vpop.f32.mrb[0].mxu0
      %v1027 = vadd.f32 0.0, %v1026
      %v1028 = vpop.f32.mrb[0].mxu0
      %1029 = vmatprep.mubr.bf16.mxu0 0
      %1030 = vmatmul.mubr.bf16.gmra.mrb[0].mxu0 %v729
      %v1031 = vpop.f32.mrb[0].mxu0
      %v1032 = vadd.f32 0.0, %v1031
      %v1033 = vpop.f32.mrb[0].mxu0
      %v1034 = vpop.f32.mrb[0].mxu0
      %v1035 = vadd.f32 0.0, %v1034
      %v1036 = vpop.f32.mrb[0].mxu0
      %1037 = vmatprep.mubr.bf16.mxu0 0
      %1038 = vmatmul.mubr.bf16.gmra.mrb[0].mxu0 %v732
      %v1039 = vpop.f32.mrb[0].mxu0
      %v1040 = vadd.f32 0.0, %v1039
      %v1041 = vpop.f32.mrb[0].mxu0
      %v1042 = vpop.f32.mrb[0].mxu0
      %v1043 = vadd.f32 0.0, %v1042
      %v1044 = vpop.f32.mrb[0].mxu0
      %1045 = vmatprep.mubr.bf16.mxu0 0
      %1046 = vmatmul.mubr.bf16.gmra.mrb[0].mxu0 %v735
      %v1047 = vpop.f32.mrb[0].mxu0
      %v1048 = vadd.f32 0.0, %v1047
      %v1049 = vpop.f32.mrb[0].mxu0
      %v1050 = vpop.f32.mrb[0].mxu0
      %v1051 = vadd.f32 0.0, %v1050
      %v1052 = vpop.f32.mrb[0].mxu0
      %1053 = vmatprep.mubr.bf16.mxu0 0
      %1054 = vmatmul.mubr.bf16.gmra.mrb[0].mxu0 %v738
      %v1055 = vpop.f32.mrb[0].mxu0
      %v1056 = vadd.f32 0.0, %v1055
      %v1057 = vpop.f32.mrb[0].mxu0
      %v1058 = vpop.f32.mrb[0].mxu0
      %v1059 = vadd.f32 0.0, %v1058
      %v1060 = vpop.f32.mrb[0].mxu0
      %1061 = vmatprep.mubr.bf16.mxu0 0
      %1062 = vmatmul.mubr.bf16.gmra.mrb[0].mxu0 %v741
      %v1063 = vpop.f32.mrb[0].mxu0
      %v1064 = vadd.f32 0.0, %v1063
      %v1065 = vpop.f32.mrb[0].mxu0
      %v1066 = vpop.f32.mrb[0].mxu0
      %v1067 = vadd.f32 0.0, %v1066
      %v1068 = vpop.f32.mrb[0].mxu0
      %1069 = vmatprep.mubr.bf16.mxu0 0
      %1070 = vmatmul.mubr.bf16.gmra.mrb[0].mxu0 %v744
      %v1071 = vpop.f32.mrb[0].mxu0
      %v1072 = vadd.f32 0.0, %v1071
      %v1073 = vpop.f32.mrb[0].mxu0
      %v1074 = vpop.f32.mrb[0].mxu0
      %v1075 = vadd.f32 0.0, %v1074
      %v1076 = vpop.f32.mrb[0].mxu0
      %1077 = vmatprep.mubr.bf16.mxu0 0
      %1078 = vmatmul.mubr.bf16.gmra.mrb[0].mxu0 %v747
      %v1079 = vpop.f32.mrb[0].mxu0
      %v1080 = vadd.f32 0.0, %v1079
      %v1081 = vpop.f32.mrb[0].mxu0
      %v1082 = vpop.f32.mrb[0].mxu0
      %v1083 = vadd.f32 0.0, %v1082
      %v1084 = vpop.f32.mrb[0].mxu0
      %1085 = vmatprep.mubr.bf16.mxu0 0
      %1086 = vmatmul.mubr.bf16.gmra.mrb[0].mxu0 %v750
      %v1087 = vpop.f32.mrb[0].mxu0
      %v1088 = vadd.f32 0.0, %v1087
      %v1089 = vpop.f32.mrb[0].mxu0
      %v1090 = vpop.f32.mrb[0].mxu0
      %v1091 = vadd.f32 0.0, %v1090
      %v1092 = vpop.f32.mrb[0].mxu0
      %1093 = vmatprep.mubr.bf16.mxu0 0
      %1094 = vmatmul.mubr.bf16.gmra.mrb[0].mxu0 %v753
      %v1095 = vpop.f32.mrb[0].mxu0
      %v1096 = vadd.f32 0.0, %v1095
      %v1097 = vpop.f32.mrb[0].mxu0
      %v1098 = vpop.f32.mrb[0].mxu0
      %v1099 = vadd.f32 0.0, %v1098
      %v1100 = vpop.f32.mrb[0].mxu0
      %1101 = vmatprep.mubr.bf16.mxu0 0
      %1102 = vmatmul.mubr.bf16.gmra.mrb[0].mxu0 %v756
      %v1103 = vpop.f32.mrb[0].mxu0
      %v1104 = vadd.f32 0.0, %v1103
      %v1105 = vpop.f32.mrb[0].mxu0
      %v1106 = vpop.f32.mrb[0].mxu0
      %v1107 = vadd.f32 0.0, %v1106
      %v1108 = vpop.f32.mrb[0].mxu0
      %1109 = vmatprep.mubr.bf16.mxu0 0
      %1110 = vmatmul.mubr.bf16.gmra.mrb[0].mxu0 %v759
      %v1111 = vpop.f32.mrb[0].mxu0
      %v1112 = vadd.f32 0.0, %v1111
      %v1113 = vpop.f32.mrb[0].mxu0
      %v1114 = vpop.f32.mrb[0].mxu0
      %v1115 = vadd.f32 0.0, %v1114
      %v1116 = vpop.f32.mrb[0].mxu0
      %1117 = vmatprep.mubr.bf16.mxu0 0
      %1118 = vmatmul.mubr.bf16.gmra.mrb[0].mxu0 %v762
      %v1119 = vpop.f32.mrb[0].mxu0
      %v1120 = vadd.f32 0.0, %v1119
      %v1121 = vpop.f32.mrb[0].mxu0
      %v1122 = vpop.f32.mrb[0].mxu0
      %v1123 = vadd.f32 0.0, %v1122
      %v1124 = vpop.f32.mrb[0].mxu0
      %1125 = vmatprep.mubr.bf16.mxu0 0
      %1126 = vmatmul.mubr.bf16.gmra.mrb[0].mxu0 %v765
      %v1127 = vpop.f32.mrb[0].mxu0
      %v1128 = vadd.f32 0.0, %v1127
      %v1129 = vpop.f32.mrb[0].mxu0
      %v1130 = vpop.f32.mrb[0].mxu0
      %v1131 = vadd.f32 0.0, %v1130
      %v1132 = vpop.f32.mrb[0].mxu0
      %1133 = vmatprep.mubr.bf16.mxu0 0
      %1134 = vmatmul.mubr.bf16.gmra.mrb[0].mxu0 %v768
      %v1135 = vpop.f32.mrb[0].mxu0
      %v1136 = vadd.f32 0.0, %v1135
      %v1137 = vpop.f32.mrb[0].mxu0
      %v1138 = vpop.f32.mrb[0].mxu0
      %v1139 = vadd.f32 0.0, %v1138
      %v1140 = vpop.f32.mrb[0].mxu0
      %1141 = vmatprep.mubr.bf16.mxu0 0
      %1142 = vmatmul.mubr.bf16.gmra.mrb[0].mxu0 %v771
      %v1143 = vpop.f32.mrb[0].mxu0
      %v1144 = vadd.f32 0.0, %v1143
      %v1145 = vpop.f32.mrb[0].mxu0
      %v1146 = vpop.f32.mrb[0].mxu0
      %v1147 = vadd.f32 0.0, %v1146
      %v1148 = vpop.f32.mrb[0].mxu0
      %1149 = vmatprep.mubr.bf16.mxu0 0
      %1150 = vmatmul.mubr.bf16.gmra.mrb[0].mxu0 %v774
      %v1151 = vpop.f32.mrb[0].mxu0
      %v1152 = vadd.f32 0.0, %v1151
      %v1153 = vpop.f32.mrb[0].mxu0
      %v1154 = vpop.f32.mrb[0].mxu0
      %v1155 = vadd.f32 0.0, %v1154
      %v1156 = vpop.f32.mrb[0].mxu0
      %1157 = vmatprep.mubr.bf16.mxu0 0
      %1158 = vmatmul.mubr.bf16.gmra.mrb[0].mxu0 %v777
      %v1159 = vpop.f32.mrb[0].mxu0
      %v1160 = vadd.f32 0.0, %v1159
      %v1161 = vpop.f32.mrb[0].mxu0
      %v1162 = vpop.f32.mrb[0].mxu0
      %v1163 = vadd.f32 0.0, %v1162
      %v1164 = vpop.f32.mrb[0].mxu0
      %1165 = vmatprep.mubr.bf16.mxu0 0
      %1166 = vmatmul.mubr.bf16.gmra.mrb[0].mxu0 %v780
      %v1167 = vpop.f32.mrb[0].mxu0
      %v1168 = vadd.f32 0.0, %v1167
      %v1169 = vpop.f32.mrb[0].mxu0
      %v1170 = vpop.f32.mrb[0].mxu0
      %v1171 = vadd.f32 0.0, %v1170
      %v1172 = vpop.f32.mrb[0].mxu0
      %1173 = vmatprep.mubr.bf16.mxu0 0
      %1174 = vmatmul.mubr.bf16.gmra.mrb[0].mxu0 %v783
      %v1175 = vpop.f32.mrb[0].mxu0
      %v1176 = vadd.f32 0.0, %v1175
      %v1177 = vpop.f32.mrb[0].mxu0
      %v1178 = vpop.f32.mrb[0].mxu0
      %v1179 = vadd.f32 0.0, %v1178
      %v1180 = vpop.f32.mrb[0].mxu0
      %1181 = vmatprep.mubr.bf16.mxu0 0
      %1182 = vmatmul.mubr.bf16.gmra.mrb[0].mxu0 %v786
      %v1183 = vpop.f32.mrb[0].mxu0
      %v1184 = vadd.f32 0.0, %v1183
      %v1185 = vpop.f32.mrb[0].mxu0
      %v1186 = vpop.f32.mrb[0].mxu0
      %v1187 = vadd.f32 0.0, %v1186
      %v1188 = vpop.f32.mrb[0].mxu0
      %1189 = vmatprep.mubr.bf16.mxu0 0
      %1190 = vmatmul.mubr.bf16.gmra.mrb[0].mxu0 %v789
      %v1191 = vpop.f32.mrb[0].mxu0
      %v1192 = vadd.f32 0.0, %v1191
      %v1193 = vpop.f32.mrb[0].mxu0
      %v1194 = vpop.f32.mrb[0].mxu0
      %v1195 = vadd.f32 0.0, %v1194
      %v1196 = vpop.f32.mrb[0].mxu0
      %1197 = vmatprep.mubr.bf16.mxu0 0
      %1198 = vmatmul.mubr.bf16.gmra.mrb[0].mxu0 %v792
      %v1199 = vpop.f32.mrb[0].mxu0
      %v1200 = vadd.f32 0.0, %v1199
      %v1201 = vpop.f32.mrb[0].mxu0
      %v1202 = vpop.f32.mrb[0].mxu0
      %v1203 = vadd.f32 0.0, %v1202
      %v1204 = vpop.f32.mrb[0].mxu0
      %1205 = vmatprep.mubr.bf16.mxu0 0
      %1206 = vmatmul.mubr.bf16.gmra.mrb[0].mxu0 %v795
      %v1207 = vpop.f32.mrb[0].mxu0
      %v1208 = vadd.f32 0.0, %v1207
      %v1209 = vpop.f32.mrb[0].mxu0
      %v1210 = vpop.f32.mrb[0].mxu0
      %v1211 = vadd.f32 0.0, %v1210
      %v1212 = vpop.f32.mrb[0].mxu0
      %1213 = vmatprep.mubr.bf16.mxu0 0
      %1214 = vmatmul.mubr.bf16.gmra.mrb[0].mxu0 %v798
      %v1215 = vpop.f32.mrb[0].mxu0
      %v1216 = vadd.f32 0.0, %v1215
      %v1217 = vpop.f32.mrb[0].mxu0
      %v1218 = vpop.f32.mrb[0].mxu0
      %v1219 = vadd.f32 0.0, %v1218
      %v1220 = vpop.f32.mrb[0].mxu0
      %1221 = vmatprep.mubr.bf16.mxu0 0
      %1222 = vmatmul.mubr.bf16.gmra.mrb[0].mxu0 %v801
      %v1223 = vpop.f32.mrb[0].mxu0
      %v1224 = vadd.f32 0.0, %v1223
      %v1225 = vpop.f32.mrb[0].mxu0
      %v1226 = vpop.f32.mrb[0].mxu0
      %v1227 = vadd.f32 0.0, %v1226
      %v1228 = vpop.f32.mrb[0].mxu0
      %1229 = vmatprep.mubr.bf16.mxu0 0
      %1230 = vmatmul.mubr.bf16.gmra.mrb[0].mxu0 %v804
      %v1231 = vpop.f32.mrb[0].mxu0
      %v1232 = vadd.f32 0.0, %v1231
      %v1233 = vpop.f32.mrb[0].mxu0
      %v1234 = vpop.f32.mrb[0].mxu0
      %v1235 = vadd.f32 0.0, %v1234
      %v1236 = vpop.f32.mrb[0].mxu0
      %1237 = vmatprep.mubr.bf16.mxu0 0
      %1238 = vmatmul.mubr.bf16.gmra.mrb[0].mxu0 %v807
      %v1239 = vpop.f32.mrb[0].mxu0
      %v1240 = vadd.f32 0.0, %v1239
      %v1241 = vpop.f32.mrb[0].mxu0
      %v1242 = vpop.f32.mrb[0].mxu0
      %v1243 = vadd.f32 0.0, %v1242
      %v1244 = vpop.f32.mrb[0].mxu0
      %1245 = vmatprep.mubr.bf16.mxu0 0
      %1246 = vmatmul.mubr.bf16.gmra.mrb[0].mxu0 %v810
      %v1247 = vpop.f32.mrb[0].mxu0
      %v1248 = vadd.f32 0.0, %v1247
      %v1249 = vpop.f32.mrb[0].mxu0
      %v1250 = vpop.f32.mrb[0].mxu0
      %v1251 = vadd.f32 0.0, %v1250
      %v1252 = vpop.f32.mrb[0].mxu0
      %1253 = vmatprep.mubr.bf16.mxu0 0
      %1254 = vmatmul.mubr.bf16.gmra.mrb[0].mxu0 %v813
      %v1255 = vpop.f32.mrb[0].mxu0
      %v1256 = vadd.f32 0.0, %v1255
      %v1257 = vpop.f32.mrb[0].mxu0
      %v1258 = vpop.f32.mrb[0].mxu0
      %v1259 = vadd.f32 0.0, %v1258
      %v1260 = vpop.f32.mrb[0].mxu0
      %1261 = vmatprep.mubr.bf16.mxu0 0
      %1262 = vmatmul.mubr.bf16.gmra.mrb[0].mxu0 %v816
      %v1263 = vpop.f32.mrb[0].mxu0
      %v1264 = vadd.f32 0.0, %v1263
      %v1265 = vpop.f32.mrb[0].mxu0
      %v1266 = vpop.f32.mrb[0].mxu0
      %v1267 = vadd.f32 0.0, %v1266
      %v1268 = vpop.f32.mrb[0].mxu0
      %1269 = vmatprep.mubr.bf16.mxu0 0
      %1270 = vmatmul.mubr.bf16.gmra.mrb[0].mxu0 %v819
      %v1271 = vpop.f32.mrb[0].mxu0
      %v1272 = vadd.f32 0.0, %v1271
      %v1273 = vpop.f32.mrb[0].mxu0
      %v1274 = vpop.f32.mrb[0].mxu0
      %v1275 = vadd.f32 0.0, %v1274
      %v1276 = vpop.f32.mrb[0].mxu0
      %1277 = vmatprep.mubr.bf16.mxu0 0
      %1278 = vmatmul.mubr.bf16.gmra.mrb[0].mxu0 %v822
      %v1279 = vpop.f32.mrb[0].mxu0
      %v1280 = vadd.f32 0.0, %v1279
      %v1281 = vpop.f32.mrb[0].mxu0
      %v1282 = vpop.f32.mrb[0].mxu0
      %v1283 = vadd.f32 0.0, %v1282
      %v1284 = vpop.f32.mrb[0].mxu0
      %1285 = vmatprep.mubr.bf16.mxu0 0
      %1286 = vmatmul.mubr.bf16.gmra.mrb[0].mxu0 %v825
      %v1287 = vpop.f32.mrb[0].mxu0
      %v1288 = vadd.f32 0.0, %v1287
      %v1289 = vpop.f32.mrb[0].mxu0
      %v1290 = vpop.f32.mrb[0].mxu0
      %v1291 = vadd.f32 0.0, %v1290
      %v1292 = vpop.f32.mrb[0].mxu0
      %1293 = vmatprep.mubr.bf16.mxu0 0
      %1294 = vmatmul.mubr.bf16.gmra.mrb[0].mxu0 %v828
      %v1295 = vpop.f32.mrb[0].mxu0
      %v1296 = vadd.f32 0.0, %v1295
      %v1297 = vpop.f32.mrb[0].mxu0
      %v1298 = vpop.f32.mrb[0].mxu0
      %v1299 = vadd.f32 0.0, %v1298
      %v1300 = vpop.f32.mrb[0].mxu0
      %1301 = vmatprep.mubr.bf16.mxu0 0
      %1302 = vmatmul.mubr.bf16.gmra.mrb[0].mxu0 %v831
      %v1303 = vpop.f32.mrb[0].mxu0
      %v1304 = vadd.f32 0.0, %v1303
      %v1305 = vpop.f32.mrb[0].mxu0
      %v1306 = vpop.f32.mrb[0].mxu0
      %v1307 = vadd.f32 0.0, %v1306
      %v1308 = vpop.f32.mrb[0].mxu0
      %1309 = vmatprep.mubr.bf16.mxu0 0
      %1310 = vmatmul.mubr.bf16.gmra.mrb[0].mxu0 %v834
      %v1311 = vpop.f32.mrb[0].mxu0
      %v1312 = vadd.f32 0.0, %v1311
      %v1313 = vpop.f32.mrb[0].mxu0
      %v1314 = vpop.f32.mrb[0].mxu0
      %v1315 = vadd.f32 0.0, %v1314
      %v1316 = vpop.f32.mrb[0].mxu0
      %1317 = vmatprep.mubr.bf16.mxu0 0
      %1318 = vmatmul.mubr.bf16.gmra.mrb[0].mxu0 %v837
      %v1319 = vpop.f32.mrb[0].mxu0
      %v1320 = vadd.f32 0.0, %v1319
      %v1321 = vpop.f32.mrb[0].mxu0
      %v1322 = vpop.f32.mrb[0].mxu0
      %v1323 = vadd.f32 0.0, %v1322
      %v1324 = vpop.f32.mrb[0].mxu0
      %1325 = vmatprep.mubr.bf16.mxu0 0
      %1326 = vmatmul.mubr.bf16.gmra.mrb[0].mxu0 %v840
      %v1327 = vpop.f32.mrb[0].mxu0
      %v1328 = vadd.f32 0.0, %v1327
      %v1329 = vpop.f32.mrb[0].mxu0
      %v1330 = vpop.f32.mrb[0].mxu0
      %v1331 = vadd.f32 0.0, %v1330
      %v1332 = vpop.f32.mrb[0].mxu0
      %1333 = vmatprep.mubr.bf16.mxu0 0
      %1334 = vmatmul.mubr.bf16.gmra.mrb[0].mxu0 %v843
      %v1335 = vpop.f32.mrb[0].mxu0
      %v1336 = vadd.f32 0.0, %v1335
      %v1337 = vpop.f32.mrb[0].mxu0
      %v1338 = vpop.f32.mrb[0].mxu0
      %v1339 = vadd.f32 0.0, %v1338
      %v1340 = vpop.f32.mrb[0].mxu0
      %1341 = vmatprep.mubr.bf16.mxu0 0
      %1342 = vmatmul.mubr.bf16.gmra.mrb[0].mxu0 %v846
      %v1343 = vpop.f32.mrb[0].mxu0
      %v1344 = vadd.f32 0.0, %v1343
      %v1345 = vpop.f32.mrb[0].mxu0
      %v1346 = vpop.f32.mrb[0].mxu0
      %v1347 = vadd.f32 0.0, %v1346
      %v1348 = vpop.f32.mrb[0].mxu0
      %1349 = vmatprep.mubr.bf16.mxu0 0
      %1350 = vmatmul.mubr.bf16.gmra.mrb[0].mxu0 %v849
      %v1351 = vpop.f32.mrb[0].mxu0
      %v1352 = vadd.f32 0.0, %v1351
      %v1353 = vpop.f32.mrb[0].mxu0
      %v1354 = vpop.f32.mrb[0].mxu0
      %v1355 = vadd.f32 0.0, %v1354
      %v1356 = vpop.f32.mrb[0].mxu0
      %1357 = vmatprep.mubr.bf16.mxu0 0
      %1358 = vmatmul.mubr.bf16.gmra.mrb[0].mxu0 %v852
      %v1359 = vpop.f32.mrb[0].mxu0
      %v1360 = vadd.f32 0.0, %v1359
      %v1361 = vpop.f32.mrb[0].mxu0
      %v1362 = vpop.f32.mrb[0].mxu0
      %v1363 = vadd.f32 0.0, %v1362
      %v1364 = vpop.f32.mrb[0].mxu0
      %1365 = vmatprep.mubr.bf16.mxu0 0
      %1366 = vmatmul.mubr.bf16.gmra.mrb[0].mxu0 %v855
      %v1367 = vpop.f32.mrb[0].mxu0
      %v1368 = vadd.f32 0.0, %v1367
      %v1369 = vpop.f32.mrb[0].mxu0
      %v1370 = vpop.f32.mrb[0].mxu0
      %v1371 = vadd.f32 0.0, %v1370
      %v1372 = vpop.f32.mrb[0].mxu0
      %1373 = vmatprep.mubr.bf16.mxu0 0
      %1374 = vmatmul.mubr.bf16.gmra.mrb[0].mxu0 %v858
      %v1375 = vpop.f32.mrb[0].mxu0
      %v1376 = vadd.f32 0.0, %v1375
      %v1377 = vpop.f32.mrb[0].mxu0
      %v1378 = vpop.f32.mrb[0].mxu0
      %v1379 = vadd.f32 0.0, %v1378
      %v1380 = vpop.f32.mrb[0].mxu0
      %1381 = vmatprep.mubr.bf16.mxu0 0
      %1382 = vmatmul.mubr.bf16.gmra.mrb[0].mxu0 %v861
      %v1383 = vpop.f32.mrb[0].mxu0
      %v1384 = vadd.f32 0.0, %v1383
      %v1385 = vpop.f32.mrb[0].mxu0
      %v1386 = vpop.f32.mrb[0].mxu0
      %v1387 = vadd.f32 0.0, %v1386
      %v1388 = vpop.f32.mrb[0].mxu0
      %1389 = vmatprep.mubr.bf16.mxu0 0
      %1390 = vmatmul.mubr.bf16.gmra.mrb[0].mxu0 %v864
      %v1391 = vpop.f32.mrb[0].mxu0
      %v1392 = vadd.f32 0.0, %v1391
      %v1393 = vpop.f32.mrb[0].mxu0
      %v1394 = vpop.f32.mrb[0].mxu0
      %v1395 = vadd.f32 0.0, %v1394
      %v1396 = vpop.f32.mrb[0].mxu0
      %1397 = vmatprep.mubr.bf16.mxu0 0
      %1398 = vmatmul.mubr.bf16.gmra.mrb[0].mxu0 %v867
      %v1399 = vpop.f32.mrb[0].mxu0
      %v1400 = vadd.f32 0.0, %v1399
      %v1401 = vpop.f32.mrb[0].mxu0
      %v1402 = vpop.f32.mrb[0].mxu0
      %v1403 = vadd.f32 0.0, %v1402
      %v1404 = vpop.f32.mrb[0].mxu0
      %1405 = vmatprep.mubr.bf16.mxu0 0
      %1406 = vmatmul.mubr.bf16.gmra.mrb[0].mxu0 %v870
      %v1407 = vpop.f32.mrb[0].mxu0
      %v1408 = vadd.f32 0.0, %v1407
      %v1409 = vpop.f32.mrb[0].mxu0
      %v1410 = vpop.f32.mrb[0].mxu0
      %v1411 = vadd.f32 0.0, %v1410
      %v1412 = vpop.f32.mrb[0].mxu0
      %1413 = vmatprep.mubr.bf16.mxu0 0
      %1414 = vmatmul.mubr.bf16.gmra.mrb[0].mxu0 %v873
      %v1415 = vpop.f32.mrb[0].mxu0
      %v1416 = vadd.f32 0.0, %v1415
      %v1417 = vpop.f32.mrb[0].mxu0
      %v1418 = vpop.f32.mrb[0].mxu0
      %v1419 = vadd.f32 0.0, %v1418
      %v1420 = vpop.f32.mrb[0].mxu0
      %1421 = vmatprep.mubr.bf16.mxu0 0
      %1422 = vmatmul.mubr.bf16.gmra.mrb[0].mxu0 %v876
      %v1423 = vpop.f32.mrb[0].mxu0
      %v1424 = vadd.f32 0.0, %v1423
      %v1425 = vpop.f32.mrb[0].mxu0
      %v1426 = vpop.f32.mrb[0].mxu0
      %v1427 = vadd.f32 0.0, %v1426
      %v1428 = vpop.f32.mrb[0].mxu0
      %1429 = vdwg.mxu0
      %v1434 = vunpack.c.l.b16 %v223
      %v1435 = vunpack.c.l.b16 %v224
      %v1436 = vunpack.c.l.b16 %v225
      %v1437 = vunpack.c.l.b16 %v226
      %v1438 = vpack.c.b16 %v1435, %v1434
      %v1439 = vpack.c.b16 %v1437, %v1436
      %v1442 = vunpack.c.l.b16 %v351
      %v1443 = vunpack.c.l.b16 %v352
      %v1444 = vpack.c.b16 %v1443, %v1442
      %v1446 = vsel %vm685, %v1438, 0
      %v1449 = vsel %vm685, %v1439, 0
      %v1452 = vand.u32 %v1444, %v881
      %1454 = vmatprep.subr.bf16.mxu0 0
      %1455 = vmatpush1.bf16.msra.mxu0 %v1452
      %1456 = vmatprep.subr.bf16.mxu0 0
      %1457 = vmatpush1.bf16.msra.mxu0 0
      %1458 = vmatprep.subr.bf16.mxu0 0
      %1459 = vmatpush1.bf16.msra.mxu0 0
      %1460 = vmatprep.subr.bf16.mxu0 0
      %1461 = vmatpush1.bf16.msra.mxu0 0
      %1462 = vmatprep.subr.bf16.mxu0 0
      %1463 = vmatpush1.bf16.msra.mxu0 0
      %1464 = vmatprep.subr.bf16.mxu0 0
      %1465 = vmatpush1.bf16.msra.mxu0 0
      %1466 = vmatprep.subr.bf16.mxu0 0
      %1467 = vmatpush1.bf16.msra.mxu0 0
      %1468 = vmatprep.subr.bf16.mxu0 0
      %1469 = vmatpush1.bf16.msra.mxu0 0
      %1470 = vmatprep.subr.bf16.mxu0 0
      %1471 = vmatpush1.bf16.msra.mxu0 0
      %1472 = vmatprep.subr.bf16.mxu0 0
      %1473 = vmatpush1.bf16.msra.mxu0 0
      %1474 = vmatprep.subr.bf16.mxu0 0
      %1475 = vmatpush1.bf16.msra.mxu0 0
      %1476 = vmatprep.subr.bf16.mxu0 0
      %1477 = vmatpush1.bf16.msra.mxu0 0
      %1478 = vmatprep.subr.bf16.mxu0 0
      %1479 = vmatpush1.bf16.msra.mxu0 0
      %1480 = vmatprep.subr.bf16.mxu0 0
      %1481 = vmatpush1.bf16.msra.mxu0 0
      %1482 = vmatprep.subr.bf16.mxu0 0
      %1483 = vmatpush1.bf16.msra.mxu0 0
      %1484 = vmatprep.subr.bf16.mxu0 0
      %1485 = vmatpush1.bf16.msra.mxu0 0
      %1486 = vmatprep.mubr.bf16.mxu0 0
      %1487 = vmatmul.mubr.bf16.gmra.mrb[0].mxu0 %v1446
      %v1488 = vpop.f32.mrb[0].mxu0
      %v1489 = vadd.f32 %v920, %v1488
      %v1490 = vpop.f32.mrb[0].mxu0
      %v1491 = vpop.f32.mrb[0].mxu0
      %v1492 = vadd.f32 %v923, %v1491
      %v1493 = vpop.f32.mrb[0].mxu0
      %1494 = vmatprep.mubr.bf16.mxu0 0
      %1495 = vmatmul.mubr.bf16.gmra.mrb[0].mxu0 %v1449
      %v1496 = vpop.f32.mrb[0].mxu0
      %v1497 = vadd.f32 %v928, %v1496
      %v1498 = vpop.f32.mrb[0].mxu0
      %v1499 = vpop.f32.mrb[0].mxu0
      %v1500 = vadd.f32 %v931, %v1499
      %v1501 = vpop.f32.mrb[0].mxu0
      %1502 = vmatprep.mubr.bf16.mxu0 0
      %1503 = vmatmul.mubr.bf16.gmra.mrb[0].mxu0 %v687
      %v1504 = vpop.f32.mrb[0].mxu0
      %v1505 = vadd.f32 %v936, %v1504
      %v1506 = vpop.f32.mrb[0].mxu0
      %v1507 = vpop.f32.mrb[0].mxu0
      %v1508 = vadd.f32 %v939, %v1507
      %v1509 = vpop.f32.mrb[0].mxu0
      %1510 = vmatprep.mubr.bf16.mxu0 0
      %1511 = vmatmul.mubr.bf16.gmra.mrb[0].mxu0 %v690
      %v1512 = vpop.f32.mrb[0].mxu0
      %v1513 = vadd.f32 %v944, %v1512
      %v1514 = vpop.f32.mrb[0].mxu0
      %v1515 = vpop.f32.mrb[0].mxu0
      %v1516 = vadd.f32 %v947, %v1515
      %v1517 = vpop.f32.mrb[0].mxu0
      %1518 = vmatprep.mubr.bf16.mxu0 0
      %1519 = vmatmul.mubr.bf16.gmra.mrb[0].mxu0 %v693
      %v1520 = vpop.f32.mrb[0].mxu0
      %v1521 = vadd.f32 %v952, %v1520
      %v1522 = vpop.f32.mrb[0].mxu0
      %v1523 = vpop.f32.mrb[0].mxu0
      %v1524 = vadd.f32 %v955, %v1523
      %v1525 = vpop.f32.mrb[0].mxu0
      %1526 = vmatprep.mubr.bf16.mxu0 0
      %1527 = vmatmul.mubr.bf16.gmra.mrb[0].mxu0 %v696
      %v1528 = vpop.f32.mrb[0].mxu0
      %v1529 = vadd.f32 %v960, %v1528
      %v1530 = vpop.f32.mrb[0].mxu0
      %v1531 = vpop.f32.mrb[0].mxu0
      %v1532 = vadd.f32 %v963, %v1531
      %v1533 = vpop.f32.mrb[0].mxu0
      %1534 = vmatprep.mubr.bf16.mxu0 0
      %1535 = vmatmul.mubr.bf16.gmra.mrb[0].mxu0 %v699
      %v1536 = vpop.f32.mrb[0].mxu0
      %v1537 = vadd.f32 %v968, %v1536
      %v1538 = vpop.f32.mrb[0].mxu0
      %v1539 = vpop.f32.mrb[0].mxu0
      %v1540 = vadd.f32 %v971, %v1539
      %v1541 = vpop.f32.mrb[0].mxu0
      %1542 = vmatprep.mubr.bf16.mxu0 0
      %1543 = vmatmul.mubr.bf16.gmra.mrb[0].mxu0 %v702
      %v1544 = vpop.f32.mrb[0].mxu0
      %v1545 = vadd.f32 %v976, %v1544
      %v1546 = vpop.f32.mrb[0].mxu0
      %v1547 = vpop.f32.mrb[0].mxu0
      %v1548 = vadd.f32 %v979, %v1547
      %v1549 = vpop.f32.mrb[0].mxu0
      %1550 = vmatprep.mubr.bf16.mxu0 0
      %1551 = vmatmul.mubr.bf16.gmra.mrb[0].mxu0 %v705
      %v1552 = vpop.f32.mrb[0].mxu0
      %v1553 = vadd.f32 %v984, %v1552
      %v1554 = vpop.f32.mrb[0].mxu0
      %v1555 = vpop.f32.mrb[0].mxu0
      %v1556 = vadd.f32 %v987, %v1555
      %v1557 = vpop.f32.mrb[0].mxu0
      %1558 = vmatprep.mubr.bf16.mxu0 0
      %1559 = vmatmul.mubr.bf16.gmra.mrb[0].mxu0 %v708
      %v1560 = vpop.f32.mrb[0].mxu0
      %v1561 = vadd.f32 %v992, %v1560
      %v1562 = vpop.f32.mrb[0].mxu0
      %v1563 = vpop.f32.mrb[0].mxu0
      %v1564 = vadd.f32 %v995, %v1563
      %v1565 = vpop.f32.mrb[0].mxu0
      %1566 = vmatprep.mubr.bf16.mxu0 0
      %1567 = vmatmul.mubr.bf16.gmra.mrb[0].mxu0 %v711
      %v1568 = vpop.f32.mrb[0].mxu0
      %v1569 = vadd.f32 %v1000, %v1568
      %v1570 = vpop.f32.mrb[0].mxu0
      %v1571 = vpop.f32.mrb[0].mxu0
      %v1572 = vadd.f32 %v1003, %v1571
      %v1573 = vpop.f32.mrb[0].mxu0
      %1574 = vmatprep.mubr.bf16.mxu0 0
      %1575 = vmatmul.mubr.bf16.gmra.mrb[0].mxu0 %v714
      %v1576 = vpop.f32.mrb[0].mxu0
      %v1577 = vadd.f32 %v1008, %v1576
      %v1578 = vpop.f32.mrb[0].mxu0
      %v1579 = vpop.f32.mrb[0].mxu0
      %v1580 = vadd.f32 %v1011, %v1579
      %v1581 = vpop.f32.mrb[0].mxu0
      %1582 = vmatprep.mubr.bf16.mxu0 0
      %1583 = vmatmul.mubr.bf16.gmra.mrb[0].mxu0 %v717
      %v1584 = vpop.f32.mrb[0].mxu0
      %v1585 = vadd.f32 %v1016, %v1584
      %v1586 = vpop.f32.mrb[0].mxu0
      %v1587 = vpop.f32.mrb[0].mxu0
      %v1588 = vadd.f32 %v1019, %v1587
      %v1589 = vpop.f32.mrb[0].mxu0
      %1590 = vmatprep.mubr.bf16.mxu0 0
      %1591 = vmatmul.mubr.bf16.gmra.mrb[0].mxu0 %v720
      %v1592 = vpop.f32.mrb[0].mxu0
      %v1593 = vadd.f32 %v1024, %v1592
      %v1594 = vpop.f32.mrb[0].mxu0
      %v1595 = vpop.f32.mrb[0].mxu0
      %v1596 = vadd.f32 %v1027, %v1595
      %v1597 = vpop.f32.mrb[0].mxu0
      %1598 = vmatprep.mubr.bf16.mxu0 0
      %1599 = vmatmul.mubr.bf16.gmra.mrb[0].mxu0 %v723
      %v1600 = vpop.f32.mrb[0].mxu0
      %v1601 = vadd.f32 %v1032, %v1600
      %v1602 = vpop.f32.mrb[0].mxu0
      %v1603 = vpop.f32.mrb[0].mxu0
      %v1604 = vadd.f32 %v1035, %v1603
      %v1605 = vpop.f32.mrb[0].mxu0
      %1606 = vmatprep.mubr.bf16.mxu0 0
      %1607 = vmatmul.mubr.bf16.gmra.mrb[0].mxu0 %v726
      %v1608 = vpop.f32.mrb[0].mxu0
      %v1609 = vadd.f32 %v1040, %v1608
      %v1610 = vpop.f32.mrb[0].mxu0
      %v1611 = vpop.f32.mrb[0].mxu0
      %v1612 = vadd.f32 %v1043, %v1611
      %v1613 = vpop.f32.mrb[0].mxu0
      %1614 = vmatprep.mubr.bf16.mxu0 0
      %1615 = vmatmul.mubr.bf16.gmra.mrb[0].mxu0 %v729
      %v1616 = vpop.f32.mrb[0].mxu0
      %v1617 = vadd.f32 %v1048, %v1616
      %v1618 = vpop.f32.mrb[0].mxu0
      %v1619 = vpop.f32.mrb[0].mxu0
      %v1620 = vadd.f32 %v1051, %v1619
      %v1621 = vpop.f32.mrb[0].mxu0
      %1622 = vmatprep.mubr.bf16.mxu0 0
      %1623 = vmatmul.mubr.bf16.gmra.mrb[0].mxu0 %v732
      %v1624 = vpop.f32.mrb[0].mxu0
      %v1625 = vadd.f32 %v1056, %v1624
      %v1626 = vpop.f32.mrb[0].mxu0
      %v1627 = vpop.f32.mrb[0].mxu0
      %v1628 = vadd.f32 %v1059, %v1627
      %v1629 = vpop.f32.mrb[0].mxu0
      %1630 = vmatprep.mubr.bf16.mxu0 0
      %1631 = vmatmul.mubr.bf16.gmra.mrb[0].mxu0 %v735
      %v1632 = vpop.f32.mrb[0].mxu0
      %v1633 = vadd.f32 %v1064, %v1632
      %v1634 = vpop.f32.mrb[0].mxu0
      %v1635 = vpop.f32.mrb[0].mxu0
      %v1636 = vadd.f32 %v1067, %v1635
      %v1637 = vpop.f32.mrb[0].mxu0
      %1638 = vmatprep.mubr.bf16.mxu0 0
      %1639 = vmatmul.mubr.bf16.gmra.mrb[0].mxu0 %v738
      %v1640 = vpop.f32.mrb[0].mxu0
      %v1641 = vadd.f32 %v1072, %v1640
      %v1642 = vpop.f32.mrb[0].mxu0
      %v1643 = vpop.f32.mrb[0].mxu0
      %v1644 = vadd.f32 %v1075, %v1643
      %v1645 = vpop.f32.mrb[0].mxu0
      %1646 = vmatprep.mubr.bf16.mxu0 0
      %1647 = vmatmul.mubr.bf16.gmra.mrb[0].mxu0 %v741
      %v1648 = vpop.f32.mrb[0].mxu0
      %v1649 = vadd.f32 %v1080, %v1648
      %v1650 = vpop.f32.mrb[0].mxu0
      %v1651 = vpop.f32.mrb[0].mxu0
      %v1652 = vadd.f32 %v1083, %v1651
      %v1653 = vpop.f32.mrb[0].mxu0
      %1654 = vmatprep.mubr.bf16.mxu0 0
      %1655 = vmatmul.mubr.bf16.gmra.mrb[0].mxu0 %v744
      %v1656 = vpop.f32.mrb[0].mxu0
      %v1657 = vadd.f32 %v1088, %v1656
      %v1658 = vpop.f32.mrb[0].mxu0
      %v1659 = vpop.f32.mrb[0].mxu0
      %v1660 = vadd.f32 %v1091, %v1659
      %v1661 = vpop.f32.mrb[0].mxu0
      %1662 = vmatprep.mubr.bf16.mxu0 0
      %1663 = vmatmul.mubr.bf16.gmra.mrb[0].mxu0 %v747
      %v1664 = vpop.f32.mrb[0].mxu0
      %v1665 = vadd.f32 %v1096, %v1664
      %v1666 = vpop.f32.mrb[0].mxu0
      %v1667 = vpop.f32.mrb[0].mxu0
      %v1668 = vadd.f32 %v1099, %v1667
      %v1669 = vpop.f32.mrb[0].mxu0
      %1670 = vmatprep.mubr.bf16.mxu0 0
      %1671 = vmatmul.mubr.bf16.gmra.mrb[0].mxu0 %v750
      %v1672 = vpop.f32.mrb[0].mxu0
      %v1673 = vadd.f32 %v1104, %v1672
      %v1674 = vpop.f32.mrb[0].mxu0
      %v1675 = vpop.f32.mrb[0].mxu0
      %v1676 = vadd.f32 %v1107, %v1675
      %v1677 = vpop.f32.mrb[0].mxu0
      %1678 = vmatprep.mubr.bf16.mxu0 0
      %1679 = vmatmul.mubr.bf16.gmra.mrb[0].mxu0 %v753
      %v1680 = vpop.f32.mrb[0].mxu0
      %v1681 = vadd.f32 %v1112, %v1680
      %v1682 = vpop.f32.mrb[0].mxu0
      %v1683 = vpop.f32.mrb[0].mxu0
      %v1684 = vadd.f32 %v1115, %v1683
      %v1685 = vpop.f32.mrb[0].mxu0
      %1686 = vmatprep.mubr.bf16.mxu0 0
      %1687 = vmatmul.mubr.bf16.gmra.mrb[0].mxu0 %v756
      %v1688 = vpop.f32.mrb[0].mxu0
      %v1689 = vadd.f32 %v1120, %v1688
      %v1690 = vpop.f32.mrb[0].mxu0
      %v1691 = vpop.f32.mrb[0].mxu0
      %v1692 = vadd.f32 %v1123, %v1691
      %v1693 = vpop.f32.mrb[0].mxu0
      %1694 = vmatprep.mubr.bf16.mxu0 0
      %1695 = vmatmul.mubr.bf16.gmra.mrb[0].mxu0 %v759
      %v1696 = vpop.f32.mrb[0].mxu0
      %v1697 = vadd.f32 %v1128, %v1696
      %v1698 = vpop.f32.mrb[0].mxu0
      %v1699 = vpop.f32.mrb[0].mxu0
      %v1700 = vadd.f32 %v1131, %v1699
      %v1701 = vpop.f32.mrb[0].mxu0
      %1702 = vmatprep.mubr.bf16.mxu0 0
      %1703 = vmatmul.mubr.bf16.gmra.mrb[0].mxu0 %v762
      %v1704 = vpop.f32.mrb[0].mxu0
      %v1705 = vadd.f32 %v1136, %v1704
      %v1706 = vpop.f32.mrb[0].mxu0
      %v1707 = vpop.f32.mrb[0].mxu0
      %v1708 = vadd.f32 %v1139, %v1707
      %v1709 = vpop.f32.mrb[0].mxu0
      %1710 = vmatprep.mubr.bf16.mxu0 0
      %1711 = vmatmul.mubr.bf16.gmra.mrb[0].mxu0 %v765
      %v1712 = vpop.f32.mrb[0].mxu0
      %v1713 = vadd.f32 %v1144, %v1712
      %v1714 = vpop.f32.mrb[0].mxu0
      %v1715 = vpop.f32.mrb[0].mxu0
      %v1716 = vadd.f32 %v1147, %v1715
      %v1717 = vpop.f32.mrb[0].mxu0
      %1718 = vmatprep.mubr.bf16.mxu0 0
      %1719 = vmatmul.mubr.bf16.gmra.mrb[0].mxu0 %v768
      %v1720 = vpop.f32.mrb[0].mxu0
      %v1721 = vadd.f32 %v1152, %v1720
      %v1722 = vpop.f32.mrb[0].mxu0
      %v1723 = vpop.f32.mrb[0].mxu0
      %v1724 = vadd.f32 %v1155, %v1723
      %v1725 = vpop.f32.mrb[0].mxu0
      %1726 = vmatprep.mubr.bf16.mxu0 0
      %1727 = vmatmul.mubr.bf16.gmra.mrb[0].mxu0 %v771
      %v1728 = vpop.f32.mrb[0].mxu0
      %v1729 = vadd.f32 %v1160, %v1728
      %v1730 = vpop.f32.mrb[0].mxu0
      %v1731 = vpop.f32.mrb[0].mxu0
      %v1732 = vadd.f32 %v1163, %v1731
      %v1733 = vpop.f32.mrb[0].mxu0
      %1734 = vmatprep.mubr.bf16.mxu0 0
      %1735 = vmatmul.mubr.bf16.gmra.mrb[0].mxu0 %v774
      %v1736 = vpop.f32.mrb[0].mxu0
      %v1737 = vadd.f32 %v1168, %v1736
      %v1738 = vpop.f32.mrb[0].mxu0
      %v1739 = vpop.f32.mrb[0].mxu0
      %v1740 = vadd.f32 %v1171, %v1739
      %v1741 = vpop.f32.mrb[0].mxu0
      %1742 = vmatprep.mubr.bf16.mxu0 0
      %1743 = vmatmul.mubr.bf16.gmra.mrb[0].mxu0 %v777
      %v1744 = vpop.f32.mrb[0].mxu0
      %v1745 = vadd.f32 %v1176, %v1744
      %v1746 = vpop.f32.mrb[0].mxu0
      %v1747 = vpop.f32.mrb[0].mxu0
      %v1748 = vadd.f32 %v1179, %v1747
      %v1749 = vpop.f32.mrb[0].mxu0
      %1750 = vmatprep.mubr.bf16.mxu0 0
      %1751 = vmatmul.mubr.bf16.gmra.mrb[0].mxu0 %v780
      %v1752 = vpop.f32.mrb[0].mxu0
      %v1753 = vadd.f32 %v1184, %v1752
      %v1754 = vpop.f32.mrb[0].mxu0
      %v1755 = vpop.f32.mrb[0].mxu0
      %v1756 = vadd.f32 %v1187, %v1755
      %v1757 = vpop.f32.mrb[0].mxu0
      %1758 = vmatprep.mubr.bf16.mxu0 0
      %1759 = vmatmul.mubr.bf16.gmra.mrb[0].mxu0 %v783
      %v1760 = vpop.f32.mrb[0].mxu0
      %v1761 = vadd.f32 %v1192, %v1760
      %v1762 = vpop.f32.mrb[0].mxu0
      %v1763 = vpop.f32.mrb[0].mxu0
      %v1764 = vadd.f32 %v1195, %v1763
      %v1765 = vpop.f32.mrb[0].mxu0
      %1766 = vmatprep.mubr.bf16.mxu0 0
      %1767 = vmatmul.mubr.bf16.gmra.mrb[0].mxu0 %v786
      %v1768 = vpop.f32.mrb[0].mxu0
      %v1769 = vadd.f32 %v1200, %v1768
      %v1770 = vpop.f32.mrb[0].mxu0
      %v1771 = vpop.f32.mrb[0].mxu0
      %v1772 = vadd.f32 %v1203, %v1771
      %v1773 = vpop.f32.mrb[0].mxu0
      %1774 = vmatprep.mubr.bf16.mxu0 0
      %1775 = vmatmul.mubr.bf16.gmra.mrb[0].mxu0 %v789
      %v1776 = vpop.f32.mrb[0].mxu0
      %v1777 = vadd.f32 %v1208, %v1776
      %v1778 = vpop.f32.mrb[0].mxu0
      %v1779 = vpop.f32.mrb[0].mxu0
      %v1780 = vadd.f32 %v1211, %v1779
      %v1781 = vpop.f32.mrb[0].mxu0
      %1782 = vmatprep.mubr.bf16.mxu0 0
      %1783 = vmatmul.mubr.bf16.gmra.mrb[0].mxu0 %v792
      %v1784 = vpop.f32.mrb[0].mxu0
      %v1785 = vadd.f32 %v1216, %v1784
      %v1786 = vpop.f32.mrb[0].mxu0
      %v1787 = vpop.f32.mrb[0].mxu0
      %v1788 = vadd.f32 %v1219, %v1787
      %v1789 = vpop.f32.mrb[0].mxu0
      %1790 = vmatprep.mubr.bf16.mxu0 0
      %1791 = vmatmul.mubr.bf16.gmra.mrb[0].mxu0 %v795
      %v1792 = vpop.f32.mrb[0].mxu0
      %v1793 = vadd.f32 %v1224, %v1792
      %v1794 = vpop.f32.mrb[0].mxu0
      %v1795 = vpop.f32.mrb[0].mxu0
      %v1796 = vadd.f32 %v1227, %v1795
      %v1797 = vpop.f32.mrb[0].mxu0
      %1798 = vmatprep.mubr.bf16.mxu0 0
      %1799 = vmatmul.mubr.bf16.gmra.mrb[0].mxu0 %v798
      %v1800 = vpop.f32.mrb[0].mxu0
      %v1801 = vadd.f32 %v1232, %v1800
      %v1802 = vpop.f32.mrb[0].mxu0
      %v1803 = vpop.f32.mrb[0].mxu0
      %v1804 = vadd.f32 %v1235, %v1803
      %v1805 = vpop.f32.mrb[0].mxu0
      %1806 = vmatprep.mubr.bf16.mxu0 0
      %1807 = vmatmul.mubr.bf16.gmra.mrb[0].mxu0 %v801
      %v1808 = vpop.f32.mrb[0].mxu0
      %v1809 = vadd.f32 %v1240, %v1808
      %v1810 = vpop.f32.mrb[0].mxu0
      %v1811 = vpop.f32.mrb[0].mxu0
      %v1812 = vadd.f32 %v1243, %v1811
      %v1813 = vpop.f32.mrb[0].mxu0
      %1814 = vmatprep.mubr.bf16.mxu0 0
      %1815 = vmatmul.mubr.bf16.gmra.mrb[0].mxu0 %v804
      %v1816 = vpop.f32.mrb[0].mxu0
      %v1817 = vadd.f32 %v1248, %v1816
      %v1818 = vpop.f32.mrb[0].mxu0
      %v1819 = vpop.f32.mrb[0].mxu0
      %v1820 = vadd.f32 %v1251, %v1819
      %v1821 = vpop.f32.mrb[0].mxu0
      %1822 = vmatprep.mubr.bf16.mxu0 0
      %1823 = vmatmul.mubr.bf16.gmra.mrb[0].mxu0 %v807
      %v1824 = vpop.f32.mrb[0].mxu0
      %v1825 = vadd.f32 %v1256, %v1824
      %v1826 = vpop.f32.mrb[0].mxu0
      %v1827 = vpop.f32.mrb[0].mxu0
      %v1828 = vadd.f32 %v1259, %v1827
      %v1829 = vpop.f32.mrb[0].mxu0
      %1830 = vmatprep.mubr.bf16.mxu0 0
      %1831 = vmatmul.mubr.bf16.gmra.mrb[0].mxu0 %v810
      %v1832 = vpop.f32.mrb[0].mxu0
      %v1833 = vadd.f32 %v1264, %v1832
      %v1834 = vpop.f32.mrb[0].mxu0
      %v1835 = vpop.f32.mrb[0].mxu0
      %v1836 = vadd.f32 %v1267, %v1835
      %v1837 = vpop.f32.mrb[0].mxu0
      %1838 = vmatprep.mubr.bf16.mxu0 0
      %1839 = vmatmul.mubr.bf16.gmra.mrb[0].mxu0 %v813
      %v1840 = vpop.f32.mrb[0].mxu0
      %v1841 = vadd.f32 %v1272, %v1840
      %v1842 = vpop.f32.mrb[0].mxu0
      %v1843 = vpop.f32.mrb[0].mxu0
      %v1844 = vadd.f32 %v1275, %v1843
      %v1845 = vpop.f32.mrb[0].mxu0
      %1846 = vmatprep.mubr.bf16.mxu0 0
      %1847 = vmatmul.mubr.bf16.gmra.mrb[0].mxu0 %v816
      %v1848 = vpop.f32.mrb[0].mxu0
      %v1849 = vadd.f32 %v1280, %v1848
      %v1850 = vpop.f32.mrb[0].mxu0
      %v1851 = vpop.f32.mrb[0].mxu0
      %v1852 = vadd.f32 %v1283, %v1851
      %v1853 = vpop.f32.mrb[0].mxu0
      %1854 = vmatprep.mubr.bf16.mxu0 0
      %1855 = vmatmul.mubr.bf16.gmra.mrb[0].mxu0 %v819
      %v1856 = vpop.f32.mrb[0].mxu0
      %v1857 = vadd.f32 %v1288, %v1856
      %v1858 = vpop.f32.mrb[0].mxu0
      %v1859 = vpop.f32.mrb[0].mxu0
      %v1860 = vadd.f32 %v1291, %v1859
      %v1861 = vpop.f32.mrb[0].mxu0
      %1862 = vmatprep.mubr.bf16.mxu0 0
      %1863 = vmatmul.mubr.bf16.gmra.mrb[0].mxu0 %v822
      %v1864 = vpop.f32.mrb[0].mxu0
      %v1865 = vadd.f32 %v1296, %v1864
      %v1866 = vpop.f32.mrb[0].mxu0
      %v1867 = vpop.f32.mrb[0].mxu0
      %v1868 = vadd.f32 %v1299, %v1867
      %v1869 = vpop.f32.mrb[0].mxu0
      %1870 = vmatprep.mubr.bf16.mxu0 0
      %1871 = vmatmul.mubr.bf16.gmra.mrb[0].mxu0 %v825
      %v1872 = vpop.f32.mrb[0].mxu0
      %v1873 = vadd.f32 %v1304, %v1872
      %v1874 = vpop.f32.mrb[0].mxu0
      %v1875 = vpop.f32.mrb[0].mxu0
      %v1876 = vadd.f32 %v1307, %v1875
      %v1877 = vpop.f32.mrb[0].mxu0
      %1878 = vmatprep.mubr.bf16.mxu0 0
      %1879 = vmatmul.mubr.bf16.gmra.mrb[0].mxu0 %v828
      %v1880 = vpop.f32.mrb[0].mxu0
      %v1881 = vadd.f32 %v1312, %v1880
      %v1882 = vpop.f32.mrb[0].mxu0
      %v1883 = vpop.f32.mrb[0].mxu0
      %v1884 = vadd.f32 %v1315, %v1883
      %v1885 = vpop.f32.mrb[0].mxu0
      %1886 = vmatprep.mubr.bf16.mxu0 0
      %1887 = vmatmul.mubr.bf16.gmra.mrb[0].mxu0 %v831
      %v1888 = vpop.f32.mrb[0].mxu0
      %v1889 = vadd.f32 %v1320, %v1888
      %v1890 = vpop.f32.mrb[0].mxu0
      %v1891 = vpop.f32.mrb[0].mxu0
      %v1892 = vadd.f32 %v1323, %v1891
      %v1893 = vpop.f32.mrb[0].mxu0
      %1894 = vmatprep.mubr.bf16.mxu0 0
      %1895 = vmatmul.mubr.bf16.gmra.mrb[0].mxu0 %v834
      %v1896 = vpop.f32.mrb[0].mxu0
      %v1897 = vadd.f32 %v1328, %v1896
      %v1898 = vpop.f32.mrb[0].mxu0
      %v1899 = vpop.f32.mrb[0].mxu0
      %v1900 = vadd.f32 %v1331, %v1899
      %v1901 = vpop.f32.mrb[0].mxu0
      %1902 = vmatprep.mubr.bf16.mxu0 0
      %1903 = vmatmul.mubr.bf16.gmra.mrb[0].mxu0 %v837
      %v1904 = vpop.f32.mrb[0].mxu0
      %v1905 = vadd.f32 %v1336, %v1904
      %v1906 = vpop.f32.mrb[0].mxu0
      %v1907 = vpop.f32.mrb[0].mxu0
      %v1908 = vadd.f32 %v1339, %v1907
      %v1909 = vpop.f32.mrb[0].mxu0
      %1910 = vmatprep.mubr.bf16.mxu0 0
      %1911 = vmatmul.mubr.bf16.gmra.mrb[0].mxu0 %v840
      %v1912 = vpop.f32.mrb[0].mxu0
      %v1913 = vadd.f32 %v1344, %v1912
      %v1914 = vpop.f32.mrb[0].mxu0
      %v1915 = vpop.f32.mrb[0].mxu0
      %v1916 = vadd.f32 %v1347, %v1915
      %v1917 = vpop.f32.mrb[0].mxu0
      %1918 = vmatprep.mubr.bf16.mxu0 0
      %1919 = vmatmul.mubr.bf16.gmra.mrb[0].mxu0 %v843
      %v1920 = vpop.f32.mrb[0].mxu0
      %v1921 = vadd.f32 %v1352, %v1920
      %v1922 = vpop.f32.mrb[0].mxu0
      %v1923 = vpop.f32.mrb[0].mxu0
      %v1924 = vadd.f32 %v1355, %v1923
      %v1925 = vpop.f32.mrb[0].mxu0
      %1926 = vmatprep.mubr.bf16.mxu0 0
      %1927 = vmatmul.mubr.bf16.gmra.mrb[0].mxu0 %v846
      %v1928 = vpop.f32.mrb[0].mxu0
      %v1929 = vadd.f32 %v1360, %v1928
      %v1930 = vpop.f32.mrb[0].mxu0
      %v1931 = vpop.f32.mrb[0].mxu0
      %v1932 = vadd.f32 %v1363, %v1931
      %v1933 = vpop.f32.mrb[0].mxu0
      %1934 = vmatprep.mubr.bf16.mxu0 0
      %1935 = vmatmul.mubr.bf16.gmra.mrb[0].mxu0 %v849
      %v1936 = vpop.f32.mrb[0].mxu0
      %v1937 = vadd.f32 %v1368, %v1936
      %v1938 = vpop.f32.mrb[0].mxu0
      %v1939 = vpop.f32.mrb[0].mxu0
      %v1940 = vadd.f32 %v1371, %v1939
      %v1941 = vpop.f32.mrb[0].mxu0
      %1942 = vmatprep.mubr.bf16.mxu0 0
      %1943 = vmatmul.mubr.bf16.gmra.mrb[0].mxu0 %v852
      %v1944 = vpop.f32.mrb[0].mxu0
      %v1945 = vadd.f32 %v1376, %v1944
      %v1946 = vpop.f32.mrb[0].mxu0
      %v1947 = vpop.f32.mrb[0].mxu0
      %v1948 = vadd.f32 %v1379, %v1947
      %v1949 = vpop.f32.mrb[0].mxu0
      %1950 = vmatprep.mubr.bf16.mxu0 0
      %1951 = vmatmul.mubr.bf16.gmra.mrb[0].mxu0 %v855
      %v1952 = vpop.f32.mrb[0].mxu0
      %v1953 = vadd.f32 %v1384, %v1952
      %v1954 = vpop.f32.mrb[0].mxu0
      %v1955 = vpop.f32.mrb[0].mxu0
      %v1956 = vadd.f32 %v1387, %v1955
      %v1957 = vpop.f32.mrb[0].mxu0
      %1958 = vmatprep.mubr.bf16.mxu0 0
      %1959 = vmatmul.mubr.bf16.gmra.mrb[0].mxu0 %v858
      %v1960 = vpop.f32.mrb[0].mxu0
      %v1961 = vadd.f32 %v1392, %v1960
      %v1962 = vpop.f32.mrb[0].mxu0
      %v1963 = vpop.f32.mrb[0].mxu0
      %v1964 = vadd.f32 %v1395, %v1963
      %v1965 = vpop.f32.mrb[0].mxu0
      %1966 = vmatprep.mubr.bf16.mxu0 0
      %1967 = vmatmul.mubr.bf16.gmra.mrb[0].mxu0 %v861
      %v1968 = vpop.f32.mrb[0].mxu0
      %v1969 = vadd.f32 %v1400, %v1968
      %v1970 = vpop.f32.mrb[0].mxu0
      %v1971 = vpop.f32.mrb[0].mxu0
      %v1972 = vadd.f32 %v1403, %v1971
      %v1973 = vpop.f32.mrb[0].mxu0
      %1974 = vmatprep.mubr.bf16.mxu0 0
      %1975 = vmatmul.mubr.bf16.gmra.mrb[0].mxu0 %v864
      %v1976 = vpop.f32.mrb[0].mxu0
      %v1977 = vadd.f32 %v1408, %v1976
      %v1978 = vpop.f32.mrb[0].mxu0
      %v1979 = vpop.f32.mrb[0].mxu0
      %v1980 = vadd.f32 %v1411, %v1979
      %v1981 = vpop.f32.mrb[0].mxu0
      %1982 = vmatprep.mubr.bf16.mxu0 0
      %1983 = vmatmul.mubr.bf16.gmra.mrb[0].mxu0 %v867
      %v1984 = vpop.f32.mrb[0].mxu0
      %v1985 = vadd.f32 %v1416, %v1984
      %v1986 = vpop.f32.mrb[0].mxu0
      %v1987 = vpop.f32.mrb[0].mxu0
      %v1988 = vadd.f32 %v1419, %v1987
      %v1989 = vpop.f32.mrb[0].mxu0
      %1990 = vmatprep.mubr.bf16.mxu0 0
      %1991 = vmatmul.mubr.bf16.gmra.mrb[0].mxu0 %v870
      %v1992 = vpop.f32.mrb[0].mxu0
      %v1993 = vadd.f32 %v1424, %v1992
      %v1994 = vpop.f32.mrb[0].mxu0
      %v1995 = vpop.f32.mrb[0].mxu0
      %v1996 = vadd.f32 %v1427, %v1995
      %v1997 = vpop.f32.mrb[0].mxu0
      %1998 = vdwg.mxu0
      %v1999 = vld [vmem:[%s206 + $0x20] sm:$0xf]
      %v2000 = vld [vmem:[%s206 + $0x24] sm:$0xf]
      %v2001 = vld [vmem:[%s206 + $0x28] sm:$0xf]
      %v2002 = vld [vmem:[%s206 + $0x2c] sm:$0xf]
      %v2003 = vld [vmem:[%s206 + $0x30] sm:$0xf]
      %v2004 = vld [vmem:[%s206 + $0x34] sm:$0xf]
      %v2005 = vld [vmem:[%s206 + $0x38] sm:$0xf]
      %v2006 = vld [vmem:[%s206 + $0x3c] sm:$0xf]
      %v2007 = vld [vmem:[%s206 + $0x40] sm:$0xf]
      %v2008 = vld [vmem:[%s206 + $0x44] sm:$0xf]
      %v2009 = vld [vmem:[%s206 + $0x48] sm:$0xf]
      %v2010 = vld [vmem:[%s206 + $0x4c] sm:$0xf]
      %v2011 = vld [vmem:[%s206 + $0x50] sm:$0xf]
      %v2012 = vld [vmem:[%s206 + $0x54] sm:$0xf]
      %v2013 = vld [vmem:[%s206 + $0x58] sm:$0xf]
      %v2014 = vld [vmem:[%s206 + $0x5c] sm:$0xf]
      %v2015 = vld [vmem:[%s206 + $0x60] sm:$0xf]
      %v2016 = vld [vmem:[%s206 + $0x64] sm:$0xf]
      %v2017 = vld [vmem:[%s206 + $0x68] sm:$0xf]
      %v2018 = vld [vmem:[%s206 + $0x6c] sm:$0xf]
      %v2019 = vld [vmem:[%s206 + $0x70] sm:$0xf]
      %v2020 = vld [vmem:[%s206 + $0x74] sm:$0xf]
      %v2021 = vld [vmem:[%s206 + $0x78] sm:$0xf]
      %v2022 = vld [vmem:[%s206 + $0x7c] sm:$0xf]
      %v2023 = vld [vmem:[%s206 + $0x80] sm:$0xf]
      %v2024 = vld [vmem:[%s206 + $0x84] sm:$0xf]
      %v2025 = vld [vmem:[%s206 + $0x88] sm:$0xf]
      %v2026 = vld [vmem:[%s206 + $0x8c] sm:$0xf]
      %v2027 = vld [vmem:[%s206 + $0x90] sm:$0xf]
      %v2028 = vld [vmem:[%s206 + $0x94] sm:$0xf]
      %v2029 = vld [vmem:[%s206 + $0x98] sm:$0xf]
      %v2030 = vld [vmem:[%s206 + $0x9c] sm:$0xf]
      %v2031 = vld [vmem:[%s206 + $0xa0] sm:$0xf]
      %v2032 = vld [vmem:[%s206 + $0xa4] sm:$0xf]
      %v2033 = vld [vmem:[%s206 + $0xa8] sm:$0xf]
      %v2034 = vld [vmem:[%s206 + $0xac] sm:$0xf]
      %v2035 = vld [vmem:[%s206 + $0xb0] sm:$0xf]
      %v2036 = vld [vmem:[%s206 + $0xb4] sm:$0xf]
      %v2037 = vld [vmem:[%s206 + $0xb8] sm:$0xf]
      %v2038 = vld [vmem:[%s206 + $0xbc] sm:$0xf]
      %v2039 = vld [vmem:[%s206 + $0xc0] sm:$0xf]
      %v2040 = vld [vmem:[%s206 + $0xc4] sm:$0xf]
      %v2041 = vld [vmem:[%s206 + $0xc8] sm:$0xf]
      %v2042 = vld [vmem:[%s206 + $0xcc] sm:$0xf]
      %v2043 = vld [vmem:[%s206 + $0xd0] sm:$0xf]
      %v2044 = vld [vmem:[%s206 + $0xd4] sm:$0xf]
      %v2045 = vld [vmem:[%s206 + $0xd8] sm:$0xf]
      %v2046 = vld [vmem:[%s206 + $0xdc] sm:$0xf]
      %v2047 = vld [vmem:[%s206 + $0xe0] sm:$0xf]
      %v2048 = vld [vmem:[%s206 + $0xe4] sm:$0xf]
      %v2049 = vld [vmem:[%s206 + $0xe8] sm:$0xf]
      %v2050 = vld [vmem:[%s206 + $0xec] sm:$0xf]
      %v2051 = vld [vmem:[%s206 + $0xf0] sm:$0xf]
      %v2052 = vld [vmem:[%s206 + $0xf4] sm:$0xf]
      %v2053 = vld [vmem:[%s206 + $0xf8] sm:$0xf]
      %v2054 = vld [vmem:[%s206 + $0xfc] sm:$0xf]
      %v2055 = vld [vmem:[%s206 + $0x100] sm:$0xf]
      %v2056 = vld [vmem:[%s206 + $0x104] sm:$0xf]
      %v2057 = vld [vmem:[%s206 + $0x108] sm:$0xf]
      %v2058 = vld [vmem:[%s206 + $0x10c] sm:$0xf]
      %v2059 = vld [vmem:[%s206 + $0x110] sm:$0xf]
      %v2060 = vld [vmem:[%s206 + $0x114] sm:$0xf]
      %v2061 = vld [vmem:[%s206 + $0x118] sm:$0xf]
      %v2062 = vld [vmem:[%s206 + $0x11c] sm:$0xf]
      %v2063 = vld [vmem:[%s206 + $0x120] sm:$0xf]
      %v2064 = vld [vmem:[%s206 + $0x124] sm:$0xf]
      %v2065 = vld [vmem:[%s206 + $0x128] sm:$0xf]
      %v2066 = vld [vmem:[%s206 + $0x12c] sm:$0xf]
      %v2067 = vld [vmem:[%s206 + $0x130] sm:$0xf]
      %v2068 = vld [vmem:[%s206 + $0x134] sm:$0xf]
      %v2069 = vld [vmem:[%s206 + $0x138] sm:$0xf]
      %v2070 = vld [vmem:[%s206 + $0x13c] sm:$0xf]
      %v2071 = vld [vmem:[%s206 + $0x140] sm:$0xf]
      %v2072 = vld [vmem:[%s206 + $0x144] sm:$0xf]
      %v2073 = vld [vmem:[%s206 + $0x148] sm:$0xf]
      %v2074 = vld [vmem:[%s206 + $0x14c] sm:$0xf]
      %v2075 = vld [vmem:[%s206 + $0x150] sm:$0xf]
      %v2076 = vld [vmem:[%s206 + $0x154] sm:$0xf]
      %v2077 = vld [vmem:[%s206 + $0x158] sm:$0xf]
      %v2078 = vld [vmem:[%s206 + $0x15c] sm:$0xf]
      %v2079 = vld [vmem:[%s206 + $0x160] sm:$0xf]
      %v2080 = vld [vmem:[%s206 + $0x164] sm:$0xf]
      %v2081 = vld [vmem:[%s206 + $0x168] sm:$0xf]
      %v2082 = vld [vmem:[%s206 + $0x16c] sm:$0xf]
      %v2083 = vld [vmem:[%s206 + $0x170] sm:$0xf]
      %v2084 = vld [vmem:[%s206 + $0x174] sm:$0xf]
      %v2085 = vld [vmem:[%s206 + $0x178] sm:$0xf]
      %v2086 = vld [vmem:[%s206 + $0x17c] sm:$0xf]
      %v2087 = vld [vmem:[%s206 + $0x180] sm:$0xf]
      %v2088 = vld [vmem:[%s206 + $0x184] sm:$0xf]
      %v2089 = vld [vmem:[%s206 + $0x188] sm:$0xf]
      %v2090 = vld [vmem:[%s206 + $0x18c] sm:$0xf]
      %v2091 = vld [vmem:[%s206 + $0x190] sm:$0xf]
      %v2092 = vld [vmem:[%s206 + $0x194] sm:$0xf]
      %v2093 = vld [vmem:[%s206 + $0x198] sm:$0xf]
      %v2094 = vld [vmem:[%s206 + $0x19c] sm:$0xf]
      %v2095 = vld [vmem:[%s206 + $0x1a0] sm:$0xf]
      %v2096 = vld [vmem:[%s206 + $0x1a4] sm:$0xf]
      %v2097 = vld [vmem:[%s206 + $0x1a8] sm:$0xf]
      %v2098 = vld [vmem:[%s206 + $0x1ac] sm:$0xf]
      %v2099 = vld [vmem:[%s206 + $0x1b0] sm:$0xf]
      %v2100 = vld [vmem:[%s206 + $0x1b4] sm:$0xf]
      %v2101 = vld [vmem:[%s206 + $0x1b8] sm:$0xf]
      %v2102 = vld [vmem:[%s206 + $0x1bc] sm:$0xf]
      %v2103 = vld [vmem:[%s206 + $0x1c0] sm:$0xf]
      %v2104 = vld [vmem:[%s206 + $0x1c4] sm:$0xf]
      %v2105 = vld [vmem:[%s206 + $0x1c8] sm:$0xf]
      %v2106 = vld [vmem:[%s206 + $0x1cc] sm:$0xf]
      %v2107 = vld [vmem:[%s206 + $0x1d0] sm:$0xf]
      %v2108 = vld [vmem:[%s206 + $0x1d4] sm:$0xf]
      %v2109 = vld [vmem:[%s206 + $0x1d8] sm:$0xf]
      %v2110 = vld [vmem:[%s206 + $0x1dc] sm:$0xf]
      %v2111 = vld [vmem:[%s206 + $0x1e0] sm:$0xf]
      %v2112 = vld [vmem:[%s206 + $0x1e4] sm:$0xf]
      %v2113 = vld [vmem:[%s206 + $0x1e8] sm:$0xf]
      %v2114 = vld [vmem:[%s206 + $0x1ec] sm:$0xf]
      %v2115 = vld [vmem:[%s206 + $0x1f0] sm:$0xf]
      %v2116 = vld [vmem:[%s206 + $0x1f4] sm:$0xf]
      %v2117 = vld [vmem:[%s206 + $0x1f8] sm:$0xf]
      %v2118 = vld [vmem:[%s206 + $0x1fc] sm:$0xf]
      %v2119 = vld [vmem:[%s206 + $0x200] sm:$0xf]
      %v2120 = vld [vmem:[%s206 + $0x204] sm:$0xf]
      %v2121 = vld [vmem:[%s206 + $0x208] sm:$0xf]
      %v2122 = vld [vmem:[%s206 + $0x20c] sm:$0xf]
      %v2123 = vld [vmem:[%s206 + $0x210] sm:$0xf]
      %v2124 = vld [vmem:[%s206 + $0x214] sm:$0xf]
      %v2125 = vld [vmem:[%s206 + $0x218] sm:$0xf]
      %v2126 = vld [vmem:[%s206 + $0x21c] sm:$0xf]
      %s2127 = scalar_lea.vmem %s210, 16
      %v2128 = vld [vmem:[%s2127] sm:$0xf]
      %v2129 = vld [vmem:[%s2127 + $0x4] sm:$0x1]
      %v2258 = vunpack.c.l.b16 %v1999
      %v2259 = vunpack.c.l.b16 %v2000
      %v2260 = vunpack.c.l.b16 %v2001
      %v2261 = vunpack.c.l.b16 %v2002
      %v2262 = vunpack.c.l.b16 %v2003
      %v2263 = vunpack.c.l.b16 %v2004
      %v2264 = vunpack.c.l.b16 %v2005
      %v2265 = vunpack.c.l.b16 %v2006
      %v2266 = vunpack.c.l.b16 %v2007
      %v2267 = vunpack.c.l.b16 %v2008
      %v2268 = vunpack.c.l.b16 %v2009
      %v2269 = vunpack.c.l.b16 %v2010
      %v2270 = vunpack.c.l.b16 %v2011
      %v2271 = vunpack.c.l.b16 %v2012
      %v2272 = vunpack.c.l.b16 %v2013
      %v2273 = vunpack.c.l.b16 %v2014
      %v2274 = vunpack.c.l.b16 %v2015
      %v2275 = vunpack.c.l.b16 %v2016
      %v2276 = vunpack.c.l.b16 %v2017
      %v2277 = vunpack.c.l.b16 %v2018
      %v2278 = vunpack.c.l.b16 %v2019
      %v2279 = vunpack.c.l.b16 %v2020
      %v2280 = vunpack.c.l.b16 %v2021
      %v2281 = vunpack.c.l.b16 %v2022
      %v2282 = vunpack.c.l.b16 %v2023
      %v2283 = vunpack.c.l.b16 %v2024
      %v2284 = vunpack.c.l.b16 %v2025
      %v2285 = vunpack.c.l.b16 %v2026
      %v2286 = vunpack.c.l.b16 %v2027
      %v2287 = vunpack.c.l.b16 %v2028
      %v2288 = vunpack.c.l.b16 %v2029
      %v2289 = vunpack.c.l.b16 %v2030
      %v2290 = vunpack.c.l.b16 %v2031
      %v2291 = vunpack.c.l.b16 %v2032
      %v2292 = vunpack.c.l.b16 %v2033
      %v2293 = vunpack.c.l.b16 %v2034
      %v2294 = vunpack.c.l.b16 %v2035
      %v2295 = vunpack.c.l.b16 %v2036
      %v2296 = vunpack.c.l.b16 %v2037
      %v2297 = vunpack.c.l.b16 %v2038
      %v2298 = vunpack.c.l.b16 %v2039
      %v2299 = vunpack.c.l.b16 %v2040
      %v2300 = vunpack.c.l.b16 %v2041
      %v2301 = vunpack.c.l.b16 %v2042
      %v2302 = vunpack.c.l.b16 %v2043
      %v2303 = vunpack.c.l.b16 %v2044
      %v2304 = vunpack.c.l.b16 %v2045
      %v2305 = vunpack.c.l.b16 %v2046
      %v2306 = vunpack.c.l.b16 %v2047
      %v2307 = vunpack.c.l.b16 %v2048
      %v2308 = vunpack.c.l.b16 %v2049
      %v2309 = vunpack.c.l.b16 %v2050
      %v2310 = vunpack.c.l.b16 %v2051
      %v2311 = vunpack.c.l.b16 %v2052
      %v2312 = vunpack.c.l.b16 %v2053
      %v2313 = vunpack.c.l.b16 %v2054
      %v2314 = vunpack.c.l.b16 %v2055
      %v2315 = vunpack.c.l.b16 %v2056
      %v2316 = vunpack.c.l.b16 %v2057
      %v2317 = vunpack.c.l.b16 %v2058
      %v2318 = vunpack.c.l.b16 %v2059
      %v2319 = vunpack.c.l.b16 %v2060
      %v2320 = vunpack.c.l.b16 %v2061
      %v2321 = vunpack.c.l.b16 %v2062
      %v2322 = vunpack.c.l.b16 %v2063
      %v2323 = vunpack.c.l.b16 %v2064
      %v2324 = vunpack.c.l.b16 %v2065
      %v2325 = vunpack.c.l.b16 %v2066
      %v2326 = vunpack.c.l.b16 %v2067
      %v2327 = vunpack.c.l.b16 %v2068
      %v2328 = vunpack.c.l.b16 %v2069
      %v2329 = vunpack.c.l.b16 %v2070
      %v2330 = vunpack.c.l.b16 %v2071
      %v2331 = vunpack.c.l.b16 %v2072
      %v2332 = vunpack.c.l.b16 %v2073
      %v2333 = vunpack.c.l.b16 %v2074
      %v2334 = vunpack.c.l.b16 %v2075
      %v2335 = vunpack.c.l.b16 %v2076
      %v2336 = vunpack.c.l.b16 %v2077
      %v2337 = vunpack.c.l.b16 %v2078
      %v2338 = vunpack.c.l.b16 %v2079
      %v2339 = vunpack.c.l.b16 %v2080
      %v2340 = vunpack.c.l.b16 %v2081
      %v2341 = vunpack.c.l.b16 %v2082
      %v2342 = vunpack.c.l.b16 %v2083
      %v2343 = vunpack.c.l.b16 %v2084
      %v2344 = vunpack.c.l.b16 %v2085
      %v2345 = vunpack.c.l.b16 %v2086
      %v2346 = vunpack.c.l.b16 %v2087
      %v2347 = vunpack.c.l.b16 %v2088
      %v2348 = vunpack.c.l.b16 %v2089
      %v2349 = vunpack.c.l.b16 %v2090
      %v2350 = vunpack.c.l.b16 %v2091
      %v2351 = vunpack.c.l.b16 %v2092
      %v2352 = vunpack.c.l.b16 %v2093
      %v2353 = vunpack.c.l.b16 %v2094
      %v2354 = vunpack.c.l.b16 %v2095
      %v2355 = vunpack.c.l.b16 %v2096
      %v2356 = vunpack.c.l.b16 %v2097
      %v2357 = vunpack.c.l.b16 %v2098
      %v2358 = vunpack.c.l.b16 %v2099
      %v2359 = vunpack.c.l.b16 %v2100
      %v2360 = vunpack.c.l.b16 %v2101
      %v2361 = vunpack.c.l.b16 %v2102
      %v2362 = vunpack.c.l.b16 %v2103
      %v2363 = vunpack.c.l.b16 %v2104
      %v2364 = vunpack.c.l.b16 %v2105
      %v2365 = vunpack.c.l.b16 %v2106
      %v2366 = vunpack.c.l.b16 %v2107
      %v2367 = vunpack.c.l.b16 %v2108
      %v2368 = vunpack.c.l.b16 %v2109
      %v2369 = vunpack.c.l.b16 %v2110
      %v2370 = vunpack.c.l.b16 %v2111
      %v2371 = vunpack.c.l.b16 %v2112
      %v2372 = vunpack.c.l.b16 %v2113
      %v2373 = vunpack.c.l.b16 %v2114
      %v2374 = vunpack.c.l.b16 %v2115
      %v2375 = vunpack.c.l.b16 %v2116
      %v2376 = vunpack.c.l.b16 %v2117
      %v2377 = vunpack.c.l.b16 %v2118
      %v2378 = vunpack.c.l.b16 %v2119
      %v2379 = vunpack.c.l.b16 %v2120
      %v2380 = vunpack.c.l.b16 %v2121
      %v2381 = vunpack.c.l.b16 %v2122
      %v2382 = vunpack.c.l.b16 %v2123
      %v2383 = vunpack.c.l.b16 %v2124
      %v2384 = vunpack.c.l.b16 %v2125
      %v2385 = vunpack.c.l.b16 %v2126
      %v2386 = vpack.c.b16 %v2259, %v2258
      %v2387 = vpack.c.b16 %v2261, %v2260
      %v2388 = vpack.c.b16 %v2263, %v2262
      %v2389 = vpack.c.b16 %v2265, %v2264
      %v2390 = vpack.c.b16 %v2267, %v2266
      %v2391 = vpack.c.b16 %v2269, %v2268
      %v2392 = vpack.c.b16 %v2271, %v2270
      %v2393 = vpack.c.b16 %v2273, %v2272
      %v2394 = vpack.c.b16 %v2275, %v2274
      %v2395 = vpack.c.b16 %v2277, %v2276
      %v2396 = vpack.c.b16 %v2279, %v2278
      %v2397 = vpack.c.b16 %v2281, %v2280
      %v2398 = vpack.c.b16 %v2283, %v2282
      %v2399 = vpack.c.b16 %v2285, %v2284
      %v2400 = vpack.c.b16 %v2287, %v2286
      %v2401 = vpack.c.b16 %v2289, %v2288
      %v2402 = vpack.c.b16 %v2291, %v2290
      %v2403 = vpack.c.b16 %v2293, %v2292
      %v2404 = vpack.c.b16 %v2295, %v2294
      %v2405 = vpack.c.b16 %v2297, %v2296
      %v2406 = vpack.c.b16 %v2299, %v2298
      %v2407 = vpack.c.b16 %v2301, %v2300
      %v2408 = vpack.c.b16 %v2303, %v2302
      %v2409 = vpack.c.b16 %v2305, %v2304
      %v2410 = vpack.c.b16 %v2307, %v2306
      %v2411 = vpack.c.b16 %v2309, %v2308
      %v2412 = vpack.c.b16 %v2311, %v2310
      %v2413 = vpack.c.b16 %v2313, %v2312
      %v2414 = vpack.c.b16 %v2315, %v2314
      %v2415 = vpack.c.b16 %v2317, %v2316
      %v2416 = vpack.c.b16 %v2319, %v2318
      %v2417 = vpack.c.b16 %v2321, %v2320
      %v2418 = vpack.c.b16 %v2323, %v2322
      %v2419 = vpack.c.b16 %v2325, %v2324
      %v2420 = vpack.c.b16 %v2327, %v2326
      %v2421 = vpack.c.b16 %v2329, %v2328
      %v2422 = vpack.c.b16 %v2331, %v2330
      %v2423 = vpack.c.b16 %v2333, %v2332
      %v2424 = vpack.c.b16 %v2335, %v2334
      %v2425 = vpack.c.b16 %v2337, %v2336
      %v2426 = vpack.c.b16 %v2339, %v2338
      %v2427 = vpack.c.b16 %v2341, %v2340
      %v2428 = vpack.c.b16 %v2343, %v2342
      %v2429 = vpack.c.b16 %v2345, %v2344
      %v2430 = vpack.c.b16 %v2347, %v2346
      %v2431 = vpack.c.b16 %v2349, %v2348
      %v2432 = vpack.c.b16 %v2351, %v2350
      %v2433 = vpack.c.b16 %v2353, %v2352
      %v2434 = vpack.c.b16 %v2355, %v2354
      %v2435 = vpack.c.b16 %v2357, %v2356
      %v2436 = vpack.c.b16 %v2359, %v2358
      %v2437 = vpack.c.b16 %v2361, %v2360
      %v2438 = vpack.c.b16 %v2363, %v2362
      %v2439 = vpack.c.b16 %v2365, %v2364
      %v2440 = vpack.c.b16 %v2367, %v2366
      %v2441 = vpack.c.b16 %v2369, %v2368
      %v2442 = vpack.c.b16 %v2371, %v2370
      %v2443 = vpack.c.b16 %v2373, %v2372
      %v2444 = vpack.c.b16 %v2375, %v2374
      %v2445 = vpack.c.b16 %v2377, %v2376
      %v2446 = vpack.c.b16 %v2379, %v2378
      %v2447 = vpack.c.b16 %v2381, %v2380
      %v2448 = vpack.c.b16 %v2383, %v2382
      %v2449 = vpack.c.b16 %v2385, %v2384
      %v2452 = vunpack.c.l.b16 %v2128
      %v2453 = vunpack.c.l.b16 %v2129
      %v2454 = vpack.c.b16 %v2453, %v2452
      %v2456 = vsel %vm685, %v2386, 0
      %v2459 = vsel %vm685, %v2387, 0
      %v2462 = vsel %vm685, %v2388, 0
      %v2465 = vsel %vm685, %v2389, 0
      %v2468 = vsel %vm685, %v2390, 0
      %v2471 = vsel %vm685, %v2391, 0
      %v2474 = vsel %vm685, %v2392, 0
      %v2477 = vsel %vm685, %v2393, 0
      %v2480 = vsel %vm685, %v2394, 0
      %v2483 = vsel %vm685, %v2395, 0
      %v2486 = vsel %vm685, %v2396, 0
      %v2489 = vsel %vm685, %v2397, 0
      %v2492 = vsel %vm685, %v2398, 0
      %v2495 = vsel %vm685, %v2399, 0
      %v2498 = vsel %vm685, %v2400, 0
      %v2501 = vsel %vm685, %v2401, 0
      %v2504 = vsel %vm685, %v2402, 0
      %v2507 = vsel %vm685, %v2403, 0
      %v2510 = vsel %vm685, %v2404, 0
      %v2513 = vsel %vm685, %v2405, 0
      %v2516 = vsel %vm685, %v2406, 0
      %v2519 = vsel %vm685, %v2407, 0
      %v2522 = vsel %vm685, %v2408, 0
      %v2525 = vsel %vm685, %v2409, 0
      %v2528 = vsel %vm685, %v2410, 0
      %v2531 = vsel %vm685, %v2411, 0
      %v2534 = vsel %vm685, %v2412, 0
      %v2537 = vsel %vm685, %v2413, 0
      %v2540 = vsel %vm685, %v2414, 0
      %v2543 = vsel %vm685, %v2415, 0
      %v2546 = vsel %vm685, %v2416, 0
      %v2549 = vsel %vm685, %v2417, 0
      %v2552 = vsel %vm685, %v2418, 0
      %v2555 = vsel %vm685, %v2419, 0
      %v2558 = vsel %vm685, %v2420, 0
      %v2561 = vsel %vm685, %v2421, 0
      %v2564 = vsel %vm685, %v2422, 0
      %v2567 = vsel %vm685, %v2423, 0
      %v2570 = vsel %vm685, %v2424, 0
      %v2573 = vsel %vm685, %v2425, 0
      %v2576 = vsel %vm685, %v2426, 0
      %v2579 = vsel %vm685, %v2427, 0
      %v2582 = vsel %vm685, %v2428, 0
      %v2585 = vsel %vm685, %v2429, 0
      %v2588 = vsel %vm685, %v2430, 0
      %v2591 = vsel %vm685, %v2431, 0
      %v2594 = vsel %vm685, %v2432, 0
      %v2597 = vsel %vm685, %v2433, 0
      %v2600 = vsel %vm685, %v2434, 0
      %v2603 = vsel %vm685, %v2435, 0
      %v2606 = vsel %vm685, %v2436, 0
      %v2609 = vsel %vm685, %v2437, 0
      %v2612 = vsel %vm685, %v2438, 0
      %v2615 = vsel %vm685, %v2439, 0
      %v2618 = vsel %vm685, %v2440, 0
      %v2621 = vsel %vm685, %v2441, 0
      %v2624 = vsel %vm685, %v2442, 0
      %v2627 = vsel %vm685, %v2443, 0
      %v2630 = vsel %vm685, %v2444, 0
      %v2633 = vsel %vm685, %v2445, 0
      %v2636 = vsel %vm685, %v2446, 0
      %v2639 = vsel %vm685, %v2447, 0
      %v2642 = vsel %vm685, %v2448, 0
      %v2645 = vsel %vm685, %v2449, 0
      %v2648 = vand.u32 %v2454, %v881
      %2650 = vmatprep.subr.bf16.mxu0 0
      %2651 = vmatpush1.bf16.msra.mxu0 %v2648
      %2652 = vmatprep.subr.bf16.mxu0 0
      %2653 = vmatpush1.bf16.msra.mxu0 0
      %2654 = vmatprep.subr.bf16.mxu0 0
      %2655 = vmatpush1.bf16.msra.mxu0 0
      %2656 = vmatprep.subr.bf16.mxu0 0
      %2657 = vmatpush1.bf16.msra.mxu0 0
      %2658 = vmatprep.subr.bf16.mxu0 0
      %2659 = vmatpush1.bf16.msra.mxu0 0
      %2660 = vmatprep.subr.bf16.mxu0 0
      %2661 = vmatpush1.bf16.msra.mxu0 0
      %2662 = vmatprep.subr.bf16.mxu0 0
      %2663 = vmatpush1.bf16.msra.mxu0 0
      %2664 = vmatprep.subr.bf16.mxu0 0
      %2665 = vmatpush1.bf16.msra.mxu0 0
      %2666 = vmatprep.subr.bf16.mxu0 0
      %2667 = vmatpush1.bf16.msra.mxu0 0
      %2668 = vmatprep.subr.bf16.mxu0 0
      %2669 = vmatpush1.bf16.msra.mxu0 0
      %2670 = vmatprep.subr.bf16.mxu0 0
      %2671 = vmatpush1.bf16.msra.mxu0 0
      %2672 = vmatprep.subr.bf16.mxu0 0
      %2673 = vmatpush1.bf16.msra.mxu0 0
      %2674 = vmatprep.subr.bf16.mxu0 0
      %2675 = vmatpush1.bf16.msra.mxu0 0
      %2676 = vmatprep.subr.bf16.mxu0 0
      %2677 = vmatpush1.bf16.msra.mxu0 0
      %2678 = vmatprep.subr.bf16.mxu0 0
      %2679 = vmatpush1.bf16.msra.mxu0 0
      %2680 = vmatprep.subr.bf16.mxu0 0
      %2681 = vmatpush1.bf16.msra.mxu0 0
      %2682 = vmatprep.mubr.bf16.mxu0 0
      %2683 = vmatmul.mubr.bf16.gmra.mrb[0].mxu0 %v2456
      %v2684 = vpop.f32.mrb[0].mxu0
      %v2685 = vadd.f32 0.0, %v2684
      %v2686 = vpop.f32.mrb[0].mxu0
      %v2687 = vpop.f32.mrb[0].mxu0
      %v2688 = vadd.f32 0.0, %v2687
      %v2689 = vpop.f32.mrb[0].mxu0
      %2690 = vmatprep.mubr.bf16.mxu0 0
      %2691 = vmatmul.mubr.bf16.gmra.mrb[0].mxu0 %v2459
      %v2692 = vpop.f32.mrb[0].mxu0
      %v2693 = vadd.f32 0.0, %v2692
      %v2694 = vpop.f32.mrb[0].mxu0
      %v2695 = vpop.f32.mrb[0].mxu0
      %v2696 = vadd.f32 0.0, %v2695
      %v2697 = vpop.f32.mrb[0].mxu0
      %2698 = vmatprep.mubr.bf16.mxu0 0
      %2699 = vmatmul.mubr.bf16.gmra.mrb[0].mxu0 %v2462
      %v2700 = vpop.f32.mrb[0].mxu0
      %v2701 = vadd.f32 0.0, %v2700
      %v2702 = vpop.f32.mrb[0].mxu0
      %v2703 = vpop.f32.mrb[0].mxu0
      %v2704 = vadd.f32 0.0, %v2703
      %v2705 = vpop.f32.mrb[0].mxu0
      %2706 = vmatprep.mubr.bf16.mxu0 0
      %2707 = vmatmul.mubr.bf16.gmra.mrb[0].mxu0 %v2465
      %v2708 = vpop.f32.mrb[0].mxu0
      %v2709 = vadd.f32 0.0, %v2708
      %v2710 = vpop.f32.mrb[0].mxu0
      %v2711 = vpop.f32.mrb[0].mxu0
      %v2712 = vadd.f32 0.0, %v2711
      %v2713 = vpop.f32.mrb[0].mxu0
      %2714 = vmatprep.mubr.bf16.mxu0 0
      %2715 = vmatmul.mubr.bf16.gmra.mrb[0].mxu0 %v2468
      %v2716 = vpop.f32.mrb[0].mxu0
      %v2717 = vadd.f32 0.0, %v2716
      %v2718 = vpop.f32.mrb[0].mxu0
      %v2719 = vpop.f32.mrb[0].mxu0
      %v2720 = vadd.f32 0.0, %v2719
      %v2721 = vpop.f32.mrb[0].mxu0
      %2722 = vmatprep.mubr.bf16.mxu0 0
      %2723 = vmatmul.mubr.bf16.gmra.mrb[0].mxu0 %v2471
      %v2724 = vpop.f32.mrb[0].mxu0
      %v2725 = vadd.f32 0.0, %v2724
      %v2726 = vpop.f32.mrb[0].mxu0
      %v2727 = vpop.f32.mrb[0].mxu0
      %v2728 = vadd.f32 0.0, %v2727
      %v2729 = vpop.f32.mrb[0].mxu0
      %2730 = vmatprep.mubr.bf16.mxu0 0
      %2731 = vmatmul.mubr.bf16.gmra.mrb[0].mxu0 %v2474
      %v2732 = vpop.f32.mrb[0].mxu0
      %v2733 = vadd.f32 0.0, %v2732
      %v2734 = vpop.f32.mrb[0].mxu0
      %v2735 = vpop.f32.mrb[0].mxu0
      %v2736 = vadd.f32 0.0, %v2735
      %v2737 = vpop.f32.mrb[0].mxu0
      %2738 = vmatprep.mubr.bf16.mxu0 0
      %2739 = vmatmul.mubr.bf16.gmra.mrb[0].mxu0 %v2477
      %v2740 = vpop.f32.mrb[0].mxu0
      %v2741 = vadd.f32 0.0, %v2740
      %v2742 = vpop.f32.mrb[0].mxu0
      %v2743 = vpop.f32.mrb[0].mxu0
      %v2744 = vadd.f32 0.0, %v2743
      %v2745 = vpop.f32.mrb[0].mxu0
      %2746 = vmatprep.mubr.bf16.mxu0 0
      %2747 = vmatmul.mubr.bf16.gmra.mrb[0].mxu0 %v2480
      %v2748 = vpop.f32.mrb[0].mxu0
      %v2749 = vadd.f32 0.0, %v2748
      %v2750 = vpop.f32.mrb[0].mxu0
      %v2751 = vpop.f32.mrb[0].mxu0
      %v2752 = vadd.f32 0.0, %v2751
      %v2753 = vpop.f32.mrb[0].mxu0
      %2754 = vmatprep.mubr.bf16.mxu0 0
      %2755 = vmatmul.mubr.bf16.gmra.mrb[0].mxu0 %v2483
      %v2756 = vpop.f32.mrb[0].mxu0
      %v2757 = vadd.f32 0.0, %v2756
      %v2758 = vpop.f32.mrb[0].mxu0
      %v2759 = vpop.f32.mrb[0].mxu0
      %v2760 = vadd.f32 0.0, %v2759
      %v2761 = vpop.f32.mrb[0].mxu0
      %2762 = vmatprep.mubr.bf16.mxu0 0
      %2763 = vmatmul.mubr.bf16.gmra.mrb[0].mxu0 %v2486
      %v2764 = vpop.f32.mrb[0].mxu0
      %v2765 = vadd.f32 0.0, %v2764
      %v2766 = vpop.f32.mrb[0].mxu0
      %v2767 = vpop.f32.mrb[0].mxu0
      %v2768 = vadd.f32 0.0, %v2767
      %v2769 = vpop.f32.mrb[0].mxu0
      %2770 = vmatprep.mubr.bf16.mxu0 0
      %2771 = vmatmul.mubr.bf16.gmra.mrb[0].mxu0 %v2489
      %v2772 = vpop.f32.mrb[0].mxu0
      %v2773 = vadd.f32 0.0, %v2772
      %v2774 = vpop.f32.mrb[0].mxu0
      %v2775 = vpop.f32.mrb[0].mxu0
      %v2776 = vadd.f32 0.0, %v2775
      %v2777 = vpop.f32.mrb[0].mxu0
      %2778 = vmatprep.mubr.bf16.mxu0 0
      %2779 = vmatmul.mubr.bf16.gmra.mrb[0].mxu0 %v2492
      %v2780 = vpop.f32.mrb[0].mxu0
      %v2781 = vadd.f32 0.0, %v2780
      %v2782 = vpop.f32.mrb[0].mxu0
      %v2783 = vpop.f32.mrb[0].mxu0
      %v2784 = vadd.f32 0.0, %v2783
      %v2785 = vpop.f32.mrb[0].mxu0
      %2786 = vmatprep.mubr.bf16.mxu0 0
      %2787 = vmatmul.mubr.bf16.gmra.mrb[0].mxu0 %v2495
      %v2788 = vpop.f32.mrb[0].mxu0
      %v2789 = vadd.f32 0.0, %v2788
      %v2790 = vpop.f32.mrb[0].mxu0
      %v2791 = vpop.f32.mrb[0].mxu0
      %v2792 = vadd.f32 0.0, %v2791
      %v2793 = vpop.f32.mrb[0].mxu0
      %2794 = vmatprep.mubr.bf16.mxu0 0
      %2795 = vmatmul.mubr.bf16.gmra.mrb[0].mxu0 %v2498
      %v2796 = vpop.f32.mrb[0].mxu0
      %v2797 = vadd.f32 0.0, %v2796
      %v2798 = vpop.f32.mrb[0].mxu0
      %v2799 = vpop.f32.mrb[0].mxu0
      %v2800 = vadd.f32 0.0, %v2799
      %v2801 = vpop.f32.mrb[0].mxu0
      %2802 = vmatprep.mubr.bf16.mxu0 0
      %2803 = vmatmul.mubr.bf16.gmra.mrb[0].mxu0 %v2501
      %v2804 = vpop.f32.mrb[0].mxu0
      %v2805 = vadd.f32 0.0, %v2804
      %v2806 = vpop.f32.mrb[0].mxu0
      %v2807 = vpop.f32.mrb[0].mxu0
      %v2808 = vadd.f32 0.0, %v2807
      %v2809 = vpop.f32.mrb[0].mxu0
      %2810 = vmatprep.mubr.bf16.mxu0 0
      %2811 = vmatmul.mubr.bf16.gmra.mrb[0].mxu0 %v2504
      %v2812 = vpop.f32.mrb[0].mxu0
      %v2813 = vadd.f32 0.0, %v2812
      %v2814 = vpop.f32.mrb[0].mxu0
      %v2815 = vpop.f32.mrb[0].mxu0
      %v2816 = vadd.f32 0.0, %v2815
      %v2817 = vpop.f32.mrb[0].mxu0
      %2818 = vmatprep.mubr.bf16.mxu0 0
      %2819 = vmatmul.mubr.bf16.gmra.mrb[0].mxu0 %v2507
      %v2820 = vpop.f32.mrb[0].mxu0
      %v2821 = vadd.f32 0.0, %v2820
      %v2822 = vpop.f32.mrb[0].mxu0
      %v2823 = vpop.f32.mrb[0].mxu0
      %v2824 = vadd.f32 0.0, %v2823
      %v2825 = vpop.f32.mrb[0].mxu0
      %2826 = vmatprep.mubr.bf16.mxu0 0
      %2827 = vmatmul.mubr.bf16.gmra.mrb[0].mxu0 %v2510
      %v2828 = vpop.f32.mrb[0].mxu0
      %v2829 = vadd.f32 0.0, %v2828
      %v2830 = vpop.f32.mrb[0].mxu0
      %v2831 = vpop.f32.mrb[0].mxu0
      %v2832 = vadd.f32 0.0, %v2831
      %v2833 = vpop.f32.mrb[0].mxu0
      %2834 = vmatprep.mubr.bf16.mxu0 0
      %2835 = vmatmul.mubr.bf16.gmra.mrb[0].mxu0 %v2513
      %v2836 = vpop.f32.mrb[0].mxu0
      %v2837 = vadd.f32 0.0, %v2836
      %v2838 = vpop.f32.mrb[0].mxu0
      %v2839 = vpop.f32.mrb[0].mxu0
      %v2840 = vadd.f32 0.0, %v2839
      %v2841 = vpop.f32.mrb[0].mxu0
      %2842 = vmatprep.mubr.bf16.mxu0 0
      %2843 = vmatmul.mubr.bf16.gmra.mrb[0].mxu0 %v2516
      %v2844 = vpop.f32.mrb[0].mxu0
      %v2845 = vadd.f32 0.0, %v2844
      %v2846 = vpop.f32.mrb[0].mxu0
      %v2847 = vpop.f32.mrb[0].mxu0
      %v2848 = vadd.f32 0.0, %v2847
      %v2849 = vpop.f32.mrb[0].mxu0
      %2850 = vmatprep.mubr.bf16.mxu0 0
      %2851 = vmatmul.mubr.bf16.gmra.mrb[0].mxu0 %v2519
      %v2852 = vpop.f32.mrb[0].mxu0
      %v2853 = vadd.f32 0.0, %v2852
      %v2854 = vpop.f32.mrb[0].mxu0
      %v2855 = vpop.f32.mrb[0].mxu0
      %v2856 = vadd.f32 0.0, %v2855
      %v2857 = vpop.f32.mrb[0].mxu0
      %2858 = vmatprep.mubr.bf16.mxu0 0
      %2859 = vmatmul.mubr.bf16.gmra.mrb[0].mxu0 %v2522
      %v2860 = vpop.f32.mrb[0].mxu0
      %v2861 = vadd.f32 0.0, %v2860
      %v2862 = vpop.f32.mrb[0].mxu0
      %v2863 = vpop.f32.mrb[0].mxu0
      %v2864 = vadd.f32 0.0, %v2863
      %v2865 = vpop.f32.mrb[0].mxu0
      %2866 = vmatprep.mubr.bf16.mxu0 0
      %2867 = vmatmul.mubr.bf16.gmra.mrb[0].mxu0 %v2525
      %v2868 = vpop.f32.mrb[0].mxu0
      %v2869 = vadd.f32 0.0, %v2868
      %v2870 = vpop.f32.mrb[0].mxu0
      %v2871 = vpop.f32.mrb[0].mxu0
      %v2872 = vadd.f32 0.0, %v2871
      %v2873 = vpop.f32.mrb[0].mxu0
      %2874 = vmatprep.mubr.bf16.mxu0 0
      %2875 = vmatmul.mubr.bf16.gmra.mrb[0].mxu0 %v2528
      %v2876 = vpop.f32.mrb[0].mxu0
      %v2877 = vadd.f32 0.0, %v2876
      %v2878 = vpop.f32.mrb[0].mxu0
      %v2879 = vpop.f32.mrb[0].mxu0
      %v2880 = vadd.f32 0.0, %v2879
      %v2881 = vpop.f32.mrb[0].mxu0
      %2882 = vmatprep.mubr.bf16.mxu0 0
      %2883 = vmatmul.mubr.bf16.gmra.mrb[0].mxu0 %v2531
      %v2884 = vpop.f32.mrb[0].mxu0
      %v2885 = vadd.f32 0.0, %v2884
      %v2886 = vpop.f32.mrb[0].mxu0
      %v2887 = vpop.f32.mrb[0].mxu0
      %v2888 = vadd.f32 0.0, %v2887
      %v2889 = vpop.f32.mrb[0].mxu0
      %2890 = vmatprep.mubr.bf16.mxu0 0
      %2891 = vmatmul.mubr.bf16.gmra.mrb[0].mxu0 %v2534
      %v2892 = vpop.f32.mrb[0].mxu0
      %v2893 = vadd.f32 0.0, %v2892
      %v2894 = vpop.f32.mrb[0].mxu0
      %v2895 = vpop.f32.mrb[0].mxu0
      %v2896 = vadd.f32 0.0, %v2895
      %v2897 = vpop.f32.mrb[0].mxu0
      %2898 = vmatprep.mubr.bf16.mxu0 0
      %2899 = vmatmul.mubr.bf16.gmra.mrb[0].mxu0 %v2537
      %v2900 = vpop.f32.mrb[0].mxu0
      %v2901 = vadd.f32 0.0, %v2900
      %v2902 = vpop.f32.mrb[0].mxu0
      %v2903 = vpop.f32.mrb[0].mxu0
      %v2904 = vadd.f32 0.0, %v2903
      %v2905 = vpop.f32.mrb[0].mxu0
      %2906 = vmatprep.mubr.bf16.mxu0 0
      %2907 = vmatmul.mubr.bf16.gmra.mrb[0].mxu0 %v2540
      %v2908 = vpop.f32.mrb[0].mxu0
      %v2909 = vadd.f32 0.0, %v2908
      %v2910 = vpop.f32.mrb[0].mxu0
      %v2911 = vpop.f32.mrb[0].mxu0
      %v2912 = vadd.f32 0.0, %v2911
      %v2913 = vpop.f32.mrb[0].mxu0
      %2914 = vmatprep.mubr.bf16.mxu0 0
      %2915 = vmatmul.mubr.bf16.gmra.mrb[0].mxu0 %v2543
      %v2916 = vpop.f32.mrb[0].mxu0
      %v2917 = vadd.f32 0.0, %v2916
      %v2918 = vpop.f32.mrb[0].mxu0
      %v2919 = vpop.f32.mrb[0].mxu0
      %v2920 = vadd.f32 0.0, %v2919
      %v2921 = vpop.f32.mrb[0].mxu0
      %2922 = vmatprep.mubr.bf16.mxu0 0
      %2923 = vmatmul.mubr.bf16.gmra.mrb[0].mxu0 %v2546
      %v2924 = vpop.f32.mrb[0].mxu0
      %v2925 = vadd.f32 0.0, %v2924
      %v2926 = vpop.f32.mrb[0].mxu0
      %v2927 = vpop.f32.mrb[0].mxu0
      %v2928 = vadd.f32 0.0, %v2927
      %v2929 = vpop.f32.mrb[0].mxu0
      %2930 = vmatprep.mubr.bf16.mxu0 0
      %2931 = vmatmul.mubr.bf16.gmra.mrb[0].mxu0 %v2549
      %v2932 = vpop.f32.mrb[0].mxu0
      %v2933 = vadd.f32 0.0, %v2932
      %v2934 = vpop.f32.mrb[0].mxu0
      %v2935 = vpop.f32.mrb[0].mxu0
      %v2936 = vadd.f32 0.0, %v2935
      %v2937 = vpop.f32.mrb[0].mxu0
      %2938 = vmatprep.mubr.bf16.mxu0 0
      %2939 = vmatmul.mubr.bf16.gmra.mrb[0].mxu0 %v2552
      %v2940 = vpop.f32.mrb[0].mxu0
      %v2941 = vadd.f32 0.0, %v2940
      %v2942 = vpop.f32.mrb[0].mxu0
      %v2943 = vpop.f32.mrb[0].mxu0
      %v2944 = vadd.f32 0.0, %v2943
      %v2945 = vpop.f32.mrb[0].mxu0
      %2946 = vmatprep.mubr.bf16.mxu0 0
      %2947 = vmatmul.mubr.bf16.gmra.mrb[0].mxu0 %v2555
      %v2948 = vpop.f32.mrb[0].mxu0
      %v2949 = vadd.f32 0.0, %v2948
      %v2950 = vpop.f32.mrb[0].mxu0
      %v2951 = vpop.f32.mrb[0].mxu0
      %v2952 = vadd.f32 0.0, %v2951
      %v2953 = vpop.f32.mrb[0].mxu0
      %2954 = vmatprep.mubr.bf16.mxu0 0
      %2955 = vmatmul.mubr.bf16.gmra.mrb[0].mxu0 %v2558
      %v2956 = vpop.f32.mrb[0].mxu0
      %v2957 = vadd.f32 0.0, %v2956
      %v2958 = vpop.f32.mrb[0].mxu0
      %v2959 = vpop.f32.mrb[0].mxu0
      %v2960 = vadd.f32 0.0, %v2959
      %v2961 = vpop.f32.mrb[0].mxu0
      %2962 = vmatprep.mubr.bf16.mxu0 0
      %2963 = vmatmul.mubr.bf16.gmra.mrb[0].mxu0 %v2561
      %v2964 = vpop.f32.mrb[0].mxu0
      %v2965 = vadd.f32 0.0, %v2964
      %v2966 = vpop.f32.mrb[0].mxu0
      %v2967 = vpop.f32.mrb[0].mxu0
      %v2968 = vadd.f32 0.0, %v2967
      %v2969 = vpop.f32.mrb[0].mxu0
      %2970 = vmatprep.mubr.bf16.mxu0 0
      %2971 = vmatmul.mubr.bf16.gmra.mrb[0].mxu0 %v2564
      %v2972 = vpop.f32.mrb[0].mxu0
      %v2973 = vadd.f32 0.0, %v2972
      %v2974 = vpop.f32.mrb[0].mxu0
      %v2975 = vpop.f32.mrb[0].mxu0
      %v2976 = vadd.f32 0.0, %v2975
      %v2977 = vpop.f32.mrb[0].mxu0
      %2978 = vmatprep.mubr.bf16.mxu0 0
      %2979 = vmatmul.mubr.bf16.gmra.mrb[0].mxu0 %v2567
      %v2980 = vpop.f32.mrb[0].mxu0
      %v2981 = vadd.f32 0.0, %v2980
      %v2982 = vpop.f32.mrb[0].mxu0
      %v2983 = vpop.f32.mrb[0].mxu0
      %v2984 = vadd.f32 0.0, %v2983
      %v2985 = vpop.f32.mrb[0].mxu0
      %2986 = vmatprep.mubr.bf16.mxu0 0
      %2987 = vmatmul.mubr.bf16.gmra.mrb[0].mxu0 %v2570
      %v2988 = vpop.f32.mrb[0].mxu0
      %v2989 = vadd.f32 0.0, %v2988
      %v2990 = vpop.f32.mrb[0].mxu0
      %v2991 = vpop.f32.mrb[0].mxu0
      %v2992 = vadd.f32 0.0, %v2991
      %v2993 = vpop.f32.mrb[0].mxu0
      %2994 = vmatprep.mubr.bf16.mxu0 0
      %2995 = vmatmul.mubr.bf16.gmra.mrb[0].mxu0 %v2573
      %v2996 = vpop.f32.mrb[0].mxu0
      %v2997 = vadd.f32 0.0, %v2996
      %v2998 = vpop.f32.mrb[0].mxu0
      %v2999 = vpop.f32.mrb[0].mxu0
      %v3000 = vadd.f32 0.0, %v2999
      %v3001 = vpop.f32.mrb[0].mxu0
      %3002 = vmatprep.mubr.bf16.mxu0 0
      %3003 = vmatmul.mubr.bf16.gmra.mrb[0].mxu0 %v2576
      %v3004 = vpop.f32.mrb[0].mxu0
      %v3005 = vadd.f32 0.0, %v3004
      %v3006 = vpop.f32.mrb[0].mxu0
      %v3007 = vpop.f32.mrb[0].mxu0
      %v3008 = vadd.f32 0.0, %v3007
      %v3009 = vpop.f32.mrb[0].mxu0
      %3010 = vmatprep.mubr.bf16.mxu0 0
      %3011 = vmatmul.mubr.bf16.gmra.mrb[0].mxu0 %v2579
      %v3012 = vpop.f32.mrb[0].mxu0
      %v3013 = vadd.f32 0.0, %v3012
      %v3014 = vpop.f32.mrb[0].mxu0
      %v3015 = vpop.f32.mrb[0].mxu0
      %v3016 = vadd.f32 0.0, %v3015
      %v3017 = vpop.f32.mrb[0].mxu0
      %3018 = vmatprep.mubr.bf16.mxu0 0
      %3019 = vmatmul.mubr.bf16.gmra.mrb[0].mxu0 %v2582
      %v3020 = vpop.f32.mrb[0].mxu0
      %v3021 = vadd.f32 0.0, %v3020
      %v3022 = vpop.f32.mrb[0].mxu0
      %v3023 = vpop.f32.mrb[0].mxu0
      %v3024 = vadd.f32 0.0, %v3023
      %v3025 = vpop.f32.mrb[0].mxu0
      %3026 = vmatprep.mubr.bf16.mxu0 0
      %3027 = vmatmul.mubr.bf16.gmra.mrb[0].mxu0 %v2585
      %v3028 = vpop.f32.mrb[0].mxu0
      %v3029 = vadd.f32 0.0, %v3028
      %v3030 = vpop.f32.mrb[0].mxu0
      %v3031 = vpop.f32.mrb[0].mxu0
      %v3032 = vadd.f32 0.0, %v3031
      %v3033 = vpop.f32.mrb[0].mxu0
      %3034 = vmatprep.mubr.bf16.mxu0 0
      %3035 = vmatmul.mubr.bf16.gmra.mrb[0].mxu0 %v2588
      %v3036 = vpop.f32.mrb[0].mxu0
      %v3037 = vadd.f32 0.0, %v3036
      %v3038 = vpop.f32.mrb[0].mxu0
      %v3039 = vpop.f32.mrb[0].mxu0
      %v3040 = vadd.f32 0.0, %v3039
      %v3041 = vpop.f32.mrb[0].mxu0
      %3042 = vmatprep.mubr.bf16.mxu0 0
      %3043 = vmatmul.mubr.bf16.gmra.mrb[0].mxu0 %v2591
      %v3044 = vpop.f32.mrb[0].mxu0
      %v3045 = vadd.f32 0.0, %v3044
      %v3046 = vpop.f32.mrb[0].mxu0
      %v3047 = vpop.f32.mrb[0].mxu0
      %v3048 = vadd.f32 0.0, %v3047
      %v3049 = vpop.f32.mrb[0].mxu0
      %3050 = vmatprep.mubr.bf16.mxu0 0
      %3051 = vmatmul.mubr.bf16.gmra.mrb[0].mxu0 %v2594
      %v3052 = vpop.f32.mrb[0].mxu0
      %v3053 = vadd.f32 0.0, %v3052
      %v3054 = vpop.f32.mrb[0].mxu0
      %v3055 = vpop.f32.mrb[0].mxu0
      %v3056 = vadd.f32 0.0, %v3055
      %v3057 = vpop.f32.mrb[0].mxu0
      %3058 = vmatprep.mubr.bf16.mxu0 0
      %3059 = vmatmul.mubr.bf16.gmra.mrb[0].mxu0 %v2597
      %v3060 = vpop.f32.mrb[0].mxu0
      %v3061 = vadd.f32 0.0, %v3060
      %v3062 = vpop.f32.mrb[0].mxu0
      %v3063 = vpop.f32.mrb[0].mxu0
      %v3064 = vadd.f32 0.0, %v3063
      %v3065 = vpop.f32.mrb[0].mxu0
      %3066 = vmatprep.mubr.bf16.mxu0 0
      %3067 = vmatmul.mubr.bf16.gmra.mrb[0].mxu0 %v2600
      %v3068 = vpop.f32.mrb[0].mxu0
      %v3069 = vadd.f32 0.0, %v3068
      %v3070 = vpop.f32.mrb[0].mxu0
      %v3071 = vpop.f32.mrb[0].mxu0
      %v3072 = vadd.f32 0.0, %v3071
      %v3073 = vpop.f32.mrb[0].mxu0
      %3074 = vmatprep.mubr.bf16.mxu0 0
      %3075 = vmatmul.mubr.bf16.gmra.mrb[0].mxu0 %v2603
      %v3076 = vpop.f32.mrb[0].mxu0
      %v3077 = vadd.f32 0.0, %v3076
      %v3078 = vpop.f32.mrb[0].mxu0
      %v3079 = vpop.f32.mrb[0].mxu0
      %v3080 = vadd.f32 0.0, %v3079
      %v3081 = vpop.f32.mrb[0].mxu0
      %3082 = vmatprep.mubr.bf16.mxu0 0
      %3083 = vmatmul.mubr.bf16.gmra.mrb[0].mxu0 %v2606
      %v3084 = vpop.f32.mrb[0].mxu0
      %v3085 = vadd.f32 0.0, %v3084
      %v3086 = vpop.f32.mrb[0].mxu0
      %v3087 = vpop.f32.mrb[0].mxu0
      %v3088 = vadd.f32 0.0, %v3087
      %v3089 = vpop.f32.mrb[0].mxu0
      %3090 = vmatprep.mubr.bf16.mxu0 0
      %3091 = vmatmul.mubr.bf16.gmra.mrb[0].mxu0 %v2609
      %v3092 = vpop.f32.mrb[0].mxu0
      %v3093 = vadd.f32 0.0, %v3092
      %v3094 = vpop.f32.mrb[0].mxu0
      %v3095 = vpop.f32.mrb[0].mxu0
      %v3096 = vadd.f32 0.0, %v3095
      %v3097 = vpop.f32.mrb[0].mxu0
      %3098 = vmatprep.mubr.bf16.mxu0 0
      %3099 = vmatmul.mubr.bf16.gmra.mrb[0].mxu0 %v2612
      %v3100 = vpop.f32.mrb[0].mxu0
      %v3101 = vadd.f32 0.0, %v3100
      %v3102 = vpop.f32.mrb[0].mxu0
      %v3103 = vpop.f32.mrb[0].mxu0
      %v3104 = vadd.f32 0.0, %v3103
      %v3105 = vpop.f32.mrb[0].mxu0
      %3106 = vmatprep.mubr.bf16.mxu0 0
      %3107 = vmatmul.mubr.bf16.gmra.mrb[0].mxu0 %v2615
      %v3108 = vpop.f32.mrb[0].mxu0
      %v3109 = vadd.f32 0.0, %v3108
      %v3110 = vpop.f32.mrb[0].mxu0
      %v3111 = vpop.f32.mrb[0].mxu0
      %v3112 = vadd.f32 0.0, %v3111
      %v3113 = vpop.f32.mrb[0].mxu0
      %3114 = vmatprep.mubr.bf16.mxu0 0
      %3115 = vmatmul.mubr.bf16.gmra.mrb[0].mxu0 %v2618
      %v3116 = vpop.f32.mrb[0].mxu0
      %v3117 = vadd.f32 0.0, %v3116
      %v3118 = vpop.f32.mrb[0].mxu0
      %v3119 = vpop.f32.mrb[0].mxu0
      %v3120 = vadd.f32 0.0, %v3119
      %v3121 = vpop.f32.mrb[0].mxu0
      %3122 = vmatprep.mubr.bf16.mxu0 0
      %3123 = vmatmul.mubr.bf16.gmra.mrb[0].mxu0 %v2621
      %v3124 = vpop.f32.mrb[0].mxu0
      %v3125 = vadd.f32 0.0, %v3124
      %v3126 = vpop.f32.mrb[0].mxu0
      %v3127 = vpop.f32.mrb[0].mxu0
      %v3128 = vadd.f32 0.0, %v3127
      %v3129 = vpop.f32.mrb[0].mxu0
      %3130 = vmatprep.mubr.bf16.mxu0 0
      %3131 = vmatmul.mubr.bf16.gmra.mrb[0].mxu0 %v2624
      %v3132 = vpop.f32.mrb[0].mxu0
      %v3133 = vadd.f32 0.0, %v3132
      %v3134 = vpop.f32.mrb[0].mxu0
      %v3135 = vpop.f32.mrb[0].mxu0
      %v3136 = vadd.f32 0.0, %v3135
      %v3137 = vpop.f32.mrb[0].mxu0
      %3138 = vmatprep.mubr.bf16.mxu0 0
      %3139 = vmatmul.mubr.bf16.gmra.mrb[0].mxu0 %v2627
      %v3140 = vpop.f32.mrb[0].mxu0
      %v3141 = vadd.f32 0.0, %v3140
      %v3142 = vpop.f32.mrb[0].mxu0
      %v3143 = vpop.f32.mrb[0].mxu0
      %v3144 = vadd.f32 0.0, %v3143
      %v3145 = vpop.f32.mrb[0].mxu0
      %3146 = vmatprep.mubr.bf16.mxu0 0
      %3147 = vmatmul.mubr.bf16.gmra.mrb[0].mxu0 %v2630
      %v3148 = vpop.f32.mrb[0].mxu0
      %v3149 = vadd.f32 0.0, %v3148
      %v3150 = vpop.f32.mrb[0].mxu0
      %v3151 = vpop.f32.mrb[0].mxu0
      %v3152 = vadd.f32 0.0, %v3151
      %v3153 = vpop.f32.mrb[0].mxu0
      %3154 = vmatprep.mubr.bf16.mxu0 0
      %3155 = vmatmul.mubr.bf16.gmra.mrb[0].mxu0 %v2633
      %v3156 = vpop.f32.mrb[0].mxu0
      %v3157 = vadd.f32 0.0, %v3156
      %v3158 = vpop.f32.mrb[0].mxu0
      %v3159 = vpop.f32.mrb[0].mxu0
      %v3160 = vadd.f32 0.0, %v3159
      %v3161 = vpop.f32.mrb[0].mxu0
      %3162 = vmatprep.mubr.bf16.mxu0 0
      %3163 = vmatmul.mubr.bf16.gmra.mrb[0].mxu0 %v2636
      %v3164 = vpop.f32.mrb[0].mxu0
      %v3165 = vadd.f32 0.0, %v3164
      %v3166 = vpop.f32.mrb[0].mxu0
      %v3167 = vpop.f32.mrb[0].mxu0
      %v3168 = vadd.f32 0.0, %v3167
      %v3169 = vpop.f32.mrb[0].mxu0
      %3170 = vmatprep.mubr.bf16.mxu0 0
      %3171 = vmatmul.mubr.bf16.gmra.mrb[0].mxu0 %v2639
      %v3172 = vpop.f32.mrb[0].mxu0
      %v3173 = vadd.f32 0.0, %v3172
      %v3174 = vpop.f32.mrb[0].mxu0
      %v3175 = vpop.f32.mrb[0].mxu0
      %v3176 = vadd.f32 0.0, %v3175
      %v3177 = vpop.f32.mrb[0].mxu0
      %3178 = vmatprep.mubr.bf16.mxu0 0
      %3179 = vmatmul.mubr.bf16.gmra.mrb[0].mxu0 %v2642
      %v3180 = vpop.f32.mrb[0].mxu0
      %v3181 = vadd.f32 0.0, %v3180
      %v3182 = vpop.f32.mrb[0].mxu0
      %v3183 = vpop.f32.mrb[0].mxu0
      %v3184 = vadd.f32 0.0, %v3183
      %v3185 = vpop.f32.mrb[0].mxu0
      %3186 = vmatprep.mubr.bf16.mxu0 0
      %3187 = vmatmul.mubr.bf16.gmra.mrb[0].mxu0 %v2645
      %v3188 = vpop.f32.mrb[0].mxu0
      %v3189 = vadd.f32 0.0, %v3188
      %v3190 = vpop.f32.mrb[0].mxu0
      %v3191 = vpop.f32.mrb[0].mxu0
      %v3192 = vadd.f32 0.0, %v3191
      %v3193 = vpop.f32.mrb[0].mxu0
      %3194 = vdwg.mxu0
      %v3195 = vadd.f32 %v1489, %v2685
      %v3196 = vadd.f32 %v1492, %v2688
      %v3197 = vadd.f32 %v1497, %v2693
      %v3198 = vadd.f32 %v1500, %v2696
      %v3199 = vadd.f32 %v1505, %v2701
      %v3200 = vadd.f32 %v1508, %v2704
      %v3201 = vadd.f32 %v1513, %v2709
      %v3202 = vadd.f32 %v1516, %v2712
      %v3203 = vadd.f32 %v1521, %v2717
      %v3204 = vadd.f32 %v1524, %v2720
      %v3205 = vadd.f32 %v1529, %v2725
      %v3206 = vadd.f32 %v1532, %v2728
      %v3207 = vadd.f32 %v1537, %v2733
      %v3208 = vadd.f32 %v1540, %v2736
      %v3209 = vadd.f32 %v1545, %v2741
      %v3210 = vadd.f32 %v1548, %v2744
      %v3211 = vadd.f32 %v1553, %v2749
      %v3212 = vadd.f32 %v1556, %v2752
      %v3213 = vadd.f32 %v1561, %v2757
      %v3214 = vadd.f32 %v1564, %v2760
      %v3215 = vadd.f32 %v1569, %v2765
      %v3216 = vadd.f32 %v1572, %v2768
      %v3217 = vadd.f32 %v1577, %v2773
      %v3218 = vadd.f32 %v1580, %v2776
      %v3219 = vadd.f32 %v1585, %v2781
      %v3220 = vadd.f32 %v1588, %v2784
      %v3221 = vadd.f32 %v1593, %v2789
      %v3222 = vadd.f32 %v1596, %v2792
      %v3223 = vadd.f32 %v1601, %v2797
      %v3224 = vadd.f32 %v1604, %v2800
      %v3225 = vadd.f32 %v1609, %v2805
      %v3226 = vadd.f32 %v1612, %v2808
      %v3227 = vadd.f32 %v1617, %v2813
      %v3228 = vadd.f32 %v1620, %v2816
      %v3229 = vadd.f32 %v1625, %v2821
      %v3230 = vadd.f32 %v1628, %v2824
      %v3231 = vadd.f32 %v1633, %v2829
      %v3232 = vadd.f32 %v1636, %v2832
      %v3233 = vadd.f32 %v1641, %v2837
      %v3234 = vadd.f32 %v1644, %v2840
      %v3235 = vadd.f32 %v1649, %v2845
      %v3236 = vadd.f32 %v1652, %v2848
      %v3237 = vadd.f32 %v1657, %v2853
      %v3238 = vadd.f32 %v1660, %v2856
      %v3239 = vadd.f32 %v1665, %v2861
      %v3240 = vadd.f32 %v1668, %v2864
      %v3241 = vadd.f32 %v1673, %v2869
      %v3242 = vadd.f32 %v1676, %v2872
      %v3243 = vadd.f32 %v1681, %v2877
      %v3244 = vadd.f32 %v1684, %v2880
      %v3245 = vadd.f32 %v1689, %v2885
      %v3246 = vadd.f32 %v1692, %v2888
      %v3247 = vadd.f32 %v1697, %v2893
      %v3248 = vadd.f32 %v1700, %v2896
      %v3249 = vadd.f32 %v1705, %v2901
      %v3250 = vadd.f32 %v1708, %v2904
      %v3251 = vadd.f32 %v1713, %v2909
      %v3252 = vadd.f32 %v1716, %v2912
      %v3253 = vadd.f32 %v1721, %v2917
      %v3254 = vadd.f32 %v1724, %v2920
      %v3255 = vadd.f32 %v1729, %v2925
      %v3256 = vadd.f32 %v1732, %v2928
      %v3257 = vadd.f32 %v1737, %v2933
      %v3258 = vadd.f32 %v1740, %v2936
      %v3259 = vadd.f32 %v1745, %v2941
      %v3260 = vadd.f32 %v1748, %v2944
      %v3261 = vadd.f32 %v1753, %v2949
      %v3262 = vadd.f32 %v1756, %v2952
      %v3263 = vadd.f32 %v1761, %v2957
      %v3264 = vadd.f32 %v1764, %v2960
      %v3265 = vadd.f32 %v1769, %v2965
      %v3266 = vadd.f32 %v1772, %v2968
      %v3267 = vadd.f32 %v1777, %v2973
      %v3268 = vadd.f32 %v1780, %v2976
      %v3269 = vadd.f32 %v1785, %v2981
      %v3270 = vadd.f32 %v1788, %v2984
      %v3271 = vadd.f32 %v1793, %v2989
      %v3272 = vadd.f32 %v1796, %v2992
      %v3273 = vadd.f32 %v1801, %v2997
      %v3274 = vadd.f32 %v1804, %v3000
      %v3275 = vadd.f32 %v1809, %v3005
      %v3276 = vadd.f32 %v1812, %v3008
      %v3277 = vadd.f32 %v1817, %v3013
      %v3278 = vadd.f32 %v1820, %v3016
      %v3279 = vadd.f32 %v1825, %v3021
      %v3280 = vadd.f32 %v1828, %v3024
      %v3281 = vadd.f32 %v1833, %v3029
      %v3282 = vadd.f32 %v1836, %v3032
      %v3283 = vadd.f32 %v1841, %v3037
      %v3284 = vadd.f32 %v1844, %v3040
      %v3285 = vadd.f32 %v1849, %v3045
      %v3286 = vadd.f32 %v1852, %v3048
      %v3287 = vadd.f32 %v1857, %v3053
      %v3288 = vadd.f32 %v1860, %v3056
      %v3289 = vadd.f32 %v1865, %v3061
      %v3290 = vadd.f32 %v1868, %v3064
      %v3291 = vadd.f32 %v1873, %v3069
      %v3292 = vadd.f32 %v1876, %v3072
      %v3293 = vadd.f32 %v1881, %v3077
      %v3294 = vadd.f32 %v1884, %v3080
      %v3295 = vadd.f32 %v1889, %v3085
      %v3296 = vadd.f32 %v1892, %v3088
      %v3297 = vadd.f32 %v1897, %v3093
      %v3298 = vadd.f32 %v1900, %v3096
      %v3299 = vadd.f32 %v1905, %v3101
      %v3300 = vadd.f32 %v1908, %v3104
      %v3301 = vadd.f32 %v1913, %v3109
      %v3302 = vadd.f32 %v1916, %v3112
      %v3303 = vadd.f32 %v1921, %v3117
      %v3304 = vadd.f32 %v1924, %v3120
      %v3305 = vadd.f32 %v1929, %v3125
      %v3306 = vadd.f32 %v1932, %v3128
      %v3307 = vadd.f32 %v1937, %v3133
      %v3308 = vadd.f32 %v1940, %v3136
      %v3309 = vadd.f32 %v1945, %v3141
      %v3310 = vadd.f32 %v1948, %v3144
      %v3311 = vadd.f32 %v1953, %v3149
      %v3312 = vadd.f32 %v1956, %v3152
      %v3313 = vadd.f32 %v1961, %v3157
      %v3314 = vadd.f32 %v1964, %v3160
      %v3315 = vadd.f32 %v1969, %v3165
      %v3316 = vadd.f32 %v1972, %v3168
      %v3317 = vadd.f32 %v1977, %v3173
      %v3318 = vadd.f32 %v1980, %v3176
      %v3319 = vadd.f32 %v1985, %v3181
      %v3320 = vadd.f32 %v1988, %v3184
      %v3321 = vadd.f32 %v1993, %v3189
      %v3322 = vadd.f32 %v1996, %v3192
      %v3323 = vld [vmem:[%s213] sm:$0x1]
      %v3325 = vlaneseq
      %v3326 = vshrl.u32 %v3325, 7
      %v3327 = vsub.s32 0, %v3326
      %v3328 = vrot.slane %v3323, %v3327
      %v3330 = vadd.f32 %v3195, %v3328
      %v3331 = vadd.f32 %v3196, %v3328
      %v3332 = vadd.f32 %v3197, %v3328
      %v3333 = vadd.f32 %v3198, %v3328
      %v3334 = vadd.f32 %v3199, %v3328
      %v3335 = vadd.f32 %v3200, %v3328
      %v3336 = vadd.f32 %v3201, %v3328
      %v3337 = vadd.f32 %v3202, %v3328
      %v3338 = vadd.f32 %v3203, %v3328
      %v3339 = vadd.f32 %v3204, %v3328
      %v3340 = vadd.f32 %v3205, %v3328
      %v3341 = vadd.f32 %v3206, %v3328
      %v3342 = vadd.f32 %v3207, %v3328
      %v3343 = vadd.f32 %v3208, %v3328
      %v3344 = vadd.f32 %v3209, %v3328
      %v3345 = vadd.f32 %v3210, %v3328
      %v3346 = vadd.f32 %v3211, %v3328
      %v3347 = vadd.f32 %v3212, %v3328
      %v3348 = vadd.f32 %v3213, %v3328
      %v3349 = vadd.f32 %v3214, %v3328
      %v3350 = vadd.f32 %v3215, %v3328
      %v3351 = vadd.f32 %v3216, %v3328
      %v3352 = vadd.f32 %v3217, %v3328
      %v3353 = vadd.f32 %v3218, %v3328
      %v3354 = vadd.f32 %v3219, %v3328
      %v3355 = vadd.f32 %v3220, %v3328
      %v3356 = vadd.f32 %v3221, %v3328
      %v3357 = vadd.f32 %v3222, %v3328
      %v3358 = vadd.f32 %v3223, %v3328
      %v3359 = vadd.f32 %v3224, %v3328
      %v3360 = vadd.f32 %v3225, %v3328
      %v3361 = vadd.f32 %v3226, %v3328
      %v3362 = vadd.f32 %v3227, %v3328
      %v3363 = vadd.f32 %v3228, %v3328
      %v3364 = vadd.f32 %v3229, %v3328
      %v3365 = vadd.f32 %v3230, %v3328
      %v3366 = vadd.f32 %v3231, %v3328
      %v3367 = vadd.f32 %v3232, %v3328
      %v3368 = vadd.f32 %v3233, %v3328
      %v3369 = vadd.f32 %v3234, %v3328
      %v3370 = vadd.f32 %v3235, %v3328
      %v3371 = vadd.f32 %v3236, %v3328
      %v3372 = vadd.f32 %v3237, %v3328
      %v3373 = vadd.f32 %v3238, %v3328
      %v3374 = vadd.f32 %v3239, %v3328
      %v3375 = vadd.f32 %v3240, %v3328
      %v3376 = vadd.f32 %v3241, %v3328
      %v3377 = vadd.f32 %v3242, %v3328
      %v3378 = vadd.f32 %v3243, %v3328
      %v3379 = vadd.f32 %v3244, %v3328
      %v3380 = vadd.f32 %v3245, %v3328
      %v3381 = vadd.f32 %v3246, %v3328
      %v3382 = vadd.f32 %v3247, %v3328
      %v3383 = vadd.f32 %v3248, %v3328
      %v3384 = vadd.f32 %v3249, %v3328
      %v3385 = vadd.f32 %v3250, %v3328
      %v3386 = vadd.f32 %v3251, %v3328
      %v3387 = vadd.f32 %v3252, %v3328
      %v3388 = vadd.f32 %v3253, %v3328
      %v3389 = vadd.f32 %v3254, %v3328
      %v3390 = vadd.f32 %v3255, %v3328
      %v3391 = vadd.f32 %v3256, %v3328
      %v3392 = vadd.f32 %v3257, %v3328
      %v3393 = vadd.f32 %v3258, %v3328
      %v3394 = vadd.f32 %v3259, %v3328
      %v3395 = vadd.f32 %v3260, %v3328
      %v3396 = vadd.f32 %v3261, %v3328
      %v3397 = vadd.f32 %v3262, %v3328
      %v3398 = vadd.f32 %v3263, %v3328
      %v3399 = vadd.f32 %v3264, %v3328
      %v3400 = vadd.f32 %v3265, %v3328
      %v3401 = vadd.f32 %v3266, %v3328
      %v3402 = vadd.f32 %v3267, %v3328
      %v3403 = vadd.f32 %v3268, %v3328
      %v3404 = vadd.f32 %v3269, %v3328
      %v3405 = vadd.f32 %v3270, %v3328
      %v3406 = vadd.f32 %v3271, %v3328
      %v3407 = vadd.f32 %v3272, %v3328
      %v3408 = vadd.f32 %v3273, %v3328
      %v3409 = vadd.f32 %v3274, %v3328
      %v3410 = vadd.f32 %v3275, %v3328
      %v3411 = vadd.f32 %v3276, %v3328
      %v3412 = vadd.f32 %v3277, %v3328
      %v3413 = vadd.f32 %v3278, %v3328
      %v3414 = vadd.f32 %v3279, %v3328
      %v3415 = vadd.f32 %v3280, %v3328
      %v3416 = vadd.f32 %v3281, %v3328
      %v3417 = vadd.f32 %v3282, %v3328
      %v3418 = vadd.f32 %v3283, %v3328
      %v3419 = vadd.f32 %v3284, %v3328
      %v3420 = vadd.f32 %v3285, %v3328
      %v3421 = vadd.f32 %v3286, %v3328
      %v3422 = vadd.f32 %v3287, %v3328
      %v3423 = vadd.f32 %v3288, %v3328
      %v3424 = vadd.f32 %v3289, %v3328
      %v3425 = vadd.f32 %v3290, %v3328
      %v3426 = vadd.f32 %v3291, %v3328
      %v3427 = vadd.f32 %v3292, %v3328
      %v3428 = vadd.f32 %v3293, %v3328
      %v3429 = vadd.f32 %v3294, %v3328
      %v3430 = vadd.f32 %v3295, %v3328
      %v3431 = vadd.f32 %v3296, %v3328
      %v3432 = vadd.f32 %v3297, %v3328
      %v3433 = vadd.f32 %v3298, %v3328
      %v3434 = vadd.f32 %v3299, %v3328
      %v3435 = vadd.f32 %v3300, %v3328
      %v3436 = vadd.f32 %v3301, %v3328
      %v3437 = vadd.f32 %v3302, %v3328
      %v3438 = vadd.f32 %v3303, %v3328
      %v3439 = vadd.f32 %v3304, %v3328
      %v3440 = vadd.f32 %v3305, %v3328
      %v3441 = vadd.f32 %v3306, %v3328
      %v3442 = vadd.f32 %v3307, %v3328
      %v3443 = vadd.f32 %v3308, %v3328
      %v3444 = vadd.f32 %v3309, %v3328
      %v3445 = vadd.f32 %v3310, %v3328
      %v3446 = vadd.f32 %v3311, %v3328
      %v3447 = vadd.f32 %v3312, %v3328
      %v3448 = vadd.f32 %v3313, %v3328
      %v3449 = vadd.f32 %v3314, %v3328
      %v3450 = vadd.f32 %v3315, %v3328
      %v3451 = vadd.f32 %v3316, %v3328
      %v3452 = vadd.f32 %v3317, %v3328
      %v3453 = vadd.f32 %v3318, %v3328
      %v3454 = vadd.f32 %v3319, %v3328
      %v3455 = vadd.f32 %v3320, %v3328
      %v3456 = vadd.f32 %v3321, %v3328
      %v3457 = vadd.f32 %v3322, %v3328
      %v3458 = vmax.f32 %v3330, 0.0
      %v3459 = vmax.f32 %v3331, 0.0
      %v3460 = vmax.f32 %v3332, 0.0
      %v3461 = vmax.f32 %v3333, 0.0
      %v3462 = vmax.f32 %v3334, 0.0
      %v3463 = vmax.f32 %v3335, 0.0
      %v3464 = vmax.f32 %v3336, 0.0
      %v3465 = vmax.f32 %v3337, 0.0
      %v3466 = vmax.f32 %v3338, 0.0
      %v3467 = vmax.f32 %v3339, 0.0
      %v3468 = vmax.f32 %v3340, 0.0
      %v3469 = vmax.f32 %v3341, 0.0
      %v3470 = vmax.f32 %v3342, 0.0
      %v3471 = vmax.f32 %v3343, 0.0
      %v3472 = vmax.f32 %v3344, 0.0
      %v3473 = vmax.f32 %v3345, 0.0
      %v3474 = vmax.f32 %v3346, 0.0
      %v3475 = vmax.f32 %v3347, 0.0
      %v3476 = vmax.f32 %v3348, 0.0
      %v3477 = vmax.f32 %v3349, 0.0
      %v3478 = vmax.f32 %v3350, 0.0
      %v3479 = vmax.f32 %v3351, 0.0
      %v3480 = vmax.f32 %v3352, 0.0
      %v3481 = vmax.f32 %v3353, 0.0
      %v3482 = vmax.f32 %v3354, 0.0
      %v3483 = vmax.f32 %v3355, 0.0
      %v3484 = vmax.f32 %v3356, 0.0
      %v3485 = vmax.f32 %v3357, 0.0
      %v3486 = vmax.f32 %v3358, 0.0
      %v3487 = vmax.f32 %v3359, 0.0
      %v3488 = vmax.f32 %v3360, 0.0
      %v3489 = vmax.f32 %v3361, 0.0
      %v3490 = vmax.f32 %v3362, 0.0
      %v3491 = vmax.f32 %v3363, 0.0
      %v3492 = vmax.f32 %v3364, 0.0
      %v3493 = vmax.f32 %v3365, 0.0
      %v3494 = vmax.f32 %v3366, 0.0
      %v3495 = vmax.f32 %v3367, 0.0
      %v3496 = vmax.f32 %v3368, 0.0
      %v3497 = vmax.f32 %v3369, 0.0
      %v3498 = vmax.f32 %v3370, 0.0
      %v3499 = vmax.f32 %v3371, 0.0
      %v3500 = vmax.f32 %v3372, 0.0
      %v3501 = vmax.f32 %v3373, 0.0
      %v3502 = vmax.f32 %v3374, 0.0
      %v3503 = vmax.f32 %v3375, 0.0
      %v3504 = vmax.f32 %v3376, 0.0
      %v3505 = vmax.f32 %v3377, 0.0
      %v3506 = vmax.f32 %v3378, 0.0
      %v3507 = vmax.f32 %v3379, 0.0
      %v3508 = vmax.f32 %v3380, 0.0
      %v3509 = vmax.f32 %v3381, 0.0
      %v3510 = vmax.f32 %v3382, 0.0
      %v3511 = vmax.f32 %v3383, 0.0
      %v3512 = vmax.f32 %v3384, 0.0
      %v3513 = vmax.f32 %v3385, 0.0
      %v3514 = vmax.f32 %v3386, 0.0
      %v3515 = vmax.f32 %v3387, 0.0
      %v3516 = vmax.f32 %v3388, 0.0
      %v3517 = vmax.f32 %v3389, 0.0
      %v3518 = vmax.f32 %v3390, 0.0
      %v3519 = vmax.f32 %v3391, 0.0
      %v3520 = vmax.f32 %v3392, 0.0
      %v3521 = vmax.f32 %v3393, 0.0
      %v3522 = vmax.f32 %v3394, 0.0
      %v3523 = vmax.f32 %v3395, 0.0
      %v3524 = vmax.f32 %v3396, 0.0
      %v3525 = vmax.f32 %v3397, 0.0
      %v3526 = vmax.f32 %v3398, 0.0
      %v3527 = vmax.f32 %v3399, 0.0
      %v3528 = vmax.f32 %v3400, 0.0
      %v3529 = vmax.f32 %v3401, 0.0
      %v3530 = vmax.f32 %v3402, 0.0
      %v3531 = vmax.f32 %v3403, 0.0
      %v3532 = vmax.f32 %v3404, 0.0
      %v3533 = vmax.f32 %v3405, 0.0
      %v3534 = vmax.f32 %v3406, 0.0
      %v3535 = vmax.f32 %v3407, 0.0
      %v3536 = vmax.f32 %v3408, 0.0
      %v3537 = vmax.f32 %v3409, 0.0
      %v3538 = vmax.f32 %v3410, 0.0
      %v3539 = vmax.f32 %v3411, 0.0
      %v3540 = vmax.f32 %v3412, 0.0
      %v3541 = vmax.f32 %v3413, 0.0
      %v3542 = vmax.f32 %v3414, 0.0
      %v3543 = vmax.f32 %v3415, 0.0
      %v3544 = vmax.f32 %v3416, 0.0
      %v3545 = vmax.f32 %v3417, 0.0
      %v3546 = vmax.f32 %v3418, 0.0
      %v3547 = vmax.f32 %v3419, 0.0
      %v3548 = vmax.f32 %v3420, 0.0
      %v3549 = vmax.f32 %v3421, 0.0
      %v3550 = vmax.f32 %v3422, 0.0
      %v3551 = vmax.f32 %v3423, 0.0
      %v3552 = vmax.f32 %v3424, 0.0
      %v3553 = vmax.f32 %v3425, 0.0
      %v3554 = vmax.f32 %v3426, 0.0
      %v3555 = vmax.f32 %v3427, 0.0
      %v3556 = vmax.f32 %v3428, 0.0
      %v3557 = vmax.f32 %v3429, 0.0
      %v3558 = vmax.f32 %v3430, 0.0
      %v3559 = vmax.f32 %v3431, 0.0
      %v3560 = vmax.f32 %v3432, 0.0
      %v3561 = vmax.f32 %v3433, 0.0
      %v3562 = vmax.f32 %v3434, 0.0
      %v3563 = vmax.f32 %v3435, 0.0
      %v3564 = vmax.f32 %v3436, 0.0
      %v3565 = vmax.f32 %v3437, 0.0
      %v3566 = vmax.f32 %v3438, 0.0
      %v3567 = vmax.f32 %v3439, 0.0
      %v3568 = vmax.f32 %v3440, 0.0
      %v3569 = vmax.f32 %v3441, 0.0
      %v3570 = vmax.f32 %v3442, 0.0
      %v3571 = vmax.f32 %v3443, 0.0
      %v3572 = vmax.f32 %v3444, 0.0
      %v3573 = vmax.f32 %v3445, 0.0
      %v3574 = vmax.f32 %v3446, 0.0
      %v3575 = vmax.f32 %v3447, 0.0
      %v3576 = vmax.f32 %v3448, 0.0
      %v3577 = vmax.f32 %v3449, 0.0
      %v3578 = vmax.f32 %v3450, 0.0
      %v3579 = vmax.f32 %v3451, 0.0
      %v3580 = vmax.f32 %v3452, 0.0
      %v3581 = vmax.f32 %v3453, 0.0
      %v3582 = vmax.f32 %v3454, 0.0
      %v3583 = vmax.f32 %v3455, 0.0
      %v3584 = vmax.f32 %v3456, 0.0
      %v3585 = vmax.f32 %v3457, 0.0
      %v3586 = vpack.c.bf16 %v3459, %v3458
      %v3587 = vpack.c.bf16 %v3461, %v3460
      %v3588 = vpack.c.bf16 %v3463, %v3462
      %v3589 = vpack.c.bf16 %v3465, %v3464
      %v3590 = vpack.c.bf16 %v3467, %v3466
      %v3591 = vpack.c.bf16 %v3469, %v3468
      %v3592 = vpack.c.bf16 %v3471, %v3470
      %v3593 = vpack.c.bf16 %v3473, %v3472
      %v3594 = vpack.c.bf16 %v3475, %v3474
      %v3595 = vpack.c.bf16 %v3477, %v3476
      %v3596 = vpack.c.bf16 %v3479, %v3478
      %v3597 = vpack.c.bf16 %v3481, %v3480
      %v3598 = vpack.c.bf16 %v3483, %v3482
      %v3599 = vpack.c.bf16 %v3485, %v3484
      %v3600 = vpack.c.bf16 %v3487, %v3486
      %v3601 = vpack.c.bf16 %v3489, %v3488
      %v3602 = vpack.c.bf16 %v3491, %v3490
      %v3603 = vpack.c.bf16 %v3493, %v3492
      %v3604 = vpack.c.bf16 %v3495, %v3494
      %v3605 = vpack.c.bf16 %v3497, %v3496
      %v3606 = vpack.c.bf16 %v3499, %v3498
      %v3607 = vpack.c.bf16 %v3501, %v3500
      %v3608 = vpack.c.bf16 %v3503, %v3502
      %v3609 = vpack.c.bf16 %v3505, %v3504
      %v3610 = vpack.c.bf16 %v3507, %v3506
      %v3611 = vpack.c.bf16 %v3509, %v3508
      %v3612 = vpack.c.bf16 %v3511, %v3510
      %v3613 = vpack.c.bf16 %v3513, %v3512
      %v3614 = vpack.c.bf16 %v3515, %v3514
      %v3615 = vpack.c.bf16 %v3517, %v3516
      %v3616 = vpack.c.bf16 %v3519, %v3518
      %v3617 = vpack.c.bf16 %v3521, %v3520
      %v3618 = vpack.c.bf16 %v3523, %v3522
      %v3619 = vpack.c.bf16 %v3525, %v3524
      %v3620 = vpack.c.bf16 %v3527, %v3526
      %v3621 = vpack.c.bf16 %v3529, %v3528
      %v3622 = vpack.c.bf16 %v3531, %v3530
      %v3623 = vpack.c.bf16 %v3533, %v3532
      %v3624 = vpack.c.bf16 %v3535, %v3534
      %v3625 = vpack.c.bf16 %v3537, %v3536
      %v3626 = vpack.c.bf16 %v3539, %v3538
      %v3627 = vpack.c.bf16 %v3541, %v3540
      %v3628 = vpack.c.bf16 %v3543, %v3542
      %v3629 = vpack.c.bf16 %v3545, %v3544
      %v3630 = vpack.c.bf16 %v3547, %v3546
      %v3631 = vpack.c.bf16 %v3549, %v3548
      %v3632 = vpack.c.bf16 %v3551, %v3550
      %v3633 = vpack.c.bf16 %v3553, %v3552
      %v3634 = vpack.c.bf16 %v3555, %v3554
      %v3635 = vpack.c.bf16 %v3557, %v3556
      %v3636 = vpack.c.bf16 %v3559, %v3558
      %v3637 = vpack.c.bf16 %v3561, %v3560
      %v3638 = vpack.c.bf16 %v3563, %v3562
      %v3639 = vpack.c.bf16 %v3565, %v3564
      %v3640 = vpack.c.bf16 %v3567, %v3566
      %v3641 = vpack.c.bf16 %v3569, %v3568
      %v3642 = vpack.c.bf16 %v3571, %v3570
      %v3643 = vpack.c.bf16 %v3573, %v3572
      %v3644 = vpack.c.bf16 %v3575, %v3574
      %v3645 = vpack.c.bf16 %v3577, %v3576
      %v3646 = vpack.c.bf16 %v3579, %v3578
      %v3647 = vpack.c.bf16 %v3581, %v3580
      %v3648 = vpack.c.bf16 %v3583, %v3582
      %v3649 = vpack.c.bf16 %v3585, %v3584
      %v3714 = vunpack.c.l.b16 %v3586
      %v3715 = vunpack.c.h.b16 %v3586
      %v3716 = vunpack.c.l.b16 %v3587
      %v3717 = vunpack.c.h.b16 %v3587
      %v3718 = vunpack.c.l.b16 %v3588
      %v3719 = vunpack.c.h.b16 %v3588
      %v3720 = vunpack.c.l.b16 %v3589
      %v3721 = vunpack.c.h.b16 %v3589
      %v3722 = vunpack.c.l.b16 %v3590
      %v3723 = vunpack.c.h.b16 %v3590
      %v3724 = vunpack.c.l.b16 %v3591
      %v3725 = vunpack.c.h.b16 %v3591
      %v3726 = vunpack.c.l.b16 %v3592
      %v3727 = vunpack.c.h.b16 %v3592
      %v3728 = vunpack.c.l.b16 %v3593
      %v3729 = vunpack.c.h.b16 %v3593
      %v3730 = vunpack.c.l.b16 %v3594
      %v3731 = vunpack.c.h.b16 %v3594
      %v3732 = vunpack.c.l.b16 %v3595
      %v3733 = vunpack.c.h.b16 %v3595
      %v3734 = vunpack.c.l.b16 %v3596
      %v3735 = vunpack.c.h.b16 %v3596
      %v3736 = vunpack.c.l.b16 %v3597
      %v3737 = vunpack.c.h.b16 %v3597
      %v3738 = vunpack.c.l.b16 %v3598
      %v3739 = vunpack.c.h.b16 %v3598
      %v3740 = vunpack.c.l.b16 %v3599
      %v3741 = vunpack.c.h.b16 %v3599
      %v3742 = vunpack.c.l.b16 %v3600
      %v3743 = vunpack.c.h.b16 %v3600
      %v3744 = vunpack.c.l.b16 %v3601
      %v3745 = vunpack.c.h.b16 %v3601
      %v3746 = vunpack.c.l.b16 %v3602
      %v3747 = vunpack.c.h.b16 %v3602
      %v3748 = vunpack.c.l.b16 %v3603
      %v3749 = vunpack.c.h.b16 %v3603
      %v3750 = vunpack.c.l.b16 %v3604
      %v3751 = vunpack.c.h.b16 %v3604
      %v3752 = vunpack.c.l.b16 %v3605
      %v3753 = vunpack.c.h.b16 %v3605
      %v3754 = vunpack.c.l.b16 %v3606
      %v3755 = vunpack.c.h.b16 %v3606
      %v3756 = vunpack.c.l.b16 %v3607
      %v3757 = vunpack.c.h.b16 %v3607
      %v3758 = vunpack.c.l.b16 %v3608
      %v3759 = vunpack.c.h.b16 %v3608
      %v3760 = vunpack.c.l.b16 %v3609
      %v3761 = vunpack.c.h.b16 %v3609
      %v3762 = vunpack.c.l.b16 %v3610
      %v3763 = vunpack.c.h.b16 %v3610
      %v3764 = vunpack.c.l.b16 %v3611
      %v3765 = vunpack.c.h.b16 %v3611
      %v3766 = vunpack.c.l.b16 %v3612
      %v3767 = vunpack.c.h.b16 %v3612
      %v3768 = vunpack.c.l.b16 %v3613
      %v3769 = vunpack.c.h.b16 %v3613
      %v3770 = vunpack.c.l.b16 %v3614
      %v3771 = vunpack.c.h.b16 %v3614
      %v3772 = vunpack.c.l.b16 %v3615
      %v3773 = vunpack.c.h.b16 %v3615
      %v3774 = vunpack.c.l.b16 %v3616
      %v3775 = vunpack.c.h.b16 %v3616
      %v3776 = vunpack.c.l.b16 %v3617
      %v3777 = vunpack.c.h.b16 %v3617
      %v3778 = vunpack.c.l.b16 %v3618
      %v3779 = vunpack.c.h.b16 %v3618
      %v3780 = vunpack.c.l.b16 %v3619
      %v3781 = vunpack.c.h.b16 %v3619
      %v3782 = vunpack.c.l.b16 %v3620
      %v3783 = vunpack.c.h.b16 %v3620
      %v3784 = vunpack.c.l.b16 %v3621
      %v3785 = vunpack.c.h.b16 %v3621
      %v3786 = vunpack.c.l.b16 %v3622
      %v3787 = vunpack.c.h.b16 %v3622
      %v3788 = vunpack.c.l.b16 %v3623
      %v3789 = vunpack.c.h.b16 %v3623
      %v3790 = vunpack.c.l.b16 %v3624
      %v3791 = vunpack.c.h.b16 %v3624
      %v3792 = vunpack.c.l.b16 %v3625
      %v3793 = vunpack.c.h.b16 %v3625
      %v3794 = vunpack.c.l.b16 %v3626
      %v3795 = vunpack.c.h.b16 %v3626
      %v3796 = vunpack.c.l.b16 %v3627
      %v3797 = vunpack.c.h.b16 %v3627
      %v3798 = vunpack.c.l.b16 %v3628
      %v3799 = vunpack.c.h.b16 %v3628
      %v3800 = vunpack.c.l.b16 %v3629
      %v3801 = vunpack.c.h.b16 %v3629
      %v3802 = vunpack.c.l.b16 %v3630
      %v3803 = vunpack.c.h.b16 %v3630
      %v3804 = vunpack.c.l.b16 %v3631
      %v3805 = vunpack.c.h.b16 %v3631
      %v3806 = vunpack.c.l.b16 %v3632
      %v3807 = vunpack.c.h.b16 %v3632
      %v3808 = vunpack.c.l.b16 %v3633
      %v3809 = vunpack.c.h.b16 %v3633
      %v3810 = vunpack.c.l.b16 %v3634
      %v3811 = vunpack.c.h.b16 %v3634
      %v3812 = vunpack.c.l.b16 %v3635
      %v3813 = vunpack.c.h.b16 %v3635
      %v3814 = vunpack.c.l.b16 %v3636
      %v3815 = vunpack.c.h.b16 %v3636
      %v3816 = vunpack.c.l.b16 %v3637
      %v3817 = vunpack.c.h.b16 %v3637
      %v3818 = vunpack.c.l.b16 %v3638
      %v3819 = vunpack.c.h.b16 %v3638
      %v3820 = vunpack.c.l.b16 %v3639
      %v3821 = vunpack.c.h.b16 %v3639
      %v3822 = vunpack.c.l.b16 %v3640
      %v3823 = vunpack.c.h.b16 %v3640
      %v3824 = vunpack.c.l.b16 %v3641
      %v3825 = vunpack.c.h.b16 %v3641
      %v3826 = vunpack.c.l.b16 %v3642
      %v3827 = vunpack.c.h.b16 %v3642
      %v3828 = vunpack.c.l.b16 %v3643
      %v3829 = vunpack.c.h.b16 %v3643
      %v3830 = vunpack.c.l.b16 %v3644
      %v3831 = vunpack.c.h.b16 %v3644
      %v3832 = vunpack.c.l.b16 %v3645
      %v3833 = vunpack.c.h.b16 %v3645
      %v3834 = vunpack.c.l.b16 %v3646
      %v3835 = vunpack.c.h.b16 %v3646
      %v3836 = vunpack.c.l.b16 %v3647
      %v3837 = vunpack.c.h.b16 %v3647
      %v3838 = vunpack.c.l.b16 %v3648
      %v3839 = vunpack.c.h.b16 %v3648
      %v3840 = vunpack.c.l.b16 %v3649
      %v3841 = vunpack.c.h.b16 %v3649
      %v3842 = vpack.c.b16 %v3714, %v3714
      %v3843 = vpack.c.b16 %v3715, %v3715
      %v3844 = vpack.c.b16 %v3716, %v3716
      %v3845 = vpack.c.b16 %v3717, %v3717
      %v3846 = vpack.c.b16 %v3718, %v3718
      %v3847 = vpack.c.b16 %v3719, %v3719
      %v3848 = vpack.c.b16 %v3720, %v3720
      %v3849 = vpack.c.b16 %v3721, %v3721
      %v3850 = vpack.c.b16 %v3722, %v3722
      %v3851 = vpack.c.b16 %v3723, %v3723
      %v3852 = vpack.c.b16 %v3724, %v3724
      %v3853 = vpack.c.b16 %v3725, %v3725
      %v3854 = vpack.c.b16 %v3726, %v3726
      %v3855 = vpack.c.b16 %v3727, %v3727
      %v3856 = vpack.c.b16 %v3728, %v3728
      %v3857 = vpack.c.b16 %v3729, %v3729
      %v3858 = vpack.c.b16 %v3730, %v3730
      %v3859 = vpack.c.b16 %v3731, %v3731
      %v3860 = vpack.c.b16 %v3732, %v3732
      %v3861 = vpack.c.b16 %v3733, %v3733
      %v3862 = vpack.c.b16 %v3734, %v3734
      %v3863 = vpack.c.b16 %v3735, %v3735
      %v3864 = vpack.c.b16 %v3736, %v3736
      %v3865 = vpack.c.b16 %v3737, %v3737
      %v3866 = vpack.c.b16 %v3738, %v3738
      %v3867 = vpack.c.b16 %v3739, %v3739
      %v3868 = vpack.c.b16 %v3740, %v3740
      %v3869 = vpack.c.b16 %v3741, %v3741
      %v3870 = vpack.c.b16 %v3742, %v3742
      %v3871 = vpack.c.b16 %v3743, %v3743
      %v3872 = vpack.c.b16 %v3744, %v3744
      %v3873 = vpack.c.b16 %v3745, %v3745
      %v3874 = vpack.c.b16 %v3746, %v3746
      %v3875 = vpack.c.b16 %v3747, %v3747
      %v3876 = vpack.c.b16 %v3748, %v3748
      %v3877 = vpack.c.b16 %v3749, %v3749
      %v3878 = vpack.c.b16 %v3750, %v3750
      %v3879 = vpack.c.b16 %v3751, %v3751
      %v3880 = vpack.c.b16 %v3752, %v3752
      %v3881 = vpack.c.b16 %v3753, %v3753
      %v3882 = vpack.c.b16 %v3754, %v3754
      %v3883 = vpack.c.b16 %v3755, %v3755
      %v3884 = vpack.c.b16 %v3756, %v3756
      %v3885 = vpack.c.b16 %v3757, %v3757
      %v3886 = vpack.c.b16 %v3758, %v3758
      %v3887 = vpack.c.b16 %v3759, %v3759
      %v3888 = vpack.c.b16 %v3760, %v3760
      %v3889 = vpack.c.b16 %v3761, %v3761
      %v3890 = vpack.c.b16 %v3762, %v3762
      %v3891 = vpack.c.b16 %v3763, %v3763
      %v3892 = vpack.c.b16 %v3764, %v3764
      %v3893 = vpack.c.b16 %v3765, %v3765
      %v3894 = vpack.c.b16 %v3766, %v3766
      %v3895 = vpack.c.b16 %v3767, %v3767
      %v3896 = vpack.c.b16 %v3768, %v3768
      %v3897 = vpack.c.b16 %v3769, %v3769
      %v3898 = vpack.c.b16 %v3770, %v3770
      %v3899 = vpack.c.b16 %v3771, %v3771
      %v3900 = vpack.c.b16 %v3772, %v3772
      %v3901 = vpack.c.b16 %v3773, %v3773
      %v3902 = vpack.c.b16 %v3774, %v3774
      %v3903 = vpack.c.b16 %v3775, %v3775
      %v3904 = vpack.c.b16 %v3776, %v3776
      %v3905 = vpack.c.b16 %v3777, %v3777
      %v3906 = vpack.c.b16 %v3778, %v3778
      %v3907 = vpack.c.b16 %v3779, %v3779
      %v3908 = vpack.c.b16 %v3780, %v3780
      %v3909 = vpack.c.b16 %v3781, %v3781
      %v3910 = vpack.c.b16 %v3782, %v3782
      %v3911 = vpack.c.b16 %v3783, %v3783
      %v3912 = vpack.c.b16 %v3784, %v3784
      %v3913 = vpack.c.b16 %v3785, %v3785
      %v3914 = vpack.c.b16 %v3786, %v3786
      %v3915 = vpack.c.b16 %v3787, %v3787
      %v3916 = vpack.c.b16 %v3788, %v3788
      %v3917 = vpack.c.b16 %v3789, %v3789
      %v3918 = vpack.c.b16 %v3790, %v3790
      %v3919 = vpack.c.b16 %v3791, %v3791
      %v3920 = vpack.c.b16 %v3792, %v3792
      %v3921 = vpack.c.b16 %v3793, %v3793
      %v3922 = vpack.c.b16 %v3794, %v3794
      %v3923 = vpack.c.b16 %v3795, %v3795
      %v3924 = vpack.c.b16 %v3796, %v3796
      %v3925 = vpack.c.b16 %v3797, %v3797
      %v3926 = vpack.c.b16 %v3798, %v3798
      %v3927 = vpack.c.b16 %v3799, %v3799
      %v3928 = vpack.c.b16 %v3800, %v3800
      %v3929 = vpack.c.b16 %v3801, %v3801
      %v3930 = vpack.c.b16 %v3802, %v3802
      %v3931 = vpack.c.b16 %v3803, %v3803
      %v3932 = vpack.c.b16 %v3804, %v3804
      %v3933 = vpack.c.b16 %v3805, %v3805
      %v3934 = vpack.c.b16 %v3806, %v3806
      %v3935 = vpack.c.b16 %v3807, %v3807
      %v3936 = vpack.c.b16 %v3808, %v3808
      %v3937 = vpack.c.b16 %v3809, %v3809
      %v3938 = vpack.c.b16 %v3810, %v3810
      %v3939 = vpack.c.b16 %v3811, %v3811
      %v3940 = vpack.c.b16 %v3812, %v3812
      %v3941 = vpack.c.b16 %v3813, %v3813
      %v3942 = vpack.c.b16 %v3814, %v3814
      %v3943 = vpack.c.b16 %v3815, %v3815
      %v3944 = vpack.c.b16 %v3816, %v3816
      %v3945 = vpack.c.b16 %v3817, %v3817
      %v3946 = vpack.c.b16 %v3818, %v3818
      %v3947 = vpack.c.b16 %v3819, %v3819
      %v3948 = vpack.c.b16 %v3820, %v3820
      %v3949 = vpack.c.b16 %v3821, %v3821
      %v3950 = vpack.c.b16 %v3822, %v3822
      %v3951 = vpack.c.b16 %v3823, %v3823
      %v3952 = vpack.c.b16 %v3824, %v3824
      %v3953 = vpack.c.b16 %v3825, %v3825
      %v3954 = vpack.c.b16 %v3826, %v3826
      %v3955 = vpack.c.b16 %v3827, %v3827
      %v3956 = vpack.c.b16 %v3828, %v3828
      %v3957 = vpack.c.b16 %v3829, %v3829
      %v3958 = vpack.c.b16 %v3830, %v3830
      %v3959 = vpack.c.b16 %v3831, %v3831
      %v3960 = vpack.c.b16 %v3832, %v3832
      %v3961 = vpack.c.b16 %v3833, %v3833
      %v3962 = vpack.c.b16 %v3834, %v3834
      %v3963 = vpack.c.b16 %v3835, %v3835
      %v3964 = vpack.c.b16 %v3836, %v3836
      %v3965 = vpack.c.b16 %v3837, %v3837
      %v3966 = vpack.c.b16 %v3838, %v3838
      %v3967 = vpack.c.b16 %v3839, %v3839
      %v3968 = vpack.c.b16 %v3840, %v3840
      %v3969 = vpack.c.b16 %v3841, %v3841
      %4098 = vst [vmem:[%s221] sm:$0xf] %v3842
      %4099 = vst [vmem:[%s221 + $0x4] sm:$0xf] %v3843
      %4100 = vst [vmem:[%s221 + $0x8] sm:$0xf] %v3844
      %4101 = vst [vmem:[%s221 + $0xc] sm:$0xf] %v3845
      %4102 = vst [vmem:[%s221 + $0x10] sm:$0xf] %v3846
      %4103 = vst [vmem:[%s221 + $0x14] sm:$0xf] %v3847
      %4104 = vst [vmem:[%s221 + $0x18] sm:$0xf] %v3848
      %4105 = vst [vmem:[%s221 + $0x1c] sm:$0xf] %v3849
      %4106 = vst [vmem:[%s221 + $0x20] sm:$0xf] %v3850
      %4107 = vst [vmem:[%s221 + $0x24] sm:$0xf] %v3851
      %4108 = vst [vmem:[%s221 + $0x28] sm:$0xf] %v3852
      %4109 = vst [vmem:[%s221 + $0x2c] sm:$0xf] %v3853
      %4110 = vst [vmem:[%s221 + $0x30] sm:$0xf] %v3854
      %4111 = vst [vmem:[%s221 + $0x34] sm:$0xf] %v3855
      %4112 = vst [vmem:[%s221 + $0x38] sm:$0xf] %v3856
      %4113 = vst [vmem:[%s221 + $0x3c] sm:$0xf] %v3857
      %4114 = vst [vmem:[%s221 + $0x40] sm:$0xf] %v3858
      %4115 = vst [vmem:[%s221 + $0x44] sm:$0xf] %v3859
      %4116 = vst [vmem:[%s221 + $0x48] sm:$0xf] %v3860
      %4117 = vst [vmem:[%s221 + $0x4c] sm:$0xf] %v3861
      %4118 = vst [vmem:[%s221 + $0x50] sm:$0xf] %v3862
      %4119 = vst [vmem:[%s221 + $0x54] sm:$0xf] %v3863
      %4120 = vst [vmem:[%s221 + $0x58] sm:$0xf] %v3864
      %4121 = vst [vmem:[%s221 + $0x5c] sm:$0xf] %v3865
      %4122 = vst [vmem:[%s221 + $0x60] sm:$0xf] %v3866
      %4123 = vst [vmem:[%s221 + $0x64] sm:$0xf] %v3867
      %4124 = vst [vmem:[%s221 + $0x68] sm:$0xf] %v3868
      %4125 = vst [vmem:[%s221 + $0x6c] sm:$0xf] %v3869
      %4126 = vst [vmem:[%s221 + $0x70] sm:$0xf] %v3870
      %4127 = vst [vmem:[%s221 + $0x74] sm:$0xf] %v3871
      %4128 = vst [vmem:[%s221 + $0x78] sm:$0xf] %v3872
      %4129 = vst [vmem:[%s221 + $0x7c] sm:$0xf] %v3873
      %4130 = vst [vmem:[%s221 + $0x80] sm:$0xf] %v3874
      %4131 = vst [vmem:[%s221 + $0x84] sm:$0xf] %v3875
      %4132 = vst [vmem:[%s221 + $0x88] sm:$0xf] %v3876
      %4133 = vst [vmem:[%s221 + $0x8c] sm:$0xf] %v3877
      %4134 = vst [vmem:[%s221 + $0x90] sm:$0xf] %v3878
      %4135 = vst [vmem:[%s221 + $0x94] sm:$0xf] %v3879
      %4136 = vst [vmem:[%s221 + $0x98] sm:$0xf] %v3880
      %4137 = vst [vmem:[%s221 + $0x9c] sm:$0xf] %v3881
      %4138 = vst [vmem:[%s221 + $0xa0] sm:$0xf] %v3882
      %4139 = vst [vmem:[%s221 + $0xa4] sm:$0xf] %v3883
      %4140 = vst [vmem:[%s221 + $0xa8] sm:$0xf] %v3884
      %4141 = vst [vmem:[%s221 + $0xac] sm:$0xf] %v3885
      %4142 = vst [vmem:[%s221 + $0xb0] sm:$0xf] %v3886
      %4143 = vst [vmem:[%s221 + $0xb4] sm:$0xf] %v3887
      %4144 = vst [vmem:[%s221 + $0xb8] sm:$0xf] %v3888
      %4145 = vst [vmem:[%s221 + $0xbc] sm:$0xf] %v3889
      %4146 = vst [vmem:[%s221 + $0xc0] sm:$0xf] %v3890
      %4147 = vst [vmem:[%s221 + $0xc4] sm:$0xf] %v3891
      %4148 = vst [vmem:[%s221 + $0xc8] sm:$0xf] %v3892
      %4149 = vst [vmem:[%s221 + $0xcc] sm:$0xf] %v3893
      %4150 = vst [vmem:[%s221 + $0xd0] sm:$0xf] %v3894
      %4151 = vst [vmem:[%s221 + $0xd4] sm:$0xf] %v3895
      %4152 = vst [vmem:[%s221 + $0xd8] sm:$0xf] %v3896
      %4153 = vst [vmem:[%s221 + $0xdc] sm:$0xf] %v3897
      %4154 = vst [vmem:[%s221 + $0xe0] sm:$0xf] %v3898
      %4155 = vst [vmem:[%s221 + $0xe4] sm:$0xf] %v3899
      %4156 = vst [vmem:[%s221 + $0xe8] sm:$0xf] %v3900
      %4157 = vst [vmem:[%s221 + $0xec] sm:$0xf] %v3901
      %4158 = vst [vmem:[%s221 + $0xf0] sm:$0xf] %v3902
      %4159 = vst [vmem:[%s221 + $0xf4] sm:$0xf] %v3903
      %4160 = vst [vmem:[%s221 + $0xf8] sm:$0xf] %v3904
      %4161 = vst [vmem:[%s221 + $0xfc] sm:$0xf] %v3905
      %4162 = vst [vmem:[%s221 + $0x100] sm:$0xf] %v3906
      %4163 = vst [vmem:[%s221 + $0x104] sm:$0xf] %v3907
      %4164 = vst [vmem:[%s221 + $0x108] sm:$0xf] %v3908
      %4165 = vst [vmem:[%s221 + $0x10c] sm:$0xf] %v3909
      %4166 = vst [vmem:[%s221 + $0x110] sm:$0xf] %v3910
      %4167 = vst [vmem:[%s221 + $0x114] sm:$0xf] %v3911
      %4168 = vst [vmem:[%s221 + $0x118] sm:$0xf] %v3912
      %4169 = vst [vmem:[%s221 + $0x11c] sm:$0xf] %v3913
      %4170 = vst [vmem:[%s221 + $0x120] sm:$0xf] %v3914
      %4171 = vst [vmem:[%s221 + $0x124] sm:$0xf] %v3915
      %4172 = vst [vmem:[%s221 + $0x128] sm:$0xf] %v3916
      %4173 = vst [vmem:[%s221 + $0x12c] sm:$0xf] %v3917
      %4174 = vst [vmem:[%s221 + $0x130] sm:$0xf] %v3918
      %4175 = vst [vmem:[%s221 + $0x134] sm:$0xf] %v3919
      %4176 = vst [vmem:[%s221 + $0x138] sm:$0xf] %v3920
      %4177 = vst [vmem:[%s221 + $0x13c] sm:$0xf] %v3921
      %4178 = vst [vmem:[%s221 + $0x140] sm:$0xf] %v3922
      %4179 = vst [vmem:[%s221 + $0x144] sm:$0xf] %v3923
      %4180 = vst [vmem:[%s221 + $0x148] sm:$0xf] %v3924
      %4181 = vst [vmem:[%s221 + $0x14c] sm:$0xf] %v3925
      %4182 = vst [vmem:[%s221 + $0x150] sm:$0xf] %v3926
      %4183 = vst [vmem:[%s221 + $0x154] sm:$0xf] %v3927
      %4184 = vst [vmem:[%s221 + $0x158] sm:$0xf] %v3928
      %4185 = vst [vmem:[%s221 + $0x15c] sm:$0xf] %v3929
      %4186 = vst [vmem:[%s221 + $0x160] sm:$0xf] %v3930
      %4187 = vst [vmem:[%s221 + $0x164] sm:$0xf] %v3931
      %4188 = vst [vmem:[%s221 + $0x168] sm:$0xf] %v3932
      %4189 = vst [vmem:[%s221 + $0x16c] sm:$0xf] %v3933
      %4190 = vst [vmem:[%s221 + $0x170] sm:$0xf] %v3934
      %4191 = vst [vmem:[%s221 + $0x174] sm:$0xf] %v3935
      %4192 = vst [vmem:[%s221 + $0x178] sm:$0xf] %v3936
      %4193 = vst [vmem:[%s221 + $0x17c] sm:$0xf] %v3937
      %4194 = vst [vmem:[%s221 + $0x180] sm:$0xf] %v3938
      %4195 = vst [vmem:[%s221 + $0x184] sm:$0xf] %v3939
      %4196 = vst [vmem:[%s221 + $0x188] sm:$0xf] %v3940
      %4197 = vst [vmem:[%s221 + $0x18c] sm:$0xf] %v3941
      %4198 = vst [vmem:[%s221 + $0x190] sm:$0xf] %v3942
      %4199 = vst [vmem:[%s221 + $0x194] sm:$0xf] %v3943
      %4200 = vst [vmem:[%s221 + $0x198] sm:$0xf] %v3944
      %4201 = vst [vmem:[%s221 + $0x19c] sm:$0xf] %v3945
      %4202 = vst [vmem:[%s221 + $0x1a0] sm:$0xf] %v3946
      %4203 = vst [vmem:[%s221 + $0x1a4] sm:$0xf] %v3947
      %4204 = vst [vmem:[%s221 + $0x1a8] sm:$0xf] %v3948
      %4205 = vst [vmem:[%s221 + $0x1ac] sm:$0xf] %v3949
      %4206 = vst [vmem:[%s221 + $0x1b0] sm:$0xf] %v3950
      %4207 = vst [vmem:[%s221 + $0x1b4] sm:$0xf] %v3951
      %4208 = vst [vmem:[%s221 + $0x1b8] sm:$0xf] %v3952
      %4209 = vst [vmem:[%s221 + $0x1bc] sm:$0xf] %v3953
      %4210 = vst [vmem:[%s221 + $0x1c0] sm:$0xf] %v3954
      %4211 = vst [vmem:[%s221 + $0x1c4] sm:$0xf] %v3955
      %4212 = vst [vmem:[%s221 + $0x1c8] sm:$0xf] %v3956
      %4213 = vst [vmem:[%s221 + $0x1cc] sm:$0xf] %v3957
      %4214 = vst [vmem:[%s221 + $0x1d0] sm:$0xf] %v3958
      %4215 = vst [vmem:[%s221 + $0x1d4] sm:$0xf] %v3959
      %4216 = vst [vmem:[%s221 + $0x1d8] sm:$0xf] %v3960
      %4217 = vst [vmem:[%s221 + $0x1dc] sm:$0xf] %v3961
      %4218 = vst [vmem:[%s221 + $0x1e0] sm:$0xf] %v3962
      %4219 = vst [vmem:[%s221 + $0x1e4] sm:$0xf] %v3963
      %4220 = vst [vmem:[%s221 + $0x1e8] sm:$0xf] %v3964
      %4221 = vst [vmem:[%s221 + $0x1ec] sm:$0xf] %v3965
      %4222 = vst [vmem:[%s221 + $0x1f0] sm:$0xf] %v3966
      %4223 = vst [vmem:[%s221 + $0x1f4] sm:$0xf] %v3967
      %4224 = vst [vmem:[%s221 + $0x1f8] sm:$0xf] %v3968
      %4225 = vst [vmem:[%s221 + $0x1fc] sm:$0xf] %v3969
      %p4226 = scmp.lt.s32.totalorder %s18, 1
      %s4227 = scalar_select %p4226, %s18, 1
      %p4228 = scmp.lt.s32.totalorder %s19, 0
      %s4229 = scalar_select %p4228, %s19, 0
      %s4230 = smul.addr %s4227, 128
      %s4231 = sadd.s32 %s4229, %s4230
      %s4232 = smul.addr %s4231, 4
      %s4233 = scalar_lea.vmem %s3, %s4232
      // Predicated region
      $region33: #{vgg_forward.6} parent=31 // pred_check
        %p4234 = pneg %p124
      $region34: #{vgg_forward.6} parent=31 // pred_check_branch
        %4236 = sbr.rel (%p4234) target = $region36
      $region35: #{vgg_forward.6} parent=31 // pred_region
        _
      $region36: #{vgg_forward.6} parent=31 // pred_fallthru
        _
    $region32: #{vgg_forward.6} parent=5 // pred_fallthru
      _
    %p4237 = scmp.le.s32.totalorder 2, %s9
    // Predicated region
    $region37: #{vgg_forward.6} parent=5 // pred_check
      %p4238 = pneg %p4237
    $region38: #{vgg_forward.6} parent=5 // pred_check_branch
      %4240 = sbr.rel (%p4238) target = $region40
    $region39: #{vgg_forward.6} parent=5 // pred_region
      %s4241 = ssub.s32 %s9, 2
      // Predicated region
      $region41: #{vgg_forward.6} parent=39 // pred_check
        %p4242 = pneg %p130
      $region42: #{vgg_forward.6} parent=39 // pred_check_branch
        %4244 = sbr.rel (%p4242) target = $region44
      $region43: #{vgg_forward.6} parent=39 // pred_region
        %p4245 = scmp.lt.s32.totalorder %s20, 1
        %s4246 = scalar_select %p4245, %s20, 1
        %p4247 = scmp.lt.s32.totalorder %s21, 0
        %s4248 = scalar_select %p4247, %s21, 0
        %s4249 = smul.addr %s4246, 128
        %s4250 = sadd.s32 %s4248, %s4249
        %s4251 = smul.addr %s4250, 4
        %s4252 = scalar_lea.vmem %s3, %s4251
      $region44: #{vgg_forward.6} parent=39 // pred_fallthru
        _
    $region40: #{vgg_forward.6} parent=5 // pred_fallthru
      _
  $region6: #{vgg_forward.6} parent=0 // loop_footer
    %s13 = sadd.s32 1, %s9
  $region7: #{vgg_forward.6} parent=0 // loop_footer_branch
    %8 = sbr.rel target = $region3
  $region8: #{vgg_forward.6} parent=0 // loop_exit
    _

// kernel: vgg_forward.7
$region0: #{vgg_forward.7}
  #allocation0 [shape = 'u32[]', space=smem, size = 0x4, offset = 0x4, fixed_abs, tag = 'smem constant byte address 0x4 - core index']
  #allocation1 [shape = 'u32[144,128]{1,0:T(1,128)}', space=vmem, size = 0x12000, scoped, tag = 'internal scratch']
  %s0 = inlined_call_operand.vmem [shape: bf16[2,288,48], index: 0, kind: input, shape index: {}]
  %s1 = inlined_call_operand.vmem [shape: bf16[3,48,128], index: 1, kind: input, shape index: {}]
  %s2 = inlined_call_operand.vmem [shape: f32[1,128], index: 2, kind: input, shape index: {}]
  %s3 = inlined_call_operand.vmem [shape: bf16[2,256,128], index: 3, kind: output, shape index: {}]
  %s4 = sld [smem:[#allocation0]]
  $region45: #{vgg_forward.7} parent=0
    _
  %s6 = ssub.s32 1, %s4
  %s7 = scalar_select 0, %s6, %s4
  loop: start=0, step=1, limit=4
  $region2: #{vgg_forward.7} parent=0 // loop_pre_header
    _
  $region3: #{vgg_forward.7} parent=0 // loop_header
    %s9 = sphi 0, %s13
    %p10 = scmp.ge.s32.totalorder %s9, 4
    %s16 = sphi 0, %s28
    %s17 = sphi 0, %s24
    %s18 = sphi 0, %s16
    %s19 = sphi 0, %s17
    %s20 = sphi 0, %s18
    %s21 = sphi 0, %s19
    %s31 = sphi 0, %s33
    %s34 = sphi 0, %s31
    %s35 = sphi 0, %s34
    %s51 = sphi 0, %s35
    %s57 = sphi 0, %s59
    %s60 = sphi 0, %s57
    %s61 = sphi 0, %s60
    %s77 = sphi 0, %s61
    %s83 = sphi 0, %s85
    %s86 = sphi 0, %s83
    %s87 = sphi 0, %s86
    %s103 = sphi 0, %s87
    %s111 = sphi 0, %s113
    %s114 = sphi 0, %s111
    %s115 = sphi 0, %s114
    %s131 = sphi 0, %s115
  $region4: #{vgg_forward.7} parent=0 // loop_header_branch
    %12 = sbr.rel (%p10) target = $region8
  $region5: #{vgg_forward.7} parent=0 // loop_body
    %s14 = ssub.s32 %s9, 1
    %s15 = ssub.s32 %s9, 2
    %s22 = sadd.s32 1, %s17
    %p23 = scmp.ge.s32.totalorder %s22, 1
    %s24 = scalar_select %p23, 0, %s22
    %s25 = sadd.s32 1, %s16
    %s26 = scalar_select %p23, %s25, %s16
    %p27 = scmp.ge.s32.totalorder %s26, 2
    %s28 = scalar_select %p27, 0, %s26
    %s29 = ssub.s32 %s16, %s28
    %p30 = scmp.eq.s32.totalorder %s29, 0
    %s32 = sadd.s32 %s31, 1
    %s33 = scalar_select %p30, %s31, %s32
    %p36 = pneg %p30
    %p37 = scmp.eq.s32.totalorder %s9, 1
    %p38 = por %p36, %p37
    %p39 = scmp.ne.s32.totalorder %s31, %s34
    %p40 = scmp.eq.s32.totalorder %s9, 0
    %p41 = por %p39, %p40
    %p42 = scmp.ne.s32.totalorder %s31, %s34
    %p43 = scmp.eq.s32.totalorder %s14, 1
    %p44 = por %p42, %p43
    %p45 = scmp.ne.s32.totalorder %s34, %s35
    %p46 = scmp.eq.s32.totalorder %s14, 0
    %p47 = por %p45, %p46
    %p48 = scmp.ne.s32.totalorder %s34, %s35
    %p49 = scmp.eq.s32.totalorder %s15, 1
    %p50 = por %p48, %p49
    %p52 = scmp.ne.s32.totalorder %s35, %s51
    %p53 = scmp.eq.s32.totalorder %s15, 0
    %p54 = por %p52, %p53
    %s55 = ssub.s32 %s17, %s24
    %p56 = scmp.eq.s32.totalorder %s55, 0
    %s58 = sadd.s32 %s57, 1
    %s59 = scalar_select %p56, %s57, %s58
    %p62 = pneg %p56
    %p63 = scmp.eq.s32.totalorder %s9, 1
    %p64 = por %p62, %p63
    %p65 = scmp.ne.s32.totalorder %s57, %s60
    %p66 = scmp.eq.s32.totalorder %s9, 0
    %p67 = por %p65, %p66
    %p68 = scmp.ne.s32.totalorder %s57, %s60
    %p69 = scmp.eq.s32.totalorder %s14, 1
    %p70 = por %p68, %p69
    %p71 = scmp.ne.s32.totalorder %s60, %s61
    %p72 = scmp.eq.s32.totalorder %s14, 0
    %p73 = por %p71, %p72
    %p74 = scmp.ne.s32.totalorder %s60, %s61
    %p75 = scmp.eq.s32.totalorder %s15, 1
    %p76 = por %p74, %p75
    %p78 = scmp.ne.s32.totalorder %s61, %s77
    %p79 = scmp.eq.s32.totalorder %s15, 0
    %p80 = por %p78, %p79
    %s81 = ssub.s32 %s17, %s24
    %p82 = scmp.eq.s32.totalorder %s81, 0
    %s84 = sadd.s32 %s83, 1
    %s85 = scalar_select %p82, %s83, %s84
    %p88 = pneg %p82
    %p89 = scmp.eq.s32.totalorder %s9, 1
    %p90 = por %p88, %p89
    %p91 = scmp.ne.s32.totalorder %s83, %s86
    %p92 = scmp.eq.s32.totalorder %s9, 0
    %p93 = por %p91, %p92
    %p94 = scmp.ne.s32.totalorder %s83, %s86
    %p95 = scmp.eq.s32.totalorder %s14, 1
    %p96 = por %p94, %p95
    %p97 = scmp.ne.s32.totalorder %s86, %s87
    %p98 = scmp.eq.s32.totalorder %s14, 0
    %p99 = por %p97, %p98
    %p100 = scmp.ne.s32.totalorder %s86, %s87
    %p101 = scmp.eq.s32.totalorder %s15, 1
    %p102 = por %p100, %p101
    %p104 = scmp.ne.s32.totalorder %s87, %s103
    %p105 = scmp.eq.s32.totalorder %s15, 0
    %p106 = por %p104, %p105
    %s107 = ssub.s32 %s16, %s28
    %s108 = ssub.s32 %s17, %s24
    %s109 = sor.u32 %s107, %s108
    %p110 = scmp.eq.s32.totalorder %s109, 0
    %s112 = sadd.s32 %s111, 1
    %s113 = scalar_select %p110, %s111, %s112
    %p116 = pneg %p110
    %p117 = scmp.eq.s32.totalorder %s9, 1
    %p118 = por %p116, %p117
    %p119 = scmp.ne.s32.totalorder %s111, %s114
    %p120 = scmp.eq.s32.totalorder %s9, 0
    %p121 = por %p119, %p120
    %p122 = scmp.ne.s32.totalorder %s111, %s114
    %p123 = scmp.eq.s32.totalorder %s14, 1
    %p124 = por %p122, %p123
    %p125 = scmp.ne.s32.totalorder %s114, %s115
    %p126 = scmp.eq.s32.totalorder %s14, 0
    %p127 = por %p125, %p126
    %p128 = scmp.ne.s32.totalorder %s114, %s115
    %p129 = scmp.eq.s32.totalorder %s15, 1
    %p130 = por %p128, %p129
    %p132 = scmp.ne.s32.totalorder %s115, %s131
    %p133 = scmp.eq.s32.totalorder %s15, 0
    %p134 = por %p132, %p133
    %p135 = scmp.le.s32.totalorder 1, %s9
    %p136 = scmp.lt.s32.totalorder %s9, 3
    %p137 = pnand %p135, %p136
    %p138 = pneg %p137
    // Predicated region
    $region9: #{vgg_forward.7} parent=5 // pred_check
      _
    $region10: #{vgg_forward.7} parent=5 // pred_check_branch
      %140 = sbr.rel (%p137) target = $region12
    $region11: #{vgg_forward.7} parent=5 // pred_region
      %s141 = ssub.s32 %s9, 1
      // Predicated region
      $region13: #{vgg_forward.7} parent=11 // pred_check
        %p142 = pneg %p73
      $region14: #{vgg_forward.7} parent=11 // pred_check_branch
        %144 = sbr.rel (%p142) target = $region16
      $region15: #{vgg_forward.7} parent=11 // pred_region
        %p145 = scmp.lt.s32.totalorder %s19, 0
        %s146 = scalar_select %p145, %s19, 0
        %s147 = smul.addr %s146, 4
        %s148 = scalar_lea.vmem %s1, %s147
      $region16: #{vgg_forward.7} parent=11 // pred_fallthru
        _
      // Predicated region
      $region17: #{vgg_forward.7} parent=11 // pred_check
        %p149 = pneg %p99
      $region18: #{vgg_forward.7} parent=11 // pred_check_branch
        %151 = sbr.rel (%p149) target = $region20
      $region19: #{vgg_forward.7} parent=11 // pred_region
        %p152 = scmp.lt.s32.totalorder %s19, 0
        %s153 = scalar_select %p152, %s19, 0
        %s154 = scalar_lea.vmem %s2, %s153
      $region20: #{vgg_forward.7} parent=11 // pred_fallthru
        _
    $region12: #{vgg_forward.7} parent=5 // pred_fallthru
      _
    %p155 = scmp.lt.s32.totalorder %s9, 2
    // Predicated region
    $region21: #{vgg_forward.7} parent=5 // pred_check
      %p156 = pneg %p155
    $region22: #{vgg_forward.7} parent=5 // pred_check_branch
      %158 = sbr.rel (%p156) target = $region24
    $region23: #{vgg_forward.7} parent=5 // pred_region
      // Predicated region
      $region25: #{vgg_forward.7} parent=23 // pred_check
        %p159 = pneg %p41
      $region26: #{vgg_forward.7} parent=23 // pred_check_branch
        %161 = sbr.rel (%p159) target = $region28
      $region27: #{vgg_forward.7} parent=23 // pred_region
        %p162 = scmp.lt.s32.totalorder %s16, 1
        %s163 = scalar_select %p162, %s16, 1
        %s164 = smul.addr %s163, 36
        %s165 = smul.addr %s164, 4
        %s166 = scalar_lea.vmem %s0, %s165
      $region28: #{vgg_forward.7} parent=23 // pred_fallthru
        _
    $region24: #{vgg_forward.7} parent=5 // pred_fallthru
      _
    %p167 = scmp.le.s32.totalorder 1, %s9
    %p168 = scmp.lt.s32.totalorder %s9, 3
    %p169 = pnand %p167, %p168
    %p170 = pneg %p169
    // Predicated region
    $region29: #{vgg_forward.7} parent=5 // pred_check
      _
    $region30: #{vgg_forward.7} parent=5 // pred_check_branch
      %172 = sbr.rel (%p169) target = $region32
    $region31: #{vgg_forward.7} parent=5 // pred_region
      %s173 = ssub.s32 %s9, 1
      %p174 = scmp.lt.s32.totalorder %s18, 1
      %s175 = scalar_select %p174, %s18, 1
      %s176 = smul.addr %s175, 36
      %s177 = smul.addr %s176, 4
      %s178 = scalar_lea.vmem %s0, %s177
      %p179 = pneg %p47
      %p180 = pneg %p44
      %p181 = scmp.lt.s32.totalorder %s19, 0
      %s182 = scalar_select %p181, %s19, 0
      %s183 = smul.addr %s182, 4
      %s184 = scalar_lea.vmem %s1, %s183
      %p185 = pneg %p73
      %p186 = pneg %p70
      %p187 = scmp.lt.s32.totalorder %s19, 0
      %s188 = scalar_select %p187, %s19, 0
      %s189 = scalar_lea.vmem %s2, %s188
      %p190 = pneg %p99
      %p191 = pneg %p96
      %p192 = pneg %p127
      %p193 = pneg %p124
      %p194 = scmp.lt.s32.totalorder %s18, 1
      %s195 = scalar_select %p194, %s18, 1
      %p196 = scmp.lt.s32.totalorder %s19, 0
      %s197 = scalar_select %p196, %s19, 0
      %s198 = smul.addr %s195, 32
      %s199 = sadd.s32 %s197, %s198
      %s200 = smul.addr %s199, 4
      %s201 = scalar_lea.vmem %s3, %s200
      %p202 = scmp.lt.s32.totalorder %s18, 1
      %s203 = scalar_select %p202, %s18, 1
      %s204 = smul.addr %s203, 36
      %s205 = smul.addr %s204, 4
      %s206 = scalar_lea.vmem %s0, %s205
      %p207 = scmp.lt.s32.totalorder %s19, 0
      %s208 = scalar_select %p207, %s19, 0
      %s209 = smul.addr %s208, 4
      %s210 = scalar_lea.vmem %s1, %s209
      %p211 = scmp.lt.s32.totalorder %s19, 0
      %s212 = scalar_select %p211, %s19, 0
      %s213 = scalar_lea.vmem %s2, %s212
      %p214 = scmp.lt.s32.totalorder %s18, 1
      %s215 = scalar_select %p214, %s18, 1
      %p216 = scmp.lt.s32.totalorder %s19, 0
      %s217 = scalar_select %p216, %s19, 0
      %s218 = smul.addr %s215, 32
      %s219 = sadd.s32 %s217, %s218
      %s220 = smul.addr %s219, 4
      %s221 = scalar_lea.vmem %s3, %s220
      %v223 = vld [vmem:[%s206] sm:$0xf]
      %v224 = vld [vmem:[%s206 + $0x4] sm:$0xf]
      %v225 = vld [vmem:[%s206 + $0x8] sm:$0xf]
      %v226 = vld [vmem:[%s206 + $0xc] sm:$0xf]
      %v227 = vld [vmem:[%s206 + $0x10] sm:$0xf]
      %v228 = vld [vmem:[%s206 + $0x14] sm:$0xf]
      %v229 = vld [vmem:[%s206 + $0x18] sm:$0xf]
      %v230 = vld [vmem:[%s206 + $0x1c] sm:$0xf]
      %v231 = vld [vmem:[%s206 + $0x20] sm:$0xf]
      %v232 = vld [vmem:[%s206 + $0x24] sm:$0xf]
      %v233 = vld [vmem:[%s206 + $0x28] sm:$0xf]
      %v234 = vld [vmem:[%s206 + $0x2c] sm:$0xf]
      %v235 = vld [vmem:[%s206 + $0x30] sm:$0xf]
      %v236 = vld [vmem:[%s206 + $0x34] sm:$0xf]
      %v237 = vld [vmem:[%s206 + $0x38] sm:$0xf]
      %v238 = vld [vmem:[%s206 + $0x3c] sm:$0xf]
      %v239 = vld [vmem:[%s206 + $0x40] sm:$0xf]
      %v240 = vld [vmem:[%s206 + $0x44] sm:$0xf]
      %v241 = vld [vmem:[%s206 + $0x48] sm:$0xf]
      %v242 = vld [vmem:[%s206 + $0x4c] sm:$0xf]
      %v243 = vld [vmem:[%s206 + $0x50] sm:$0xf]
      %v244 = vld [vmem:[%s206 + $0x54] sm:$0xf]
      %v245 = vld [vmem:[%s206 + $0x58] sm:$0xf]
      %v246 = vld [vmem:[%s206 + $0x5c] sm:$0xf]
      %v247 = vld [vmem:[%s206 + $0x60] sm:$0xf]
      %v248 = vld [vmem:[%s206 + $0x64] sm:$0xf]
      %v249 = vld [vmem:[%s206 + $0x68] sm:$0xf]
      %v250 = vld [vmem:[%s206 + $0x6c] sm:$0xf]
      %v251 = vld [vmem:[%s206 + $0x70] sm:$0xf]
      %v252 = vld [vmem:[%s206 + $0x74] sm:$0xf]
      %v253 = vld [vmem:[%s206 + $0x78] sm:$0xf]
      %v254 = vld [vmem:[%s206 + $0x7c] sm:$0xf]
      %v255 = vld [vmem:[%s210] sm:$0xf]
      %v256 = vld [vmem:[%s210 + $0x4] sm:$0xf]
      %v257 = vld [vmem:[%s210 + $0x8] sm:$0xf]
      %v258 = vld [vmem:[%s210 + $0xc] sm:$0xf]
      %v259 = vld [vmem:[%s210 + $0x10] sm:$0xf]
      %v260 = vld [vmem:[%s210 + $0x14] sm:$0xf]
      %v261 = vld [vmem:[%s206 + $0x80] sm:$0xf]
      %v262 = vld [vmem:[%s206 + $0x84] sm:$0xf]
      %s263 = scalar_lea.vmem %s210, 24
      %v264 = vld [vmem:[%s263] sm:$0xf]
      %v265 = vld [vmem:[%s263 + $0x4] sm:$0xf]
      %v266 = vld [vmem:[%s263 + $0x8] sm:$0xf]
      %v267 = vld [vmem:[%s263 + $0xc] sm:$0xf]
      %v268 = vld [vmem:[%s263 + $0x10] sm:$0xf]
      %v269 = vld [vmem:[%s263 + $0x14] sm:$0xf]
      %v302 = vunpack.c.l.b16 %v225
      %v303 = vunpack.c.l.b16 %v226
      %v304 = vunpack.c.l.b16 %v227
      %v305 = vunpack.c.l.b16 %v228
      %v306 = vunpack.c.l.b16 %v229
      %v307 = vunpack.c.l.b16 %v230
      %v308 = vunpack.c.l.b16 %v231
      %v309 = vunpack.c.l.b16 %v232
      %v310 = vunpack.c.l.b16 %v233
      %v311 = vunpack.c.l.b16 %v234
      %v312 = vunpack.c.l.b16 %v235
      %v313 = vunpack.c.l.b16 %v236
      %v314 = vunpack.c.l.b16 %v237
      %v315 = vunpack.c.l.b16 %v238
      %v316 = vunpack.c.l.b16 %v239
      %v317 = vunpack.c.l.b16 %v240
      %v318 = vunpack.c.l.b16 %v241
      %v319 = vunpack.c.l.b16 %v242
      %v320 = vunpack.c.l.b16 %v243
      %v321 = vunpack.c.l.b16 %v244
      %v322 = vunpack.c.l.b16 %v245
      %v323 = vunpack.c.l.b16 %v246
      %v324 = vunpack.c.l.b16 %v247
      %v325 = vunpack.c.l.b16 %v248
      %v326 = vunpack.c.l.b16 %v249
      %v327 = vunpack.c.l.b16 %v250
      %v328 = vunpack.c.l.b16 %v251
      %v329 = vunpack.c.l.b16 %v252
      %v330 = vunpack.c.l.b16 %v253
      %v331 = vunpack.c.l.b16 %v254
      %v332 = vunpack.c.l.b16 %v261
      %v333 = vunpack.c.l.b16 %v262
      %v334 = vpack.c.b16 %v303, %v302
      %v335 = vpack.c.b16 %v305, %v304
      %v336 = vpack.c.b16 %v307, %v306
      %v337 = vpack.c.b16 %v309, %v308
      %v338 = vpack.c.b16 %v311, %v310
      %v339 = vpack.c.b16 %v313, %v312
      %v340 = vpack.c.b16 %v315, %v314
      %v341 = vpack.c.b16 %v317, %v316
      %v342 = vpack.c.b16 %v319, %v318
      %v343 = vpack.c.b16 %v321, %v320
      %v344 = vpack.c.b16 %v323, %v322
      %v345 = vpack.c.b16 %v325, %v324
      %v346 = vpack.c.b16 %v327, %v326
      %v347 = vpack.c.b16 %v329, %v328
      %v348 = vpack.c.b16 %v331, %v330
      %v349 = vpack.c.b16 %v333, %v332
      %v356 = vunpack.c.l.b16 %v264
      %v357 = vunpack.c.l.b16 %v265
      %v358 = vunpack.c.l.b16 %v266
      %v359 = vunpack.c.l.b16 %v267
      %v360 = vunpack.c.l.b16 %v268
      %v361 = vunpack.c.l.b16 %v269
      %v362 = vpack.c.b16 %v357, %v356
      %v363 = vpack.c.b16 %v359, %v358
      %v364 = vpack.c.b16 %v361, %v360
      %vm368 = vcmask 392192
      %v370 = vsel %vm368, %v334, 0
      %v373 = vsel %vm368, %v335, 0
      %v376 = vsel %vm368, %v336, 0
      %v379 = vsel %vm368, %v337, 0
      %v382 = vsel %vm368, %v338, 0
      %v385 = vsel %vm368, %v339, 0
      %v388 = vsel %vm368, %v340, 0
      %v391 = vsel %vm368, %v341, 0
      %v394 = vsel %vm368, %v342, 0
      %v397 = vsel %vm368, %v343, 0
      %v400 = vsel %vm368, %v344, 0
      %v403 = vsel %vm368, %v345, 0
      %v406 = vsel %vm368, %v346, 0
      %v409 = vsel %vm368, %v347, 0
      %v412 = vsel %vm368, %v348, 0
      %v415 = vsel %vm368, %v349, 0
      %417 = vmatprep.subr.bf16.mxu0 0
      %418 = vmatpush1.bf16.msra.mxu0 %v362
      %419 = vmatprep.subr.bf16.mxu0 0
      %420 = vmatpush1.bf16.msra.mxu0 %v363
      %421 = vmatprep.subr.bf16.mxu0 0
      %422 = vmatpush1.bf16.msra.mxu0 %v364
      %423 = vmatprep.subr.bf16.mxu0 0
      %424 = vmatpush1.bf16.msra.mxu0 0
      %425 = vmatprep.subr.bf16.mxu0 0
      %426 = vmatpush1.bf16.msra.mxu0 0
      %427 = vmatprep.subr.bf16.mxu0 0
      %428 = vmatpush1.bf16.msra.mxu0 0
      %429 = vmatprep.subr.bf16.mxu0 0
      %430 = vmatpush1.bf16.msra.mxu0 0
      %431 = vmatprep.subr.bf16.mxu0 0
      %432 = vmatpush1.bf16.msra.mxu0 0
      %433 = vmatprep.subr.bf16.mxu0 0
      %434 = vmatpush1.bf16.msra.mxu0 0
      %435 = vmatprep.subr.bf16.mxu0 0
      %436 = vmatpush1.bf16.msra.mxu0 0
      %437 = vmatprep.subr.bf16.mxu0 0
      %438 = vmatpush1.bf16.msra.mxu0 0
      %439 = vmatprep.subr.bf16.mxu0 0
      %440 = vmatpush1.bf16.msra.mxu0 0
      %441 = vmatprep.subr.bf16.mxu0 0
      %442 = vmatpush1.bf16.msra.mxu0 0
      %443 = vmatprep.subr.bf16.mxu0 0
      %444 = vmatpush1.bf16.msra.mxu0 0
      %445 = vmatprep.subr.bf16.mxu0 0
      %446 = vmatpush1.bf16.msra.mxu0 0
      %447 = vmatprep.subr.bf16.mxu0 0
      %448 = vmatpush1.bf16.msra.mxu0 0
      %449 = vmatprep.mubr.bf16.mxu0 0
      %450 = vmatmul.mubr.bf16.gmra.mrb[0].mxu0 %v370
      %v451 = vpop.f32.mrb[0].mxu0
      %v452 = vadd.f32 0.0, %v451
      %v453 = vpop.f32.mrb[0].mxu0
      %v454 = vpop.f32.mrb[0].mxu0
      %v455 = vadd.f32 0.0, %v454
      %v456 = vpop.f32.mrb[0].mxu0
      %457 = vmatprep.mubr.bf16.mxu0 0
      %458 = vmatmul.mubr.bf16.gmra.mrb[0].mxu0 %v373
      %v459 = vpop.f32.mrb[0].mxu0
      %v460 = vadd.f32 0.0, %v459
      %v461 = vpop.f32.mrb[0].mxu0
      %v462 = vpop.f32.mrb[0].mxu0
      %v463 = vadd.f32 0.0, %v462
      %v464 = vpop.f32.mrb[0].mxu0
      %465 = vmatprep.mubr.bf16.mxu0 0
      %466 = vmatmul.mubr.bf16.gmra.mrb[0].mxu0 %v376
      %v467 = vpop.f32.mrb[0].mxu0
      %v468 = vadd.f32 0.0, %v467
      %v469 = vpop.f32.mrb[0].mxu0
      %v470 = vpop.f32.mrb[0].mxu0
      %v471 = vadd.f32 0.0, %v470
      %v472 = vpop.f32.mrb[0].mxu0
      %473 = vmatprep.mubr.bf16.mxu0 0
      %474 = vmatmul.mubr.bf16.gmra.mrb[0].mxu0 %v379
      %v475 = vpop.f32.mrb[0].mxu0
      %v476 = vadd.f32 0.0, %v475
      %v477 = vpop.f32.mrb[0].mxu0
      %v478 = vpop.f32.mrb[0].mxu0
      %v479 = vadd.f32 0.0, %v478
      %v480 = vpop.f32.mrb[0].mxu0
      %481 = vmatprep.mubr.bf16.mxu0 0
      %482 = vmatmul.mubr.bf16.gmra.mrb[0].mxu0 %v382
      %v483 = vpop.f32.mrb[0].mxu0
      %v484 = vadd.f32 0.0, %v483
      %v485 = vpop.f32.mrb[0].mxu0
      %v486 = vpop.f32.mrb[0].mxu0
      %v487 = vadd.f32 0.0, %v486
      %v488 = vpop.f32.mrb[0].mxu0
      %489 = vmatprep.mubr.bf16.mxu0 0
      %490 = vmatmul.mubr.bf16.gmra.mrb[0].mxu0 %v385
      %v491 = vpop.f32.mrb[0].mxu0
      %v492 = vadd.f32 0.0, %v491
      %v493 = vpop.f32.mrb[0].mxu0
      %v494 = vpop.f32.mrb[0].mxu0
      %v495 = vadd.f32 0.0, %v494
      %v496 = vpop.f32.mrb[0].mxu0
      %497 = vmatprep.mubr.bf16.mxu0 0
      %498 = vmatmul.mubr.bf16.gmra.mrb[0].mxu0 %v388
      %v499 = vpop.f32.mrb[0].mxu0
      %v500 = vadd.f32 0.0, %v499
      %v501 = vpop.f32.mrb[0].mxu0
      %v502 = vpop.f32.mrb[0].mxu0
      %v503 = vadd.f32 0.0, %v502
      %v504 = vpop.f32.mrb[0].mxu0
      %505 = vmatprep.mubr.bf16.mxu0 0
      %506 = vmatmul.mubr.bf16.gmra.mrb[0].mxu0 %v391
      %v507 = vpop.f32.mrb[0].mxu0
      %v508 = vadd.f32 0.0, %v507
      %v509 = vpop.f32.mrb[0].mxu0
      %v510 = vpop.f32.mrb[0].mxu0
      %v511 = vadd.f32 0.0, %v510
      %v512 = vpop.f32.mrb[0].mxu0
      %513 = vmatprep.mubr.bf16.mxu0 0
      %514 = vmatmul.mubr.bf16.gmra.mrb[0].mxu0 %v394
      %v515 = vpop.f32.mrb[0].mxu0
      %v516 = vadd.f32 0.0, %v515
      %v517 = vpop.f32.mrb[0].mxu0
      %v518 = vpop.f32.mrb[0].mxu0
      %v519 = vadd.f32 0.0, %v518
      %v520 = vpop.f32.mrb[0].mxu0
      %521 = vmatprep.mubr.bf16.mxu0 0
      %522 = vmatmul.mubr.bf16.gmra.mrb[0].mxu0 %v397
      %v523 = vpop.f32.mrb[0].mxu0
      %v524 = vadd.f32 0.0, %v523
      %v525 = vpop.f32.mrb[0].mxu0
      %v526 = vpop.f32.mrb[0].mxu0
      %v527 = vadd.f32 0.0, %v526
      %v528 = vpop.f32.mrb[0].mxu0
      %529 = vmatprep.mubr.bf16.mxu0 0
      %530 = vmatmul.mubr.bf16.gmra.mrb[0].mxu0 %v400
      %v531 = vpop.f32.mrb[0].mxu0
      %v532 = vadd.f32 0.0, %v531
      %v533 = vpop.f32.mrb[0].mxu0
      %v534 = vpop.f32.mrb[0].mxu0
      %v535 = vadd.f32 0.0, %v534
      %v536 = vpop.f32.mrb[0].mxu0
      %537 = vmatprep.mubr.bf16.mxu0 0
      %538 = vmatmul.mubr.bf16.gmra.mrb[0].mxu0 %v403
      %v539 = vpop.f32.mrb[0].mxu0
      %v540 = vadd.f32 0.0, %v539
      %v541 = vpop.f32.mrb[0].mxu0
      %v542 = vpop.f32.mrb[0].mxu0
      %v543 = vadd.f32 0.0, %v542
      %v544 = vpop.f32.mrb[0].mxu0
      %545 = vmatprep.mubr.bf16.mxu0 0
      %546 = vmatmul.mubr.bf16.gmra.mrb[0].mxu0 %v406
      %v547 = vpop.f32.mrb[0].mxu0
      %v548 = vadd.f32 0.0, %v547
      %v549 = vpop.f32.mrb[0].mxu0
      %v550 = vpop.f32.mrb[0].mxu0
      %v551 = vadd.f32 0.0, %v550
      %v552 = vpop.f32.mrb[0].mxu0
      %553 = vmatprep.mubr.bf16.mxu0 0
      %554 = vmatmul.mubr.bf16.gmra.mrb[0].mxu0 %v409
      %v555 = vpop.f32.mrb[0].mxu0
      %v556 = vadd.f32 0.0, %v555
      %v557 = vpop.f32.mrb[0].mxu0
      %v558 = vpop.f32.mrb[0].mxu0
      %v559 = vadd.f32 0.0, %v558
      %v560 = vpop.f32.mrb[0].mxu0
      %561 = vmatprep.mubr.bf16.mxu0 0
      %562 = vmatmul.mubr.bf16.gmra.mrb[0].mxu0 %v412
      %v563 = vpop.f32.mrb[0].mxu0
      %v564 = vadd.f32 0.0, %v563
      %v565 = vpop.f32.mrb[0].mxu0
      %v566 = vpop.f32.mrb[0].mxu0
      %v567 = vadd.f32 0.0, %v566
      %v568 = vpop.f32.mrb[0].mxu0
      %569 = vmatprep.mubr.bf16.mxu0 0
      %570 = vmatmul.mubr.bf16.gmra.mrb[0].mxu0 %v415
      %v571 = vpop.f32.mrb[0].mxu0
      %v572 = vadd.f32 0.0, %v571
      %v573 = vpop.f32.mrb[0].mxu0
      %v574 = vpop.f32.mrb[0].mxu0
      %v575 = vadd.f32 0.0, %v574
      %v576 = vpop.f32.mrb[0].mxu0
      %577 = vdwg.mxu0
      %v580 = vunpack.c.l.b16 %v223
      %v581 = vunpack.c.l.b16 %v224
      %v582 = vpack.c.b16 %v581, %v580
      %v589 = vunpack.c.l.b16 %v255
      %v590 = vunpack.c.l.b16 %v256
      %v591 = vunpack.c.l.b16 %v257
      %v592 = vunpack.c.l.b16 %v258
      %v593 = vunpack.c.l.b16 %v259
      %v594 = vunpack.c.l.b16 %v260
      %v595 = vpack.c.b16 %v590, %v589
      %v596 = vpack.c.b16 %v592, %v591
      %v597 = vpack.c.b16 %v594, %v593
      %v602 = vsel %vm368, %v582, 0
      %604 = vmatprep.subr.bf16.mxu0 0
      %605 = vmatpush1.bf16.msra.mxu0 %v595
      %606 = vmatprep.subr.bf16.mxu0 0
      %607 = vmatpush1.bf16.msra.mxu0 %v596
      %608 = vmatprep.subr.bf16.mxu0 0
      %609 = vmatpush1.bf16.msra.mxu0 %v597
      %610 = vmatprep.subr.bf16.mxu0 0
      %611 = vmatpush1.bf16.msra.mxu0 0
      %612 = vmatprep.subr.bf16.mxu0 0
      %613 = vmatpush1.bf16.msra.mxu0 0
      %614 = vmatprep.subr.bf16.mxu0 0
      %615 = vmatpush1.bf16.msra.mxu0 0
      %616 = vmatprep.subr.bf16.mxu0 0
      %617 = vmatpush1.bf16.msra.mxu0 0
      %618 = vmatprep.subr.bf16.mxu0 0
      %619 = vmatpush1.bf16.msra.mxu0 0
      %620 = vmatprep.subr.bf16.mxu0 0
      %621 = vmatpush1.bf16.msra.mxu0 0
      %622 = vmatprep.subr.bf16.mxu0 0
      %623 = vmatpush1.bf16.msra.mxu0 0
      %624 = vmatprep.subr.bf16.mxu0 0
      %625 = vmatpush1.bf16.msra.mxu0 0
      %626 = vmatprep.subr.bf16.mxu0 0
      %627 = vmatpush1.bf16.msra.mxu0 0
      %628 = vmatprep.subr.bf16.mxu0 0
      %629 = vmatpush1.bf16.msra.mxu0 0
      %630 = vmatprep.subr.bf16.mxu0 0
      %631 = vmatpush1.bf16.msra.mxu0 0
      %632 = vmatprep.subr.bf16.mxu0 0
      %633 = vmatpush1.bf16.msra.mxu0 0
      %634 = vmatprep.subr.bf16.mxu0 0
      %635 = vmatpush1.bf16.msra.mxu0 0
      %636 = vmatprep.mubr.bf16.mxu0 0
      %637 = vmatmul.mubr.bf16.gmra.mrb[0].mxu0 %v602
      %v638 = vpop.f32.mrb[0].mxu0
      %v639 = vadd.f32 %v452, %v638
      %v640 = vpop.f32.mrb[0].mxu0
      %v641 = vpop.f32.mrb[0].mxu0
      %v642 = vadd.f32 %v455, %v641
      %v643 = vpop.f32.mrb[0].mxu0
      %644 = vmatprep.mubr.bf16.mxu0 0
      %645 = vmatmul.mubr.bf16.gmra.mrb[0].mxu0 %v370
      %v646 = vpop.f32.mrb[0].mxu0
      %v647 = vadd.f32 %v460, %v646
      %v648 = vpop.f32.mrb[0].mxu0
      %v649 = vpop.f32.mrb[0].mxu0
      %v650 = vadd.f32 %v463, %v649
      %v651 = vpop.f32.mrb[0].mxu0
      %652 = vmatprep.mubr.bf16.mxu0 0
      %653 = vmatmul.mubr.bf16.gmra.mrb[0].mxu0 %v373
      %v654 = vpop.f32.mrb[0].mxu0
      %v655 = vadd.f32 %v468, %v654
      %v656 = vpop.f32.mrb[0].mxu0
      %v657 = vpop.f32.mrb[0].mxu0
      %v658 = vadd.f32 %v471, %v657
      %v659 = vpop.f32.mrb[0].mxu0
      %660 = vmatprep.mubr.bf16.mxu0 0
      %661 = vmatmul.mubr.bf16.gmra.mrb[0].mxu0 %v376
      %v662 = vpop.f32.mrb[0].mxu0
      %v663 = vadd.f32 %v476, %v662
      %v664 = vpop.f32.mrb[0].mxu0
      %v665 = vpop.f32.mrb[0].mxu0
      %v666 = vadd.f32 %v479, %v665
      %v667 = vpop.f32.mrb[0].mxu0
      %668 = vmatprep.mubr.bf16.mxu0 0
      %669 = vmatmul.mubr.bf16.gmra.mrb[0].mxu0 %v379
      %v670 = vpop.f32.mrb[0].mxu0
      %v671 = vadd.f32 %v484, %v670
      %v672 = vpop.f32.mrb[0].mxu0
      %v673 = vpop.f32.mrb[0].mxu0
      %v674 = vadd.f32 %v487, %v673
      %v675 = vpop.f32.mrb[0].mxu0
      %676 = vmatprep.mubr.bf16.mxu0 0
      %677 = vmatmul.mubr.bf16.gmra.mrb[0].mxu0 %v382
      %v678 = vpop.f32.mrb[0].mxu0
      %v679 = vadd.f32 %v492, %v678
      %v680 = vpop.f32.mrb[0].mxu0
      %v681 = vpop.f32.mrb[0].mxu0
      %v682 = vadd.f32 %v495, %v681
      %v683 = vpop.f32.mrb[0].mxu0
      %684 = vmatprep.mubr.bf16.mxu0 0
      %685 = vmatmul.mubr.bf16.gmra.mrb[0].mxu0 %v385
      %v686 = vpop.f32.mrb[0].mxu0
      %v687 = vadd.f32 %v500, %v686
      %v688 = vpop.f32.mrb[0].mxu0
      %v689 = vpop.f32.mrb[0].mxu0
      %v690 = vadd.f32 %v503, %v689
      %v691 = vpop.f32.mrb[0].mxu0
      %692 = vmatprep.mubr.bf16.mxu0 0
      %693 = vmatmul.mubr.bf16.gmra.mrb[0].mxu0 %v388
      %v694 = vpop.f32.mrb[0].mxu0
      %v695 = vadd.f32 %v508, %v694
      %v696 = vpop.f32.mrb[0].mxu0
      %v697 = vpop.f32.mrb[0].mxu0
      %v698 = vadd.f32 %v511, %v697
      %v699 = vpop.f32.mrb[0].mxu0
      %700 = vmatprep.mubr.bf16.mxu0 0
      %701 = vmatmul.mubr.bf16.gmra.mrb[0].mxu0 %v391
      %v702 = vpop.f32.mrb[0].mxu0
      %v703 = vadd.f32 %v516, %v702
      %v704 = vpop.f32.mrb[0].mxu0
      %v705 = vpop.f32.mrb[0].mxu0
      %v706 = vadd.f32 %v519, %v705
      %v707 = vpop.f32.mrb[0].mxu0
      %708 = vmatprep.mubr.bf16.mxu0 0
      %709 = vmatmul.mubr.bf16.gmra.mrb[0].mxu0 %v394
      %v710 = vpop.f32.mrb[0].mxu0
      %v711 = vadd.f32 %v524, %v710
      %v712 = vpop.f32.mrb[0].mxu0
      %v713 = vpop.f32.mrb[0].mxu0
      %v714 = vadd.f32 %v527, %v713
      %v715 = vpop.f32.mrb[0].mxu0
      %716 = vmatprep.mubr.bf16.mxu0 0
      %717 = vmatmul.mubr.bf16.gmra.mrb[0].mxu0 %v397
      %v718 = vpop.f32.mrb[0].mxu0
      %v719 = vadd.f32 %v532, %v718
      %v720 = vpop.f32.mrb[0].mxu0
      %v721 = vpop.f32.mrb[0].mxu0
      %v722 = vadd.f32 %v535, %v721
      %v723 = vpop.f32.mrb[0].mxu0
      %724 = vmatprep.mubr.bf16.mxu0 0
      %725 = vmatmul.mubr.bf16.gmra.mrb[0].mxu0 %v400
      %v726 = vpop.f32.mrb[0].mxu0
      %v727 = vadd.f32 %v540, %v726
      %v728 = vpop.f32.mrb[0].mxu0
      %v729 = vpop.f32.mrb[0].mxu0
      %v730 = vadd.f32 %v543, %v729
      %v731 = vpop.f32.mrb[0].mxu0
      %732 = vmatprep.mubr.bf16.mxu0 0
      %733 = vmatmul.mubr.bf16.gmra.mrb[0].mxu0 %v403
      %v734 = vpop.f32.mrb[0].mxu0
      %v735 = vadd.f32 %v548, %v734
      %v736 = vpop.f32.mrb[0].mxu0
      %v737 = vpop.f32.mrb[0].mxu0
      %v738 = vadd.f32 %v551, %v737
      %v739 = vpop.f32.mrb[0].mxu0
      %740 = vmatprep.mubr.bf16.mxu0 0
      %741 = vmatmul.mubr.bf16.gmra.mrb[0].mxu0 %v406
      %v742 = vpop.f32.mrb[0].mxu0
      %v743 = vadd.f32 %v556, %v742
      %v744 = vpop.f32.mrb[0].mxu0
      %v745 = vpop.f32.mrb[0].mxu0
      %v746 = vadd.f32 %v559, %v745
      %v747 = vpop.f32.mrb[0].mxu0
      %748 = vmatprep.mubr.bf16.mxu0 0
      %749 = vmatmul.mubr.bf16.gmra.mrb[0].mxu0 %v409
      %v750 = vpop.f32.mrb[0].mxu0
      %v751 = vadd.f32 %v564, %v750
      %v752 = vpop.f32.mrb[0].mxu0
      %v753 = vpop.f32.mrb[0].mxu0
      %v754 = vadd.f32 %v567, %v753
      %v755 = vpop.f32.mrb[0].mxu0
      %756 = vmatprep.mubr.bf16.mxu0 0
      %757 = vmatmul.mubr.bf16.gmra.mrb[0].mxu0 %v412
      %v758 = vpop.f32.mrb[0].mxu0
      %v759 = vadd.f32 %v572, %v758
      %v760 = vpop.f32.mrb[0].mxu0
      %v761 = vpop.f32.mrb[0].mxu0
      %v762 = vadd.f32 %v575, %v761
      %v763 = vpop.f32.mrb[0].mxu0
      %764 = vdwg.mxu0
      %v765 = vld [vmem:[%s206 + $0x10] sm:$0xf]
      %v766 = vld [vmem:[%s206 + $0x14] sm:$0xf]
      %v767 = vld [vmem:[%s206 + $0x18] sm:$0xf]
      %v768 = vld [vmem:[%s206 + $0x1c] sm:$0xf]
      %v769 = vld [vmem:[%s206 + $0x20] sm:$0xf]
      %v770 = vld [vmem:[%s206 + $0x24] sm:$0xf]
      %v771 = vld [vmem:[%s206 + $0x28] sm:$0xf]
      %v772 = vld [vmem:[%s206 + $0x2c] sm:$0xf]
      %v773 = vld [vmem:[%s206 + $0x30] sm:$0xf]
      %v774 = vld [vmem:[%s206 + $0x34] sm:$0xf]
      %v775 = vld [vmem:[%s206 + $0x38] sm:$0xf]
      %v776 = vld [vmem:[%s206 + $0x3c] sm:$0xf]
      %v777 = vld [vmem:[%s206 + $0x40] sm:$0xf]
      %v778 = vld [vmem:[%s206 + $0x44] sm:$0xf]
      %v779 = vld [vmem:[%s206 + $0x48] sm:$0xf]
      %v780 = vld [vmem:[%s206 + $0x4c] sm:$0xf]
      %v781 = vld [vmem:[%s206 + $0x50] sm:$0xf]
      %v782 = vld [vmem:[%s206 + $0x54] sm:$0xf]
      %v783 = vld [vmem:[%s206 + $0x58] sm:$0xf]
      %v784 = vld [vmem:[%s206 + $0x5c] sm:$0xf]
      %v785 = vld [vmem:[%s206 + $0x60] sm:$0xf]
      %v786 = vld [vmem:[%s206 + $0x64] sm:$0xf]
      %v787 = vld [vmem:[%s206 + $0x68] sm:$0xf]
      %v788 = vld [vmem:[%s206 + $0x6c] sm:$0xf]
      %v789 = vld [vmem:[%s206 + $0x70] sm:$0xf]
      %v790 = vld [vmem:[%s206 + $0x74] sm:$0xf]
      %v791 = vld [vmem:[%s206 + $0x78] sm:$0xf]
      %v792 = vld [vmem:[%s206 + $0x7c] sm:$0xf]
      %v793 = vld [vmem:[%s206 + $0x80] sm:$0xf]
      %v794 = vld [vmem:[%s206 + $0x84] sm:$0xf]
      %v795 = vld [vmem:[%s206 + $0x88] sm:$0xf]
      %v796 = vld [vmem:[%s206 + $0x8c] sm:$0xf]
      %s797 = scalar_lea.vmem %s210, 48
      %v798 = vld [vmem:[%s797] sm:$0xf]
      %v799 = vld [vmem:[%s797 + $0x4] sm:$0xf]
      %v800 = vld [vmem:[%s797 + $0x8] sm:$0xf]
      %v801 = vld [vmem:[%s797 + $0xc] sm:$0xf]
      %v802 = vld [vmem:[%s797 + $0x10] sm:$0xf]
      %v803 = vld [vmem:[%s797 + $0x14] sm:$0xf]
      %v836 = vunpack.c.l.b16 %v765
      %v837 = vunpack.c.l.b16 %v766
      %v838 = vunpack.c.l.b16 %v767
      %v839 = vunpack.c.l.b16 %v768
      %v840 = vunpack.c.l.b16 %v769
      %v841 = vunpack.c.l.b16 %v770
      %v842 = vunpack.c.l.b16 %v771
      %v843 = vunpack.c.l.b16 %v772
      %v844 = vunpack.c.l.b16 %v773
      %v845 = vunpack.c.l.b16 %v774
      %v846 = vunpack.c.l.b16 %v775
      %v847 = vunpack.c.l.b16 %v776
      %v848 = vunpack.c.l.b16 %v777
      %v849 = vunpack.c.l.b16 %v778
      %v850 = vunpack.c.l.b16 %v779
      %v851 = vunpack.c.l.b16 %v780
      %v852 = vunpack.c.l.b16 %v781
      %v853 = vunpack.c.l.b16 %v782
      %v854 = vunpack.c.l.b16 %v783
      %v855 = vunpack.c.l.b16 %v784
      %v856 = vunpack.c.l.b16 %v785
      %v857 = vunpack.c.l.b16 %v786
      %v858 = vunpack.c.l.b16 %v787
      %v859 = vunpack.c.l.b16 %v788
      %v860 = vunpack.c.l.b16 %v789
      %v861 = vunpack.c.l.b16 %v790
      %v862 = vunpack.c.l.b16 %v791
      %v863 = vunpack.c.l.b16 %v792
      %v864 = vunpack.c.l.b16 %v793
      %v865 = vunpack.c.l.b16 %v794
      %v866 = vunpack.c.l.b16 %v795
      %v867 = vunpack.c.l.b16 %v796
      %v868 = vpack.c.b16 %v837, %v836
      %v869 = vpack.c.b16 %v839, %v838
      %v870 = vpack.c.b16 %v841, %v840
      %v871 = vpack.c.b16 %v843, %v842
      %v872 = vpack.c.b16 %v845, %v844
      %v873 = vpack.c.b16 %v847, %v846
      %v874 = vpack.c.b16 %v849, %v848
      %v875 = vpack.c.b16 %v851, %v850
      %v876 = vpack.c.b16 %v853, %v852
      %v877 = vpack.c.b16 %v855, %v854
      %v878 = vpack.c.b16 %v857, %v856
      %v879 = vpack.c.b16 %v859, %v858
      %v880 = vpack.c.b16 %v861, %v860
      %v881 = vpack.c.b16 %v863, %v862
      %v882 = vpack.c.b16 %v865, %v864
      %v883 = vpack.c.b16 %v867, %v866
      %v890 = vunpack.c.l.b16 %v798
      %v891 = vunpack.c.l.b16 %v799
      %v892 = vunpack.c.l.b16 %v800
      %v893 = vunpack.c.l.b16 %v801
      %v894 = vunpack.c.l.b16 %v802
      %v895 = vunpack.c.l.b16 %v803
      %v896 = vpack.c.b16 %v891, %v890
      %v897 = vpack.c.b16 %v893, %v892
      %v898 = vpack.c.b16 %v895, %v894
      %v903 = vsel %vm368, %v868, 0
      %v906 = vsel %vm368, %v869, 0
      %v909 = vsel %vm368, %v870, 0
      %v912 = vsel %vm368, %v871, 0
      %v915 = vsel %vm368, %v872, 0
      %v918 = vsel %vm368, %v873, 0
      %v921 = vsel %vm368, %v874, 0
      %v924 = vsel %vm368, %v875, 0
      %v927 = vsel %vm368, %v876, 0
      %v930 = vsel %vm368, %v877, 0
      %v933 = vsel %vm368, %v878, 0
      %v936 = vsel %vm368, %v879, 0
      %v939 = vsel %vm368, %v880, 0
      %v942 = vsel %vm368, %v881, 0
      %v945 = vsel %vm368, %v882, 0
      %v948 = vsel %vm368, %v883, 0
      %950 = vmatprep.subr.bf16.mxu0 0
      %951 = vmatpush1.bf16.msra.mxu0 %v896
      %952 = vmatprep.subr.bf16.mxu0 0
      %953 = vmatpush1.bf16.msra.mxu0 %v897
      %954 = vmatprep.subr.bf16.mxu0 0
      %955 = vmatpush1.bf16.msra.mxu0 %v898
      %956 = vmatprep.subr.bf16.mxu0 0
      %957 = vmatpush1.bf16.msra.mxu0 0
      %958 = vmatprep.subr.bf16.mxu0 0
      %959 = vmatpush1.bf16.msra.mxu0 0
      %960 = vmatprep.subr.bf16.mxu0 0
      %961 = vmatpush1.bf16.msra.mxu0 0
      %962 = vmatprep.subr.bf16.mxu0 0
      %963 = vmatpush1.bf16.msra.mxu0 0
      %964 = vmatprep.subr.bf16.mxu0 0
      %965 = vmatpush1.bf16.msra.mxu0 0
      %966 = vmatprep.subr.bf16.mxu0 0
      %967 = vmatpush1.bf16.msra.mxu0 0
      %968 = vmatprep.subr.bf16.mxu0 0
      %969 = vmatpush1.bf16.msra.mxu0 0
      %970 = vmatprep.subr.bf16.mxu0 0
      %971 = vmatpush1.bf16.msra.mxu0 0
      %972 = vmatprep.subr.bf16.mxu0 0
      %973 = vmatpush1.bf16.msra.mxu0 0
      %974 = vmatprep.subr.bf16.mxu0 0
      %975 = vmatpush1.bf16.msra.mxu0 0
      %976 = vmatprep.subr.bf16.mxu0 0
      %977 = vmatpush1.bf16.msra.mxu0 0
      %978 = vmatprep.subr.bf16.mxu0 0
      %979 = vmatpush1.bf16.msra.mxu0 0
      %980 = vmatprep.subr.bf16.mxu0 0
      %981 = vmatpush1.bf16.msra.mxu0 0
      %982 = vmatprep.mubr.bf16.mxu0 0
      %983 = vmatmul.mubr.bf16.gmra.mrb[0].mxu0 %v903
      %v984 = vpop.f32.mrb[0].mxu0
      %v985 = vadd.f32 0.0, %v984
      %v986 = vpop.f32.mrb[0].mxu0
      %v987 = vpop.f32.mrb[0].mxu0
      %v988 = vadd.f32 0.0, %v987
      %v989 = vpop.f32.mrb[0].mxu0
      %990 = vmatprep.mubr.bf16.mxu0 0
      %991 = vmatmul.mubr.bf16.gmra.mrb[0].mxu0 %v906
      %v992 = vpop.f32.mrb[0].mxu0
      %v993 = vadd.f32 0.0, %v992
      %v994 = vpop.f32.mrb[0].mxu0
      %v995 = vpop.f32.mrb[0].mxu0
      %v996 = vadd.f32 0.0, %v995
      %v997 = vpop.f32.mrb[0].mxu0
      %998 = vmatprep.mubr.bf16.mxu0 0
      %999 = vmatmul.mubr.bf16.gmra.mrb[0].mxu0 %v909
      %v1000 = vpop.f32.mrb[0].mxu0
      %v1001 = vadd.f32 0.0, %v1000
      %v1002 = vpop.f32.mrb[0].mxu0
      %v1003 = vpop.f32.mrb[0].mxu0
      %v1004 = vadd.f32 0.0, %v1003
      %v1005 = vpop.f32.mrb[0].mxu0
      %1006 = vmatprep.mubr.bf16.mxu0 0
      %1007 = vmatmul.mubr.bf16.gmra.mrb[0].mxu0 %v912
      %v1008 = vpop.f32.mrb[0].mxu0
      %v1009 = vadd.f32 0.0, %v1008
      %v1010 = vpop.f32.mrb[0].mxu0
      %v1011 = vpop.f32.mrb[0].mxu0
      %v1012 = vadd.f32 0.0, %v1011
      %v1013 = vpop.f32.mrb[0].mxu0
      %1014 = vmatprep.mubr.bf16.mxu0 0
      %1015 = vmatmul.mubr.bf16.gmra.mrb[0].mxu0 %v915
      %v1016 = vpop.f32.mrb[0].mxu0
      %v1017 = vadd.f32 0.0, %v1016
      %v1018 = vpop.f32.mrb[0].mxu0
      %v1019 = vpop.f32.mrb[0].mxu0
      %v1020 = vadd.f32 0.0, %v1019
      %v1021 = vpop.f32.mrb[0].mxu0
      %1022 = vmatprep.mubr.bf16.mxu0 0
      %1023 = vmatmul.mubr.bf16.gmra.mrb[0].mxu0 %v918
      %v1024 = vpop.f32.mrb[0].mxu0
      %v1025 = vadd.f32 0.0, %v1024
      %v1026 = vpop.f32.mrb[0].mxu0
      %v1027 = vpop.f32.mrb[0].mxu0
      %v1028 = vadd.f32 0.0, %v1027
      %v1029 = vpop.f32.mrb[0].mxu0
      %1030 = vmatprep.mubr.bf16.mxu0 0
      %1031 = vmatmul.mubr.bf16.gmra.mrb[0].mxu0 %v921
      %v1032 = vpop.f32.mrb[0].mxu0
      %v1033 = vadd.f32 0.0, %v1032
      %v1034 = vpop.f32.mrb[0].mxu0
      %v1035 = vpop.f32.mrb[0].mxu0
      %v1036 = vadd.f32 0.0, %v1035
      %v1037 = vpop.f32.mrb[0].mxu0
      %1038 = vmatprep.mubr.bf16.mxu0 0
      %1039 = vmatmul.mubr.bf16.gmra.mrb[0].mxu0 %v924
      %v1040 = vpop.f32.mrb[0].mxu0
      %v1041 = vadd.f32 0.0, %v1040
      %v1042 = vpop.f32.mrb[0].mxu0
      %v1043 = vpop.f32.mrb[0].mxu0
      %v1044 = vadd.f32 0.0, %v1043
      %v1045 = vpop.f32.mrb[0].mxu0
      %1046 = vmatprep.mubr.bf16.mxu0 0
      %1047 = vmatmul.mubr.bf16.gmra.mrb[0].mxu0 %v927
      %v1048 = vpop.f32.mrb[0].mxu0
      %v1049 = vadd.f32 0.0, %v1048
      %v1050 = vpop.f32.mrb[0].mxu0
      %v1051 = vpop.f32.mrb[0].mxu0
      %v1052 = vadd.f32 0.0, %v1051
      %v1053 = vpop.f32.mrb[0].mxu0
      %1054 = vmatprep.mubr.bf16.mxu0 0
      %1055 = vmatmul.mubr.bf16.gmra.mrb[0].mxu0 %v930
      %v1056 = vpop.f32.mrb[0].mxu0
      %v1057 = vadd.f32 0.0, %v1056
      %v1058 = vpop.f32.mrb[0].mxu0
      %v1059 = vpop.f32.mrb[0].mxu0
      %v1060 = vadd.f32 0.0, %v1059
      %v1061 = vpop.f32.mrb[0].mxu0
      %1062 = vmatprep.mubr.bf16.mxu0 0
      %1063 = vmatmul.mubr.bf16.gmra.mrb[0].mxu0 %v933
      %v1064 = vpop.f32.mrb[0].mxu0
      %v1065 = vadd.f32 0.0, %v1064
      %v1066 = vpop.f32.mrb[0].mxu0
      %v1067 = vpop.f32.mrb[0].mxu0
      %v1068 = vadd.f32 0.0, %v1067
      %v1069 = vpop.f32.mrb[0].mxu0
      %1070 = vmatprep.mubr.bf16.mxu0 0
      %1071 = vmatmul.mubr.bf16.gmra.mrb[0].mxu0 %v936
      %v1072 = vpop.f32.mrb[0].mxu0
      %v1073 = vadd.f32 0.0, %v1072
      %v1074 = vpop.f32.mrb[0].mxu0
      %v1075 = vpop.f32.mrb[0].mxu0
      %v1076 = vadd.f32 0.0, %v1075
      %v1077 = vpop.f32.mrb[0].mxu0
      %1078 = vmatprep.mubr.bf16.mxu0 0
      %1079 = vmatmul.mubr.bf16.gmra.mrb[0].mxu0 %v939
      %v1080 = vpop.f32.mrb[0].mxu0
      %v1081 = vadd.f32 0.0, %v1080
      %v1082 = vpop.f32.mrb[0].mxu0
      %v1083 = vpop.f32.mrb[0].mxu0
      %v1084 = vadd.f32 0.0, %v1083
      %v1085 = vpop.f32.mrb[0].mxu0
      %1086 = vmatprep.mubr.bf16.mxu0 0
      %1087 = vmatmul.mubr.bf16.gmra.mrb[0].mxu0 %v942
      %v1088 = vpop.f32.mrb[0].mxu0
      %v1089 = vadd.f32 0.0, %v1088
      %v1090 = vpop.f32.mrb[0].mxu0
      %v1091 = vpop.f32.mrb[0].mxu0
      %v1092 = vadd.f32 0.0, %v1091
      %v1093 = vpop.f32.mrb[0].mxu0
      %1094 = vmatprep.mubr.bf16.mxu0 0
      %1095 = vmatmul.mubr.bf16.gmra.mrb[0].mxu0 %v945
      %v1096 = vpop.f32.mrb[0].mxu0
      %v1097 = vadd.f32 0.0, %v1096
      %v1098 = vpop.f32.mrb[0].mxu0
      %v1099 = vpop.f32.mrb[0].mxu0
      %v1100 = vadd.f32 0.0, %v1099
      %v1101 = vpop.f32.mrb[0].mxu0
      %1102 = vmatprep.mubr.bf16.mxu0 0
      %1103 = vmatmul.mubr.bf16.gmra.mrb[0].mxu0 %v948
      %v1104 = vpop.f32.mrb[0].mxu0
      %v1105 = vadd.f32 0.0, %v1104
      %v1106 = vpop.f32.mrb[0].mxu0
      %v1107 = vpop.f32.mrb[0].mxu0
      %v1108 = vadd.f32 0.0, %v1107
      %v1109 = vpop.f32.mrb[0].mxu0
      %1110 = vdwg.mxu0
      %v1111 = vadd.f32 %v639, %v985
      %v1112 = vadd.f32 %v642, %v988
      %v1113 = vadd.f32 %v647, %v993
      %v1114 = vadd.f32 %v650, %v996
      %v1115 = vadd.f32 %v655, %v1001
      %v1116 = vadd.f32 %v658, %v1004
      %v1117 = vadd.f32 %v663, %v1009
      %v1118 = vadd.f32 %v666, %v1012
      %v1119 = vadd.f32 %v671, %v1017
      %v1120 = vadd.f32 %v674, %v1020
      %v1121 = vadd.f32 %v679, %v1025
      %v1122 = vadd.f32 %v682, %v1028
      %v1123 = vadd.f32 %v687, %v1033
      %v1124 = vadd.f32 %v690, %v1036
      %v1125 = vadd.f32 %v695, %v1041
      %v1126 = vadd.f32 %v698, %v1044
      %v1127 = vadd.f32 %v703, %v1049
      %v1128 = vadd.f32 %v706, %v1052
      %v1129 = vadd.f32 %v711, %v1057
      %v1130 = vadd.f32 %v714, %v1060
      %v1131 = vadd.f32 %v719, %v1065
      %v1132 = vadd.f32 %v722, %v1068
      %v1133 = vadd.f32 %v727, %v1073
      %v1134 = vadd.f32 %v730, %v1076
      %v1135 = vadd.f32 %v735, %v1081
      %v1136 = vadd.f32 %v738, %v1084
      %v1137 = vadd.f32 %v743, %v1089
      %v1138 = vadd.f32 %v746, %v1092
      %v1139 = vadd.f32 %v751, %v1097
      %v1140 = vadd.f32 %v754, %v1100
      %v1141 = vadd.f32 %v759, %v1105
      %v1142 = vadd.f32 %v762, %v1108
      %v1143 = vld [vmem:[%s213] sm:$0x1]
      %v1145 = vlaneseq
      %v1146 = vshrl.u32 %v1145, 7
      %v1147 = vsub.s32 0, %v1146
      %v1148 = vrot.slane %v1143, %v1147
      %v1150 = vadd.f32 %v1111, %v1148
      %v1151 = vadd.f32 %v1112, %v1148
      %v1152 = vadd.f32 %v1113, %v1148
      %v1153 = vadd.f32 %v1114, %v1148
      %v1154 = vadd.f32 %v1115, %v1148
      %v1155 = vadd.f32 %v1116, %v1148
      %v1156 = vadd.f32 %v1117, %v1148
      %v1157 = vadd.f32 %v1118, %v1148
      %v1158 = vadd.f32 %v1119, %v1148
      %v1159 = vadd.f32 %v1120, %v1148
      %v1160 = vadd.f32 %v1121, %v1148
      %v1161 = vadd.f32 %v1122, %v1148
      %v1162 = vadd.f32 %v1123, %v1148
      %v1163 = vadd.f32 %v1124, %v1148
      %v1164 = vadd.f32 %v1125, %v1148
      %v1165 = vadd.f32 %v1126, %v1148
      %v1166 = vadd.f32 %v1127, %v1148
      %v1167 = vadd.f32 %v1128, %v1148
      %v1168 = vadd.f32 %v1129, %v1148
      %v1169 = vadd.f32 %v1130, %v1148
      %v1170 = vadd.f32 %v1131, %v1148
      %v1171 = vadd.f32 %v1132, %v1148
      %v1172 = vadd.f32 %v1133, %v1148
      %v1173 = vadd.f32 %v1134, %v1148
      %v1174 = vadd.f32 %v1135, %v1148
      %v1175 = vadd.f32 %v1136, %v1148
      %v1176 = vadd.f32 %v1137, %v1148
      %v1177 = vadd.f32 %v1138, %v1148
      %v1178 = vadd.f32 %v1139, %v1148
      %v1179 = vadd.f32 %v1140, %v1148
      %v1180 = vadd.f32 %v1141, %v1148
      %v1181 = vadd.f32 %v1142, %v1148
      %v1182 = vmax.f32 %v1150, 0.0
      %v1183 = vmax.f32 %v1151, 0.0
      %v1184 = vmax.f32 %v1152, 0.0
      %v1185 = vmax.f32 %v1153, 0.0
      %v1186 = vmax.f32 %v1154, 0.0
      %v1187 = vmax.f32 %v1155, 0.0
      %v1188 = vmax.f32 %v1156, 0.0
      %v1189 = vmax.f32 %v1157, 0.0
      %v1190 = vmax.f32 %v1158, 0.0
      %v1191 = vmax.f32 %v1159, 0.0
      %v1192 = vmax.f32 %v1160, 0.0
      %v1193 = vmax.f32 %v1161, 0.0
      %v1194 = vmax.f32 %v1162, 0.0
      %v1195 = vmax.f32 %v1163, 0.0
      %v1196 = vmax.f32 %v1164, 0.0
      %v1197 = vmax.f32 %v1165, 0.0
      %v1198 = vmax.f32 %v1166, 0.0
      %v1199 = vmax.f32 %v1167, 0.0
      %v1200 = vmax.f32 %v1168, 0.0
      %v1201 = vmax.f32 %v1169, 0.0
      %v1202 = vmax.f32 %v1170, 0.0
      %v1203 = vmax.f32 %v1171, 0.0
      %v1204 = vmax.f32 %v1172, 0.0
      %v1205 = vmax.f32 %v1173, 0.0
      %v1206 = vmax.f32 %v1174, 0.0
      %v1207 = vmax.f32 %v1175, 0.0
      %v1208 = vmax.f32 %v1176, 0.0
      %v1209 = vmax.f32 %v1177, 0.0
      %v1210 = vmax.f32 %v1178, 0.0
      %v1211 = vmax.f32 %v1179, 0.0
      %v1212 = vmax.f32 %v1180, 0.0
      %v1213 = vmax.f32 %v1181, 0.0
      %v1214 = vpack.c.bf16 %v1183, %v1182
      %v1215 = vpack.c.bf16 %v1185, %v1184
      %v1216 = vpack.c.bf16 %v1187, %v1186
      %v1217 = vpack.c.bf16 %v1189, %v1188
      %v1218 = vpack.c.bf16 %v1191, %v1190
      %v1219 = vpack.c.bf16 %v1193, %v1192
      %v1220 = vpack.c.bf16 %v1195, %v1194
      %v1221 = vpack.c.bf16 %v1197, %v1196
      %v1222 = vpack.c.bf16 %v1199, %v1198
      %v1223 = vpack.c.bf16 %v1201, %v1200
      %v1224 = vpack.c.bf16 %v1203, %v1202
      %v1225 = vpack.c.bf16 %v1205, %v1204
      %v1226 = vpack.c.bf16 %v1207, %v1206
      %v1227 = vpack.c.bf16 %v1209, %v1208
      %v1228 = vpack.c.bf16 %v1211, %v1210
      %v1229 = vpack.c.bf16 %v1213, %v1212
      %v1246 = vunpack.c.l.b16 %v1214
      %v1247 = vunpack.c.h.b16 %v1214
      %v1248 = vunpack.c.l.b16 %v1215
      %v1249 = vunpack.c.h.b16 %v1215
      %v1250 = vunpack.c.l.b16 %v1216
      %v1251 = vunpack.c.h.b16 %v1216
      %v1252 = vunpack.c.l.b16 %v1217
      %v1253 = vunpack.c.h.b16 %v1217
      %v1254 = vunpack.c.l.b16 %v1218
      %v1255 = vunpack.c.h.b16 %v1218
      %v1256 = vunpack.c.l.b16 %v1219
      %v1257 = vunpack.c.h.b16 %v1219
      %v1258 = vunpack.c.l.b16 %v1220
      %v1259 = vunpack.c.h.b16 %v1220
      %v1260 = vunpack.c.l.b16 %v1221
      %v1261 = vunpack.c.h.b16 %v1221
      %v1262 = vunpack.c.l.b16 %v1222
      %v1263 = vunpack.c.h.b16 %v1222
      %v1264 = vunpack.c.l.b16 %v1223
      %v1265 = vunpack.c.h.b16 %v1223
      %v1266 = vunpack.c.l.b16 %v1224
      %v1267 = vunpack.c.h.b16 %v1224
      %v1268 = vunpack.c.l.b16 %v1225
      %v1269 = vunpack.c.h.b16 %v1225
      %v1270 = vunpack.c.l.b16 %v1226
      %v1271 = vunpack.c.h.b16 %v1226
      %v1272 = vunpack.c.l.b16 %v1227
      %v1273 = vunpack.c.h.b16 %v1227
      %v1274 = vunpack.c.l.b16 %v1228
      %v1275 = vunpack.c.h.b16 %v1228
      %v1276 = vunpack.c.l.b16 %v1229
      %v1277 = vunpack.c.h.b16 %v1229
      %v1278 = vpack.c.b16 %v1246, %v1246
      %v1279 = vpack.c.b16 %v1247, %v1247
      %v1280 = vpack.c.b16 %v1248, %v1248
      %v1281 = vpack.c.b16 %v1249, %v1249
      %v1282 = vpack.c.b16 %v1250, %v1250
      %v1283 = vpack.c.b16 %v1251, %v1251
      %v1284 = vpack.c.b16 %v1252, %v1252
      %v1285 = vpack.c.b16 %v1253, %v1253
      %v1286 = vpack.c.b16 %v1254, %v1254
      %v1287 = vpack.c.b16 %v1255, %v1255
      %v1288 = vpack.c.b16 %v1256, %v1256
      %v1289 = vpack.c.b16 %v1257, %v1257
      %v1290 = vpack.c.b16 %v1258, %v1258
      %v1291 = vpack.c.b16 %v1259, %v1259
      %v1292 = vpack.c.b16 %v1260, %v1260
      %v1293 = vpack.c.b16 %v1261, %v1261
      %v1294 = vpack.c.b16 %v1262, %v1262
      %v1295 = vpack.c.b16 %v1263, %v1263
      %v1296 = vpack.c.b16 %v1264, %v1264
      %v1297 = vpack.c.b16 %v1265, %v1265
      %v1298 = vpack.c.b16 %v1266, %v1266
      %v1299 = vpack.c.b16 %v1267, %v1267
      %v1300 = vpack.c.b16 %v1268, %v1268
      %v1301 = vpack.c.b16 %v1269, %v1269
      %v1302 = vpack.c.b16 %v1270, %v1270
      %v1303 = vpack.c.b16 %v1271, %v1271
      %v1304 = vpack.c.b16 %v1272, %v1272
      %v1305 = vpack.c.b16 %v1273, %v1273
      %v1306 = vpack.c.b16 %v1274, %v1274
      %v1307 = vpack.c.b16 %v1275, %v1275
      %v1308 = vpack.c.b16 %v1276, %v1276
      %v1309 = vpack.c.b16 %v1277, %v1277
      %1342 = vst [vmem:[%s221] sm:$0xf] %v1278
      %1343 = vst [vmem:[%s221 + $0x4] sm:$0xf] %v1279
      %1344 = vst [vmem:[%s221 + $0x8] sm:$0xf] %v1280
      %1345 = vst [vmem:[%s221 + $0xc] sm:$0xf] %v1281
      %1346 = vst [vmem:[%s221 + $0x10] sm:$0xf] %v1282
      %1347 = vst [vmem:[%s221 + $0x14] sm:$0xf] %v1283
      %1348 = vst [vmem:[%s221 + $0x18] sm:$0xf] %v1284
      %1349 = vst [vmem:[%s221 + $0x1c] sm:$0xf] %v1285
      %1350 = vst [vmem:[%s221 + $0x20] sm:$0xf] %v1286
      %1351 = vst [vmem:[%s221 + $0x24] sm:$0xf] %v1287
      %1352 = vst [vmem:[%s221 + $0x28] sm:$0xf] %v1288
      %1353 = vst [vmem:[%s221 + $0x2c] sm:$0xf] %v1289
      %1354 = vst [vmem:[%s221 + $0x30] sm:$0xf] %v1290
      %1355 = vst [vmem:[%s221 + $0x34] sm:$0xf] %v1291
      %1356 = vst [vmem:[%s221 + $0x38] sm:$0xf] %v1292
      %1357 = vst [vmem:[%s221 + $0x3c] sm:$0xf] %v1293
      %1358 = vst [vmem:[%s221 + $0x40] sm:$0xf] %v1294
      %1359 = vst [vmem:[%s221 + $0x44] sm:$0xf] %v1295
      %1360 = vst [vmem:[%s221 + $0x48] sm:$0xf] %v1296
      %1361 = vst [vmem:[%s221 + $0x4c] sm:$0xf] %v1297
      %1362 = vst [vmem:[%s221 + $0x50] sm:$0xf] %v1298
      %1363 = vst [vmem:[%s221 + $0x54] sm:$0xf] %v1299
      %1364 = vst [vmem:[%s221 + $0x58] sm:$0xf] %v1300
      %1365 = vst [vmem:[%s221 + $0x5c] sm:$0xf] %v1301
      %1366 = vst [vmem:[%s221 + $0x60] sm:$0xf] %v1302
      %1367 = vst [vmem:[%s221 + $0x64] sm:$0xf] %v1303
      %1368 = vst [vmem:[%s221 + $0x68] sm:$0xf] %v1304
      %1369 = vst [vmem:[%s221 + $0x6c] sm:$0xf] %v1305
      %1370 = vst [vmem:[%s221 + $0x70] sm:$0xf] %v1306
      %1371 = vst [vmem:[%s221 + $0x74] sm:$0xf] %v1307
      %1372 = vst [vmem:[%s221 + $0x78] sm:$0xf] %v1308
      %1373 = vst [vmem:[%s221 + $0x7c] sm:$0xf] %v1309
      %p1374 = scmp.lt.s32.totalorder %s18, 1
      %s1375 = scalar_select %p1374, %s18, 1
      %p1376 = scmp.lt.s32.totalorder %s19, 0
      %s1377 = scalar_select %p1376, %s19, 0
      %s1378 = smul.addr %s1375, 32
      %s1379 = sadd.s32 %s1377, %s1378
      %s1380 = smul.addr %s1379, 4
      %s1381 = scalar_lea.vmem %s3, %s1380
      // Predicated region
      $region33: #{vgg_forward.7} parent=31 // pred_check
        %p1382 = pneg %p124
      $region34: #{vgg_forward.7} parent=31 // pred_check_branch
        %1384 = sbr.rel (%p1382) target = $region36
      $region35: #{vgg_forward.7} parent=31 // pred_region
        _
      $region36: #{vgg_forward.7} parent=31 // pred_fallthru
        _
    $region32: #{vgg_forward.7} parent=5 // pred_fallthru
      _
    %p1385 = scmp.le.s32.totalorder 2, %s9
    // Predicated region
    $region37: #{vgg_forward.7} parent=5 // pred_check
      %p1386 = pneg %p1385
    $region38: #{vgg_forward.7} parent=5 // pred_check_branch
      %1388 = sbr.rel (%p1386) target = $region40
    $region39: #{vgg_forward.7} parent=5 // pred_region
      %s1389 = ssub.s32 %s9, 2
      // Predicated region
      $region41: #{vgg_forward.7} parent=39 // pred_check
        %p1390 = pneg %p130
      $region42: #{vgg_forward.7} parent=39 // pred_check_branch
        %1392 = sbr.rel (%p1390) target = $region44
      $region43: #{vgg_forward.7} parent=39 // pred_region
        %p1393 = scmp.lt.s32.totalorder %s20, 1
        %s1394 = scalar_select %p1393, %s20, 1
        %p1395 = scmp.lt.s32.totalorder %s21, 0
        %s1396 = scalar_select %p1395, %s21, 0
        %s1397 = smul.addr %s1394, 32
        %s1398 = sadd.s32 %s1396, %s1397
        %s1399 = smul.addr %s1398, 4
        %s1400 = scalar_lea.vmem %s3, %s1399
      $region44: #{vgg_forward.7} parent=39 // pred_fallthru
        _
    $region40: #{vgg_forward.7} parent=5 // pred_fallthru
      _
  $region6: #{vgg_forward.7} parent=0 // loop_footer
    %s13 = sadd.s32 1, %s9
  $region7: #{vgg_forward.7} parent=0 // loop_footer_branch
    %8 = sbr.rel target = $region3
  $region8: #{vgg_forward.7} parent=0 // loop_exit
    _

// kernel: vgg_forward.8
$region0: #{vgg_forward.8}
  #allocation0 [shape = 'u32[]', space=smem, size = 0x4, offset = 0x4, fixed_abs, tag = 'smem constant byte address 0x4 - core index']
  #allocation1 [shape = 'u32[144,128]{1,0:T(1,128)}', space=vmem, size = 0x12000, scoped, tag = 'internal scratch']
  %s0 = inlined_call_operand.vmem [shape: bf16[2,160,96], index: 0, kind: input, shape index: {}]
  %s1 = inlined_call_operand.vmem [shape: bf16[3,96,128], index: 1, kind: input, shape index: {}]
  %s2 = inlined_call_operand.vmem [shape: f32[1,128], index: 2, kind: input, shape index: {}]
  %s3 = inlined_call_operand.vmem [shape: bf16[2,128,128], index: 3, kind: output, shape index: {}]
  %s4 = sld [smem:[#allocation0]]
  $region45: #{vgg_forward.8} parent=0
    _
  %s6 = ssub.s32 1, %s4
  %s7 = scalar_select 0, %s6, %s4
  loop: start=0, step=1, limit=4
  $region2: #{vgg_forward.8} parent=0 // loop_pre_header
    _
  $region3: #{vgg_forward.8} parent=0 // loop_header
    %s9 = sphi 0, %s13
    %p10 = scmp.ge.s32.totalorder %s9, 4
    %s16 = sphi 0, %s28
    %s17 = sphi 0, %s24
    %s18 = sphi 0, %s16
    %s19 = sphi 0, %s17
    %s20 = sphi 0, %s18
    %s21 = sphi 0, %s19
    %s31 = sphi 0, %s33
    %s34 = sphi 0, %s31
    %s35 = sphi 0, %s34
    %s51 = sphi 0, %s35
    %s57 = sphi 0, %s59
    %s60 = sphi 0, %s57
    %s61 = sphi 0, %s60
    %s77 = sphi 0, %s61
    %s83 = sphi 0, %s85
    %s86 = sphi 0, %s83
    %s87 = sphi 0, %s86
    %s103 = sphi 0, %s87
    %s111 = sphi 0, %s113
    %s114 = sphi 0, %s111
    %s115 = sphi 0, %s114
    %s131 = sphi 0, %s115
  $region4: #{vgg_forward.8} parent=0 // loop_header_branch
    %12 = sbr.rel (%p10) target = $region8
  $region5: #{vgg_forward.8} parent=0 // loop_body
    %s14 = ssub.s32 %s9, 1
    %s15 = ssub.s32 %s9, 2
    %s22 = sadd.s32 1, %s17
    %p23 = scmp.ge.s32.totalorder %s22, 1
    %s24 = scalar_select %p23, 0, %s22
    %s25 = sadd.s32 1, %s16
    %s26 = scalar_select %p23, %s25, %s16
    %p27 = scmp.ge.s32.totalorder %s26, 2
    %s28 = scalar_select %p27, 0, %s26
    %s29 = ssub.s32 %s16, %s28
    %p30 = scmp.eq.s32.totalorder %s29, 0
    %s32 = sadd.s32 %s31, 1
    %s33 = scalar_select %p30, %s31, %s32
    %p36 = pneg %p30
    %p37 = scmp.eq.s32.totalorder %s9, 1
    %p38 = por %p36, %p37
    %p39 = scmp.ne.s32.totalorder %s31, %s34
    %p40 = scmp.eq.s32.totalorder %s9, 0
    %p41 = por %p39, %p40
    %p42 = scmp.ne.s32.totalorder %s31, %s34
    %p43 = scmp.eq.s32.totalorder %s14, 1
    %p44 = por %p42, %p43
    %p45 = scmp.ne.s32.totalorder %s34, %s35
    %p46 = scmp.eq.s32.totalorder %s14, 0
    %p47 = por %p45, %p46
    %p48 = scmp.ne.s32.totalorder %s34, %s35
    %p49 = scmp.eq.s32.totalorder %s15, 1
    %p50 = por %p48, %p49
    %p52 = scmp.ne.s32.totalorder %s35, %s51
    %p53 = scmp.eq.s32.totalorder %s15, 0
    %p54 = por %p52, %p53
    %s55 = ssub.s32 %s17, %s24
    %p56 = scmp.eq.s32.totalorder %s55, 0
    %s58 = sadd.s32 %s57, 1
    %s59 = scalar_select %p56, %s57, %s58
    %p62 = pneg %p56
    %p63 = scmp.eq.s32.totalorder %s9, 1
    %p64 = por %p62, %p63
    %p65 = scmp.ne.s32.totalorder %s57, %s60
    %p66 = scmp.eq.s32.totalorder %s9, 0
    %p67 = por %p65, %p66
    %p68 = scmp.ne.s32.totalorder %s57, %s60
    %p69 = scmp.eq.s32.totalorder %s14, 1
    %p70 = por %p68, %p69
    %p71 = scmp.ne.s32.totalorder %s60, %s61
    %p72 = scmp.eq.s32.totalorder %s14, 0
    %p73 = por %p71, %p72
    %p74 = scmp.ne.s32.totalorder %s60, %s61
    %p75 = scmp.eq.s32.totalorder %s15, 1
    %p76 = por %p74, %p75
    %p78 = scmp.ne.s32.totalorder %s61, %s77
    %p79 = scmp.eq.s32.totalorder %s15, 0
    %p80 = por %p78, %p79
    %s81 = ssub.s32 %s17, %s24
    %p82 = scmp.eq.s32.totalorder %s81, 0
    %s84 = sadd.s32 %s83, 1
    %s85 = scalar_select %p82, %s83, %s84
    %p88 = pneg %p82
    %p89 = scmp.eq.s32.totalorder %s9, 1
    %p90 = por %p88, %p89
    %p91 = scmp.ne.s32.totalorder %s83, %s86
    %p92 = scmp.eq.s32.totalorder %s9, 0
    %p93 = por %p91, %p92
    %p94 = scmp.ne.s32.totalorder %s83, %s86
    %p95 = scmp.eq.s32.totalorder %s14, 1
    %p96 = por %p94, %p95
    %p97 = scmp.ne.s32.totalorder %s86, %s87
    %p98 = scmp.eq.s32.totalorder %s14, 0
    %p99 = por %p97, %p98
    %p100 = scmp.ne.s32.totalorder %s86, %s87
    %p101 = scmp.eq.s32.totalorder %s15, 1
    %p102 = por %p100, %p101
    %p104 = scmp.ne.s32.totalorder %s87, %s103
    %p105 = scmp.eq.s32.totalorder %s15, 0
    %p106 = por %p104, %p105
    %s107 = ssub.s32 %s16, %s28
    %s108 = ssub.s32 %s17, %s24
    %s109 = sor.u32 %s107, %s108
    %p110 = scmp.eq.s32.totalorder %s109, 0
    %s112 = sadd.s32 %s111, 1
    %s113 = scalar_select %p110, %s111, %s112
    %p116 = pneg %p110
    %p117 = scmp.eq.s32.totalorder %s9, 1
    %p118 = por %p116, %p117
    %p119 = scmp.ne.s32.totalorder %s111, %s114
    %p120 = scmp.eq.s32.totalorder %s9, 0
    %p121 = por %p119, %p120
    %p122 = scmp.ne.s32.totalorder %s111, %s114
    %p123 = scmp.eq.s32.totalorder %s14, 1
    %p124 = por %p122, %p123
    %p125 = scmp.ne.s32.totalorder %s114, %s115
    %p126 = scmp.eq.s32.totalorder %s14, 0
    %p127 = por %p125, %p126
    %p128 = scmp.ne.s32.totalorder %s114, %s115
    %p129 = scmp.eq.s32.totalorder %s15, 1
    %p130 = por %p128, %p129
    %p132 = scmp.ne.s32.totalorder %s115, %s131
    %p133 = scmp.eq.s32.totalorder %s15, 0
    %p134 = por %p132, %p133
    %p135 = scmp.le.s32.totalorder 1, %s9
    %p136 = scmp.lt.s32.totalorder %s9, 3
    %p137 = pnand %p135, %p136
    %p138 = pneg %p137
    // Predicated region
    $region9: #{vgg_forward.8} parent=5 // pred_check
      _
    $region10: #{vgg_forward.8} parent=5 // pred_check_branch
      %140 = sbr.rel (%p137) target = $region12
    $region11: #{vgg_forward.8} parent=5 // pred_region
      %s141 = ssub.s32 %s9, 1
      // Predicated region
      $region13: #{vgg_forward.8} parent=11 // pred_check
        %p142 = pneg %p73
      $region14: #{vgg_forward.8} parent=11 // pred_check_branch
        %144 = sbr.rel (%p142) target = $region16
      $region15: #{vgg_forward.8} parent=11 // pred_region
        %p145 = scmp.lt.s32.totalorder %s19, 0
        %s146 = scalar_select %p145, %s19, 0
        %s147 = smul.addr %s146, 4
        %s148 = scalar_lea.vmem %s1, %s147
      $region16: #{vgg_forward.8} parent=11 // pred_fallthru
        _
      // Predicated region
      $region17: #{vgg_forward.8} parent=11 // pred_check
        %p149 = pneg %p99
      $region18: #{vgg_forward.8} parent=11 // pred_check_branch
        %151 = sbr.rel (%p149) target = $region20
      $region19: #{vgg_forward.8} parent=11 // pred_region
        %p152 = scmp.lt.s32.totalorder %s19, 0
        %s153 = scalar_select %p152, %s19, 0
        %s154 = scalar_lea.vmem %s2, %s153
      $region20: #{vgg_forward.8} parent=11 // pred_fallthru
        _
    $region12: #{vgg_forward.8} parent=5 // pred_fallthru
      _
    %p155 = scmp.lt.s32.totalorder %s9, 2
    // Predicated region
    $region21: #{vgg_forward.8} parent=5 // pred_check
      %p156 = pneg %p155
    $region22: #{vgg_forward.8} parent=5 // pred_check_branch
      %158 = sbr.rel (%p156) target = $region24
    $region23: #{vgg_forward.8} parent=5 // pred_region
      // Predicated region
      $region25: #{vgg_forward.8} parent=23 // pred_check
        %p159 = pneg %p41
      $region26: #{vgg_forward.8} parent=23 // pred_check_branch
        %161 = sbr.rel (%p159) target = $region28
      $region27: #{vgg_forward.8} parent=23 // pred_region
        %p162 = scmp.lt.s32.totalorder %s16, 1
        %s163 = scalar_select %p162, %s16, 1
        %s164 = smul.addr %s163, 20
        %s165 = smul.addr %s164, 4
        %s166 = scalar_lea.vmem %s0, %s165
      $region28: #{vgg_forward.8} parent=23 // pred_fallthru
        _
    $region24: #{vgg_forward.8} parent=5 // pred_fallthru
      _
    %p167 = scmp.le.s32.totalorder 1, %s9
    %p168 = scmp.lt.s32.totalorder %s9, 3
    %p169 = pnand %p167, %p168
    %p170 = pneg %p169
    // Predicated region
    $region29: #{vgg_forward.8} parent=5 // pred_check
      _
    $region30: #{vgg_forward.8} parent=5 // pred_check_branch
      %172 = sbr.rel (%p169) target = $region32
    $region31: #{vgg_forward.8} parent=5 // pred_region
      %s173 = ssub.s32 %s9, 1
      %p174 = scmp.lt.s32.totalorder %s18, 1
      %s175 = scalar_select %p174, %s18, 1
      %s176 = smul.addr %s175, 20
      %s177 = smul.addr %s176, 4
      %s178 = scalar_lea.vmem %s0, %s177
      %p179 = pneg %p47
      %p180 = pneg %p44
      %p181 = scmp.lt.s32.totalorder %s19, 0
      %s182 = scalar_select %p181, %s19, 0
      %s183 = smul.addr %s182, 4
      %s184 = scalar_lea.vmem %s1, %s183
      %p185 = pneg %p73
      %p186 = pneg %p70
      %p187 = scmp.lt.s32.totalorder %s19, 0
      %s188 = scalar_select %p187, %s19, 0
      %s189 = scalar_lea.vmem %s2, %s188
      %p190 = pneg %p99
      %p191 = pneg %p96
      %p192 = pneg %p127
      %p193 = pneg %p124
      %p194 = scmp.lt.s32.totalorder %s18, 1
      %s195 = scalar_select %p194, %s18, 1
      %p196 = scmp.lt.s32.totalorder %s19, 0
      %s197 = scalar_select %p196, %s19, 0
      %s198 = smul.addr %s195, 16
      %s199 = sadd.s32 %s197, %s198
      %s200 = smul.addr %s199, 4
      %s201 = scalar_lea.vmem %s3, %s200
      %p202 = scmp.lt.s32.totalorder %s18, 1
      %s203 = scalar_select %p202, %s18, 1
      %s204 = smul.addr %s203, 20
      %s205 = smul.addr %s204, 4
      %s206 = scalar_lea.vmem %s0, %s205
      %p207 = scmp.lt.s32.totalorder %s19, 0
      %s208 = scalar_select %p207, %s19, 0
      %s209 = smul.addr %s208, 4
      %s210 = scalar_lea.vmem %s1, %s209
      %p211 = scmp.lt.s32.totalorder %s19, 0
      %s212 = scalar_select %p211, %s19, 0
      %s213 = scalar_lea.vmem %s2, %s212
      %p214 = scmp.lt.s32.totalorder %s18, 1
      %s215 = scalar_select %p214, %s18, 1
      %p216 = scmp.lt.s32.totalorder %s19, 0
      %s217 = scalar_select %p216, %s19, 0
      %s218 = smul.addr %s215, 16
      %s219 = sadd.s32 %s217, %s218
      %s220 = smul.addr %s219, 4
      %s221 = scalar_lea.vmem %s3, %s220
      %v223 = vld [vmem:[%s206] sm:$0xf]
      %v224 = vld [vmem:[%s206 + $0x4] sm:$0xf]
      %v225 = vld [vmem:[%s206 + $0x8] sm:$0xf]
      %v226 = vld [vmem:[%s206 + $0xc] sm:$0xf]
      %v227 = vld [vmem:[%s206 + $0x10] sm:$0xf]
      %v228 = vld [vmem:[%s206 + $0x14] sm:$0xf]
      %v229 = vld [vmem:[%s206 + $0x18] sm:$0xf]
      %v230 = vld [vmem:[%s206 + $0x1c] sm:$0xf]
      %v231 = vld [vmem:[%s206 + $0x20] sm:$0xf]
      %v232 = vld [vmem:[%s206 + $0x24] sm:$0xf]
      %v233 = vld [vmem:[%s206 + $0x28] sm:$0xf]
      %v234 = vld [vmem:[%s206 + $0x2c] sm:$0xf]
      %v235 = vld [vmem:[%s206 + $0x30] sm:$0xf]
      %v236 = vld [vmem:[%s206 + $0x34] sm:$0xf]
      %v237 = vld [vmem:[%s206 + $0x38] sm:$0xf]
      %v238 = vld [vmem:[%s206 + $0x3c] sm:$0xf]
      %v239 = vld [vmem:[%s210] sm:$0xf]
      %v240 = vld [vmem:[%s210 + $0x4] sm:$0xf]
      %v241 = vld [vmem:[%s210 + $0x8] sm:$0xf]
      %v242 = vld [vmem:[%s210 + $0xc] sm:$0xf]
      %v243 = vld [vmem:[%s210 + $0x10] sm:$0xf]
      %v244 = vld [vmem:[%s210 + $0x14] sm:$0xf]
      %v245 = vld [vmem:[%s210 + $0x18] sm:$0xf]
      %v246 = vld [vmem:[%s210 + $0x1c] sm:$0xf]
      %v247 = vld [vmem:[%s210 + $0x20] sm:$0xf]
      %v248 = vld [vmem:[%s210 + $0x24] sm:$0xf]
      %v249 = vld [vmem:[%s210 + $0x28] sm:$0xf]
      %v250 = vld [vmem:[%s210 + $0x2c] sm:$0xf]
      %v251 = vld [vmem:[%s206 + $0x40] sm:$0xf]
      %v252 = vld [vmem:[%s206 + $0x44] sm:$0xf]
      %s253 = scalar_lea.vmem %s210, 48
      %v254 = vld [vmem:[%s253] sm:$0xf]
      %v255 = vld [vmem:[%s253 + $0x4] sm:$0xf]
      %v256 = vld [vmem:[%s253 + $0x8] sm:$0xf]
      %v257 = vld [vmem:[%s253 + $0xc] sm:$0xf]
      %v258 = vld [vmem:[%s253 + $0x10] sm:$0xf]
      %v259 = vld [vmem:[%s253 + $0x14] sm:$0xf]
      %v260 = vld [vmem:[%s253 + $0x18] sm:$0xf]
      %v261 = vld [vmem:[%s253 + $0x1c] sm:$0xf]
      %v262 = vld [vmem:[%s253 + $0x20] sm:$0xf]
      %v263 = vld [vmem:[%s253 + $0x24] sm:$0xf]
      %v264 = vld [vmem:[%s253 + $0x28] sm:$0xf]
      %v265 = vld [vmem:[%s253 + $0x2c] sm:$0xf]
      %v282 = vunpack.c.l.b16 %v225
      %v283 = vunpack.c.l.b16 %v226
      %v284 = vunpack.c.l.b16 %v227
      %v285 = vunpack.c.l.b16 %v228
      %v286 = vunpack.c.l.b16 %v229
      %v287 = vunpack.c.l.b16 %v230
      %v288 = vunpack.c.l.b16 %v231
      %v289 = vunpack.c.l.b16 %v232
      %v290 = vunpack.c.l.b16 %v233
      %v291 = vunpack.c.l.b16 %v234
      %v292 = vunpack.c.l.b16 %v235
      %v293 = vunpack.c.l.b16 %v236
      %v294 = vunpack.c.l.b16 %v237
      %v295 = vunpack.c.l.b16 %v238
      %v296 = vunpack.c.l.b16 %v251
      %v297 = vunpack.c.l.b16 %v252
      %v298 = vpack.c.b16 %v283, %v282
      %v299 = vpack.c.b16 %v285, %v284
      %v300 = vpack.c.b16 %v287, %v286
      %v301 = vpack.c.b16 %v289, %v288
      %v302 = vpack.c.b16 %v291, %v290
      %v303 = vpack.c.b16 %v293, %v292
      %v304 = vpack.c.b16 %v295, %v294
      %v305 = vpack.c.b16 %v297, %v296
      %v318 = vunpack.c.l.b16 %v254
      %v319 = vunpack.c.l.b16 %v255
      %v320 = vunpack.c.l.b16 %v256
      %v321 = vunpack.c.l.b16 %v257
      %v322 = vunpack.c.l.b16 %v258
      %v323 = vunpack.c.l.b16 %v259
      %v324 = vunpack.c.l.b16 %v260
      %v325 = vunpack.c.l.b16 %v261
      %v326 = vunpack.c.l.b16 %v262
      %v327 = vunpack.c.l.b16 %v263
      %v328 = vunpack.c.l.b16 %v264
      %v329 = vunpack.c.l.b16 %v265
      %v330 = vpack.c.b16 %v319, %v318
      %v331 = vpack.c.b16 %v321, %v320
      %v332 = vpack.c.b16 %v323, %v322
      %v333 = vpack.c.b16 %v325, %v324
      %v334 = vpack.c.b16 %v327, %v326
      %v335 = vpack.c.b16 %v329, %v328
      %vm342 = vcmask 785408
      %v344 = vsel %vm342, %v298, 0
      %v347 = vsel %vm342, %v299, 0
      %v350 = vsel %vm342, %v300, 0
      %v353 = vsel %vm342, %v301, 0
      %v356 = vsel %vm342, %v302, 0
      %v359 = vsel %vm342, %v303, 0
      %v362 = vsel %vm342, %v304, 0
      %v365 = vsel %vm342, %v305, 0
      %367 = vmatprep.subr.bf16.mxu0 0
      %368 = vmatpush1.bf16.msra.mxu0 %v330
      %369 = vmatprep.subr.bf16.mxu0 0
      %370 = vmatpush1.bf16.msra.mxu0 %v331
      %371 = vmatprep.subr.bf16.mxu0 0
      %372 = vmatpush1.bf16.msra.mxu0 %v332
      %373 = vmatprep.subr.bf16.mxu0 0
      %374 = vmatpush1.bf16.msra.mxu0 %v333
      %375 = vmatprep.subr.bf16.mxu0 0
      %376 = vmatpush1.bf16.msra.mxu0 %v334
      %377 = vmatprep.subr.bf16.mxu0 0
      %378 = vmatpush1.bf16.msra.mxu0 %v335
      %379 = vmatprep.subr.bf16.mxu0 0
      %380 = vmatpush1.bf16.msra.mxu0 0
      %381 = vmatprep.subr.bf16.mxu0 0
      %382 = vmatpush1.bf16.msra.mxu0 0
      %383 = vmatprep.subr.bf16.mxu0 0
      %384 = vmatpush1.bf16.msra.mxu0 0
      %385 = vmatprep.subr.bf16.mxu0 0
      %386 = vmatpush1.bf16.msra.mxu0 0
      %387 = vmatprep.subr.bf16.mxu0 0
      %388 = vmatpush1.bf16.msra.mxu0 0
      %389 = vmatprep.subr.bf16.mxu0 0
      %390 = vmatpush1.bf16.msra.mxu0 0
      %391 = vmatprep.subr.bf16.mxu0 0
      %392 = vmatpush1.bf16.msra.mxu0 0
      %393 = vmatprep.subr.bf16.mxu0 0
      %394 = vmatpush1.bf16.msra.mxu0 0
      %395 = vmatprep.subr.bf16.mxu0 0
      %396 = vmatpush1.bf16.msra.mxu0 0
      %397 = vmatprep.subr.bf16.mxu0 0
      %398 = vmatpush1.bf16.msra.mxu0 0
      %399 = vmatprep.mubr.bf16.mxu0 0
      %400 = vmatmul.mubr.bf16.gmra.mrb[0].mxu0 %v344
      %v401 = vpop.f32.mrb[0].mxu0
      %v402 = vadd.f32 0.0, %v401
      %v403 = vpop.f32.mrb[0].mxu0
      %v404 = vpop.f32.mrb[0].mxu0
      %v405 = vadd.f32 0.0, %v404
      %v406 = vpop.f32.mrb[0].mxu0
      %407 = vmatprep.mubr.bf16.mxu0 0
      %408 = vmatmul.mubr.bf16.gmra.mrb[0].mxu0 %v347
      %v409 = vpop.f32.mrb[0].mxu0
      %v410 = vadd.f32 0.0, %v409
      %v411 = vpop.f32.mrb[0].mxu0
      %v412 = vpop.f32.mrb[0].mxu0
      %v413 = vadd.f32 0.0, %v412
      %v414 = vpop.f32.mrb[0].mxu0
      %415 = vmatprep.mubr.bf16.mxu0 0
      %416 = vmatmul.mubr.bf16.gmra.mrb[0].mxu0 %v350
      %v417 = vpop.f32.mrb[0].mxu0
      %v418 = vadd.f32 0.0, %v417
      %v419 = vpop.f32.mrb[0].mxu0
      %v420 = vpop.f32.mrb[0].mxu0
      %v421 = vadd.f32 0.0, %v420
      %v422 = vpop.f32.mrb[0].mxu0
      %423 = vmatprep.mubr.bf16.mxu0 0
      %424 = vmatmul.mubr.bf16.gmra.mrb[0].mxu0 %v353
      %v425 = vpop.f32.mrb[0].mxu0
      %v426 = vadd.f32 0.0, %v425
      %v427 = vpop.f32.mrb[0].mxu0
      %v428 = vpop.f32.mrb[0].mxu0
      %v429 = vadd.f32 0.0, %v428
      %v430 = vpop.f32.mrb[0].mxu0
      %431 = vmatprep.mubr.bf16.mxu0 0
      %432 = vmatmul.mubr.bf16.gmra.mrb[0].mxu0 %v356
      %v433 = vpop.f32.mrb[0].mxu0
      %v434 = vadd.f32 0.0, %v433
      %v435 = vpop.f32.mrb[0].mxu0
      %v436 = vpop.f32.mrb[0].mxu0
      %v437 = vadd.f32 0.0, %v436
      %v438 = vpop.f32.mrb[0].mxu0
      %439 = vmatprep.mubr.bf16.mxu0 0
      %440 = vmatmul.mubr.bf16.gmra.mrb[0].mxu0 %v359
      %v441 = vpop.f32.mrb[0].mxu0
      %v442 = vadd.f32 0.0, %v441
      %v443 = vpop.f32.mrb[0].mxu0
      %v444 = vpop.f32.mrb[0].mxu0
      %v445 = vadd.f32 0.0, %v444
      %v446 = vpop.f32.mrb[0].mxu0
      %447 = vmatprep.mubr.bf16.mxu0 0
      %448 = vmatmul.mubr.bf16.gmra.mrb[0].mxu0 %v362
      %v449 = vpop.f32.mrb[0].mxu0
      %v450 = vadd.f32 0.0, %v449
      %v451 = vpop.f32.mrb[0].mxu0
      %v452 = vpop.f32.mrb[0].mxu0
      %v453 = vadd.f32 0.0, %v452
      %v454 = vpop.f32.mrb[0].mxu0
      %455 = vmatprep.mubr.bf16.mxu0 0
      %456 = vmatmul.mubr.bf16.gmra.mrb[0].mxu0 %v365
      %v457 = vpop.f32.mrb[0].mxu0
      %v458 = vadd.f32 0.0, %v457
      %v459 = vpop.f32.mrb[0].mxu0
      %v460 = vpop.f32.mrb[0].mxu0
      %v461 = vadd.f32 0.0, %v460
      %v462 = vpop.f32.mrb[0].mxu0
      %463 = vdwg.mxu0
      %v466 = vunpack.c.l.b16 %v223
      %v467 = vunpack.c.l.b16 %v224
      %v468 = vpack.c.b16 %v467, %v466
      %v481 = vunpack.c.l.b16 %v239
      %v482 = vunpack.c.l.b16 %v240
      %v483 = vunpack.c.l.b16 %v241
      %v484 = vunpack.c.l.b16 %v242
      %v485 = vunpack.c.l.b16 %v243
      %v486 = vunpack.c.l.b16 %v244
      %v487 = vunpack.c.l.b16 %v245
      %v488 = vunpack.c.l.b16 %v246
      %v489 = vunpack.c.l.b16 %v247
      %v490 = vunpack.c.l.b16 %v248
      %v491 = vunpack.c.l.b16 %v249
      %v492 = vunpack.c.l.b16 %v250
      %v493 = vpack.c.b16 %v482, %v481
      %v494 = vpack.c.b16 %v484, %v483
      %v495 = vpack.c.b16 %v486, %v485
      %v496 = vpack.c.b16 %v488, %v487
      %v497 = vpack.c.b16 %v490, %v489
      %v498 = vpack.c.b16 %v492, %v491
      %v506 = vsel %vm342, %v468, 0
      %508 = vmatprep.subr.bf16.mxu0 0
      %509 = vmatpush1.bf16.msra.mxu0 %v493
      %510 = vmatprep.subr.bf16.mxu0 0
      %511 = vmatpush1.bf16.msra.mxu0 %v494
      %512 = vmatprep.subr.bf16.mxu0 0
      %513 = vmatpush1.bf16.msra.mxu0 %v495
      %514 = vmatprep.subr.bf16.mxu0 0
      %515 = vmatpush1.bf16.msra.mxu0 %v496
      %516 = vmatprep.subr.bf16.mxu0 0
      %517 = vmatpush1.bf16.msra.mxu0 %v497
      %518 = vmatprep.subr.bf16.mxu0 0
      %519 = vmatpush1.bf16.msra.mxu0 %v498
      %520 = vmatprep.subr.bf16.mxu0 0
      %521 = vmatpush1.bf16.msra.mxu0 0
      %522 = vmatprep.subr.bf16.mxu0 0
      %523 = vmatpush1.bf16.msra.mxu0 0
      %524 = vmatprep.subr.bf16.mxu0 0
      %525 = vmatpush1.bf16.msra.mxu0 0
      %526 = vmatprep.subr.bf16.mxu0 0
      %527 = vmatpush1.bf16.msra.mxu0 0
      %528 = vmatprep.subr.bf16.mxu0 0
      %529 = vmatpush1.bf16.msra.mxu0 0
      %530 = vmatprep.subr.bf16.mxu0 0
      %531 = vmatpush1.bf16.msra.mxu0 0
      %532 = vmatprep.subr.bf16.mxu0 0
      %533 = vmatpush1.bf16.msra.mxu0 0
      %534 = vmatprep.subr.bf16.mxu0 0
      %535 = vmatpush1.bf16.msra.mxu0 0
      %536 = vmatprep.subr.bf16.mxu0 0
      %537 = vmatpush1.bf16.msra.mxu0 0
      %538 = vmatprep.subr.bf16.mxu0 0
      %539 = vmatpush1.bf16.msra.mxu0 0
      %540 = vmatprep.mubr.bf16.mxu0 0
      %541 = vmatmul.mubr.bf16.gmra.mrb[0].mxu0 %v506
      %v542 = vpop.f32.mrb[0].mxu0
      %v543 = vadd.f32 %v402, %v542
      %v544 = vpop.f32.mrb[0].mxu0
      %v545 = vpop.f32.mrb[0].mxu0
      %v546 = vadd.f32 %v405, %v545
      %v547 = vpop.f32.mrb[0].mxu0
      %548 = vmatprep.mubr.bf16.mxu0 0
      %549 = vmatmul.mubr.bf16.gmra.mrb[0].mxu0 %v344
      %v550 = vpop.f32.mrb[0].mxu0
      %v551 = vadd.f32 %v410, %v550
      %v552 = vpop.f32.mrb[0].mxu0
      %v553 = vpop.f32.mrb[0].mxu0
      %v554 = vadd.f32 %v413, %v553
      %v555 = vpop.f32.mrb[0].mxu0
      %556 = vmatprep.mubr.bf16.mxu0 0
      %557 = vmatmul.mubr.bf16.gmra.mrb[0].mxu0 %v347
      %v558 = vpop.f32.mrb[0].mxu0
      %v559 = vadd.f32 %v418, %v558
      %v560 = vpop.f32.mrb[0].mxu0
      %v561 = vpop.f32.mrb[0].mxu0
      %v562 = vadd.f32 %v421, %v561
      %v563 = vpop.f32.mrb[0].mxu0
      %564 = vmatprep.mubr.bf16.mxu0 0
      %565 = vmatmul.mubr.bf16.gmra.mrb[0].mxu0 %v350
      %v566 = vpop.f32.mrb[0].mxu0
      %v567 = vadd.f32 %v426, %v566
      %v568 = vpop.f32.mrb[0].mxu0
      %v569 = vpop.f32.mrb[0].mxu0
      %v570 = vadd.f32 %v429, %v569
      %v571 = vpop.f32.mrb[0].mxu0
      %572 = vmatprep.mubr.bf16.mxu0 0
      %573 = vmatmul.mubr.bf16.gmra.mrb[0].mxu0 %v353
      %v574 = vpop.f32.mrb[0].mxu0
      %v575 = vadd.f32 %v434, %v574
      %v576 = vpop.f32.mrb[0].mxu0
      %v577 = vpop.f32.mrb[0].mxu0
      %v578 = vadd.f32 %v437, %v577
      %v579 = vpop.f32.mrb[0].mxu0
      %580 = vmatprep.mubr.bf16.mxu0 0
      %581 = vmatmul.mubr.bf16.gmra.mrb[0].mxu0 %v356
      %v582 = vpop.f32.mrb[0].mxu0
      %v583 = vadd.f32 %v442, %v582
      %v584 = vpop.f32.mrb[0].mxu0
      %v585 = vpop.f32.mrb[0].mxu0
      %v586 = vadd.f32 %v445, %v585
      %v587 = vpop.f32.mrb[0].mxu0
      %588 = vmatprep.mubr.bf16.mxu0 0
      %589 = vmatmul.mubr.bf16.gmra.mrb[0].mxu0 %v359
      %v590 = vpop.f32.mrb[0].mxu0
      %v591 = vadd.f32 %v450, %v590
      %v592 = vpop.f32.mrb[0].mxu0
      %v593 = vpop.f32.mrb[0].mxu0
      %v594 = vadd.f32 %v453, %v593
      %v595 = vpop.f32.mrb[0].mxu0
      %596 = vmatprep.mubr.bf16.mxu0 0
      %597 = vmatmul.mubr.bf16.gmra.mrb[0].mxu0 %v362
      %v598 = vpop.f32.mrb[0].mxu0
      %v599 = vadd.f32 %v458, %v598
      %v600 = vpop.f32.mrb[0].mxu0
      %v601 = vpop.f32.mrb[0].mxu0
      %v602 = vadd.f32 %v461, %v601
      %v603 = vpop.f32.mrb[0].mxu0
      %604 = vdwg.mxu0
      %v605 = vld [vmem:[%s206 + $0x10] sm:$0xf]
      %v606 = vld [vmem:[%s206 + $0x14] sm:$0xf]
      %v607 = vld [vmem:[%s206 + $0x18] sm:$0xf]
      %v608 = vld [vmem:[%s206 + $0x1c] sm:$0xf]
      %v609 = vld [vmem:[%s206 + $0x20] sm:$0xf]
      %v610 = vld [vmem:[%s206 + $0x24] sm:$0xf]
      %v611 = vld [vmem:[%s206 + $0x28] sm:$0xf]
      %v612 = vld [vmem:[%s206 + $0x2c] sm:$0xf]
      %v613 = vld [vmem:[%s206 + $0x30] sm:$0xf]
      %v614 = vld [vmem:[%s206 + $0x34] sm:$0xf]
      %v615 = vld [vmem:[%s206 + $0x38] sm:$0xf]
      %v616 = vld [vmem:[%s206 + $0x3c] sm:$0xf]
      %v617 = vld [vmem:[%s206 + $0x40] sm:$0xf]
      %v618 = vld [vmem:[%s206 + $0x44] sm:$0xf]
      %v619 = vld [vmem:[%s206 + $0x48] sm:$0xf]
      %v620 = vld [vmem:[%s206 + $0x4c] sm:$0xf]
      %s621 = scalar_lea.vmem %s210, 96
      %v622 = vld [vmem:[%s621] sm:$0xf]
      %v623 = vld [vmem:[%s621 + $0x4] sm:$0xf]
      %v624 = vld [vmem:[%s621 + $0x8] sm:$0xf]
      %v625 = vld [vmem:[%s621 + $0xc] sm:$0xf]
      %v626 = vld [vmem:[%s621 + $0x10] sm:$0xf]
      %v627 = vld [vmem:[%s621 + $0x14] sm:$0xf]
      %v628 = vld [vmem:[%s621 + $0x18] sm:$0xf]
      %v629 = vld [vmem:[%s621 + $0x1c] sm:$0xf]
      %v630 = vld [vmem:[%s621 + $0x20] sm:$0xf]
      %v631 = vld [vmem:[%s621 + $0x24] sm:$0xf]
      %v632 = vld [vmem:[%s621 + $0x28] sm:$0xf]
      %v633 = vld [vmem:[%s621 + $0x2c] sm:$0xf]
      %v650 = vunpack.c.l.b16 %v605
      %v651 = vunpack.c.l.b16 %v606
      %v652 = vunpack.c.l.b16 %v607
      %v653 = vunpack.c.l.b16 %v608
      %v654 = vunpack.c.l.b16 %v609
      %v655 = vunpack.c.l.b16 %v610
      %v656 = vunpack.c.l.b16 %v611
      %v657 = vunpack.c.l.b16 %v612
      %v658 = vunpack.c.l.b16 %v613
      %v659 = vunpack.c.l.b16 %v614
      %v660 = vunpack.c.l.b16 %v615
      %v661 = vunpack.c.l.b16 %v616
      %v662 = vunpack.c.l.b16 %v617
      %v663 = vunpack.c.l.b16 %v618
      %v664 = vunpack.c.l.b16 %v619
      %v665 = vunpack.c.l.b16 %v620
      %v666 = vpack.c.b16 %v651, %v650
      %v667 = vpack.c.b16 %v653, %v652
      %v668 = vpack.c.b16 %v655, %v654
      %v669 = vpack.c.b16 %v657, %v656
      %v670 = vpack.c.b16 %v659, %v658
      %v671 = vpack.c.b16 %v661, %v660
      %v672 = vpack.c.b16 %v663, %v662
      %v673 = vpack.c.b16 %v665, %v664
      %v686 = vunpack.c.l.b16 %v622
      %v687 = vunpack.c.l.b16 %v623
      %v688 = vunpack.c.l.b16 %v624
      %v689 = vunpack.c.l.b16 %v625
      %v690 = vunpack.c.l.b16 %v626
      %v691 = vunpack.c.l.b16 %v627
      %v692 = vunpack.c.l.b16 %v628
      %v693 = vunpack.c.l.b16 %v629
      %v694 = vunpack.c.l.b16 %v630
      %v695 = vunpack.c.l.b16 %v631
      %v696 = vunpack.c.l.b16 %v632
      %v697 = vunpack.c.l.b16 %v633
      %v698 = vpack.c.b16 %v687, %v686
      %v699 = vpack.c.b16 %v689, %v688
      %v700 = vpack.c.b16 %v691, %v690
      %v701 = vpack.c.b16 %v693, %v692
      %v702 = vpack.c.b16 %v695, %v694
      %v703 = vpack.c.b16 %v697, %v696
      %v711 = vsel %vm342, %v666, 0
      %v714 = vsel %vm342, %v667, 0
      %v717 = vsel %vm342, %v668, 0
      %v720 = vsel %vm342, %v669, 0
      %v723 = vsel %vm342, %v670, 0
      %v726 = vsel %vm342, %v671, 0
      %v729 = vsel %vm342, %v672, 0
      %v732 = vsel %vm342, %v673, 0
      %734 = vmatprep.subr.bf16.mxu0 0
      %735 = vmatpush1.bf16.msra.mxu0 %v698
      %736 = vmatprep.subr.bf16.mxu0 0
      %737 = vmatpush1.bf16.msra.mxu0 %v699
      %738 = vmatprep.subr.bf16.mxu0 0
      %739 = vmatpush1.bf16.msra.mxu0 %v700
      %740 = vmatprep.subr.bf16.mxu0 0
      %741 = vmatpush1.bf16.msra.mxu0 %v701
      %742 = vmatprep.subr.bf16.mxu0 0
      %743 = vmatpush1.bf16.msra.mxu0 %v702
      %744 = vmatprep.subr.bf16.mxu0 0
      %745 = vmatpush1.bf16.msra.mxu0 %v703
      %746 = vmatprep.subr.bf16.mxu0 0
      %747 = vmatpush1.bf16.msra.mxu0 0
      %748 = vmatprep.subr.bf16.mxu0 0
      %749 = vmatpush1.bf16.msra.mxu0 0
      %750 = vmatprep.subr.bf16.mxu0 0
      %751 = vmatpush1.bf16.msra.mxu0 0
      %752 = vmatprep.subr.bf16.mxu0 0
      %753 = vmatpush1.bf16.msra.mxu0 0
      %754 = vmatprep.subr.bf16.mxu0 0
      %755 = vmatpush1.bf16.msra.mxu0 0
      %756 = vmatprep.subr.bf16.mxu0 0
      %757 = vmatpush1.bf16.msra.mxu0 0
      %758 = vmatprep.subr.bf16.mxu0 0
      %759 = vmatpush1.bf16.msra.mxu0 0
      %760 = vmatprep.subr.bf16.mxu0 0
      %761 = vmatpush1.bf16.msra.mxu0 0
      %762 = vmatprep.subr.bf16.mxu0 0
      %763 = vmatpush1.bf16.msra.mxu0 0
      %764 = vmatprep.subr.bf16.mxu0 0
      %765 = vmatpush1.bf16.msra.mxu0 0
      %766 = vmatprep.mubr.bf16.mxu0 0
      %767 = vmatmul.mubr.bf16.gmra.mrb[0].mxu0 %v711
      %v768 = vpop.f32.mrb[0].mxu0
      %v769 = vadd.f32 0.0, %v768
      %v770 = vpop.f32.mrb[0].mxu0
      %v771 = vpop.f32.mrb[0].mxu0
      %v772 = vadd.f32 0.0, %v771
      %v773 = vpop.f32.mrb[0].mxu0
      %774 = vmatprep.mubr.bf16.mxu0 0
      %775 = vmatmul.mubr.bf16.gmra.mrb[0].mxu0 %v714
      %v776 = vpop.f32.mrb[0].mxu0
      %v777 = vadd.f32 0.0, %v776
      %v778 = vpop.f32.mrb[0].mxu0
      %v779 = vpop.f32.mrb[0].mxu0
      %v780 = vadd.f32 0.0, %v779
      %v781 = vpop.f32.mrb[0].mxu0
      %782 = vmatprep.mubr.bf16.mxu0 0
      %783 = vmatmul.mubr.bf16.gmra.mrb[0].mxu0 %v717
      %v784 = vpop.f32.mrb[0].mxu0
      %v785 = vadd.f32 0.0, %v784
      %v786 = vpop.f32.mrb[0].mxu0
      %v787 = vpop.f32.mrb[0].mxu0
      %v788 = vadd.f32 0.0, %v787
      %v789 = vpop.f32.mrb[0].mxu0
      %790 = vmatprep.mubr.bf16.mxu0 0
      %791 = vmatmul.mubr.bf16.gmra.mrb[0].mxu0 %v720
      %v792 = vpop.f32.mrb[0].mxu0
      %v793 = vadd.f32 0.0, %v792
      %v794 = vpop.f32.mrb[0].mxu0
      %v795 = vpop.f32.mrb[0].mxu0
      %v796 = vadd.f32 0.0, %v795
      %v797 = vpop.f32.mrb[0].mxu0
      %798 = vmatprep.mubr.bf16.mxu0 0
      %799 = vmatmul.mubr.bf16.gmra.mrb[0].mxu0 %v723
      %v800 = vpop.f32.mrb[0].mxu0
      %v801 = vadd.f32 0.0, %v800
      %v802 = vpop.f32.mrb[0].mxu0
      %v803 = vpop.f32.mrb[0].mxu0
      %v804 = vadd.f32 0.0, %v803
      %v805 = vpop.f32.mrb[0].mxu0
      %806 = vmatprep.mubr.bf16.mxu0 0
      %807 = vmatmul.mubr.bf16.gmra.mrb[0].mxu0 %v726
      %v808 = vpop.f32.mrb[0].mxu0
      %v809 = vadd.f32 0.0, %v808
      %v810 = vpop.f32.mrb[0].mxu0
      %v811 = vpop.f32.mrb[0].mxu0
      %v812 = vadd.f32 0.0, %v811
      %v813 = vpop.f32.mrb[0].mxu0
      %814 = vmatprep.mubr.bf16.mxu0 0
      %815 = vmatmul.mubr.bf16.gmra.mrb[0].mxu0 %v729
      %v816 = vpop.f32.mrb[0].mxu0
      %v817 = vadd.f32 0.0, %v816
      %v818 = vpop.f32.mrb[0].mxu0
      %v819 = vpop.f32.mrb[0].mxu0
      %v820 = vadd.f32 0.0, %v819
      %v821 = vpop.f32.mrb[0].mxu0
      %822 = vmatprep.mubr.bf16.mxu0 0
      %823 = vmatmul.mubr.bf16.gmra.mrb[0].mxu0 %v732
      %v824 = vpop.f32.mrb[0].mxu0
      %v825 = vadd.f32 0.0, %v824
      %v826 = vpop.f32.mrb[0].mxu0
      %v827 = vpop.f32.mrb[0].mxu0
      %v828 = vadd.f32 0.0, %v827
      %v829 = vpop.f32.mrb[0].mxu0
      %830 = vdwg.mxu0
      %v831 = vadd.f32 %v543, %v769
      %v832 = vadd.f32 %v546, %v772
      %v833 = vadd.f32 %v551, %v777
      %v834 = vadd.f32 %v554, %v780
      %v835 = vadd.f32 %v559, %v785
      %v836 = vadd.f32 %v562, %v788
      %v837 = vadd.f32 %v567, %v793
      %v838 = vadd.f32 %v570, %v796
      %v839 = vadd.f32 %v575, %v801
      %v840 = vadd.f32 %v578, %v804
      %v841 = vadd.f32 %v583, %v809
      %v842 = vadd.f32 %v586, %v812
      %v843 = vadd.f32 %v591, %v817
      %v844 = vadd.f32 %v594, %v820
      %v845 = vadd.f32 %v599, %v825
      %v846 = vadd.f32 %v602, %v828
      %v847 = vld [vmem:[%s213] sm:$0x1]
      %v849 = vlaneseq
      %v850 = vshrl.u32 %v849, 7
      %v851 = vsub.s32 0, %v850
      %v852 = vrot.slane %v847, %v851
      %v854 = vadd.f32 %v831, %v852
      %v855 = vadd.f32 %v832, %v852
      %v856 = vadd.f32 %v833, %v852
      %v857 = vadd.f32 %v834, %v852
      %v858 = vadd.f32 %v835, %v852
      %v859 = vadd.f32 %v836, %v852
      %v860 = vadd.f32 %v837, %v852
      %v861 = vadd.f32 %v838, %v852
      %v862 = vadd.f32 %v839, %v852
      %v863 = vadd.f32 %v840, %v852
      %v864 = vadd.f32 %v841, %v852
      %v865 = vadd.f32 %v842, %v852
      %v866 = vadd.f32 %v843, %v852
      %v867 = vadd.f32 %v844, %v852
      %v868 = vadd.f32 %v845, %v852
      %v869 = vadd.f32 %v846, %v852
      %v870 = vmax.f32 %v854, 0.0
      %v871 = vmax.f32 %v855, 0.0
      %v872 = vmax.f32 %v856, 0.0
      %v873 = vmax.f32 %v857, 0.0
      %v874 = vmax.f32 %v858, 0.0
      %v875 = vmax.f32 %v859, 0.0
      %v876 = vmax.f32 %v860, 0.0
      %v877 = vmax.f32 %v861, 0.0
      %v878 = vmax.f32 %v862, 0.0
      %v879 = vmax.f32 %v863, 0.0
      %v880 = vmax.f32 %v864, 0.0
      %v881 = vmax.f32 %v865, 0.0
      %v882 = vmax.f32 %v866, 0.0
      %v883 = vmax.f32 %v867, 0.0
      %v884 = vmax.f32 %v868, 0.0
      %v885 = vmax.f32 %v869, 0.0
      %v886 = vpack.c.bf16 %v871, %v870
      %v887 = vpack.c.bf16 %v873, %v872
      %v888 = vpack.c.bf16 %v875, %v874
      %v889 = vpack.c.bf16 %v877, %v876
      %v890 = vpack.c.bf16 %v879, %v878
      %v891 = vpack.c.bf16 %v881, %v880
      %v892 = vpack.c.bf16 %v883, %v882
      %v893 = vpack.c.bf16 %v885, %v884
      %v902 = vunpack.c.l.b16 %v886
      %v903 = vunpack.c.h.b16 %v886
      %v904 = vunpack.c.l.b16 %v887
      %v905 = vunpack.c.h.b16 %v887
      %v906 = vunpack.c.l.b16 %v888
      %v907 = vunpack.c.h.b16 %v888
      %v908 = vunpack.c.l.b16 %v889
      %v909 = vunpack.c.h.b16 %v889
      %v910 = vunpack.c.l.b16 %v890
      %v911 = vunpack.c.h.b16 %v890
      %v912 = vunpack.c.l.b16 %v891
      %v913 = vunpack.c.h.b16 %v891
      %v914 = vunpack.c.l.b16 %v892
      %v915 = vunpack.c.h.b16 %v892
      %v916 = vunpack.c.l.b16 %v893
      %v917 = vunpack.c.h.b16 %v893
      %v918 = vpack.c.b16 %v902, %v902
      %v919 = vpack.c.b16 %v903, %v903
      %v920 = vpack.c.b16 %v904, %v904
      %v921 = vpack.c.b16 %v905, %v905
      %v922 = vpack.c.b16 %v906, %v906
      %v923 = vpack.c.b16 %v907, %v907
      %v924 = vpack.c.b16 %v908, %v908
      %v925 = vpack.c.b16 %v909, %v909
      %v926 = vpack.c.b16 %v910, %v910
      %v927 = vpack.c.b16 %v911, %v911
      %v928 = vpack.c.b16 %v912, %v912
      %v929 = vpack.c.b16 %v913, %v913
      %v930 = vpack.c.b16 %v914, %v914
      %v931 = vpack.c.b16 %v915, %v915
      %v932 = vpack.c.b16 %v916, %v916
      %v933 = vpack.c.b16 %v917, %v917
      %950 = vst [vmem:[%s221] sm:$0xf] %v918
      %951 = vst [vmem:[%s221 + $0x4] sm:$0xf] %v919
      %952 = vst [vmem:[%s221 + $0x8] sm:$0xf] %v920
      %953 = vst [vmem:[%s221 + $0xc] sm:$0xf] %v921
      %954 = vst [vmem:[%s221 + $0x10] sm:$0xf] %v922
      %955 = vst [vmem:[%s221 + $0x14] sm:$0xf] %v923
      %956 = vst [vmem:[%s221 + $0x18] sm:$0xf] %v924
      %957 = vst [vmem:[%s221 + $0x1c] sm:$0xf] %v925
      %958 = vst [vmem:[%s221 + $0x20] sm:$0xf] %v926
      %959 = vst [vmem:[%s221 + $0x24] sm:$0xf] %v927
      %960 = vst [vmem:[%s221 + $0x28] sm:$0xf] %v928
      %961 = vst [vmem:[%s221 + $0x2c] sm:$0xf] %v929
      %962 = vst [vmem:[%s221 + $0x30] sm:$0xf] %v930
      %963 = vst [vmem:[%s221 + $0x34] sm:$0xf] %v931
      %964 = vst [vmem:[%s221 + $0x38] sm:$0xf] %v932
      %965 = vst [vmem:[%s221 + $0x3c] sm:$0xf] %v933
      %p966 = scmp.lt.s32.totalorder %s18, 1
      %s967 = scalar_select %p966, %s18, 1
      %p968 = scmp.lt.s32.totalorder %s19, 0
      %s969 = scalar_select %p968, %s19, 0
      %s970 = smul.addr %s967, 16
      %s971 = sadd.s32 %s969, %s970
      %s972 = smul.addr %s971, 4
      %s973 = scalar_lea.vmem %s3, %s972
      // Predicated region
      $region33: #{vgg_forward.8} parent=31 // pred_check
        %p974 = pneg %p124
      $region34: #{vgg_forward.8} parent=31 // pred_check_branch
        %976 = sbr.rel (%p974) target = $region36
      $region35: #{vgg_forward.8} parent=31 // pred_region
        _
      $region36: #{vgg_forward.8} parent=31 // pred_fallthru
        _
    $region32: #{vgg_forward.8} parent=5 // pred_fallthru
      _
    %p977 = scmp.le.s32.totalorder 2, %s9
    // Predicated region
    $region37: #{vgg_forward.8} parent=5 // pred_check
      %p978 = pneg %p977
    $region38: #{vgg_forward.8} parent=5 // pred_check_branch
      %980 = sbr.rel (%p978) target = $region40
    $region39: #{vgg_forward.8} parent=5 // pred_region
      %s981 = ssub.s32 %s9, 2
      // Predicated region
      $region41: #{vgg_forward.8} parent=39 // pred_check
        %p982 = pneg %p130
      $region42: #{vgg_forward.8} parent=39 // pred_check_branch
        %984 = sbr.rel (%p982) target = $region44
      $region43: #{vgg_forward.8} parent=39 // pred_region
        %p985 = scmp.lt.s32.totalorder %s20, 1
        %s986 = scalar_select %p985, %s20, 1
        %p987 = scmp.lt.s32.totalorder %s21, 0
        %s988 = scalar_select %p987, %s21, 0
        %s989 = smul.addr %s986, 16
        %s990 = sadd.s32 %s988, %s989
        %s991 = smul.addr %s990, 4
        %s992 = scalar_lea.vmem %s3, %s991
      $region44: #{vgg_forward.8} parent=39 // pred_fallthru
        _
    $region40: #{vgg_forward.8} parent=5 // pred_fallthru
      _
  $region6: #{vgg_forward.8} parent=0 // loop_footer
    %s13 = sadd.s32 1, %s9
  $region7: #{vgg_forward.8} parent=0 // loop_footer_branch
    %8 = sbr.rel target = $region3
  $region8: #{vgg_forward.8} parent=0 // loop_exit
    _

// kernel: vgg_forward.9
$region0: #{vgg_forward.9}
  #allocation0 [shape = 'u32[]', space=smem, size = 0x4, offset = 0x4, fixed_abs, tag = 'smem constant byte address 0x4 - core index']
  #allocation1 [shape = 'u32[144,128]{1,0:T(1,128)}', space=vmem, size = 0x12000, scoped, tag = 'internal scratch']
  %s0 = inlined_call_operand.vmem [shape: bf16[2,96,192], index: 0, kind: input, shape index: {}]
  %s1 = inlined_call_operand.vmem [shape: bf16[3,192,128], index: 1, kind: input, shape index: {}]
  %s2 = inlined_call_operand.vmem [shape: f32[1,128], index: 2, kind: input, shape index: {}]
  %s3 = inlined_call_operand.vmem [shape: bf16[2,64,128], index: 3, kind: output, shape index: {}]
  %s4 = sld [smem:[#allocation0]]
  $region45: #{vgg_forward.9} parent=0
    _
  %s6 = ssub.s32 1, %s4
  %s7 = scalar_select 0, %s6, %s4
  loop: start=0, step=1, limit=4
  $region2: #{vgg_forward.9} parent=0 // loop_pre_header
    _
  $region3: #{vgg_forward.9} parent=0 // loop_header
    %s9 = sphi 0, %s13
    %p10 = scmp.ge.s32.totalorder %s9, 4
    %s16 = sphi 0, %s28
    %s17 = sphi 0, %s24
    %s18 = sphi 0, %s16
    %s19 = sphi 0, %s17
    %s20 = sphi 0, %s18
    %s21 = sphi 0, %s19
    %s31 = sphi 0, %s33
    %s34 = sphi 0, %s31
    %s35 = sphi 0, %s34
    %s51 = sphi 0, %s35
    %s57 = sphi 0, %s59
    %s60 = sphi 0, %s57
    %s61 = sphi 0, %s60
    %s77 = sphi 0, %s61
    %s83 = sphi 0, %s85
    %s86 = sphi 0, %s83
    %s87 = sphi 0, %s86
    %s103 = sphi 0, %s87
    %s111 = sphi 0, %s113
    %s114 = sphi 0, %s111
    %s115 = sphi 0, %s114
    %s131 = sphi 0, %s115
  $region4: #{vgg_forward.9} parent=0 // loop_header_branch
    %12 = sbr.rel (%p10) target = $region8
  $region5: #{vgg_forward.9} parent=0 // loop_body
    %s14 = ssub.s32 %s9, 1
    %s15 = ssub.s32 %s9, 2
    %s22 = sadd.s32 1, %s17
    %p23 = scmp.ge.s32.totalorder %s22, 1
    %s24 = scalar_select %p23, 0, %s22
    %s25 = sadd.s32 1, %s16
    %s26 = scalar_select %p23, %s25, %s16
    %p27 = scmp.ge.s32.totalorder %s26, 2
    %s28 = scalar_select %p27, 0, %s26
    %s29 = ssub.s32 %s16, %s28
    %p30 = scmp.eq.s32.totalorder %s29, 0
    %s32 = sadd.s32 %s31, 1
    %s33 = scalar_select %p30, %s31, %s32
    %p36 = pneg %p30
    %p37 = scmp.eq.s32.totalorder %s9, 1
    %p38 = por %p36, %p37
    %p39 = scmp.ne.s32.totalorder %s31, %s34
    %p40 = scmp.eq.s32.totalorder %s9, 0
    %p41 = por %p39, %p40
    %p42 = scmp.ne.s32.totalorder %s31, %s34
    %p43 = scmp.eq.s32.totalorder %s14, 1
    %p44 = por %p42, %p43
    %p45 = scmp.ne.s32.totalorder %s34, %s35
    %p46 = scmp.eq.s32.totalorder %s14, 0
    %p47 = por %p45, %p46
    %p48 = scmp.ne.s32.totalorder %s34, %s35
    %p49 = scmp.eq.s32.totalorder %s15, 1
    %p50 = por %p48, %p49
    %p52 = scmp.ne.s32.totalorder %s35, %s51
    %p53 = scmp.eq.s32.totalorder %s15, 0
    %p54 = por %p52, %p53
    %s55 = ssub.s32 %s17, %s24
    %p56 = scmp.eq.s32.totalorder %s55, 0
    %s58 = sadd.s32 %s57, 1
    %s59 = scalar_select %p56, %s57, %s58
    %p62 = pneg %p56
    %p63 = scmp.eq.s32.totalorder %s9, 1
    %p64 = por %p62, %p63
    %p65 = scmp.ne.s32.totalorder %s57, %s60
    %p66 = scmp.eq.s32.totalorder %s9, 0
    %p67 = por %p65, %p66
    %p68 = scmp.ne.s32.totalorder %s57, %s60
    %p69 = scmp.eq.s32.totalorder %s14, 1
    %p70 = por %p68, %p69
    %p71 = scmp.ne.s32.totalorder %s60, %s61
    %p72 = scmp.eq.s32.totalorder %s14, 0
    %p73 = por %p71, %p72
    %p74 = scmp.ne.s32.totalorder %s60, %s61
    %p75 = scmp.eq.s32.totalorder %s15, 1
    %p76 = por %p74, %p75
    %p78 = scmp.ne.s32.totalorder %s61, %s77
    %p79 = scmp.eq.s32.totalorder %s15, 0
    %p80 = por %p78, %p79
    %s81 = ssub.s32 %s17, %s24
    %p82 = scmp.eq.s32.totalorder %s81, 0
    %s84 = sadd.s32 %s83, 1
    %s85 = scalar_select %p82, %s83, %s84
    %p88 = pneg %p82
    %p89 = scmp.eq.s32.totalorder %s9, 1
    %p90 = por %p88, %p89
    %p91 = scmp.ne.s32.totalorder %s83, %s86
    %p92 = scmp.eq.s32.totalorder %s9, 0
    %p93 = por %p91, %p92
    %p94 = scmp.ne.s32.totalorder %s83, %s86
    %p95 = scmp.eq.s32.totalorder %s14, 1
    %p96 = por %p94, %p95
    %p97 = scmp.ne.s32.totalorder %s86, %s87
    %p98 = scmp.eq.s32.totalorder %s14, 0
    %p99 = por %p97, %p98
    %p100 = scmp.ne.s32.totalorder %s86, %s87
    %p101 = scmp.eq.s32.totalorder %s15, 1
    %p102 = por %p100, %p101
    %p104 = scmp.ne.s32.totalorder %s87, %s103
    %p105 = scmp.eq.s32.totalorder %s15, 0
    %p106 = por %p104, %p105
    %s107 = ssub.s32 %s16, %s28
    %s108 = ssub.s32 %s17, %s24
    %s109 = sor.u32 %s107, %s108
    %p110 = scmp.eq.s32.totalorder %s109, 0
    %s112 = sadd.s32 %s111, 1
    %s113 = scalar_select %p110, %s111, %s112
    %p116 = pneg %p110
    %p117 = scmp.eq.s32.totalorder %s9, 1
    %p118 = por %p116, %p117
    %p119 = scmp.ne.s32.totalorder %s111, %s114
    %p120 = scmp.eq.s32.totalorder %s9, 0
    %p121 = por %p119, %p120
    %p122 = scmp.ne.s32.totalorder %s111, %s114
    %p123 = scmp.eq.s32.totalorder %s14, 1
    %p124 = por %p122, %p123
    %p125 = scmp.ne.s32.totalorder %s114, %s115
    %p126 = scmp.eq.s32.totalorder %s14, 0
    %p127 = por %p125, %p126
    %p128 = scmp.ne.s32.totalorder %s114, %s115
    %p129 = scmp.eq.s32.totalorder %s15, 1
    %p130 = por %p128, %p129
    %p132 = scmp.ne.s32.totalorder %s115, %s131
    %p133 = scmp.eq.s32.totalorder %s15, 0
    %p134 = por %p132, %p133
    %p135 = scmp.le.s32.totalorder 1, %s9
    %p136 = scmp.lt.s32.totalorder %s9, 3
    %p137 = pnand %p135, %p136
    %p138 = pneg %p137
    // Predicated region
    $region9: #{vgg_forward.9} parent=5 // pred_check
      _
    $region10: #{vgg_forward.9} parent=5 // pred_check_branch
      %140 = sbr.rel (%p137) target = $region12
    $region11: #{vgg_forward.9} parent=5 // pred_region
      %s141 = ssub.s32 %s9, 1
      // Predicated region
      $region13: #{vgg_forward.9} parent=11 // pred_check
        %p142 = pneg %p73
      $region14: #{vgg_forward.9} parent=11 // pred_check_branch
        %144 = sbr.rel (%p142) target = $region16
      $region15: #{vgg_forward.9} parent=11 // pred_region
        %p145 = scmp.lt.s32.totalorder %s19, 0
        %s146 = scalar_select %p145, %s19, 0
        %s147 = smul.addr %s146, 4
        %s148 = scalar_lea.vmem %s1, %s147
      $region16: #{vgg_forward.9} parent=11 // pred_fallthru
        _
      // Predicated region
      $region17: #{vgg_forward.9} parent=11 // pred_check
        %p149 = pneg %p99
      $region18: #{vgg_forward.9} parent=11 // pred_check_branch
        %151 = sbr.rel (%p149) target = $region20
      $region19: #{vgg_forward.9} parent=11 // pred_region
        %p152 = scmp.lt.s32.totalorder %s19, 0
        %s153 = scalar_select %p152, %s19, 0
        %s154 = scalar_lea.vmem %s2, %s153
      $region20: #{vgg_forward.9} parent=11 // pred_fallthru
        _
    $region12: #{vgg_forward.9} parent=5 // pred_fallthru
      _
    %p155 = scmp.lt.s32.totalorder %s9, 2
    // Predicated region
    $region21: #{vgg_forward.9} parent=5 // pred_check
      %p156 = pneg %p155
    $region22: #{vgg_forward.9} parent=5 // pred_check_branch
      %158 = sbr.rel (%p156) target = $region24
    $region23: #{vgg_forward.9} parent=5 // pred_region
      // Predicated region
      $region25: #{vgg_forward.9} parent=23 // pred_check
        %p159 = pneg %p41
      $region26: #{vgg_forward.9} parent=23 // pred_check_branch
        %161 = sbr.rel (%p159) target = $region28
      $region27: #{vgg_forward.9} parent=23 // pred_region
        %p162 = scmp.lt.s32.totalorder %s16, 1
        %s163 = scalar_select %p162, %s16, 1
        %s164 = smul.addr %s163, 24
        %s165 = smul.addr %s164, 4
        %s166 = scalar_lea.vmem %s0, %s165
      $region28: #{vgg_forward.9} parent=23 // pred_fallthru
        _
    $region24: #{vgg_forward.9} parent=5 // pred_fallthru
      _
    %p167 = scmp.le.s32.totalorder 1, %s9
    %p168 = scmp.lt.s32.totalorder %s9, 3
    %p169 = pnand %p167, %p168
    %p170 = pneg %p169
    // Predicated region
    $region29: #{vgg_forward.9} parent=5 // pred_check
      _
    $region30: #{vgg_forward.9} parent=5 // pred_check_branch
      %172 = sbr.rel (%p169) target = $region32
    $region31: #{vgg_forward.9} parent=5 // pred_region
      %s173 = ssub.s32 %s9, 1
      %p174 = scmp.lt.s32.totalorder %s18, 1
      %s175 = scalar_select %p174, %s18, 1
      %s176 = smul.addr %s175, 24
      %s177 = smul.addr %s176, 4
      %s178 = scalar_lea.vmem %s0, %s177
      %p179 = pneg %p47
      %p180 = pneg %p44
      %p181 = scmp.lt.s32.totalorder %s19, 0
      %s182 = scalar_select %p181, %s19, 0
      %s183 = smul.addr %s182, 4
      %s184 = scalar_lea.vmem %s1, %s183
      %p185 = pneg %p73
      %p186 = pneg %p70
      %p187 = scmp.lt.s32.totalorder %s19, 0
      %s188 = scalar_select %p187, %s19, 0
      %s189 = scalar_lea.vmem %s2, %s188
      %p190 = pneg %p99
      %p191 = pneg %p96
      %p192 = pneg %p127
      %p193 = pneg %p124
      %p194 = scmp.lt.s32.totalorder %s18, 1
      %s195 = scalar_select %p194, %s18, 1
      %p196 = scmp.lt.s32.totalorder %s19, 0
      %s197 = scalar_select %p196, %s19, 0
      %s198 = smul.addr %s195, 8
      %s199 = sadd.s32 %s197, %s198
      %s200 = smul.addr %s199, 4
      %s201 = scalar_lea.vmem %s3, %s200
      %p202 = scmp.lt.s32.totalorder %s18, 1
      %s203 = scalar_select %p202, %s18, 1
      %s204 = smul.addr %s203, 24
      %s205 = smul.addr %s204, 4
      %s206 = scalar_lea.vmem %s0, %s205
      %p207 = scmp.lt.s32.totalorder %s19, 0
      %s208 = scalar_select %p207, %s19, 0
      %s209 = smul.addr %s208, 4
      %s210 = scalar_lea.vmem %s1, %s209
      %p211 = scmp.lt.s32.totalorder %s19, 0
      %s212 = scalar_select %p211, %s19, 0
      %s213 = scalar_lea.vmem %s2, %s212
      %p214 = scmp.lt.s32.totalorder %s18, 1
      %s215 = scalar_select %p214, %s18, 1
      %p216 = scmp.lt.s32.totalorder %s19, 0
      %s217 = scalar_select %p216, %s19, 0
      %s218 = smul.addr %s215, 8
      %s219 = sadd.s32 %s217, %s218
      %s220 = smul.addr %s219, 4
      %s221 = scalar_lea.vmem %s3, %s220
      %v223 = vld [vmem:[%s206] sm:$0xff]
      %v224 = vld [vmem:[%s206 + $0x8] sm:$0xff]
      %v225 = vld [vmem:[%s206 + $0x10] sm:$0xff]
      %v226 = vld [vmem:[%s206 + $0x18] sm:$0xff]
      %v227 = vld [vmem:[%s206 + $0x20] sm:$0xff]
      %v228 = vld [vmem:[%s206 + $0x28] sm:$0xff]
      %v229 = vld [vmem:[%s206 + $0x30] sm:$0xff]
      %v230 = vld [vmem:[%s206 + $0x38] sm:$0xff]
      %v231 = vld [vmem:[%s210] sm:$0xf]
      %v232 = vld [vmem:[%s210 + $0x4] sm:$0xf]
      %v233 = vld [vmem:[%s210 + $0x8] sm:$0xf]
      %v234 = vld [vmem:[%s210 + $0xc] sm:$0xf]
      %v235 = vld [vmem:[%s210 + $0x10] sm:$0xf]
      %v236 = vld [vmem:[%s210 + $0x14] sm:$0xf]
      %v237 = vld [vmem:[%s210 + $0x18] sm:$0xf]
      %v238 = vld [vmem:[%s210 + $0x1c] sm:$0xf]
      %v239 = vld [vmem:[%s210 + $0x20] sm:$0xf]
      %v240 = vld [vmem:[%s210 + $0x24] sm:$0xf]
      %v241 = vld [vmem:[%s210 + $0x28] sm:$0xf]
      %v242 = vld [vmem:[%s210 + $0x2c] sm:$0xf]
      %v243 = vld [vmem:[%s210 + $0x30] sm:$0xf]
      %v244 = vld [vmem:[%s210 + $0x34] sm:$0xf]
      %v245 = vld [vmem:[%s210 + $0x38] sm:$0xf]
      %v246 = vld [vmem:[%s210 + $0x3c] sm:$0xf]
      %v247 = vld [vmem:[%s210 + $0x40] sm:$0xf]
      %v248 = vld [vmem:[%s210 + $0x44] sm:$0xf]
      %v249 = vld [vmem:[%s210 + $0x48] sm:$0xf]
      %v250 = vld [vmem:[%s210 + $0x4c] sm:$0xf]
      %v251 = vld [vmem:[%s210 + $0x50] sm:$0xf]
      %v252 = vld [vmem:[%s210 + $0x54] sm:$0xf]
      %v253 = vld [vmem:[%s210 + $0x58] sm:$0xf]
      %v254 = vld [vmem:[%s210 + $0x5c] sm:$0xf]
      %v255 = vld [vmem:[%s206 + $0x40] sm:$0xff]
      %v256 = vld [vmem:[%s206 + $0x48] sm:$0xff]
      %s257 = scalar_lea.vmem %s210, 96
      %v258 = vld [vmem:[%s257] sm:$0xf]
      %v259 = vld [vmem:[%s257 + $0x4] sm:$0xf]
      %v260 = vld [vmem:[%s257 + $0x8] sm:$0xf]
      %v261 = vld [vmem:[%s257 + $0xc] sm:$0xf]
      %v262 = vld [vmem:[%s257 + $0x10] sm:$0xf]
      %v263 = vld [vmem:[%s257 + $0x14] sm:$0xf]
      %v264 = vld [vmem:[%s257 + $0x18] sm:$0xf]
      %v265 = vld [vmem:[%s257 + $0x1c] sm:$0xf]
      %v266 = vld [vmem:[%s257 + $0x20] sm:$0xf]
      %v267 = vld [vmem:[%s257 + $0x24] sm:$0xf]
      %v268 = vld [vmem:[%s257 + $0x28] sm:$0xf]
      %v269 = vld [vmem:[%s257 + $0x2c] sm:$0xf]
      %v270 = vld [vmem:[%s257 + $0x30] sm:$0xf]
      %v271 = vld [vmem:[%s257 + $0x34] sm:$0xf]
      %v272 = vld [vmem:[%s257 + $0x38] sm:$0xf]
      %v273 = vld [vmem:[%s257 + $0x3c] sm:$0xf]
      %v274 = vld [vmem:[%s257 + $0x40] sm:$0xf]
      %v275 = vld [vmem:[%s257 + $0x44] sm:$0xf]
      %v276 = vld [vmem:[%s257 + $0x48] sm:$0xf]
      %v277 = vld [vmem:[%s257 + $0x4c] sm:$0xf]
      %v278 = vld [vmem:[%s257 + $0x50] sm:$0xf]
      %v279 = vld [vmem:[%s257 + $0x54] sm:$0xf]
      %v280 = vld [vmem:[%s257 + $0x58] sm:$0xf]
      %v281 = vld [vmem:[%s257 + $0x5c] sm:$0xf]
      %v290 = vunpack.c.l.b16 %v225
      %v291 = vunpack.c.h.b16 %v225
      %v292 = vunpack.c.l.b16 %v226
      %v293 = vunpack.c.h.b16 %v226
      %v294 = vunpack.c.l.b16 %v227
      %v295 = vunpack.c.h.b16 %v227
      %v296 = vunpack.c.l.b16 %v228
      %v297 = vunpack.c.h.b16 %v228
      %v298 = vunpack.c.l.b16 %v229
      %v299 = vunpack.c.h.b16 %v229
      %v300 = vunpack.c.l.b16 %v230
      %v301 = vunpack.c.h.b16 %v230
      %v302 = vunpack.c.l.b16 %v255
      %v303 = vunpack.c.h.b16 %v255
      %v304 = vunpack.c.l.b16 %v256
      %v305 = vunpack.c.h.b16 %v256
      %v306 = vpack.c.b16 %v292, %v290
      %v307 = vpack.c.b16 %v293, %v291
      %v308 = vpack.c.b16 %v296, %v294
      %v309 = vpack.c.b16 %v297, %v295
      %v310 = vpack.c.b16 %v300, %v298
      %v311 = vpack.c.b16 %v301, %v299
      %v312 = vpack.c.b16 %v304, %v302
      %v313 = vpack.c.b16 %v305, %v303
      %v342 = vunpack.c.l.b16 %v258
      %v343 = vunpack.c.l.b16 %v259
      %v344 = vunpack.c.l.b16 %v260
      %v345 = vunpack.c.l.b16 %v261
      %v346 = vunpack.c.l.b16 %v262
      %v347 = vunpack.c.l.b16 %v263
      %v348 = vunpack.c.l.b16 %v264
      %v349 = vunpack.c.l.b16 %v265
      %v350 = vunpack.c.l.b16 %v266
      %v351 = vunpack.c.l.b16 %v267
      %v352 = vunpack.c.l.b16 %v268
      %v353 = vunpack.c.l.b16 %v269
      %v354 = vunpack.c.l.b16 %v270
      %v355 = vunpack.c.l.b16 %v271
      %v356 = vunpack.c.l.b16 %v272
      %v357 = vunpack.c.l.b16 %v273
      %v358 = vunpack.c.l.b16 %v274
      %v359 = vunpack.c.l.b16 %v275
      %v360 = vunpack.c.l.b16 %v276
      %v361 = vunpack.c.l.b16 %v277
      %v362 = vunpack.c.l.b16 %v278
      %v363 = vunpack.c.l.b16 %v279
      %v364 = vunpack.c.l.b16 %v280
      %v365 = vunpack.c.l.b16 %v281
      %v366 = vpack.c.b16 %v343, %v342
      %v367 = vpack.c.b16 %v345, %v344
      %v368 = vpack.c.b16 %v347, %v346
      %v369 = vpack.c.b16 %v349, %v348
      %v370 = vpack.c.b16 %v351, %v350
      %v371 = vpack.c.b16 %v353, %v352
      %v372 = vpack.c.b16 %v355, %v354
      %v373 = vpack.c.b16 %v357, %v356
      %v374 = vpack.c.b16 %v359, %v358
      %v375 = vpack.c.b16 %v361, %v360
      %v376 = vpack.c.b16 %v363, %v362
      %v377 = vpack.c.b16 %v365, %v364
      %vm390 = vcmask 523264
      %v392 = vsel %vm390, %v307, 0
      %v395 = vsel %vm390, %v309, 0
      %v398 = vsel %vm390, %v311, 0
      %v401 = vsel %vm390, %v313, 0
      %403 = vmatprep.subr.bf16.mxu0 0
      %404 = vmatpush1.bf16.msra.mxu0 %v366
      %405 = vmatprep.subr.bf16.mxu0 0
      %406 = vmatpush1.bf16.msra.mxu0 %v367
      %407 = vmatprep.subr.bf16.mxu0 0
      %408 = vmatpush1.bf16.msra.mxu0 %v368
      %409 = vmatprep.subr.bf16.mxu0 0
      %410 = vmatpush1.bf16.msra.mxu0 %v369
      %411 = vmatprep.subr.bf16.mxu0 0
      %412 = vmatpush1.bf16.msra.mxu0 %v370
      %413 = vmatprep.subr.bf16.mxu0 0
      %414 = vmatpush1.bf16.msra.mxu0 %v371
      %415 = vmatprep.subr.bf16.mxu0 0
      %416 = vmatpush1.bf16.msra.mxu0 %v372
      %417 = vmatprep.subr.bf16.mxu0 0
      %418 = vmatpush1.bf16.msra.mxu0 %v373
      %419 = vmatprep.subr.bf16.mxu0 0
      %420 = vmatpush1.bf16.msra.mxu0 %v374
      %421 = vmatprep.subr.bf16.mxu0 0
      %422 = vmatpush1.bf16.msra.mxu0 %v375
      %423 = vmatprep.subr.bf16.mxu0 0
      %424 = vmatpush1.bf16.msra.mxu0 %v376
      %425 = vmatprep.subr.bf16.mxu0 0
      %426 = vmatpush1.bf16.msra.mxu0 %v377
      %427 = vmatprep.subr.bf16.mxu0 0
      %428 = vmatpush1.bf16.msra.mxu0 0
      %429 = vmatprep.subr.bf16.mxu0 0
      %430 = vmatpush1.bf16.msra.mxu0 0
      %431 = vmatprep.subr.bf16.mxu0 0
      %432 = vmatpush1.bf16.msra.mxu0 0
      %433 = vmatprep.subr.bf16.mxu0 0
      %434 = vmatpush1.bf16.msra.mxu0 0
      %435 = vmatprep.mubr.bf16.mxu0 %v392
      %436 = vmatmul.mubr.bf16.gmra.mrb[0].mxu0 %v306
      %v437 = vpop.f32.mrb[0].mxu0
      %v438 = vadd.f32 0.0, %v437
      %v439 = vpop.f32.mrb[0].mxu0
      %v440 = vpop.f32.mrb[0].mxu0
      %v441 = vadd.f32 0.0, %v440
      %v442 = vpop.f32.mrb[0].mxu0
      %443 = vmatprep.mubr.bf16.mxu0 %v395
      %444 = vmatmul.mubr.bf16.gmra.mrb[0].mxu0 %v308
      %v445 = vpop.f32.mrb[0].mxu0
      %v446 = vadd.f32 0.0, %v445
      %v447 = vpop.f32.mrb[0].mxu0
      %v448 = vpop.f32.mrb[0].mxu0
      %v449 = vadd.f32 0.0, %v448
      %v450 = vpop.f32.mrb[0].mxu0
      %451 = vmatprep.mubr.bf16.mxu0 %v398
      %452 = vmatmul.mubr.bf16.gmra.mrb[0].mxu0 %v310
      %v453 = vpop.f32.mrb[0].mxu0
      %v454 = vadd.f32 0.0, %v453
      %v455 = vpop.f32.mrb[0].mxu0
      %v456 = vpop.f32.mrb[0].mxu0
      %v457 = vadd.f32 0.0, %v456
      %v458 = vpop.f32.mrb[0].mxu0
      %459 = vmatprep.mubr.bf16.mxu0 %v401
      %460 = vmatmul.mubr.bf16.gmra.mrb[0].mxu0 %v312
      %v461 = vpop.f32.mrb[0].mxu0
      %v462 = vadd.f32 0.0, %v461
      %v463 = vpop.f32.mrb[0].mxu0
      %v464 = vpop.f32.mrb[0].mxu0
      %v465 = vadd.f32 0.0, %v464
      %v466 = vpop.f32.mrb[0].mxu0
      %467 = vdwg.mxu0
      %v470 = vunpack.c.l.b16 %v223
      %v471 = vunpack.c.h.b16 %v223
      %v472 = vunpack.c.l.b16 %v224
      %v473 = vunpack.c.h.b16 %v224
      %v474 = vpack.c.b16 %v472, %v470
      %v475 = vpack.c.b16 %v473, %v471
      %v501 = vunpack.c.l.b16 %v231
      %v502 = vunpack.c.l.b16 %v232
      %v503 = vunpack.c.l.b16 %v233
      %v504 = vunpack.c.l.b16 %v234
      %v505 = vunpack.c.l.b16 %v235
      %v506 = vunpack.c.l.b16 %v236
      %v507 = vunpack.c.l.b16 %v237
      %v508 = vunpack.c.l.b16 %v238
      %v509 = vunpack.c.l.b16 %v239
      %v510 = vunpack.c.l.b16 %v240
      %v511 = vunpack.c.l.b16 %v241
      %v512 = vunpack.c.l.b16 %v242
      %v513 = vunpack.c.l.b16 %v243
      %v514 = vunpack.c.l.b16 %v244
      %v515 = vunpack.c.l.b16 %v245
      %v516 = vunpack.c.l.b16 %v246
      %v517 = vunpack.c.l.b16 %v247
      %v518 = vunpack.c.l.b16 %v248
      %v519 = vunpack.c.l.b16 %v249
      %v520 = vunpack.c.l.b16 %v250
      %v521 = vunpack.c.l.b16 %v251
      %v522 = vunpack.c.l.b16 %v252
      %v523 = vunpack.c.l.b16 %v253
      %v524 = vunpack.c.l.b16 %v254
      %v525 = vpack.c.b16 %v502, %v501
      %v526 = vpack.c.b16 %v504, %v503
      %v527 = vpack.c.b16 %v506, %v505
      %v528 = vpack.c.b16 %v508, %v507
      %v529 = vpack.c.b16 %v510, %v509
      %v530 = vpack.c.b16 %v512, %v511
      %v531 = vpack.c.b16 %v514, %v513
      %v532 = vpack.c.b16 %v516, %v515
      %v533 = vpack.c.b16 %v518, %v517
      %v534 = vpack.c.b16 %v520, %v519
      %v535 = vpack.c.b16 %v522, %v521
      %v536 = vpack.c.b16 %v524, %v523
      %v550 = vsel %vm390, %v475, 0
      %552 = vmatprep.subr.bf16.mxu0 0
      %553 = vmatpush1.bf16.msra.mxu0 %v525
      %554 = vmatprep.subr.bf16.mxu0 0
      %555 = vmatpush1.bf16.msra.mxu0 %v526
      %556 = vmatprep.subr.bf16.mxu0 0
      %557 = vmatpush1.bf16.msra.mxu0 %v527
      %558 = vmatprep.subr.bf16.mxu0 0
      %559 = vmatpush1.bf16.msra.mxu0 %v528
      %560 = vmatprep.subr.bf16.mxu0 0
      %561 = vmatpush1.bf16.msra.mxu0 %v529
      %562 = vmatprep.subr.bf16.mxu0 0
      %563 = vmatpush1.bf16.msra.mxu0 %v530
      %564 = vmatprep.subr.bf16.mxu0 0
      %565 = vmatpush1.bf16.msra.mxu0 %v531
      %566 = vmatprep.subr.bf16.mxu0 0
      %567 = vmatpush1.bf16.msra.mxu0 %v532
      %568 = vmatprep.subr.bf16.mxu0 0
      %569 = vmatpush1.bf16.msra.mxu0 %v533
      %570 = vmatprep.subr.bf16.mxu0 0
      %571 = vmatpush1.bf16.msra.mxu0 %v534
      %572 = vmatprep.subr.bf16.mxu0 0
      %573 = vmatpush1.bf16.msra.mxu0 %v535
      %574 = vmatprep.subr.bf16.mxu0 0
      %575 = vmatpush1.bf16.msra.mxu0 %v536
      %576 = vmatprep.subr.bf16.mxu0 0
      %577 = vmatpush1.bf16.msra.mxu0 0
      %578 = vmatprep.subr.bf16.mxu0 0
      %579 = vmatpush1.bf16.msra.mxu0 0
      %580 = vmatprep.subr.bf16.mxu0 0
      %581 = vmatpush1.bf16.msra.mxu0 0
      %582 = vmatprep.subr.bf16.mxu0 0
      %583 = vmatpush1.bf16.msra.mxu0 0
      %584 = vmatprep.mubr.bf16.mxu0 %v550
      %585 = vmatmul.mubr.bf16.gmra.mrb[0].mxu0 %v474
      %v586 = vpop.f32.mrb[0].mxu0
      %v587 = vadd.f32 %v438, %v586
      %v588 = vpop.f32.mrb[0].mxu0
      %v589 = vpop.f32.mrb[0].mxu0
      %v590 = vadd.f32 %v441, %v589
      %v591 = vpop.f32.mrb[0].mxu0
      %592 = vmatprep.mubr.bf16.mxu0 %v392
      %593 = vmatmul.mubr.bf16.gmra.mrb[0].mxu0 %v306
      %v594 = vpop.f32.mrb[0].mxu0
      %v595 = vadd.f32 %v446, %v594
      %v596 = vpop.f32.mrb[0].mxu0
      %v597 = vpop.f32.mrb[0].mxu0
      %v598 = vadd.f32 %v449, %v597
      %v599 = vpop.f32.mrb[0].mxu0
      %600 = vmatprep.mubr.bf16.mxu0 %v395
      %601 = vmatmul.mubr.bf16.gmra.mrb[0].mxu0 %v308
      %v602 = vpop.f32.mrb[0].mxu0
      %v603 = vadd.f32 %v454, %v602
      %v604 = vpop.f32.mrb[0].mxu0
      %v605 = vpop.f32.mrb[0].mxu0
      %v606 = vadd.f32 %v457, %v605
      %v607 = vpop.f32.mrb[0].mxu0
      %608 = vmatprep.mubr.bf16.mxu0 %v398
      %609 = vmatmul.mubr.bf16.gmra.mrb[0].mxu0 %v310
      %v610 = vpop.f32.mrb[0].mxu0
      %v611 = vadd.f32 %v462, %v610
      %v612 = vpop.f32.mrb[0].mxu0
      %v613 = vpop.f32.mrb[0].mxu0
      %v614 = vadd.f32 %v465, %v613
      %v615 = vpop.f32.mrb[0].mxu0
      %616 = vdwg.mxu0
      %v617 = vld [vmem:[%s206 + $0x20] sm:$0xff]
      %v618 = vld [vmem:[%s206 + $0x28] sm:$0xff]
      %v619 = vld [vmem:[%s206 + $0x30] sm:$0xff]
      %v620 = vld [vmem:[%s206 + $0x38] sm:$0xff]
      %v621 = vld [vmem:[%s206 + $0x40] sm:$0xff]
      %v622 = vld [vmem:[%s206 + $0x48] sm:$0xff]
      %v623 = vld [vmem:[%s206 + $0x50] sm:$0xff]
      %v624 = vld [vmem:[%s206 + $0x58] sm:$0xff]
      %s625 = scalar_lea.vmem %s210, 192
      %v626 = vld [vmem:[%s625] sm:$0xf]
      %v627 = vld [vmem:[%s625 + $0x4] sm:$0xf]
      %v628 = vld [vmem:[%s625 + $0x8] sm:$0xf]
      %v629 = vld [vmem:[%s625 + $0xc] sm:$0xf]
      %v630 = vld [vmem:[%s625 + $0x10] sm:$0xf]
      %v631 = vld [vmem:[%s625 + $0x14] sm:$0xf]
      %v632 = vld [vmem:[%s625 + $0x18] sm:$0xf]
      %v633 = vld [vmem:[%s625 + $0x1c] sm:$0xf]
      %v634 = vld [vmem:[%s625 + $0x20] sm:$0xf]
      %v635 = vld [vmem:[%s625 + $0x24] sm:$0xf]
      %v636 = vld [vmem:[%s625 + $0x28] sm:$0xf]
      %v637 = vld [vmem:[%s625 + $0x2c] sm:$0xf]
      %v638 = vld [vmem:[%s625 + $0x30] sm:$0xf]
      %v639 = vld [vmem:[%s625 + $0x34] sm:$0xf]
      %v640 = vld [vmem:[%s625 + $0x38] sm:$0xf]
      %v641 = vld [vmem:[%s625 + $0x3c] sm:$0xf]
      %v642 = vld [vmem:[%s625 + $0x40] sm:$0xf]
      %v643 = vld [vmem:[%s625 + $0x44] sm:$0xf]
      %v644 = vld [vmem:[%s625 + $0x48] sm:$0xf]
      %v645 = vld [vmem:[%s625 + $0x4c] sm:$0xf]
      %v646 = vld [vmem:[%s625 + $0x50] sm:$0xf]
      %v647 = vld [vmem:[%s625 + $0x54] sm:$0xf]
      %v648 = vld [vmem:[%s625 + $0x58] sm:$0xf]
      %v649 = vld [vmem:[%s625 + $0x5c] sm:$0xf]
      %v658 = vunpack.c.l.b16 %v617
      %v659 = vunpack.c.h.b16 %v617
      %v660 = vunpack.c.l.b16 %v618
      %v661 = vunpack.c.h.b16 %v618
      %v662 = vunpack.c.l.b16 %v619
      %v663 = vunpack.c.h.b16 %v619
      %v664 = vunpack.c.l.b16 %v620
      %v665 = vunpack.c.h.b16 %v620
      %v666 = vunpack.c.l.b16 %v621
      %v667 = vunpack.c.h.b16 %v621
      %v668 = vunpack.c.l.b16 %v622
      %v669 = vunpack.c.h.b16 %v622
      %v670 = vunpack.c.l.b16 %v623
      %v671 = vunpack.c.h.b16 %v623
      %v672 = vunpack.c.l.b16 %v624
      %v673 = vunpack.c.h.b16 %v624
      %v674 = vpack.c.b16 %v660, %v658
      %v675 = vpack.c.b16 %v661, %v659
      %v676 = vpack.c.b16 %v664, %v662
      %v677 = vpack.c.b16 %v665, %v663
      %v678 = vpack.c.b16 %v668, %v666
      %v679 = vpack.c.b16 %v669, %v667
      %v680 = vpack.c.b16 %v672, %v670
      %v681 = vpack.c.b16 %v673, %v671
      %v710 = vunpack.c.l.b16 %v626
      %v711 = vunpack.c.l.b16 %v627
      %v712 = vunpack.c.l.b16 %v628
      %v713 = vunpack.c.l.b16 %v629
      %v714 = vunpack.c.l.b16 %v630
      %v715 = vunpack.c.l.b16 %v631
      %v716 = vunpack.c.l.b16 %v632
      %v717 = vunpack.c.l.b16 %v633
      %v718 = vunpack.c.l.b16 %v634
      %v719 = vunpack.c.l.b16 %v635
      %v720 = vunpack.c.l.b16 %v636
      %v721 = vunpack.c.l.b16 %v637
      %v722 = vunpack.c.l.b16 %v638
      %v723 = vunpack.c.l.b16 %v639
      %v724 = vunpack.c.l.b16 %v640
      %v725 = vunpack.c.l.b16 %v641
      %v726 = vunpack.c.l.b16 %v642
      %v727 = vunpack.c.l.b16 %v643
      %v728 = vunpack.c.l.b16 %v644
      %v729 = vunpack.c.l.b16 %v645
      %v730 = vunpack.c.l.b16 %v646
      %v731 = vunpack.c.l.b16 %v647
      %v732 = vunpack.c.l.b16 %v648
      %v733 = vunpack.c.l.b16 %v649
      %v734 = vpack.c.b16 %v711, %v710
      %v735 = vpack.c.b16 %v713, %v712
      %v736 = vpack.c.b16 %v715, %v714
      %v737 = vpack.c.b16 %v717, %v716
      %v738 = vpack.c.b16 %v719, %v718
      %v739 = vpack.c.b16 %v721, %v720
      %v740 = vpack.c.b16 %v723, %v722
      %v741 = vpack.c.b16 %v725, %v724
      %v742 = vpack.c.b16 %v727, %v726
      %v743 = vpack.c.b16 %v729, %v728
      %v744 = vpack.c.b16 %v731, %v730
      %v745 = vpack.c.b16 %v733, %v732
      %v759 = vsel %vm390, %v675, 0
      %v762 = vsel %vm390, %v677, 0
      %v765 = vsel %vm390, %v679, 0
      %v768 = vsel %vm390, %v681, 0
      %770 = vmatprep.subr.bf16.mxu0 0
      %771 = vmatpush1.bf16.msra.mxu0 %v734
      %772 = vmatprep.subr.bf16.mxu0 0
      %773 = vmatpush1.bf16.msra.mxu0 %v735
      %774 = vmatprep.subr.bf16.mxu0 0
      %775 = vmatpush1.bf16.msra.mxu0 %v736
      %776 = vmatprep.subr.bf16.mxu0 0
      %777 = vmatpush1.bf16.msra.mxu0 %v737
      %778 = vmatprep.subr.bf16.mxu0 0
      %779 = vmatpush1.bf16.msra.mxu0 %v738
      %780 = vmatprep.subr.bf16.mxu0 0
      %781 = vmatpush1.bf16.msra.mxu0 %v739
      %782 = vmatprep.subr.bf16.mxu0 0
      %783 = vmatpush1.bf16.msra.mxu0 %v740
      %784 = vmatprep.subr.bf16.mxu0 0
      %785 = vmatpush1.bf16.msra.mxu0 %v741
      %786 = vmatprep.subr.bf16.mxu0 0
      %787 = vmatpush1.bf16.msra.mxu0 %v742
      %788 = vmatprep.subr.bf16.mxu0 0
      %789 = vmatpush1.bf16.msra.mxu0 %v743
      %790 = vmatprep.subr.bf16.mxu0 0
      %791 = vmatpush1.bf16.msra.mxu0 %v744
      %792 = vmatprep.subr.bf16.mxu0 0
      %793 = vmatpush1.bf16.msra.mxu0 %v745
      %794 = vmatprep.subr.bf16.mxu0 0
      %795 = vmatpush1.bf16.msra.mxu0 0
      %796 = vmatprep.subr.bf16.mxu0 0
      %797 = vmatpush1.bf16.msra.mxu0 0
      %798 = vmatprep.subr.bf16.mxu0 0
      %799 = vmatpush1.bf16.msra.mxu0 0
      %800 = vmatprep.subr.bf16.mxu0 0
      %801 = vmatpush1.bf16.msra.mxu0 0
      %802 = vmatprep.mubr.bf16.mxu0 %v759
      %803 = vmatmul.mubr.bf16.gmra.mrb[0].mxu0 %v674
      %v804 = vpop.f32.mrb[0].mxu0
      %v805 = vadd.f32 0.0, %v804
      %v806 = vpop.f32.mrb[0].mxu0
      %v807 = vpop.f32.mrb[0].mxu0
      %v808 = vadd.f32 0.0, %v807
      %v809 = vpop.f32.mrb[0].mxu0
      %810 = vmatprep.mubr.bf16.mxu0 %v762
      %811 = vmatmul.mubr.bf16.gmra.mrb[0].mxu0 %v676
      %v812 = vpop.f32.mrb[0].mxu0
      %v813 = vadd.f32 0.0, %v812
      %v814 = vpop.f32.mrb[0].mxu0
      %v815 = vpop.f32.mrb[0].mxu0
      %v816 = vadd.f32 0.0, %v815
      %v817 = vpop.f32.mrb[0].mxu0
      %818 = vmatprep.mubr.bf16.mxu0 %v765
      %819 = vmatmul.mubr.bf16.gmra.mrb[0].mxu0 %v678
      %v820 = vpop.f32.mrb[0].mxu0
      %v821 = vadd.f32 0.0, %v820
      %v822 = vpop.f32.mrb[0].mxu0
      %v823 = vpop.f32.mrb[0].mxu0
      %v824 = vadd.f32 0.0, %v823
      %v825 = vpop.f32.mrb[0].mxu0
      %826 = vmatprep.mubr.bf16.mxu0 %v768
      %827 = vmatmul.mubr.bf16.gmra.mrb[0].mxu0 %v680
      %v828 = vpop.f32.mrb[0].mxu0
      %v829 = vadd.f32 0.0, %v828
      %v830 = vpop.f32.mrb[0].mxu0
      %v831 = vpop.f32.mrb[0].mxu0
      %v832 = vadd.f32 0.0, %v831
      %v833 = vpop.f32.mrb[0].mxu0
      %834 = vdwg.mxu0
      %v835 = vadd.f32 %v587, %v805
      %v836 = vadd.f32 %v590, %v808
      %v837 = vadd.f32 %v595, %v813
      %v838 = vadd.f32 %v598, %v816
      %v839 = vadd.f32 %v603, %v821
      %v840 = vadd.f32 %v606, %v824
      %v841 = vadd.f32 %v611, %v829
      %v842 = vadd.f32 %v614, %v832
      %v843 = vld [vmem:[%s213] sm:$0x1]
      %v845 = vlaneseq
      %v846 = vshrl.u32 %v845, 7
      %v847 = vsub.s32 0, %v846
      %v848 = vrot.slane %v843, %v847
      %v850 = vadd.f32 %v835, %v848
      %v851 = vadd.f32 %v836, %v848
      %v852 = vadd.f32 %v837, %v848
      %v853 = vadd.f32 %v838, %v848
      %v854 = vadd.f32 %v839, %v848
      %v855 = vadd.f32 %v840, %v848
      %v856 = vadd.f32 %v841, %v848
      %v857 = vadd.f32 %v842, %v848
      %v858 = vmax.f32 %v850, 0.0
      %v859 = vmax.f32 %v851, 0.0
      %v860 = vmax.f32 %v852, 0.0
      %v861 = vmax.f32 %v853, 0.0
      %v862 = vmax.f32 %v854, 0.0
      %v863 = vmax.f32 %v855, 0.0
      %v864 = vmax.f32 %v856, 0.0
      %v865 = vmax.f32 %v857, 0.0
      %v866 = vpack.c.bf16 %v859, %v858
      %v867 = vpack.c.bf16 %v861, %v860
      %v868 = vpack.c.bf16 %v863, %v862
      %v869 = vpack.c.bf16 %v865, %v864
      %v874 = vunpack.c.l.b16 %v866
      %v875 = vunpack.c.h.b16 %v866
      %v876 = vunpack.c.l.b16 %v867
      %v877 = vunpack.c.h.b16 %v867
      %v878 = vunpack.c.l.b16 %v868
      %v879 = vunpack.c.h.b16 %v868
      %v880 = vunpack.c.l.b16 %v869
      %v881 = vunpack.c.h.b16 %v869
      %v882 = vpack.c.b16 %v874, %v874
      %v883 = vpack.c.b16 %v875, %v875
      %v884 = vpack.c.b16 %v876, %v876
      %v885 = vpack.c.b16 %v877, %v877
      %v886 = vpack.c.b16 %v878, %v878
      %v887 = vpack.c.b16 %v879, %v879
      %v888 = vpack.c.b16 %v880, %v880
      %v889 = vpack.c.b16 %v881, %v881
      %898 = vst [vmem:[%s221] sm:$0xf] %v882
      %899 = vst [vmem:[%s221 + $0x4] sm:$0xf] %v883
      %900 = vst [vmem:[%s221 + $0x8] sm:$0xf] %v884
      %901 = vst [vmem:[%s221 + $0xc] sm:$0xf] %v885
      %902 = vst [vmem:[%s221 + $0x10] sm:$0xf] %v886
      %903 = vst [vmem:[%s221 + $0x14] sm:$0xf] %v887
      %904 = vst [vmem:[%s221 + $0x18] sm:$0xf] %v888
      %905 = vst [vmem:[%s221 + $0x1c] sm:$0xf] %v889
      %p906 = scmp.lt.s32.totalorder %s18, 1
      %s907 = scalar_select %p906, %s18, 1
      %p908 = scmp.lt.s32.totalorder %s19, 0
      %s909 = scalar_select %p908, %s19, 0
      %s910 = smul.addr %s907, 8
      %s911 = sadd.s32 %s909, %s910
      %s912 = smul.addr %s911, 4
      %s913 = scalar_lea.vmem %s3, %s912
      // Predicated region
      $region33: #{vgg_forward.9} parent=31 // pred_check
        %p914 = pneg %p124
      $region34: #{vgg_forward.9} parent=31 // pred_check_branch
        %916 = sbr.rel (%p914) target = $region36
      $region35: #{vgg_forward.9} parent=31 // pred_region
        _
      $region36: #{vgg_forward.9} parent=31 // pred_fallthru
        _
    $region32: #{vgg_forward.9} parent=5 // pred_fallthru
      _
    %p917 = scmp.le.s32.totalorder 2, %s9
    // Predicated region
    $region37: #{vgg_forward.9} parent=5 // pred_check
      %p918 = pneg %p917
    $region38: #{vgg_forward.9} parent=5 // pred_check_branch
      %920 = sbr.rel (%p918) target = $region40
    $region39: #{vgg_forward.9} parent=5 // pred_region
      %s921 = ssub.s32 %s9, 2
      // Predicated region
      $region41: #{vgg_forward.9} parent=39 // pred_check
        %p922 = pneg %p130
      $region42: #{vgg_forward.9} parent=39 // pred_check_branch
        %924 = sbr.rel (%p922) target = $region44
      $region43: #{vgg_forward.9} parent=39 // pred_region
        %p925 = scmp.lt.s32.totalorder %s20, 1
        %s926 = scalar_select %p925, %s20, 1
        %p927 = scmp.lt.s32.totalorder %s21, 0
        %s928 = scalar_select %p927, %s21, 0
        %s929 = smul.addr %s926, 8
        %s930 = sadd.s32 %s928, %s929
        %s931 = smul.addr %s930, 4
        %s932 = scalar_lea.vmem %s3, %s931
      $region44: #{vgg_forward.9} parent=39 // pred_fallthru
        _
    $region40: #{vgg_forward.9} parent=5 // pred_fallthru
      _
  $region6: #{vgg_forward.9} parent=0 // loop_footer
    %s13 = sadd.s32 1, %s9
  $region7: #{vgg_forward.9} parent=0 // loop_footer_branch
    %8 = sbr.rel target = $region3
  $region8: #{vgg_forward.9} parent=0 // loop_exit
    _

// kernel: vgg_forward.10
$region0: #{vgg_forward.10}
  #allocation0 [shape = 'u32[]', space=smem, size = 0x4, offset = 0x4, fixed_abs, tag = 'smem constant byte address 0x4 - core index']
  #allocation1 [shape = 'u32[144,128]{1,0:T(1,128)}', space=vmem, size = 0x12000, scoped, tag = 'internal scratch']
  %s0 = inlined_call_operand.vmem [shape: bf16[2,64,384], index: 0, kind: input, shape index: {}]
  %s1 = inlined_call_operand.vmem [shape: bf16[3,384,512], index: 1, kind: input, shape index: {}]
  %s2 = inlined_call_operand.vmem [shape: f32[1,512], index: 2, kind: input, shape index: {}]
  %s3 = inlined_call_operand.vmem [shape: bf16[2,32,512], index: 3, kind: output, shape index: {}]
  %s4 = sld [smem:[#allocation0]]
  $region123: #{vgg_forward.10} parent=0
    _
  %s6 = ssub.s32 1, %s4
  %s7 = scalar_select 0, %s6, %s4
  $region1: #{vgg_forward.10} parent=0
    #allocation2 [shape = 'u8[589824]{0}', space=vmem, size = 0x90000, scoped, tag = 'input window, operand 1']
    #allocation3 [shape = 'u8[16384]{0}', space=vmem, size = 0x4000, scoped, tag = 'output window, operand 0']
    loop: start=0, step=1, limit=10
    $region2: #{vgg_forward.10} parent=1 // loop_pre_header
      _
    $region3: #{vgg_forward.10} parent=1 // loop_header
      %s9 = sphi 0, %s13
      %p10 = scmp.ge.s32.totalorder %s9, 10
      %s16 = sphi 0, %s28
      %s17 = sphi 0, %s24
      %s18 = sphi 0, %s16
      %s19 = sphi 0, %s17
      %s20 = sphi 0, %s18
      %s21 = sphi 0, %s19
      %s31 = sphi 0, %s33
      %s34 = sphi 0, %s31
      %s35 = sphi 0, %s34
      %s51 = sphi 0, %s35
      %s57 = sphi 0, %s59
      %s60 = sphi 0, %s57
      %s61 = sphi 0, %s60
      %s77 = sphi 0, %s61
      %s83 = sphi 0, %s85
      %s86 = sphi 0, %s83
      %s87 = sphi 0, %s86
      %s103 = sphi 0, %s87
      %s111 = sphi 0, %s113
      %s114 = sphi 0, %s111
      %s115 = sphi 0, %s114
      %s131 = sphi 0, %s115
    $region4: #{vgg_forward.10} parent=1 // loop_header_branch
      %12 = sbr.rel (%p10) target = $region8
    $region5: #{vgg_forward.10} parent=1 // loop_body
      %s14 = ssub.s32 %s9, 1
      %s15 = ssub.s32 %s9, 2
      %s22 = sadd.s32 1, %s17
      %p23 = scmp.ge.s32.totalorder %s22, 4
      %s24 = scalar_select %p23, 0, %s22
      %s25 = sadd.s32 1, %s16
      %s26 = scalar_select %p23, %s25, %s16
      %p27 = scmp.ge.s32.totalorder %s26, 2
      %s28 = scalar_select %p27, 0, %s26
      %s29 = ssub.s32 %s16, %s28
      %p30 = scmp.eq.s32.totalorder %s29, 0
      %s32 = sadd.s32 %s31, 1
      %s33 = scalar_select %p30, %s31, %s32
      %p36 = pneg %p30
      %p37 = scmp.eq.s32.totalorder %s9, 7
      %p38 = por %p36, %p37
      %p39 = scmp.ne.s32.totalorder %s31, %s34
      %p40 = scmp.eq.s32.totalorder %s9, 0
      %p41 = por %p39, %p40
      %p42 = scmp.ne.s32.totalorder %s31, %s34
      %p43 = scmp.eq.s32.totalorder %s14, 7
      %p44 = por %p42, %p43
      %p45 = scmp.ne.s32.totalorder %s34, %s35
      %p46 = scmp.eq.s32.totalorder %s14, 0
      %p47 = por %p45, %p46
      %p48 = scmp.ne.s32.totalorder %s34, %s35
      %p49 = scmp.eq.s32.totalorder %s15, 7
      %p50 = por %p48, %p49
      %p52 = scmp.ne.s32.totalorder %s35, %s51
      %p53 = scmp.eq.s32.totalorder %s15, 0
      %p54 = por %p52, %p53
      %s55 = ssub.s32 %s17, %s24
      %p56 = scmp.eq.s32.totalorder %s55, 0
      %s58 = sadd.s32 %s57, 1
      %s59 = scalar_select %p56, %s57, %s58
      %p62 = pneg %p56
      %p63 = scmp.eq.s32.totalorder %s9, 7
      %p64 = por %p62, %p63
      %p65 = scmp.ne.s32.totalorder %s57, %s60
      %p66 = scmp.eq.s32.totalorder %s9, 0
      %p67 = por %p65, %p66
      %p68 = scmp.ne.s32.totalorder %s57, %s60
      %p69 = scmp.eq.s32.totalorder %s14, 7
      %p70 = por %p68, %p69
      %p71 = scmp.ne.s32.totalorder %s60, %s61
      %p72 = scmp.eq.s32.totalorder %s14, 0
      %p73 = por %p71, %p72
      %p74 = scmp.ne.s32.totalorder %s60, %s61
      %p75 = scmp.eq.s32.totalorder %s15, 7
      %p76 = por %p74, %p75
      %p78 = scmp.ne.s32.totalorder %s61, %s77
      %p79 = scmp.eq.s32.totalorder %s15, 0
      %p80 = por %p78, %p79
      %s81 = ssub.s32 %s17, %s24
      %p82 = scmp.eq.s32.totalorder %s81, 0
      %s84 = sadd.s32 %s83, 1
      %s85 = scalar_select %p82, %s83, %s84
      %p88 = pneg %p82
      %p89 = scmp.eq.s32.totalorder %s9, 7
      %p90 = por %p88, %p89
      %p91 = scmp.ne.s32.totalorder %s83, %s86
      %p92 = scmp.eq.s32.totalorder %s9, 0
      %p93 = por %p91, %p92
      %p94 = scmp.ne.s32.totalorder %s83, %s86
      %p95 = scmp.eq.s32.totalorder %s14, 7
      %p96 = por %p94, %p95
      %p97 = scmp.ne.s32.totalorder %s86, %s87
      %p98 = scmp.eq.s32.totalorder %s14, 0
      %p99 = por %p97, %p98
      %p100 = scmp.ne.s32.totalorder %s86, %s87
      %p101 = scmp.eq.s32.totalorder %s15, 7
      %p102 = por %p100, %p101
      %p104 = scmp.ne.s32.totalorder %s87, %s103
      %p105 = scmp.eq.s32.totalorder %s15, 0
      %p106 = por %p104, %p105
      %s107 = ssub.s32 %s16, %s28
      %s108 = ssub.s32 %s17, %s24
      %s109 = sor.u32 %s107, %s108
      %p110 = scmp.eq.s32.totalorder %s109, 0
      %s112 = sadd.s32 %s111, 1
      %s113 = scalar_select %p110, %s111, %s112
      %p116 = pneg %p110
      %p117 = scmp.eq.s32.totalorder %s9, 7
      %p118 = por %p116, %p117
      %p119 = scmp.ne.s32.totalorder %s111, %s114
      %p120 = scmp.eq.s32.totalorder %s9, 0
      %p121 = por %p119, %p120
      %p122 = scmp.ne.s32.totalorder %s111, %s114
      %p123 = scmp.eq.s32.totalorder %s14, 7
      %p124 = por %p122, %p123
      %p125 = scmp.ne.s32.totalorder %s114, %s115
      %p126 = scmp.eq.s32.totalorder %s14, 0
      %p127 = por %p125, %p126
      %p128 = scmp.ne.s32.totalorder %s114, %s115
      %p129 = scmp.eq.s32.totalorder %s15, 7
      %p130 = por %p128, %p129
      %p132 = scmp.ne.s32.totalorder %s115, %s131
      %p133 = scmp.eq.s32.totalorder %s15, 0
      %p134 = por %p132, %p133
      %p135 = scmp.le.s32.totalorder 1, %s9
      %p136 = scmp.lt.s32.totalorder %s9, 9
      %p137 = pnand %p135, %p136
      %p138 = pneg %p137
      // Predicated region
      $region9: #{vgg_forward.10} parent=5 // pred_check
        _
      $region10: #{vgg_forward.10} parent=5 // pred_check_branch
        %140 = sbr.rel (%p137) target = $region12
      $region11: #{vgg_forward.10} parent=5 // pred_region
        %s141 = ssub.s32 %s9, 1
      $region12: #{vgg_forward.10} parent=5 // pred_fallthru
        _
      %p142 = scmp.lt.s32.totalorder %s9, 8
      // Predicated region
      $region13: #{vgg_forward.10} parent=5 // pred_check
        %p143 = pneg %p142
      $region14: #{vgg_forward.10} parent=5 // pred_check_branch
        %145 = sbr.rel (%p143) target = $region16
      $region15: #{vgg_forward.10} parent=5 // pred_region
        // Predicated region
        $region17: #{vgg_forward.10} parent=15 // pred_check
          %p146 = pneg %p41
        $region18: #{vgg_forward.10} parent=15 // pred_check_branch
          %148 = sbr.rel (%p146) target = $region20
        $region19: #{vgg_forward.10} parent=15 // pred_region
          %p149 = scmp.lt.s32.totalorder %s16, 1
          %s150 = scalar_select %p149, %s16, 1
          %s151 = smul.addr %s150, 24
          %s152 = smul.addr %s151, 4
          %s153 = scalar_lea.vmem %s0, %s152
        $region20: #{vgg_forward.10} parent=15 // pred_fallthru
          _
        // Predicated region
        $region21: #{vgg_forward.10} parent=15 // pred_check
          %p154 = pneg %p67
        $region22: #{vgg_forward.10} parent=15 // pred_check_branch
          %156 = sbr.rel (%p154) target = $region24
        $region23: #{vgg_forward.10} parent=15 // pred_region
          %s157 = sand.u32 %s57, 1
          %s158 = sand.u32 %s57, 1
          %s159 = smul.addr %s158, 576
          %s160 = scalar_lea.vmem [#allocation2], %s159
          %s161 = smul.addr %s17, 4
          %s162 = scalar_lea.vmem %s1, %s161
          // Predicated region
          $region25: #{vgg_forward.10} parent=23 // pred_check
            _
          $region26: #{vgg_forward.10} parent=23 // pred_check_branch
            %164 = sbr.rel (0) target = $region28
          $region27: #{vgg_forward.10} parent=23 // pred_region
            // Predicated region
            $region29: #{vgg_forward.10} parent=27 // pred_check
              _
            $region30: #{vgg_forward.10} parent=27 // pred_check_branch
              %166 = sbr.rel target = $region32
            $region31: #{vgg_forward.10} parent=27 // pred_region
              // Predicated region
              $region44: #{vgg_forward.10} parent=31 // pred_check
                _
              $region45: #{vgg_forward.10} parent=31 // pred_check_branch
                %467 = sbr.rel (0) target = $region47
              $region46: #{vgg_forward.10} parent=31 // pred_region
                loop: start=0, step=1, limit=1
                $region48: #{vgg_forward.10} parent=46 // loop_pre_header
                  _
                $region49: #{vgg_forward.10} parent=46 // loop_header
                  %s469 = sphi 0, %s473
                  %p470 = scmp.ge.s32.totalorder %s469, 1
                  %s474 = sphi %s162, %s162
                  %s475 = sphi %s160, %s160
                $region50: #{vgg_forward.10} parent=46 // loop_header_branch
                  %472 = sbr.rel (%p470) target = $region54
                $region51: #{vgg_forward.10} parent=46 // loop_body
                  _
                $region52: #{vgg_forward.10} parent=46 // loop_footer
                  %s473 = sadd.s32 1, %s469
                $region53: #{vgg_forward.10} parent=46 // loop_footer_branch
                  %468 = sbr.rel target = $region49
                $region54: #{vgg_forward.10} parent=46 // loop_exit
                  _
                loop: start=0, step=1, limit=1
                $region55: #{vgg_forward.10} parent=46 // loop_pre_header
                  _
                $region56: #{vgg_forward.10} parent=46 // loop_header
                  %s478 = sphi 0, %s482
                  %p479 = scmp.ge.s32.totalorder %s478, 1
                  %s483 = sphi %s162, %s162
                  %s484 = sphi %s160, %s160
                $region57: #{vgg_forward.10} parent=46 // loop_header_branch
                  %481 = sbr.rel (%p479) target = $region61
                $region58: #{vgg_forward.10} parent=46 // loop_body
                  %v485 = vld [vmem:[%s483] sm:$0xf]
                  %486 = vst [vmem:[%s484] sm:$0xf] %v485
                  %v487 = vld [vmem:[%s483 + $0x10] sm:$0xf]
                  %488 = vst [vmem:[%s484 + $0x4] sm:$0xf] %v487
                  %v489 = vld [vmem:[%s483 + $0x20] sm:$0xf]
                  %490 = vst [vmem:[%s484 + $0x8] sm:$0xf] %v489
                  %v491 = vld [vmem:[%s483 + $0x30] sm:$0xf]
                  %492 = vst [vmem:[%s484 + $0xc] sm:$0xf] %v491
                  %v493 = vld [vmem:[%s483 + $0x40] sm:$0xf]
                  %494 = vst [vmem:[%s484 + $0x10] sm:$0xf] %v493
                  %v495 = vld [vmem:[%s483 + $0x50] sm:$0xf]
                  %496 = vst [vmem:[%s484 + $0x14] sm:$0xf] %v495
                  %v497 = vld [vmem:[%s483 + $0x60] sm:$0xf]
                  %498 = vst [vmem:[%s484 + $0x18] sm:$0xf] %v497
                  %v499 = vld [vmem:[%s483 + $0x70] sm:$0xf]
                  %500 = vst [vmem:[%s484 + $0x1c] sm:$0xf] %v499
                  %v501 = vld [vmem:[%s483 + $0x80] sm:$0xf]
                  %502 = vst [vmem:[%s484 + $0x20] sm:$0xf] %v501
                  %v503 = vld [vmem:[%s483 + $0x90] sm:$0xf]
                  %504 = vst [vmem:[%s484 + $0x24] sm:$0xf] %v503
                  %v505 = vld [vmem:[%s483 + $0xa0] sm:$0xf]
                  %506 = vst [vmem:[%s484 + $0x28] sm:$0xf] %v505
                  %v507 = vld [vmem:[%s483 + $0xb0] sm:$0xf]
                  %508 = vst [vmem:[%s484 + $0x2c] sm:$0xf] %v507
                  %v509 = vld [vmem:[%s483 + $0xc0] sm:$0xf]
                  %510 = vst [vmem:[%s484 + $0x30] sm:$0xf] %v509
                  %v511 = vld [vmem:[%s483 + $0xd0] sm:$0xf]
                  %512 = vst [vmem:[%s484 + $0x34] sm:$0xf] %v511
                  %v513 = vld [vmem:[%s483 + $0xe0] sm:$0xf]
                  %514 = vst [vmem:[%s484 + $0x38] sm:$0xf] %v513
                  %v515 = vld [vmem:[%s483 + $0xf0] sm:$0xf]
                  %516 = vst [vmem:[%s484 + $0x3c] sm:$0xf] %v515
                  %v517 = vld [vmem:[%s483 + $0x100] sm:$0xf]
                  %518 = vst [vmem:[%s484 + $0x40] sm:$0xf] %v517
                  %v519 = vld [vmem:[%s483 + $0x110] sm:$0xf]
                  %520 = vst [vmem:[%s484 + $0x44] sm:$0xf] %v519
                  %v521 = vld [vmem:[%s483 + $0x120] sm:$0xf]
                  %522 = vst [vmem:[%s484 + $0x48] sm:$0xf] %v521
                  %v523 = vld [vmem:[%s483 + $0x130] sm:$0xf]
                  %524 = vst [vmem:[%s484 + $0x4c] sm:$0xf] %v523
                  %v525 = vld [vmem:[%s483 + $0x140] sm:$0xf]
                  %526 = vst [vmem:[%s484 + $0x50] sm:$0xf] %v525
                  %v527 = vld [vmem:[%s483 + $0x150] sm:$0xf]
                  %528 = vst [vmem:[%s484 + $0x54] sm:$0xf] %v527
                  %v529 = vld [vmem:[%s483 + $0x160] sm:$0xf]
                  %530 = vst [vmem:[%s484 + $0x58] sm:$0xf] %v529
                  %v531 = vld [vmem:[%s483 + $0x170] sm:$0xf]
                  %532 = vst [vmem:[%s484 + $0x5c] sm:$0xf] %v531
                  %v533 = vld [vmem:[%s483 + $0x180] sm:$0xf]
                  %534 = vst [vmem:[%s484 + $0x60] sm:$0xf] %v533
                  %v535 = vld [vmem:[%s483 + $0x190] sm:$0xf]
                  %536 = vst [vmem:[%s484 + $0x64] sm:$0xf] %v535
                  %v537 = vld [vmem:[%s483 + $0x1a0] sm:$0xf]
                  %538 = vst [vmem:[%s484 + $0x68] sm:$0xf] %v537
                  %v539 = vld [vmem:[%s483 + $0x1b0] sm:$0xf]
                  %540 = vst [vmem:[%s484 + $0x6c] sm:$0xf] %v539
                  %v541 = vld [vmem:[%s483 + $0x1c0] sm:$0xf]
                  %542 = vst [vmem:[%s484 + $0x70] sm:$0xf] %v541
                  %v543 = vld [vmem:[%s483 + $0x1d0] sm:$0xf]
                  %544 = vst [vmem:[%s484 + $0x74] sm:$0xf] %v543
                  %v545 = vld [vmem:[%s483 + $0x1e0] sm:$0xf]
                  %546 = vst [vmem:[%s484 + $0x78] sm:$0xf] %v545
                  %v547 = vld [vmem:[%s483 + $0x1f0] sm:$0xf]
                  %548 = vst [vmem:[%s484 + $0x7c] sm:$0xf] %v547
                  %v549 = vld [vmem:[%s483 + $0x200] sm:$0xf]
                  %550 = vst [vmem:[%s484 + $0x80] sm:$0xf] %v549
                  %v551 = vld [vmem:[%s483 + $0x210] sm:$0xf]
                  %552 = vst [vmem:[%s484 + $0x84] sm:$0xf] %v551
                  %v553 = vld [vmem:[%s483 + $0x220] sm:$0xf]
                  %554 = vst [vmem:[%s484 + $0x88] sm:$0xf] %v553
                  %v555 = vld [vmem:[%s483 + $0x230] sm:$0xf]
                  %556 = vst [vmem:[%s484 + $0x8c] sm:$0xf] %v555
                  %v557 = vld [vmem:[%s483 + $0x240] sm:$0xf]
                  %558 = vst [vmem:[%s484 + $0x90] sm:$0xf] %v557
                  %v559 = vld [vmem:[%s483 + $0x250] sm:$0xf]
                  %560 = vst [vmem:[%s484 + $0x94] sm:$0xf] %v559
                  %v561 = vld [vmem:[%s483 + $0x260] sm:$0xf]
                  %562 = vst [vmem:[%s484 + $0x98] sm:$0xf] %v561
                  %v563 = vld [vmem:[%s483 + $0x270] sm:$0xf]
                  %564 = vst [vmem:[%s484 + $0x9c] sm:$0xf] %v563
                  %v565 = vld [vmem:[%s483 + $0x280] sm:$0xf]
                  %566 = vst [vmem:[%s484 + $0xa0] sm:$0xf] %v565
                  %v567 = vld [vmem:[%s483 + $0x290] sm:$0xf]
                  %568 = vst [vmem:[%s484 + $0xa4] sm:$0xf] %v567
                  %v569 = vld [vmem:[%s483 + $0x2a0] sm:$0xf]
                  %570 = vst [vmem:[%s484 + $0xa8] sm:$0xf] %v569
                  %v571 = vld [vmem:[%s483 + $0x2b0] sm:$0xf]
                  %572 = vst [vmem:[%s484 + $0xac] sm:$0xf] %v571
                  %v573 = vld [vmem:[%s483 + $0x2c0] sm:$0xf]
                  %574 = vst [vmem:[%s484 + $0xb0] sm:$0xf] %v573
                  %v575 = vld [vmem:[%s483 + $0x2d0] sm:$0xf]
                  %576 = vst [vmem:[%s484 + $0xb4] sm:$0xf] %v575
                  %v577 = vld [vmem:[%s483 + $0x2e0] sm:$0xf]
                  %578 = vst [vmem:[%s484 + $0xb8] sm:$0xf] %v577
                  %v579 = vld [vmem:[%s483 + $0x2f0] sm:$0xf]
                  %580 = vst [vmem:[%s484 + $0xbc] sm:$0xf] %v579
                  %v581 = vld [vmem:[%s483 + $0x300] sm:$0xf]
                  %582 = vst [vmem:[%s484 + $0xc0] sm:$0xf] %v581
                  %v583 = vld [vmem:[%s483 + $0x310] sm:$0xf]
                  %584 = vst [vmem:[%s484 + $0xc4] sm:$0xf] %v583
                  %v585 = vld [vmem:[%s483 + $0x320] sm:$0xf]
                  %586 = vst [vmem:[%s484 + $0xc8] sm:$0xf] %v585
                  %v587 = vld [vmem:[%s483 + $0x330] sm:$0xf]
                  %588 = vst [vmem:[%s484 + $0xcc] sm:$0xf] %v587
                  %v589 = vld [vmem:[%s483 + $0x340] sm:$0xf]
                  %590 = vst [vmem:[%s484 + $0xd0] sm:$0xf] %v589
                  %v591 = vld [vmem:[%s483 + $0x350] sm:$0xf]
                  %592 = vst [vmem:[%s484 + $0xd4] sm:$0xf] %v591
                  %v593 = vld [vmem:[%s483 + $0x360] sm:$0xf]
                  %594 = vst [vmem:[%s484 + $0xd8] sm:$0xf] %v593
                  %v595 = vld [vmem:[%s483 + $0x370] sm:$0xf]
                  %596 = vst [vmem:[%s484 + $0xdc] sm:$0xf] %v595
                  %v597 = vld [vmem:[%s483 + $0x380] sm:$0xf]
                  %598 = vst [vmem:[%s484 + $0xe0] sm:$0xf] %v597
                  %v599 = vld [vmem:[%s483 + $0x390] sm:$0xf]
                  %600 = vst [vmem:[%s484 + $0xe4] sm:$0xf] %v599
                  %v601 = vld [vmem:[%s483 + $0x3a0] sm:$0xf]
                  %602 = vst [vmem:[%s484 + $0xe8] sm:$0xf] %v601
                  %v603 = vld [vmem:[%s483 + $0x3b0] sm:$0xf]
                  %604 = vst [vmem:[%s484 + $0xec] sm:$0xf] %v603
                  %v605 = vld [vmem:[%s483 + $0x3c0] sm:$0xf]
                  %606 = vst [vmem:[%s484 + $0xf0] sm:$0xf] %v605
                  %v607 = vld [vmem:[%s483 + $0x3d0] sm:$0xf]
                  %608 = vst [vmem:[%s484 + $0xf4] sm:$0xf] %v607
                  %v609 = vld [vmem:[%s483 + $0x3e0] sm:$0xf]
                  %610 = vst [vmem:[%s484 + $0xf8] sm:$0xf] %v609
                  %v611 = vld [vmem:[%s483 + $0x3f0] sm:$0xf]
                  %612 = vst [vmem:[%s484 + $0xfc] sm:$0xf] %v611
                  %v613 = vld [vmem:[%s483 + $0x400] sm:$0xf]
                  %614 = vst [vmem:[%s484 + $0x100] sm:$0xf] %v613
                  %v615 = vld [vmem:[%s483 + $0x410] sm:$0xf]
                  %616 = vst [vmem:[%s484 + $0x104] sm:$0xf] %v615
                  %v617 = vld [vmem:[%s483 + $0x420] sm:$0xf]
                  %618 = vst [vmem:[%s484 + $0x108] sm:$0xf] %v617
                  %v619 = vld [vmem:[%s483 + $0x430] sm:$0xf]
                  %620 = vst [vmem:[%s484 + $0x10c] sm:$0xf] %v619
                  %v621 = vld [vmem:[%s483 + $0x440] sm:$0xf]
                  %622 = vst [vmem:[%s484 + $0x110] sm:$0xf] %v621
                  %v623 = vld [vmem:[%s483 + $0x450] sm:$0xf]
                  %624 = vst [vmem:[%s484 + $0x114] sm:$0xf] %v623
                  %v625 = vld [vmem:[%s483 + $0x460] sm:$0xf]
                  %626 = vst [vmem:[%s484 + $0x118] sm:$0xf] %v625
                  %v627 = vld [vmem:[%s483 + $0x470] sm:$0xf]
                  %628 = vst [vmem:[%s484 + $0x11c] sm:$0xf] %v627
                  %v629 = vld [vmem:[%s483 + $0x480] sm:$0xf]
                  %630 = vst [vmem:[%s484 + $0x120] sm:$0xf] %v629
                  %v631 = vld [vmem:[%s483 + $0x490] sm:$0xf]
                  %632 = vst [vmem:[%s484 + $0x124] sm:$0xf] %v631
                  %v633 = vld [vmem:[%s483 + $0x4a0] sm:$0xf]
                  %634 = vst [vmem:[%s484 + $0x128] sm:$0xf] %v633
                  %v635 = vld [vmem:[%s483 + $0x4b0] sm:$0xf]
                  %636 = vst [vmem:[%s484 + $0x12c] sm:$0xf] %v635
                  %v637 = vld [vmem:[%s483 + $0x4c0] sm:$0xf]
                  %638 = vst [vmem:[%s484 + $0x130] sm:$0xf] %v637
                  %v639 = vld [vmem:[%s483 + $0x4d0] sm:$0xf]
                  %640 = vst [vmem:[%s484 + $0x134] sm:$0xf] %v639
                  %v641 = vld [vmem:[%s483 + $0x4e0] sm:$0xf]
                  %642 = vst [vmem:[%s484 + $0x138] sm:$0xf] %v641
                  %v643 = vld [vmem:[%s483 + $0x4f0] sm:$0xf]
                  %644 = vst [vmem:[%s484 + $0x13c] sm:$0xf] %v643
                  %v645 = vld [vmem:[%s483 + $0x500] sm:$0xf]
                  %646 = vst [vmem:[%s484 + $0x140] sm:$0xf] %v645
                  %v647 = vld [vmem:[%s483 + $0x510] sm:$0xf]
                  %648 = vst [vmem:[%s484 + $0x144] sm:$0xf] %v647
                  %v649 = vld [vmem:[%s483 + $0x520] sm:$0xf]
                  %650 = vst [vmem:[%s484 + $0x148] sm:$0xf] %v649
                  %v651 = vld [vmem:[%s483 + $0x530] sm:$0xf]
                  %652 = vst [vmem:[%s484 + $0x14c] sm:$0xf] %v651
                  %v653 = vld [vmem:[%s483 + $0x540] sm:$0xf]
                  %654 = vst [vmem:[%s484 + $0x150] sm:$0xf] %v653
                  %v655 = vld [vmem:[%s483 + $0x550] sm:$0xf]
                  %656 = vst [vmem:[%s484 + $0x154] sm:$0xf] %v655
                  %v657 = vld [vmem:[%s483 + $0x560] sm:$0xf]
                  %658 = vst [vmem:[%s484 + $0x158] sm:$0xf] %v657
                  %v659 = vld [vmem:[%s483 + $0x570] sm:$0xf]
                  %660 = vst [vmem:[%s484 + $0x15c] sm:$0xf] %v659
                  %v661 = vld [vmem:[%s483 + $0x580] sm:$0xf]
                  %662 = vst [vmem:[%s484 + $0x160] sm:$0xf] %v661
                  %v663 = vld [vmem:[%s483 + $0x590] sm:$0xf]
                  %664 = vst [vmem:[%s484 + $0x164] sm:$0xf] %v663
                  %v665 = vld [vmem:[%s483 + $0x5a0] sm:$0xf]
                  %666 = vst [vmem:[%s484 + $0x168] sm:$0xf] %v665
                  %v667 = vld [vmem:[%s483 + $0x5b0] sm:$0xf]
                  %668 = vst [vmem:[%s484 + $0x16c] sm:$0xf] %v667
                  %v669 = vld [vmem:[%s483 + $0x5c0] sm:$0xf]
                  %670 = vst [vmem:[%s484 + $0x170] sm:$0xf] %v669
                  %v671 = vld [vmem:[%s483 + $0x5d0] sm:$0xf]
                  %672 = vst [vmem:[%s484 + $0x174] sm:$0xf] %v671
                  %v673 = vld [vmem:[%s483 + $0x5e0] sm:$0xf]
                  %674 = vst [vmem:[%s484 + $0x178] sm:$0xf] %v673
                  %v675 = vld [vmem:[%s483 + $0x5f0] sm:$0xf]
                  %676 = vst [vmem:[%s484 + $0x17c] sm:$0xf] %v675
                  %v677 = vld [vmem:[%s483 + $0x600] sm:$0xf]
                  %678 = vst [vmem:[%s484 + $0x180] sm:$0xf] %v677
                  %v679 = vld [vmem:[%s483 + $0x610] sm:$0xf]
                  %680 = vst [vmem:[%s484 + $0x184] sm:$0xf] %v679
                  %v681 = vld [vmem:[%s483 + $0x620] sm:$0xf]
                  %682 = vst [vmem:[%s484 + $0x188] sm:$0xf] %v681
                  %v683 = vld [vmem:[%s483 + $0x630] sm:$0xf]
                  %684 = vst [vmem:[%s484 + $0x18c] sm:$0xf] %v683
                  %v685 = vld [vmem:[%s483 + $0x640] sm:$0xf]
                  %686 = vst [vmem:[%s484 + $0x190] sm:$0xf] %v685
                  %v687 = vld [vmem:[%s483 + $0x650] sm:$0xf]
                  %688 = vst [vmem:[%s484 + $0x194] sm:$0xf] %v687
                  %v689 = vld [vmem:[%s483 + $0x660] sm:$0xf]
                  %690 = vst [vmem:[%s484 + $0x198] sm:$0xf] %v689
                  %v691 = vld [vmem:[%s483 + $0x670] sm:$0xf]
                  %692 = vst [vmem:[%s484 + $0x19c] sm:$0xf] %v691
                  %v693 = vld [vmem:[%s483 + $0x680] sm:$0xf]
                  %694 = vst [vmem:[%s484 + $0x1a0] sm:$0xf] %v693
                  %v695 = vld [vmem:[%s483 + $0x690] sm:$0xf]
                  %696 = vst [vmem:[%s484 + $0x1a4] sm:$0xf] %v695
                  %v697 = vld [vmem:[%s483 + $0x6a0] sm:$0xf]
                  %698 = vst [vmem:[%s484 + $0x1a8] sm:$0xf] %v697
                  %v699 = vld [vmem:[%s483 + $0x6b0] sm:$0xf]
                  %700 = vst [vmem:[%s484 + $0x1ac] sm:$0xf] %v699
                  %v701 = vld [vmem:[%s483 + $0x6c0] sm:$0xf]
                  %702 = vst [vmem:[%s484 + $0x1b0] sm:$0xf] %v701
                  %v703 = vld [vmem:[%s483 + $0x6d0] sm:$0xf]
                  %704 = vst [vmem:[%s484 + $0x1b4] sm:$0xf] %v703
                  %v705 = vld [vmem:[%s483 + $0x6e0] sm:$0xf]
                  %706 = vst [vmem:[%s484 + $0x1b8] sm:$0xf] %v705
                  %v707 = vld [vmem:[%s483 + $0x6f0] sm:$0xf]
                  %708 = vst [vmem:[%s484 + $0x1bc] sm:$0xf] %v707
                  %v709 = vld [vmem:[%s483 + $0x700] sm:$0xf]
                  %710 = vst [vmem:[%s484 + $0x1c0] sm:$0xf] %v709
                  %v711 = vld [vmem:[%s483 + $0x710] sm:$0xf]
                  %712 = vst [vmem:[%s484 + $0x1c4] sm:$0xf] %v711
                  %v713 = vld [vmem:[%s483 + $0x720] sm:$0xf]
                  %714 = vst [vmem:[%s484 + $0x1c8] sm:$0xf] %v713
                  %v715 = vld [vmem:[%s483 + $0x730] sm:$0xf]
                  %716 = vst [vmem:[%s484 + $0x1cc] sm:$0xf] %v715
                  %v717 = vld [vmem:[%s483 + $0x740] sm:$0xf]
                  %718 = vst [vmem:[%s484 + $0x1d0] sm:$0xf] %v717
                  %v719 = vld [vmem:[%s483 + $0x750] sm:$0xf]
                  %720 = vst [vmem:[%s484 + $0x1d4] sm:$0xf] %v719
                  %v721 = vld [vmem:[%s483 + $0x760] sm:$0xf]
                  %722 = vst [vmem:[%s484 + $0x1d8] sm:$0xf] %v721
                  %v723 = vld [vmem:[%s483 + $0x770] sm:$0xf]
                  %724 = vst [vmem:[%s484 + $0x1dc] sm:$0xf] %v723
                  %v725 = vld [vmem:[%s483 + $0x780] sm:$0xf]
                  %726 = vst [vmem:[%s484 + $0x1e0] sm:$0xf] %v725
                  %v727 = vld [vmem:[%s483 + $0x790] sm:$0xf]
                  %728 = vst [vmem:[%s484 + $0x1e4] sm:$0xf] %v727
                  %v729 = vld [vmem:[%s483 + $0x7a0] sm:$0xf]
                  %730 = vst [vmem:[%s484 + $0x1e8] sm:$0xf] %v729
                  %v731 = vld [vmem:[%s483 + $0x7b0] sm:$0xf]
                  %732 = vst [vmem:[%s484 + $0x1ec] sm:$0xf] %v731
                  %v733 = vld [vmem:[%s483 + $0x7c0] sm:$0xf]
                  %734 = vst [vmem:[%s484 + $0x1f0] sm:$0xf] %v733
                  %v735 = vld [vmem:[%s483 + $0x7d0] sm:$0xf]
                  %736 = vst [vmem:[%s484 + $0x1f4] sm:$0xf] %v735
                  %v737 = vld [vmem:[%s483 + $0x7e0] sm:$0xf]
                  %738 = vst [vmem:[%s484 + $0x1f8] sm:$0xf] %v737
                  %v739 = vld [vmem:[%s483 + $0x7f0] sm:$0xf]
                  %740 = vst [vmem:[%s484 + $0x1fc] sm:$0xf] %v739
                  %v741 = vld [vmem:[%s483 + $0x800] sm:$0xf]
                  %742 = vst [vmem:[%s484 + $0x200] sm:$0xf] %v741
                  %v743 = vld [vmem:[%s483 + $0x810] sm:$0xf]
                  %744 = vst [vmem:[%s484 + $0x204] sm:$0xf] %v743
                  %v745 = vld [vmem:[%s483 + $0x820] sm:$0xf]
                  %746 = vst [vmem:[%s484 + $0x208] sm:$0xf] %v745
                  %v747 = vld [vmem:[%s483 + $0x830] sm:$0xf]
                  %748 = vst [vmem:[%s484 + $0x20c] sm:$0xf] %v747
                  %v749 = vld [vmem:[%s483 + $0x840] sm:$0xf]
                  %750 = vst [vmem:[%s484 + $0x210] sm:$0xf] %v749
                  %v751 = vld [vmem:[%s483 + $0x850] sm:$0xf]
                  %752 = vst [vmem:[%s484 + $0x214] sm:$0xf] %v751
                  %v753 = vld [vmem:[%s483 + $0x860] sm:$0xf]
                  %754 = vst [vmem:[%s484 + $0x218] sm:$0xf] %v753
                  %v755 = vld [vmem:[%s483 + $0x870] sm:$0xf]
                  %756 = vst [vmem:[%s484 + $0x21c] sm:$0xf] %v755
                  %v757 = vld [vmem:[%s483 + $0x880] sm:$0xf]
                  %758 = vst [vmem:[%s484 + $0x220] sm:$0xf] %v757
                  %v759 = vld [vmem:[%s483 + $0x890] sm:$0xf]
                  %760 = vst [vmem:[%s484 + $0x224] sm:$0xf] %v759
                  %v761 = vld [vmem:[%s483 + $0x8a0] sm:$0xf]
                  %762 = vst [vmem:[%s484 + $0x228] sm:$0xf] %v761
                  %v763 = vld [vmem:[%s483 + $0x8b0] sm:$0xf]
                  %764 = vst [vmem:[%s484 + $0x22c] sm:$0xf] %v763
                  %v765 = vld [vmem:[%s483 + $0x8c0] sm:$0xf]
                  %766 = vst [vmem:[%s484 + $0x230] sm:$0xf] %v765
                  %v767 = vld [vmem:[%s483 + $0x8d0] sm:$0xf]
                  %768 = vst [vmem:[%s484 + $0x234] sm:$0xf] %v767
                  %v769 = vld [vmem:[%s483 + $0x8e0] sm:$0xf]
                  %770 = vst [vmem:[%s484 + $0x238] sm:$0xf] %v769
                  %v771 = vld [vmem:[%s483 + $0x8f0] sm:$0xf]
                  %772 = vst [vmem:[%s484 + $0x23c] sm:$0xf] %v771
                $region59: #{vgg_forward.10} parent=46 // loop_footer
                  %s482 = sadd.s32 1, %s478
                $region60: #{vgg_forward.10} parent=46 // loop_footer_branch
                  %477 = sbr.rel target = $region56
                $region61: #{vgg_forward.10} parent=46 // loop_exit
                  _
              $region47: #{vgg_forward.10} parent=31 // pred_fallthru
                _
            $region32: #{vgg_forward.10} parent=27 // pred_fallthru
              _
            // Predicated region
            $region33: #{vgg_forward.10} parent=27 // pred_check
              _
            $region34: #{vgg_forward.10} parent=27 // pred_check_branch
              %168 = sbr.rel (0) target = $region36
            $region35: #{vgg_forward.10} parent=27 // pred_region
              loop: start=0, step=1, limit=1
              $region37: #{vgg_forward.10} parent=35 // loop_pre_header
                _
              $region38: #{vgg_forward.10} parent=35 // loop_header
                %s171 = sphi 0, %s175
                %p172 = scmp.ge.s32.totalorder %s171, 1
                %s176 = sphi %s162, %s162
                %s177 = sphi %s160, %s160
              $region39: #{vgg_forward.10} parent=35 // loop_header_branch
                %174 = sbr.rel (%p172) target = $region43
              $region40: #{vgg_forward.10} parent=35 // loop_body
                %v178 = vld [vmem:[%s176] sm:$0xf]
                %179 = vst [vmem:[%s177] sm:$0xf] %v178
                %v180 = vld [vmem:[%s176 + $0x10] sm:$0xf]
                %181 = vst [vmem:[%s177 + $0x4] sm:$0xf] %v180
                %v182 = vld [vmem:[%s176 + $0x20] sm:$0xf]
                %183 = vst [vmem:[%s177 + $0x8] sm:$0xf] %v182
                %v184 = vld [vmem:[%s176 + $0x30] sm:$0xf]
                %185 = vst [vmem:[%s177 + $0xc] sm:$0xf] %v184
                %v186 = vld [vmem:[%s176 + $0x40] sm:$0xf]
                %187 = vst [vmem:[%s177 + $0x10] sm:$0xf] %v186
                %v188 = vld [vmem:[%s176 + $0x50] sm:$0xf]
                %189 = vst [vmem:[%s177 + $0x14] sm:$0xf] %v188
                %v190 = vld [vmem:[%s176 + $0x60] sm:$0xf]
                %191 = vst [vmem:[%s177 + $0x18] sm:$0xf] %v190
                %v192 = vld [vmem:[%s176 + $0x70] sm:$0xf]
                %193 = vst [vmem:[%s177 + $0x1c] sm:$0xf] %v192
                %v194 = vld [vmem:[%s176 + $0x80] sm:$0xf]
                %195 = vst [vmem:[%s177 + $0x20] sm:$0xf] %v194
                %v196 = vld [vmem:[%s176 + $0x90] sm:$0xf]
                %197 = vst [vmem:[%s177 + $0x24] sm:$0xf] %v196
                %v198 = vld [vmem:[%s176 + $0xa0] sm:$0xf]
                %199 = vst [vmem:[%s177 + $0x28] sm:$0xf] %v198
                %v200 = vld [vmem:[%s176 + $0xb0] sm:$0xf]
                %201 = vst [vmem:[%s177 + $0x2c] sm:$0xf] %v200
                %v202 = vld [vmem:[%s176 + $0xc0] sm:$0xf]
                %203 = vst [vmem:[%s177 + $0x30] sm:$0xf] %v202
                %v204 = vld [vmem:[%s176 + $0xd0] sm:$0xf]
                %205 = vst [vmem:[%s177 + $0x34] sm:$0xf] %v204
                %v206 = vld [vmem:[%s176 + $0xe0] sm:$0xf]
                %207 = vst [vmem:[%s177 + $0x38] sm:$0xf] %v206
                %v208 = vld [vmem:[%s176 + $0xf0] sm:$0xf]
                %209 = vst [vmem:[%s177 + $0x3c] sm:$0xf] %v208
                %v210 = vld [vmem:[%s176 + $0x100] sm:$0xf]
                %211 = vst [vmem:[%s177 + $0x40] sm:$0xf] %v210
                %v212 = vld [vmem:[%s176 + $0x110] sm:$0xf]
                %213 = vst [vmem:[%s177 + $0x44] sm:$0xf] %v212
                %v214 = vld [vmem:[%s176 + $0x120] sm:$0xf]
                %215 = vst [vmem:[%s177 + $0x48] sm:$0xf] %v214
                %v216 = vld [vmem:[%s176 + $0x130] sm:$0xf]
                %217 = vst [vmem:[%s177 + $0x4c] sm:$0xf] %v216
                %v218 = vld [vmem:[%s176 + $0x140] sm:$0xf]
                %219 = vst [vmem:[%s177 + $0x50] sm:$0xf] %v218
                %v220 = vld [vmem:[%s176 + $0x150] sm:$0xf]
                %221 = vst [vmem:[%s177 + $0x54] sm:$0xf] %v220
                %v222 = vld [vmem:[%s176 + $0x160] sm:$0xf]
                %223 = vst [vmem:[%s177 + $0x58] sm:$0xf] %v222
                %v224 = vld [vmem:[%s176 + $0x170] sm:$0xf]
                %225 = vst [vmem:[%s177 + $0x5c] sm:$0xf] %v224
                %v226 = vld [vmem:[%s176 + $0x180] sm:$0xf]
                %227 = vst [vmem:[%s177 + $0x60] sm:$0xf] %v226
                %v228 = vld [vmem:[%s176 + $0x190] sm:$0xf]
                %229 = vst [vmem:[%s177 + $0x64] sm:$0xf] %v228
                %v230 = vld [vmem:[%s176 + $0x1a0] sm:$0xf]
                %231 = vst [vmem:[%s177 + $0x68] sm:$0xf] %v230
                %v232 = vld [vmem:[%s176 + $0x1b0] sm:$0xf]
                %233 = vst [vmem:[%s177 + $0x6c] sm:$0xf] %v232
                %v234 = vld [vmem:[%s176 + $0x1c0] sm:$0xf]
                %235 = vst [vmem:[%s177 + $0x70] sm:$0xf] %v234
                %v236 = vld [vmem:[%s176 + $0x1d0] sm:$0xf]
                %237 = vst [vmem:[%s177 + $0x74] sm:$0xf] %v236
                %v238 = vld [vmem:[%s176 + $0x1e0] sm:$0xf]
                %239 = vst [vmem:[%s177 + $0x78] sm:$0xf] %v238
                %v240 = vld [vmem:[%s176 + $0x1f0] sm:$0xf]
                %241 = vst [vmem:[%s177 + $0x7c] sm:$0xf] %v240
                %v242 = vld [vmem:[%s176 + $0x200] sm:$0xf]
                %243 = vst [vmem:[%s177 + $0x80] sm:$0xf] %v242
                %v244 = vld [vmem:[%s176 + $0x210] sm:$0xf]
                %245 = vst [vmem:[%s177 + $0x84] sm:$0xf] %v244
                %v246 = vld [vmem:[%s176 + $0x220] sm:$0xf]
                %247 = vst [vmem:[%s177 + $0x88] sm:$0xf] %v246
                %v248 = vld [vmem:[%s176 + $0x230] sm:$0xf]
                %249 = vst [vmem:[%s177 + $0x8c] sm:$0xf] %v248
                %v250 = vld [vmem:[%s176 + $0x240] sm:$0xf]
                %251 = vst [vmem:[%s177 + $0x90] sm:$0xf] %v250
                %v252 = vld [vmem:[%s176 + $0x250] sm:$0xf]
                %253 = vst [vmem:[%s177 + $0x94] sm:$0xf] %v252
                %v254 = vld [vmem:[%s176 + $0x260] sm:$0xf]
                %255 = vst [vmem:[%s177 + $0x98] sm:$0xf] %v254
                %v256 = vld [vmem:[%s176 + $0x270] sm:$0xf]
                %257 = vst [vmem:[%s177 + $0x9c] sm:$0xf] %v256
                %v258 = vld [vmem:[%s176 + $0x280] sm:$0xf]
                %259 = vst [vmem:[%s177 + $0xa0] sm:$0xf] %v258
                %v260 = vld [vmem:[%s176 + $0x290] sm:$0xf]
                %261 = vst [vmem:[%s177 + $0xa4] sm:$0xf] %v260
                %v262 = vld [vmem:[%s176 + $0x2a0] sm:$0xf]
                %263 = vst [vmem:[%s177 + $0xa8] sm:$0xf] %v262
                %v264 = vld [vmem:[%s176 + $0x2b0] sm:$0xf]
                %265 = vst [vmem:[%s177 + $0xac] sm:$0xf] %v264
                %v266 = vld [vmem:[%s176 + $0x2c0] sm:$0xf]
                %267 = vst [vmem:[%s177 + $0xb0] sm:$0xf] %v266
                %v268 = vld [vmem:[%s176 + $0x2d0] sm:$0xf]
                %269 = vst [vmem:[%s177 + $0xb4] sm:$0xf] %v268
                %v270 = vld [vmem:[%s176 + $0x2e0] sm:$0xf]
                %271 = vst [vmem:[%s177 + $0xb8] sm:$0xf] %v270
                %v272 = vld [vmem:[%s176 + $0x2f0] sm:$0xf]
                %273 = vst [vmem:[%s177 + $0xbc] sm:$0xf] %v272
                %v274 = vld [vmem:[%s176 + $0x300] sm:$0xf]
                %275 = vst [vmem:[%s177 + $0xc0] sm:$0xf] %v274
                %v276 = vld [vmem:[%s176 + $0x310] sm:$0xf]
                %277 = vst [vmem:[%s177 + $0xc4] sm:$0xf] %v276
                %v278 = vld [vmem:[%s176 + $0x320] sm:$0xf]
                %279 = vst [vmem:[%s177 + $0xc8] sm:$0xf] %v278
                %v280 = vld [vmem:[%s176 + $0x330] sm:$0xf]
                %281 = vst [vmem:[%s177 + $0xcc] sm:$0xf] %v280
                %v282 = vld [vmem:[%s176 + $0x340] sm:$0xf]
                %283 = vst [vmem:[%s177 + $0xd0] sm:$0xf] %v282
                %v284 = vld [vmem:[%s176 + $0x350] sm:$0xf]
                %285 = vst [vmem:[%s177 + $0xd4] sm:$0xf] %v284
                %v286 = vld [vmem:[%s176 + $0x360] sm:$0xf]
                %287 = vst [vmem:[%s177 + $0xd8] sm:$0xf] %v286
                %v288 = vld [vmem:[%s176 + $0x370] sm:$0xf]
                %289 = vst [vmem:[%s177 + $0xdc] sm:$0xf] %v288
                %v290 = vld [vmem:[%s176 + $0x380] sm:$0xf]
                %291 = vst [vmem:[%s177 + $0xe0] sm:$0xf] %v290
                %v292 = vld [vmem:[%s176 + $0x390] sm:$0xf]
                %293 = vst [vmem:[%s177 + $0xe4] sm:$0xf] %v292
                %v294 = vld [vmem:[%s176 + $0x3a0] sm:$0xf]
                %295 = vst [vmem:[%s177 + $0xe8] sm:$0xf] %v294
                %v296 = vld [vmem:[%s176 + $0x3b0] sm:$0xf]
                %297 = vst [vmem:[%s177 + $0xec] sm:$0xf] %v296
                %v298 = vld [vmem:[%s176 + $0x3c0] sm:$0xf]
                %299 = vst [vmem:[%s177 + $0xf0] sm:$0xf] %v298
                %v300 = vld [vmem:[%s176 + $0x3d0] sm:$0xf]
                %301 = vst [vmem:[%s177 + $0xf4] sm:$0xf] %v300
                %v302 = vld [vmem:[%s176 + $0x3e0] sm:$0xf]
                %303 = vst [vmem:[%s177 + $0xf8] sm:$0xf] %v302
                %v304 = vld [vmem:[%s176 + $0x3f0] sm:$0xf]
                %305 = vst [vmem:[%s177 + $0xfc] sm:$0xf] %v304
                %v306 = vld [vmem:[%s176 + $0x400] sm:$0xf]
                %307 = vst [vmem:[%s177 + $0x100] sm:$0xf] %v306
                %v308 = vld [vmem:[%s176 + $0x410] sm:$0xf]
                %309 = vst [vmem:[%s177 + $0x104] sm:$0xf] %v308
                %v310 = vld [vmem:[%s176 + $0x420] sm:$0xf]
                %311 = vst [vmem:[%s177 + $0x108] sm:$0xf] %v310
                %v312 = vld [vmem:[%s176 + $0x430] sm:$0xf]
                %313 = vst [vmem:[%s177 + $0x10c] sm:$0xf] %v312
                %v314 = vld [vmem:[%s176 + $0x440] sm:$0xf]
                %315 = vst [vmem:[%s177 + $0x110] sm:$0xf] %v314
                %v316 = vld [vmem:[%s176 + $0x450] sm:$0xf]
                %317 = vst [vmem:[%s177 + $0x114] sm:$0xf] %v316
                %v318 = vld [vmem:[%s176 + $0x460] sm:$0xf]
                %319 = vst [vmem:[%s177 + $0x118] sm:$0xf] %v318
                %v320 = vld [vmem:[%s176 + $0x470] sm:$0xf]
                %321 = vst [vmem:[%s177 + $0x11c] sm:$0xf] %v320
                %v322 = vld [vmem:[%s176 + $0x480] sm:$0xf]
                %323 = vst [vmem:[%s177 + $0x120] sm:$0xf] %v322
                %v324 = vld [vmem:[%s176 + $0x490] sm:$0xf]
                %325 = vst [vmem:[%s177 + $0x124] sm:$0xf] %v324
                %v326 = vld [vmem:[%s176 + $0x4a0] sm:$0xf]
                %327 = vst [vmem:[%s177 + $0x128] sm:$0xf] %v326
                %v328 = vld [vmem:[%s176 + $0x4b0] sm:$0xf]
                %329 = vst [vmem:[%s177 + $0x12c] sm:$0xf] %v328
                %v330 = vld [vmem:[%s176 + $0x4c0] sm:$0xf]
                %331 = vst [vmem:[%s177 + $0x130] sm:$0xf] %v330
                %v332 = vld [vmem:[%s176 + $0x4d0] sm:$0xf]
                %333 = vst [vmem:[%s177 + $0x134] sm:$0xf] %v332
                %v334 = vld [vmem:[%s176 + $0x4e0] sm:$0xf]
                %335 = vst [vmem:[%s177 + $0x138] sm:$0xf] %v334
                %v336 = vld [vmem:[%s176 + $0x4f0] sm:$0xf]
                %337 = vst [vmem:[%s177 + $0x13c] sm:$0xf] %v336
                %v338 = vld [vmem:[%s176 + $0x500] sm:$0xf]
                %339 = vst [vmem:[%s177 + $0x140] sm:$0xf] %v338
                %v340 = vld [vmem:[%s176 + $0x510] sm:$0xf]
                %341 = vst [vmem:[%s177 + $0x144] sm:$0xf] %v340
                %v342 = vld [vmem:[%s176 + $0x520] sm:$0xf]
                %343 = vst [vmem:[%s177 + $0x148] sm:$0xf] %v342
                %v344 = vld [vmem:[%s176 + $0x530] sm:$0xf]
                %345 = vst [vmem:[%s177 + $0x14c] sm:$0xf] %v344
                %v346 = vld [vmem:[%s176 + $0x540] sm:$0xf]
                %347 = vst [vmem:[%s177 + $0x150] sm:$0xf] %v346
                %v348 = vld [vmem:[%s176 + $0x550] sm:$0xf]
                %349 = vst [vmem:[%s177 + $0x154] sm:$0xf] %v348
                %v350 = vld [vmem:[%s176 + $0x560] sm:$0xf]
                %351 = vst [vmem:[%s177 + $0x158] sm:$0xf] %v350
                %v352 = vld [vmem:[%s176 + $0x570] sm:$0xf]
                %353 = vst [vmem:[%s177 + $0x15c] sm:$0xf] %v352
                %v354 = vld [vmem:[%s176 + $0x580] sm:$0xf]
                %355 = vst [vmem:[%s177 + $0x160] sm:$0xf] %v354
                %v356 = vld [vmem:[%s176 + $0x590] sm:$0xf]
                %357 = vst [vmem:[%s177 + $0x164] sm:$0xf] %v356
                %v358 = vld [vmem:[%s176 + $0x5a0] sm:$0xf]
                %359 = vst [vmem:[%s177 + $0x168] sm:$0xf] %v358
                %v360 = vld [vmem:[%s176 + $0x5b0] sm:$0xf]
                %361 = vst [vmem:[%s177 + $0x16c] sm:$0xf] %v360
                %v362 = vld [vmem:[%s176 + $0x5c0] sm:$0xf]
                %363 = vst [vmem:[%s177 + $0x170] sm:$0xf] %v362
                %v364 = vld [vmem:[%s176 + $0x5d0] sm:$0xf]
                %365 = vst [vmem:[%s177 + $0x174] sm:$0xf] %v364
                %v366 = vld [vmem:[%s176 + $0x5e0] sm:$0xf]
                %367 = vst [vmem:[%s177 + $0x178] sm:$0xf] %v366
                %v368 = vld [vmem:[%s176 + $0x5f0] sm:$0xf]
                %369 = vst [vmem:[%s177 + $0x17c] sm:$0xf] %v368
                %v370 = vld [vmem:[%s176 + $0x600] sm:$0xf]
                %371 = vst [vmem:[%s177 + $0x180] sm:$0xf] %v370
                %v372 = vld [vmem:[%s176 + $0x610] sm:$0xf]
                %373 = vst [vmem:[%s177 + $0x184] sm:$0xf] %v372
                %v374 = vld [vmem:[%s176 + $0x620] sm:$0xf]
                %375 = vst [vmem:[%s177 + $0x188] sm:$0xf] %v374
                %v376 = vld [vmem:[%s176 + $0x630] sm:$0xf]
                %377 = vst [vmem:[%s177 + $0x18c] sm:$0xf] %v376
                %v378 = vld [vmem:[%s176 + $0x640] sm:$0xf]
                %379 = vst [vmem:[%s177 + $0x190] sm:$0xf] %v378
                %v380 = vld [vmem:[%s176 + $0x650] sm:$0xf]
                %381 = vst [vmem:[%s177 + $0x194] sm:$0xf] %v380
                %v382 = vld [vmem:[%s176 + $0x660] sm:$0xf]
                %383 = vst [vmem:[%s177 + $0x198] sm:$0xf] %v382
                %v384 = vld [vmem:[%s176 + $0x670] sm:$0xf]
                %385 = vst [vmem:[%s177 + $0x19c] sm:$0xf] %v384
                %v386 = vld [vmem:[%s176 + $0x680] sm:$0xf]
                %387 = vst [vmem:[%s177 + $0x1a0] sm:$0xf] %v386
                %v388 = vld [vmem:[%s176 + $0x690] sm:$0xf]
                %389 = vst [vmem:[%s177 + $0x1a4] sm:$0xf] %v388
                %v390 = vld [vmem:[%s176 + $0x6a0] sm:$0xf]
                %391 = vst [vmem:[%s177 + $0x1a8] sm:$0xf] %v390
                %v392 = vld [vmem:[%s176 + $0x6b0] sm:$0xf]
                %393 = vst [vmem:[%s177 + $0x1ac] sm:$0xf] %v392
                %v394 = vld [vmem:[%s176 + $0x6c0] sm:$0xf]
                %395 = vst [vmem:[%s177 + $0x1b0] sm:$0xf] %v394
                %v396 = vld [vmem:[%s176 + $0x6d0] sm:$0xf]
                %397 = vst [vmem:[%s177 + $0x1b4] sm:$0xf] %v396
                %v398 = vld [vmem:[%s176 + $0x6e0] sm:$0xf]
                %399 = vst [vmem:[%s177 + $0x1b8] sm:$0xf] %v398
                %v400 = vld [vmem:[%s176 + $0x6f0] sm:$0xf]
                %401 = vst [vmem:[%s177 + $0x1bc] sm:$0xf] %v400
                %v402 = vld [vmem:[%s176 + $0x700] sm:$0xf]
                %403 = vst [vmem:[%s177 + $0x1c0] sm:$0xf] %v402
                %v404 = vld [vmem:[%s176 + $0x710] sm:$0xf]
                %405 = vst [vmem:[%s177 + $0x1c4] sm:$0xf] %v404
                %v406 = vld [vmem:[%s176 + $0x720] sm:$0xf]
                %407 = vst [vmem:[%s177 + $0x1c8] sm:$0xf] %v406
                %v408 = vld [vmem:[%s176 + $0x730] sm:$0xf]
                %409 = vst [vmem:[%s177 + $0x1cc] sm:$0xf] %v408
                %v410 = vld [vmem:[%s176 + $0x740] sm:$0xf]
                %411 = vst [vmem:[%s177 + $0x1d0] sm:$0xf] %v410
                %v412 = vld [vmem:[%s176 + $0x750] sm:$0xf]
                %413 = vst [vmem:[%s177 + $0x1d4] sm:$0xf] %v412
                %v414 = vld [vmem:[%s176 + $0x760] sm:$0xf]
                %415 = vst [vmem:[%s177 + $0x1d8] sm:$0xf] %v414
                %v416 = vld [vmem:[%s176 + $0x770] sm:$0xf]
                %417 = vst [vmem:[%s177 + $0x1dc] sm:$0xf] %v416
                %v418 = vld [vmem:[%s176 + $0x780] sm:$0xf]
                %419 = vst [vmem:[%s177 + $0x1e0] sm:$0xf] %v418
                %v420 = vld [vmem:[%s176 + $0x790] sm:$0xf]
                %421 = vst [vmem:[%s177 + $0x1e4] sm:$0xf] %v420
                %v422 = vld [vmem:[%s176 + $0x7a0] sm:$0xf]
                %423 = vst [vmem:[%s177 + $0x1e8] sm:$0xf] %v422
                %v424 = vld [vmem:[%s176 + $0x7b0] sm:$0xf]
                %425 = vst [vmem:[%s177 + $0x1ec] sm:$0xf] %v424
                %v426 = vld [vmem:[%s176 + $0x7c0] sm:$0xf]
                %427 = vst [vmem:[%s177 + $0x1f0] sm:$0xf] %v426
                %v428 = vld [vmem:[%s176 + $0x7d0] sm:$0xf]
                %429 = vst [vmem:[%s177 + $0x1f4] sm:$0xf] %v428
                %v430 = vld [vmem:[%s176 + $0x7e0] sm:$0xf]
                %431 = vst [vmem:[%s177 + $0x1f8] sm:$0xf] %v430
                %v432 = vld [vmem:[%s176 + $0x7f0] sm:$0xf]
                %433 = vst [vmem:[%s177 + $0x1fc] sm:$0xf] %v432
                %v434 = vld [vmem:[%s176 + $0x800] sm:$0xf]
                %435 = vst [vmem:[%s177 + $0x200] sm:$0xf] %v434
                %v436 = vld [vmem:[%s176 + $0x810] sm:$0xf]
                %437 = vst [vmem:[%s177 + $0x204] sm:$0xf] %v436
                %v438 = vld [vmem:[%s176 + $0x820] sm:$0xf]
                %439 = vst [vmem:[%s177 + $0x208] sm:$0xf] %v438
                %v440 = vld [vmem:[%s176 + $0x830] sm:$0xf]
                %441 = vst [vmem:[%s177 + $0x20c] sm:$0xf] %v440
                %v442 = vld [vmem:[%s176 + $0x840] sm:$0xf]
                %443 = vst [vmem:[%s177 + $0x210] sm:$0xf] %v442
                %v444 = vld [vmem:[%s176 + $0x850] sm:$0xf]
                %445 = vst [vmem:[%s177 + $0x214] sm:$0xf] %v444
                %v446 = vld [vmem:[%s176 + $0x860] sm:$0xf]
                %447 = vst [vmem:[%s177 + $0x218] sm:$0xf] %v446
                %v448 = vld [vmem:[%s176 + $0x870] sm:$0xf]
                %449 = vst [vmem:[%s177 + $0x21c] sm:$0xf] %v448
                %v450 = vld [vmem:[%s176 + $0x880] sm:$0xf]
                %451 = vst [vmem:[%s177 + $0x220] sm:$0xf] %v450
                %v452 = vld [vmem:[%s176 + $0x890] sm:$0xf]
                %453 = vst [vmem:[%s177 + $0x224] sm:$0xf] %v452
                %v454 = vld [vmem:[%s176 + $0x8a0] sm:$0xf]
                %455 = vst [vmem:[%s177 + $0x228] sm:$0xf] %v454
                %v456 = vld [vmem:[%s176 + $0x8b0] sm:$0xf]
                %457 = vst [vmem:[%s177 + $0x22c] sm:$0xf] %v456
                %v458 = vld [vmem:[%s176 + $0x8c0] sm:$0xf]
                %459 = vst [vmem:[%s177 + $0x230] sm:$0xf] %v458
                %v460 = vld [vmem:[%s176 + $0x8d0] sm:$0xf]
                %461 = vst [vmem:[%s177 + $0x234] sm:$0xf] %v460
                %v462 = vld [vmem:[%s176 + $0x8e0] sm:$0xf]
                %463 = vst [vmem:[%s177 + $0x238] sm:$0xf] %v462
                %v464 = vld [vmem:[%s176 + $0x8f0] sm:$0xf]
                %465 = vst [vmem:[%s177 + $0x23c] sm:$0xf] %v464
              $region41: #{vgg_forward.10} parent=35 // loop_footer
                %s175 = sadd.s32 1, %s171
              $region42: #{vgg_forward.10} parent=35 // loop_footer_branch
                %170 = sbr.rel target = $region38
              $region43: #{vgg_forward.10} parent=35 // loop_exit
                _
            $region36: #{vgg_forward.10} parent=27 // pred_fallthru
              _
          $region28: #{vgg_forward.10} parent=23 // pred_fallthru
            _
          %773 = vnop
        $region24: #{vgg_forward.10} parent=15 // pred_fallthru
          _
        // Predicated region
        $region62: #{vgg_forward.10} parent=15 // pred_check
          %p774 = pneg %p93
        $region63: #{vgg_forward.10} parent=15 // pred_check_branch
          %776 = sbr.rel (%p774) target = $region65
        $region64: #{vgg_forward.10} parent=15 // pred_region
          %p777 = scmp.lt.s32.totalorder %s17, 3
          %s778 = scalar_select %p777, %s17, 3
          %s779 = scalar_lea.vmem %s2, %s778
        $region65: #{vgg_forward.10} parent=15 // pred_fallthru
          _
      $region16: #{vgg_forward.10} parent=5 // pred_fallthru
        _
      %p780 = scmp.le.s32.totalorder 1, %s9
      %p781 = scmp.lt.s32.totalorder %s9, 9
      %p782 = pnand %p780, %p781
      %p783 = pneg %p782
      // Predicated region
      $region66: #{vgg_forward.10} parent=5 // pred_check
        _
      $region67: #{vgg_forward.10} parent=5 // pred_check_branch
        %785 = sbr.rel (%p782) target = $region69
      $region68: #{vgg_forward.10} parent=5 // pred_region
        %s786 = ssub.s32 %s9, 1
        %s787 = sand.u32 %s60, 1
        %s788 = sand.u32 %s60, 1
        %s789 = smul.addr %s788, 576
        %s790 = scalar_lea.vmem [#allocation2], %s789
        // Predicated region
        $region70: #{vgg_forward.10} parent=68 // pred_check
          %p791 = pneg %p73
        $region71: #{vgg_forward.10} parent=68 // pred_check_branch
          %793 = sbr.rel (%p791) target = $region73
        $region72: #{vgg_forward.10} parent=68 // pred_region
          _
        $region73: #{vgg_forward.10} parent=68 // pred_fallthru
          _
        %p794 = scmp.lt.s32.totalorder %s18, 1
        %s795 = scalar_select %p794, %s18, 1
        %s796 = smul.addr %s795, 24
        %s797 = smul.addr %s796, 4
        %s798 = scalar_lea.vmem %s0, %s797
        %p799 = pneg %p47
        %p800 = pneg %p44
        %s801 = sand.u32 %s60, 1
        %s802 = sand.u32 %s60, 1
        %s803 = smul.addr %s802, 576
        %s804 = scalar_lea.vmem [#allocation2], %s803
        %p805 = pneg %p73
        %p806 = pneg %p70
        %p807 = scmp.lt.s32.totalorder %s19, 3
        %s808 = scalar_select %p807, %s19, 3
        %s809 = scalar_lea.vmem %s2, %s808
        %p810 = pneg %p99
        %p811 = pneg %p96
        %p812 = pneg %p127
        %p813 = pneg %p124
        %s814 = sand.u32 %s114, 1
        %s815 = sand.u32 %s114, 1
        %s816 = smul.addr %s815, 16
        %s817 = scalar_lea.vmem [#allocation3], %s816
        %p818 = scmp.lt.s32.totalorder %s18, 1
        %s819 = scalar_select %p818, %s18, 1
        %s820 = smul.addr %s819, 24
        %s821 = smul.addr %s820, 4
        %s822 = scalar_lea.vmem %s0, %s821
        %p823 = scmp.lt.s32.totalorder %s19, 3
        %s824 = scalar_select %p823, %s19, 3
        %s825 = scalar_lea.vmem %s2, %s824
        %v827 = vld [vmem:[%s822] sm:$0xff]
        %v828 = vld [vmem:[%s822 + $0x8] sm:$0xf]
        %v829 = vld [vmem:[%s822 + $0xc] sm:$0xff]
        %v830 = vld [vmem:[%s822 + $0x14] sm:$0xf]
        %v831 = vld [vmem:[%s822 + $0x18] sm:$0xff]
        %v832 = vld [vmem:[%s822 + $0x20] sm:$0xf]
        %v833 = vld [vmem:[%s822 + $0x24] sm:$0xff]
        %v834 = vld [vmem:[%s822 + $0x2c] sm:$0xf]
        %v835 = vld [vmem:[%s790] sm:$0xf]
        %v836 = vld [vmem:[%s790 + $0x4] sm:$0xf]
        %v837 = vld [vmem:[%s790 + $0x8] sm:$0xf]
        %v838 = vld [vmem:[%s790 + $0xc] sm:$0xf]
        %v839 = vld [vmem:[%s790 + $0x10] sm:$0xf]
        %v840 = vld [vmem:[%s790 + $0x14] sm:$0xf]
        %v841 = vld [vmem:[%s790 + $0x18] sm:$0xf]
        %v842 = vld [vmem:[%s790 + $0x1c] sm:$0xf]
        %v843 = vld [vmem:[%s790 + $0x20] sm:$0xf]
        %v844 = vld [vmem:[%s790 + $0x24] sm:$0xf]
        %v845 = vld [vmem:[%s790 + $0x28] sm:$0xf]
        %v846 = vld [vmem:[%s790 + $0x2c] sm:$0xf]
        %v847 = vld [vmem:[%s790 + $0x30] sm:$0xf]
        %v848 = vld [vmem:[%s790 + $0x34] sm:$0xf]
        %v849 = vld [vmem:[%s790 + $0x38] sm:$0xf]
        %v850 = vld [vmem:[%s790 + $0x3c] sm:$0xf]
        %v851 = vld [vmem:[%s790 + $0x40] sm:$0xf]
        %v852 = vld [vmem:[%s790 + $0x44] sm:$0xf]
        %v853 = vld [vmem:[%s790 + $0x48] sm:$0xf]
        %v854 = vld [vmem:[%s790 + $0x4c] sm:$0xf]
        %v855 = vld [vmem:[%s790 + $0x50] sm:$0xf]
        %v856 = vld [vmem:[%s790 + $0x54] sm:$0xf]
        %v857 = vld [vmem:[%s790 + $0x58] sm:$0xf]
        %v858 = vld [vmem:[%s790 + $0x5c] sm:$0xf]
        %v859 = vld [vmem:[%s790 + $0x60] sm:$0xf]
        %v860 = vld [vmem:[%s790 + $0x64] sm:$0xf]
        %v861 = vld [vmem:[%s790 + $0x68] sm:$0xf]
        %v862 = vld [vmem:[%s790 + $0x6c] sm:$0xf]
        %v863 = vld [vmem:[%s790 + $0x70] sm:$0xf]
        %v864 = vld [vmem:[%s790 + $0x74] sm:$0xf]
        %v865 = vld [vmem:[%s790 + $0x78] sm:$0xf]
        %v866 = vld [vmem:[%s790 + $0x7c] sm:$0xf]
        %v867 = vld [vmem:[%s790 + $0x80] sm:$0xf]
        %v868 = vld [vmem:[%s790 + $0x84] sm:$0xf]
        %v869 = vld [vmem:[%s790 + $0x88] sm:$0xf]
        %v870 = vld [vmem:[%s790 + $0x8c] sm:$0xf]
        %v871 = vld [vmem:[%s790 + $0x90] sm:$0xf]
        %v872 = vld [vmem:[%s790 + $0x94] sm:$0xf]
        %v873 = vld [vmem:[%s790 + $0x98] sm:$0xf]
        %v874 = vld [vmem:[%s790 + $0x9c] sm:$0xf]
        %v875 = vld [vmem:[%s790 + $0xa0] sm:$0xf]
        %v876 = vld [vmem:[%s790 + $0xa4] sm:$0xf]
        %v877 = vld [vmem:[%s790 + $0xa8] sm:$0xf]
        %v878 = vld [vmem:[%s790 + $0xac] sm:$0xf]
        %v879 = vld [vmem:[%s790 + $0xb0] sm:$0xf]
        %v880 = vld [vmem:[%s790 + $0xb4] sm:$0xf]
        %v881 = vld [vmem:[%s790 + $0xb8] sm:$0xf]
        %v882 = vld [vmem:[%s790 + $0xbc] sm:$0xf]
        %v883 = vld [vmem:[%s822 + $0x30] sm:$0xff]
        %v884 = vld [vmem:[%s822 + $0x38] sm:$0xf]
        %v885 = vld [vmem:[%s822 + $0x3c] sm:$0xff]
        %v886 = vld [vmem:[%s822 + $0x44] sm:$0xf]
        %s887 = scalar_lea.vmem %s790, 192 [#allocation2]
        %v888 = vld [vmem:[%s887] sm:$0xf]
        %v889 = vld [vmem:[%s887 + $0x4] sm:$0xf]
        %v890 = vld [vmem:[%s887 + $0x8] sm:$0xf]
        %v891 = vld [vmem:[%s887 + $0xc] sm:$0xf]
        %v892 = vld [vmem:[%s887 + $0x10] sm:$0xf]
        %v893 = vld [vmem:[%s887 + $0x14] sm:$0xf]
        %v894 = vld [vmem:[%s887 + $0x18] sm:$0xf]
        %v895 = vld [vmem:[%s887 + $0x1c] sm:$0xf]
        %v896 = vld [vmem:[%s887 + $0x20] sm:$0xf]
        %v897 = vld [vmem:[%s887 + $0x24] sm:$0xf]
        %v898 = vld [vmem:[%s887 + $0x28] sm:$0xf]
        %v899 = vld [vmem:[%s887 + $0x2c] sm:$0xf]
        %v900 = vld [vmem:[%s887 + $0x30] sm:$0xf]
        %v901 = vld [vmem:[%s887 + $0x34] sm:$0xf]
        %v902 = vld [vmem:[%s887 + $0x38] sm:$0xf]
        %v903 = vld [vmem:[%s887 + $0x3c] sm:$0xf]
        %v904 = vld [vmem:[%s887 + $0x40] sm:$0xf]
        %v905 = vld [vmem:[%s887 + $0x44] sm:$0xf]
        %v906 = vld [vmem:[%s887 + $0x48] sm:$0xf]
        %v907 = vld [vmem:[%s887 + $0x4c] sm:$0xf]
        %v908 = vld [vmem:[%s887 + $0x50] sm:$0xf]
        %v909 = vld [vmem:[%s887 + $0x54] sm:$0xf]
        %v910 = vld [vmem:[%s887 + $0x58] sm:$0xf]
        %v911 = vld [vmem:[%s887 + $0x5c] sm:$0xf]
        %v912 = vld [vmem:[%s887 + $0x60] sm:$0xf]
        %v913 = vld [vmem:[%s887 + $0x64] sm:$0xf]
        %v914 = vld [vmem:[%s887 + $0x68] sm:$0xf]
        %v915 = vld [vmem:[%s887 + $0x6c] sm:$0xf]
        %v916 = vld [vmem:[%s887 + $0x70] sm:$0xf]
        %v917 = vld [vmem:[%s887 + $0x74] sm:$0xf]
        %v918 = vld [vmem:[%s887 + $0x78] sm:$0xf]
        %v919 = vld [vmem:[%s887 + $0x7c] sm:$0xf]
        %v920 = vld [vmem:[%s887 + $0x80] sm:$0xf]
        %v921 = vld [vmem:[%s887 + $0x84] sm:$0xf]
        %v922 = vld [vmem:[%s887 + $0x88] sm:$0xf]
        %v923 = vld [vmem:[%s887 + $0x8c] sm:$0xf]
        %v924 = vld [vmem:[%s887 + $0x90] sm:$0xf]
        %v925 = vld [vmem:[%s887 + $0x94] sm:$0xf]
        %v926 = vld [vmem:[%s887 + $0x98] sm:$0xf]
        %v927 = vld [vmem:[%s887 + $0x9c] sm:$0xf]
        %v928 = vld [vmem:[%s887 + $0xa0] sm:$0xf]
        %v929 = vld [vmem:[%s887 + $0xa4] sm:$0xf]
        %v930 = vld [vmem:[%s887 + $0xa8] sm:$0xf]
        %v931 = vld [vmem:[%s887 + $0xac] sm:$0xf]
        %v932 = vld [vmem:[%s887 + $0xb0] sm:$0xf]
        %v933 = vld [vmem:[%s887 + $0xb4] sm:$0xf]
        %v934 = vld [vmem:[%s887 + $0xb8] sm:$0xf]
        %v935 = vld [vmem:[%s887 + $0xbc] sm:$0xf]
        %v944 = vunpack.c.l.b16 %v831
        %v945 = vunpack.c.h.b16 %v831
        %v946 = vunpack.c.l.b16 %v832
        %v947 = vunpack.c.l.b16 %v833
        %v948 = vunpack.c.h.b16 %v833
        %v949 = vunpack.c.l.b16 %v834
        %v950 = vunpack.c.l.b16 %v883
        %v951 = vunpack.c.h.b16 %v883
        %v952 = vunpack.c.l.b16 %v884
        %v953 = vunpack.c.l.b16 %v885
        %v954 = vunpack.c.h.b16 %v885
        %v955 = vunpack.c.l.b16 %v886
        %v956 = vpack.c.b16 %v947, %v944
        %v957 = vpack.c.b16 %v948, %v945
        %v958 = vpack.c.b16 %v949, %v946
        %v959 = vpack.c.b16 %v953, %v950
        %v960 = vpack.c.b16 %v954, %v951
        %v961 = vpack.c.b16 %v955, %v952
        %v1016 = vunpack.c.l.b16 %v888
        %v1017 = vunpack.c.l.b16 %v889
        %v1018 = vunpack.c.l.b16 %v890
        %v1019 = vunpack.c.l.b16 %v891
        %v1020 = vunpack.c.l.b16 %v892
        %v1021 = vunpack.c.l.b16 %v893
        %v1022 = vunpack.c.l.b16 %v894
        %v1023 = vunpack.c.l.b16 %v895
        %v1024 = vunpack.c.l.b16 %v896
        %v1025 = vunpack.c.l.b16 %v897
        %v1026 = vunpack.c.l.b16 %v898
        %v1027 = vunpack.c.l.b16 %v899
        %v1028 = vunpack.c.l.b16 %v900
        %v1029 = vunpack.c.l.b16 %v901
        %v1030 = vunpack.c.l.b16 %v902
        %v1031 = vunpack.c.l.b16 %v903
        %v1032 = vunpack.c.l.b16 %v904
        %v1033 = vunpack.c.l.b16 %v905
        %v1034 = vunpack.c.l.b16 %v906
        %v1035 = vunpack.c.l.b16 %v907
        %v1036 = vunpack.c.l.b16 %v908
        %v1037 = vunpack.c.l.b16 %v909
        %v1038 = vunpack.c.l.b16 %v910
        %v1039 = vunpack.c.l.b16 %v911
        %v1040 = vunpack.c.l.b16 %v912
        %v1041 = vunpack.c.l.b16 %v913
        %v1042 = vunpack.c.l.b16 %v914
        %v1043 = vunpack.c.l.b16 %v915
        %v1044 = vunpack.c.l.b16 %v916
        %v1045 = vunpack.c.l.b16 %v917
        %v1046 = vunpack.c.l.b16 %v918
        %v1047 = vunpack.c.l.b16 %v919
        %v1048 = vunpack.c.l.b16 %v920
        %v1049 = vunpack.c.l.b16 %v921
        %v1050 = vunpack.c.l.b16 %v922
        %v1051 = vunpack.c.l.b16 %v923
        %v1052 = vunpack.c.l.b16 %v924
        %v1053 = vunpack.c.l.b16 %v925
        %v1054 = vunpack.c.l.b16 %v926
        %v1055 = vunpack.c.l.b16 %v927
        %v1056 = vunpack.c.l.b16 %v928
        %v1057 = vunpack.c.l.b16 %v929
        %v1058 = vunpack.c.l.b16 %v930
        %v1059 = vunpack.c.l.b16 %v931
        %v1060 = vunpack.c.l.b16 %v932
        %v1061 = vunpack.c.l.b16 %v933
        %v1062 = vunpack.c.l.b16 %v934
        %v1063 = vunpack.c.l.b16 %v935
        %v1064 = vpack.c.b16 %v1017, %v1016
        %v1065 = vpack.c.b16 %v1019, %v1018
        %v1066 = vpack.c.b16 %v1021, %v1020
        %v1067 = vpack.c.b16 %v1023, %v1022
        %v1068 = vpack.c.b16 %v1025, %v1024
        %v1069 = vpack.c.b16 %v1027, %v1026
        %v1070 = vpack.c.b16 %v1029, %v1028
        %v1071 = vpack.c.b16 %v1031, %v1030
        %v1072 = vpack.c.b16 %v1033, %v1032
        %v1073 = vpack.c.b16 %v1035, %v1034
        %v1074 = vpack.c.b16 %v1037, %v1036
        %v1075 = vpack.c.b16 %v1039, %v1038
        %v1076 = vpack.c.b16 %v1041, %v1040
        %v1077 = vpack.c.b16 %v1043, %v1042
        %v1078 = vpack.c.b16 %v1045, %v1044
        %v1079 = vpack.c.b16 %v1047, %v1046
        %v1080 = vpack.c.b16 %v1049, %v1048
        %v1081 = vpack.c.b16 %v1051, %v1050
        %v1082 = vpack.c.b16 %v1053, %v1052
        %v1083 = vpack.c.b16 %v1055, %v1054
        %v1084 = vpack.c.b16 %v1057, %v1056
        %v1085 = vpack.c.b16 %v1059, %v1058
        %v1086 = vpack.c.b16 %v1061, %v1060
        %v1087 = vpack.c.b16 %v1063, %v1062
        %1112 = vmatprep.subr.bf16.mxu0 0
        %1113 = vmatpush1.bf16.msra.mxu0 %v1064
        %1114 = vmatprep.subr.bf16.mxu0 0
        %1115 = vmatpush1.bf16.msra.mxu0 %v1065
        %1116 = vmatprep.subr.bf16.mxu0 0
        %1117 = vmatpush1.bf16.msra.mxu0 %v1066
        %1118 = vmatprep.subr.bf16.mxu0 0
        %1119 = vmatpush1.bf16.msra.mxu0 %v1067
        %1120 = vmatprep.subr.bf16.mxu0 0
        %1121 = vmatpush1.bf16.msra.mxu0 %v1068
        %1122 = vmatprep.subr.bf16.mxu0 0
        %1123 = vmatpush1.bf16.msra.mxu0 %v1069
        %1124 = vmatprep.subr.bf16.mxu0 0
        %1125 = vmatpush1.bf16.msra.mxu0 %v1070
        %1126 = vmatprep.subr.bf16.mxu0 0
        %1127 = vmatpush1.bf16.msra.mxu0 %v1071
        %1128 = vmatprep.subr.bf16.mxu0 0
        %1129 = vmatpush1.bf16.msra.mxu0 %v1072
        %1130 = vmatprep.subr.bf16.mxu0 0
        %1131 = vmatpush1.bf16.msra.mxu0 %v1073
        %1132 = vmatprep.subr.bf16.mxu0 0
        %1133 = vmatpush1.bf16.msra.mxu0 %v1074
        %1134 = vmatprep.subr.bf16.mxu0 0
        %1135 = vmatpush1.bf16.msra.mxu0 %v1075
        %1136 = vmatprep.subr.bf16.mxu0 0
        %1137 = vmatpush1.bf16.msra.mxu0 %v1076
        %1138 = vmatprep.subr.bf16.mxu0 0
        %1139 = vmatpush1.bf16.msra.mxu0 %v1077
        %1140 = vmatprep.subr.bf16.mxu0 0
        %1141 = vmatpush1.bf16.msra.mxu0 %v1078
        %1142 = vmatprep.subr.bf16.mxu0 0
        %1143 = vmatpush1.bf16.msra.mxu0 %v1079
        %1144 = vmatprep.mubr.bf16.mxu0 %v957
        %1145 = vmatmul.mubr.bf16.gmra.mrb[0].mxu0 %v956
        %v1146 = vpop.f32.mrb[0].mxu0
        %v1147 = vadd.f32 0.0, %v1146
        %v1148 = vpop.f32.mrb[0].mxu0
        %v1149 = vpop.f32.mrb[0].mxu0
        %v1150 = vadd.f32 0.0, %v1149
        %v1151 = vpop.f32.mrb[0].mxu0
        %1152 = vmatprep.mubr.bf16.mxu0 %v960
        %1153 = vmatmul.mubr.bf16.gmra.mrb[0].mxu0 %v959
        %v1154 = vpop.f32.mrb[0].mxu0
        %v1155 = vadd.f32 0.0, %v1154
        %v1156 = vpop.f32.mrb[0].mxu0
        %v1157 = vpop.f32.mrb[0].mxu0
        %v1158 = vadd.f32 0.0, %v1157
        %v1159 = vpop.f32.mrb[0].mxu0
        %1160 = vdwg.mxu0
        %1161 = vmatprep.subr.bf16.mxu0 0
        %1162 = vmatpush1.bf16.msra.mxu0 %v1080
        %1163 = vmatprep.subr.bf16.mxu0 0
        %1164 = vmatpush1.bf16.msra.mxu0 %v1081
        %1165 = vmatprep.subr.bf16.mxu0 0
        %1166 = vmatpush1.bf16.msra.mxu0 %v1082
        %1167 = vmatprep.subr.bf16.mxu0 0
        %1168 = vmatpush1.bf16.msra.mxu0 %v1083
        %1169 = vmatprep.subr.bf16.mxu0 0
        %1170 = vmatpush1.bf16.msra.mxu0 %v1084
        %1171 = vmatprep.subr.bf16.mxu0 0
        %1172 = vmatpush1.bf16.msra.mxu0 %v1085
        %1173 = vmatprep.subr.bf16.mxu0 0
        %1174 = vmatpush1.bf16.msra.mxu0 %v1086
        %1175 = vmatprep.subr.bf16.mxu0 0
        %1176 = vmatpush1.bf16.msra.mxu0 %v1087
        %1177 = vmatprep.subr.bf16.mxu0 0
        %1178 = vmatpush1.bf16.msra.mxu0 0
        %1179 = vmatprep.subr.bf16.mxu0 0
        %1180 = vmatpush1.bf16.msra.mxu0 0
        %1181 = vmatprep.subr.bf16.mxu0 0
        %1182 = vmatpush1.bf16.msra.mxu0 0
        %1183 = vmatprep.subr.bf16.mxu0 0
        %1184 = vmatpush1.bf16.msra.mxu0 0
        %1185 = vmatprep.subr.bf16.mxu0 0
        %1186 = vmatpush1.bf16.msra.mxu0 0
        %1187 = vmatprep.subr.bf16.mxu0 0
        %1188 = vmatpush1.bf16.msra.mxu0 0
        %1189 = vmatprep.subr.bf16.mxu0 0
        %1190 = vmatpush1.bf16.msra.mxu0 0
        %1191 = vmatprep.subr.bf16.mxu0 0
        %1192 = vmatpush1.bf16.msra.mxu0 0
        %1193 = vmatprep.mubr.bf16.mxu0 0
        %1194 = vmatmul.mubr.bf16.gmra.mrb[0].mxu0 %v958
        %v1195 = vpop.f32.mrb[0].mxu0
        %v1196 = vadd.f32 %v1147, %v1195
        %v1197 = vpop.f32.mrb[0].mxu0
        %v1198 = vpop.f32.mrb[0].mxu0
        %v1199 = vadd.f32 %v1150, %v1198
        %v1200 = vpop.f32.mrb[0].mxu0
        %1201 = vmatprep.mubr.bf16.mxu0 0
        %1202 = vmatmul.mubr.bf16.gmra.mrb[0].mxu0 %v961
        %v1203 = vpop.f32.mrb[0].mxu0
        %v1204 = vadd.f32 %v1155, %v1203
        %v1205 = vpop.f32.mrb[0].mxu0
        %v1206 = vpop.f32.mrb[0].mxu0
        %v1207 = vadd.f32 %v1158, %v1206
        %v1208 = vpop.f32.mrb[0].mxu0
        %1209 = vdwg.mxu0
        %v1214 = vunpack.c.l.b16 %v827
        %v1215 = vunpack.c.h.b16 %v827
        %v1216 = vunpack.c.l.b16 %v828
        %v1217 = vunpack.c.l.b16 %v829
        %v1218 = vunpack.c.h.b16 %v829
        %v1219 = vunpack.c.l.b16 %v830
        %v1220 = vpack.c.b16 %v1217, %v1214
        %v1221 = vpack.c.b16 %v1218, %v1215
        %v1222 = vpack.c.b16 %v1219, %v1216
        %v1274 = vunpack.c.l.b16 %v835
        %v1275 = vunpack.c.l.b16 %v836
        %v1276 = vunpack.c.l.b16 %v837
        %v1277 = vunpack.c.l.b16 %v838
        %v1278 = vunpack.c.l.b16 %v839
        %v1279 = vunpack.c.l.b16 %v840
        %v1280 = vunpack.c.l.b16 %v841
        %v1281 = vunpack.c.l.b16 %v842
        %v1282 = vunpack.c.l.b16 %v843
        %v1283 = vunpack.c.l.b16 %v844
        %v1284 = vunpack.c.l.b16 %v845
        %v1285 = vunpack.c.l.b16 %v846
        %v1286 = vunpack.c.l.b16 %v847
        %v1287 = vunpack.c.l.b16 %v848
        %v1288 = vunpack.c.l.b16 %v849
        %v1289 = vunpack.c.l.b16 %v850
        %v1290 = vunpack.c.l.b16 %v851
        %v1291 = vunpack.c.l.b16 %v852
        %v1292 = vunpack.c.l.b16 %v853
        %v1293 = vunpack.c.l.b16 %v854
        %v1294 = vunpack.c.l.b16 %v855
        %v1295 = vunpack.c.l.b16 %v856
        %v1296 = vunpack.c.l.b16 %v857
        %v1297 = vunpack.c.l.b16 %v858
        %v1298 = vunpack.c.l.b16 %v859
        %v1299 = vunpack.c.l.b16 %v860
        %v1300 = vunpack.c.l.b16 %v861
        %v1301 = vunpack.c.l.b16 %v862
        %v1302 = vunpack.c.l.b16 %v863
        %v1303 = vunpack.c.l.b16 %v864
        %v1304 = vunpack.c.l.b16 %v865
        %v1305 = vunpack.c.l.b16 %v866
        %v1306 = vunpack.c.l.b16 %v867
        %v1307 = vunpack.c.l.b16 %v868
        %v1308 = vunpack.c.l.b16 %v869
        %v1309 = vunpack.c.l.b16 %v870
        %v1310 = vunpack.c.l.b16 %v871
        %v1311 = vunpack.c.l.b16 %v872
        %v1312 = vunpack.c.l.b16 %v873
        %v1313 = vunpack.c.l.b16 %v874
        %v1314 = vunpack.c.l.b16 %v875
        %v1315 = vunpack.c.l.b16 %v876
        %v1316 = vunpack.c.l.b16 %v877
        %v1317 = vunpack.c.l.b16 %v878
        %v1318 = vunpack.c.l.b16 %v879
        %v1319 = vunpack.c.l.b16 %v880
        %v1320 = vunpack.c.l.b16 %v881
        %v1321 = vunpack.c.l.b16 %v882
        %v1322 = vpack.c.b16 %v1275, %v1274
        %v1323 = vpack.c.b16 %v1277, %v1276
        %v1324 = vpack.c.b16 %v1279, %v1278
        %v1325 = vpack.c.b16 %v1281, %v1280
        %v1326 = vpack.c.b16 %v1283, %v1282
        %v1327 = vpack.c.b16 %v1285, %v1284
        %v1328 = vpack.c.b16 %v1287, %v1286
        %v1329 = vpack.c.b16 %v1289, %v1288
        %v1330 = vpack.c.b16 %v1291, %v1290
        %v1331 = vpack.c.b16 %v1293, %v1292
        %v1332 = vpack.c.b16 %v1295, %v1294
        %v1333 = vpack.c.b16 %v1297, %v1296
        %v1334 = vpack.c.b16 %v1299, %v1298
        %v1335 = vpack.c.b16 %v1301, %v1300
        %v1336 = vpack.c.b16 %v1303, %v1302
        %v1337 = vpack.c.b16 %v1305, %v1304
        %v1338 = vpack.c.b16 %v1307, %v1306
        %v1339 = vpack.c.b16 %v1309, %v1308
        %v1340 = vpack.c.b16 %v1311, %v1310
        %v1341 = vpack.c.b16 %v1313, %v1312
        %v1342 = vpack.c.b16 %v1315, %v1314
        %v1343 = vpack.c.b16 %v1317, %v1316
        %v1344 = vpack.c.b16 %v1319, %v1318
        %v1345 = vpack.c.b16 %v1321, %v1320
        %1370 = vmatprep.subr.bf16.mxu0 0
        %1371 = vmatpush1.bf16.msra.mxu0 %v1322
        %1372 = vmatprep.subr.bf16.mxu0 0
        %1373 = vmatpush1.bf16.msra.mxu0 %v1323
        %1374 = vmatprep.subr.bf16.mxu0 0
        %1375 = vmatpush1.bf16.msra.mxu0 %v1324
        %1376 = vmatprep.subr.bf16.mxu0 0
        %1377 = vmatpush1.bf16.msra.mxu0 %v1325
        %1378 = vmatprep.subr.bf16.mxu0 0
        %1379 = vmatpush1.bf16.msra.mxu0 %v1326
        %1380 = vmatprep.subr.bf16.mxu0 0
        %1381 = vmatpush1.bf16.msra.mxu0 %v1327
        %1382 = vmatprep.subr.bf16.mxu0 0
        %1383 = vmatpush1.bf16.msra.mxu0 %v1328
        %1384 = vmatprep.subr.bf16.mxu0 0
        %1385 = vmatpush1.bf16.msra.mxu0 %v1329
        %1386 = vmatprep.subr.bf16.mxu0 0
        %1387 = vmatpush1.bf16.msra.mxu0 %v1330
        %1388 = vmatprep.subr.bf16.mxu0 0
        %1389 = vmatpush1.bf16.msra.mxu0 %v1331
        %1390 = vmatprep.subr.bf16.mxu0 0
        %1391 = vmatpush1.bf16.msra.mxu0 %v1332
        %1392 = vmatprep.subr.bf16.mxu0 0
        %1393 = vmatpush1.bf16.msra.mxu0 %v1333
        %1394 = vmatprep.subr.bf16.mxu0 0
        %1395 = vmatpush1.bf16.msra.mxu0 %v1334
        %1396 = vmatprep.subr.bf16.mxu0 0
        %1397 = vmatpush1.bf16.msra.mxu0 %v1335
        %1398 = vmatprep.subr.bf16.mxu0 0
        %1399 = vmatpush1.bf16.msra.mxu0 %v1336
        %1400 = vmatprep.subr.bf16.mxu0 0
        %1401 = vmatpush1.bf16.msra.mxu0 %v1337
        %1402 = vmatprep.mubr.bf16.mxu0 %v1221
        %1403 = vmatmul.mubr.bf16.gmra.mrb[0].mxu0 %v1220
        %v1404 = vpop.f32.mrb[0].mxu0
        %v1405 = vadd.f32 %v1196, %v1404
        %v1406 = vpop.f32.mrb[0].mxu0
        %v1407 = vpop.f32.mrb[0].mxu0
        %v1408 = vadd.f32 %v1199, %v1407
        %v1409 = vpop.f32.mrb[0].mxu0
        %1410 = vmatprep.mubr.bf16.mxu0 %v957
        %1411 = vmatmul.mubr.bf16.gmra.mrb[0].mxu0 %v956
        %v1412 = vpop.f32.mrb[0].mxu0
        %v1413 = vadd.f32 %v1204, %v1412
        %v1414 = vpop.f32.mrb[0].mxu0
        %v1415 = vpop.f32.mrb[0].mxu0
        %v1416 = vadd.f32 %v1207, %v1415
        %v1417 = vpop.f32.mrb[0].mxu0
        %1418 = vdwg.mxu0
        %1419 = vmatprep.subr.bf16.mxu0 0
        %1420 = vmatpush1.bf16.msra.mxu0 %v1338
        %1421 = vmatprep.subr.bf16.mxu0 0
        %1422 = vmatpush1.bf16.msra.mxu0 %v1339
        %1423 = vmatprep.subr.bf16.mxu0 0
        %1424 = vmatpush1.bf16.msra.mxu0 %v1340
        %1425 = vmatprep.subr.bf16.mxu0 0
        %1426 = vmatpush1.bf16.msra.mxu0 %v1341
        %1427 = vmatprep.subr.bf16.mxu0 0
        %1428 = vmatpush1.bf16.msra.mxu0 %v1342
        %1429 = vmatprep.subr.bf16.mxu0 0
        %1430 = vmatpush1.bf16.msra.mxu0 %v1343
        %1431 = vmatprep.subr.bf16.mxu0 0
        %1432 = vmatpush1.bf16.msra.mxu0 %v1344
        %1433 = vmatprep.subr.bf16.mxu0 0
        %1434 = vmatpush1.bf16.msra.mxu0 %v1345
        %1435 = vmatprep.subr.bf16.mxu0 0
        %1436 = vmatpush1.bf16.msra.mxu0 0
        %1437 = vmatprep.subr.bf16.mxu0 0
        %1438 = vmatpush1.bf16.msra.mxu0 0
        %1439 = vmatprep.subr.bf16.mxu0 0
        %1440 = vmatpush1.bf16.msra.mxu0 0
        %1441 = vmatprep.subr.bf16.mxu0 0
        %1442 = vmatpush1.bf16.msra.mxu0 0
        %1443 = vmatprep.subr.bf16.mxu0 0
        %1444 = vmatpush1.bf16.msra.mxu0 0
        %1445 = vmatprep.subr.bf16.mxu0 0
        %1446 = vmatpush1.bf16.msra.mxu0 0
        %1447 = vmatprep.subr.bf16.mxu0 0
        %1448 = vmatpush1.bf16.msra.mxu0 0
        %1449 = vmatprep.subr.bf16.mxu0 0
        %1450 = vmatpush1.bf16.msra.mxu0 0
        %1451 = vmatprep.mubr.bf16.mxu0 0
        %1452 = vmatmul.mubr.bf16.gmra.mrb[0].mxu0 %v1222
        %v1453 = vpop.f32.mrb[0].mxu0
        %v1454 = vadd.f32 %v1405, %v1453
        %v1455 = vpop.f32.mrb[0].mxu0
        %v1456 = vpop.f32.mrb[0].mxu0
        %v1457 = vadd.f32 %v1408, %v1456
        %v1458 = vpop.f32.mrb[0].mxu0
        %1459 = vmatprep.mubr.bf16.mxu0 0
        %1460 = vmatmul.mubr.bf16.gmra.mrb[0].mxu0 %v958
        %v1461 = vpop.f32.mrb[0].mxu0
        %v1462 = vadd.f32 %v1413, %v1461
        %v1463 = vpop.f32.mrb[0].mxu0
        %v1464 = vpop.f32.mrb[0].mxu0
        %v1465 = vadd.f32 %v1416, %v1464
        %v1466 = vpop.f32.mrb[0].mxu0
        %1467 = vdwg.mxu0
        %v1468 = vld [vmem:[%s822 + $0x30] sm:$0xff]
        %v1469 = vld [vmem:[%s822 + $0x38] sm:$0xf]
        %v1470 = vld [vmem:[%s822 + $0x3c] sm:$0xff]
        %v1471 = vld [vmem:[%s822 + $0x44] sm:$0xf]
        %v1472 = vld [vmem:[%s822 + $0x48] sm:$0xff]
        %v1473 = vld [vmem:[%s822 + $0x50] sm:$0xf]
        %v1474 = vld [vmem:[%s822 + $0x54] sm:$0xff]
        %v1475 = vld [vmem:[%s822 + $0x5c] sm:$0xf]
        %s1476 = scalar_lea.vmem %s790, 384 [#allocation2]
        %v1477 = vld [vmem:[%s1476] sm:$0xf]
        %v1478 = vld [vmem:[%s1476 + $0x4] sm:$0xf]
        %v1479 = vld [vmem:[%s1476 + $0x8] sm:$0xf]
        %v1480 = vld [vmem:[%s1476 + $0xc] sm:$0xf]
        %v1481 = vld [vmem:[%s1476 + $0x10] sm:$0xf]
        %v1482 = vld [vmem:[%s1476 + $0x14] sm:$0xf]
        %v1483 = vld [vmem:[%s1476 + $0x18] sm:$0xf]
        %v1484 = vld [vmem:[%s1476 + $0x1c] sm:$0xf]
        %v1485 = vld [vmem:[%s1476 + $0x20] sm:$0xf]
        %v1486 = vld [vmem:[%s1476 + $0x24] sm:$0xf]
        %v1487 = vld [vmem:[%s1476 + $0x28] sm:$0xf]
        %v1488 = vld [vmem:[%s1476 + $0x2c] sm:$0xf]
        %v1489 = vld [vmem:[%s1476 + $0x30] sm:$0xf]
        %v1490 = vld [vmem:[%s1476 + $0x34] sm:$0xf]
        %v1491 = vld [vmem:[%s1476 + $0x38] sm:$0xf]
        %v1492 = vld [vmem:[%s1476 + $0x3c] sm:$0xf]
        %v1493 = vld [vmem:[%s1476 + $0x40] sm:$0xf]
        %v1494 = vld [vmem:[%s1476 + $0x44] sm:$0xf]
        %v1495 = vld [vmem:[%s1476 + $0x48] sm:$0xf]
        %v1496 = vld [vmem:[%s1476 + $0x4c] sm:$0xf]
        %v1497 = vld [vmem:[%s1476 + $0x50] sm:$0xf]
        %v1498 = vld [vmem:[%s1476 + $0x54] sm:$0xf]
        %v1499 = vld [vmem:[%s1476 + $0x58] sm:$0xf]
        %v1500 = vld [vmem:[%s1476 + $0x5c] sm:$0xf]
        %v1501 = vld [vmem:[%s1476 + $0x60] sm:$0xf]
        %v1502 = vld [vmem:[%s1476 + $0x64] sm:$0xf]
        %v1503 = vld [vmem:[%s1476 + $0x68] sm:$0xf]
        %v1504 = vld [vmem:[%s1476 + $0x6c] sm:$0xf]
        %v1505 = vld [vmem:[%s1476 + $0x70] sm:$0xf]
        %v1506 = vld [vmem:[%s1476 + $0x74] sm:$0xf]
        %v1507 = vld [vmem:[%s1476 + $0x78] sm:$0xf]
        %v1508 = vld [vmem:[%s1476 + $0x7c] sm:$0xf]
        %v1509 = vld [vmem:[%s1476 + $0x80] sm:$0xf]
        %v1510 = vld [vmem:[%s1476 + $0x84] sm:$0xf]
        %v1511 = vld [vmem:[%s1476 + $0x88] sm:$0xf]
        %v1512 = vld [vmem:[%s1476 + $0x8c] sm:$0xf]
        %v1513 = vld [vmem:[%s1476 + $0x90] sm:$0xf]
        %v1514 = vld [vmem:[%s1476 + $0x94] sm:$0xf]
        %v1515 = vld [vmem:[%s1476 + $0x98] sm:$0xf]
        %v1516 = vld [vmem:[%s1476 + $0x9c] sm:$0xf]
        %v1517 = vld [vmem:[%s1476 + $0xa0] sm:$0xf]
        %v1518 = vld [vmem:[%s1476 + $0xa4] sm:$0xf]
        %v1519 = vld [vmem:[%s1476 + $0xa8] sm:$0xf]
        %v1520 = vld [vmem:[%s1476 + $0xac] sm:$0xf]
        %v1521 = vld [vmem:[%s1476 + $0xb0] sm:$0xf]
        %v1522 = vld [vmem:[%s1476 + $0xb4] sm:$0xf]
        %v1523 = vld [vmem:[%s1476 + $0xb8] sm:$0xf]
        %v1524 = vld [vmem:[%s1476 + $0xbc] sm:$0xf]
        %v1533 = vunpack.c.l.b16 %v1468
        %v1534 = vunpack.c.h.b16 %v1468
        %v1535 = vunpack.c.l.b16 %v1469
        %v1536 = vunpack.c.l.b16 %v1470
        %v1537 = vunpack.c.h.b16 %v1470
        %v1538 = vunpack.c.l.b16 %v1471
        %v1539 = vunpack.c.l.b16 %v1472
        %v1540 = vunpack.c.h.b16 %v1472
        %v1541 = vunpack.c.l.b16 %v1473
        %v1542 = vunpack.c.l.b16 %v1474
        %v1543 = vunpack.c.h.b16 %v1474
        %v1544 = vunpack.c.l.b16 %v1475
        %v1545 = vpack.c.b16 %v1536, %v1533
        %v1546 = vpack.c.b16 %v1537, %v1534
        %v1547 = vpack.c.b16 %v1538, %v1535
        %v1548 = vpack.c.b16 %v1542, %v1539
        %v1549 = vpack.c.b16 %v1543, %v1540
        %v1550 = vpack.c.b16 %v1544, %v1541
        %v1605 = vunpack.c.l.b16 %v1477
        %v1606 = vunpack.c.l.b16 %v1478
        %v1607 = vunpack.c.l.b16 %v1479
        %v1608 = vunpack.c.l.b16 %v1480
        %v1609 = vunpack.c.l.b16 %v1481
        %v1610 = vunpack.c.l.b16 %v1482
        %v1611 = vunpack.c.l.b16 %v1483
        %v1612 = vunpack.c.l.b16 %v1484
        %v1613 = vunpack.c.l.b16 %v1485
        %v1614 = vunpack.c.l.b16 %v1486
        %v1615 = vunpack.c.l.b16 %v1487
        %v1616 = vunpack.c.l.b16 %v1488
        %v1617 = vunpack.c.l.b16 %v1489
        %v1618 = vunpack.c.l.b16 %v1490
        %v1619 = vunpack.c.l.b16 %v1491
        %v1620 = vunpack.c.l.b16 %v1492
        %v1621 = vunpack.c.l.b16 %v1493
        %v1622 = vunpack.c.l.b16 %v1494
        %v1623 = vunpack.c.l.b16 %v1495
        %v1624 = vunpack.c.l.b16 %v1496
        %v1625 = vunpack.c.l.b16 %v1497
        %v1626 = vunpack.c.l.b16 %v1498
        %v1627 = vunpack.c.l.b16 %v1499
        %v1628 = vunpack.c.l.b16 %v1500
        %v1629 = vunpack.c.l.b16 %v1501
        %v1630 = vunpack.c.l.b16 %v1502
        %v1631 = vunpack.c.l.b16 %v1503
        %v1632 = vunpack.c.l.b16 %v1504
        %v1633 = vunpack.c.l.b16 %v1505
        %v1634 = vunpack.c.l.b16 %v1506
        %v1635 = vunpack.c.l.b16 %v1507
        %v1636 = vunpack.c.l.b16 %v1508
        %v1637 = vunpack.c.l.b16 %v1509
        %v1638 = vunpack.c.l.b16 %v1510
        %v1639 = vunpack.c.l.b16 %v1511
        %v1640 = vunpack.c.l.b16 %v1512
        %v1641 = vunpack.c.l.b16 %v1513
        %v1642 = vunpack.c.l.b16 %v1514
        %v1643 = vunpack.c.l.b16 %v1515
        %v1644 = vunpack.c.l.b16 %v1516
        %v1645 = vunpack.c.l.b16 %v1517
        %v1646 = vunpack.c.l.b16 %v1518
        %v1647 = vunpack.c.l.b16 %v1519
        %v1648 = vunpack.c.l.b16 %v1520
        %v1649 = vunpack.c.l.b16 %v1521
        %v1650 = vunpack.c.l.b16 %v1522
        %v1651 = vunpack.c.l.b16 %v1523
        %v1652 = vunpack.c.l.b16 %v1524
        %v1653 = vpack.c.b16 %v1606, %v1605
        %v1654 = vpack.c.b16 %v1608, %v1607
        %v1655 = vpack.c.b16 %v1610, %v1609
        %v1656 = vpack.c.b16 %v1612, %v1611
        %v1657 = vpack.c.b16 %v1614, %v1613
        %v1658 = vpack.c.b16 %v1616, %v1615
        %v1659 = vpack.c.b16 %v1618, %v1617
        %v1660 = vpack.c.b16 %v1620, %v1619
        %v1661 = vpack.c.b16 %v1622, %v1621
        %v1662 = vpack.c.b16 %v1624, %v1623
        %v1663 = vpack.c.b16 %v1626, %v1625
        %v1664 = vpack.c.b16 %v1628, %v1627
        %v1665 = vpack.c.b16 %v1630, %v1629
        %v1666 = vpack.c.b16 %v1632, %v1631
        %v1667 = vpack.c.b16 %v1634, %v1633
        %v1668 = vpack.c.b16 %v1636, %v1635
        %v1669 = vpack.c.b16 %v1638, %v1637
        %v1670 = vpack.c.b16 %v1640, %v1639
        %v1671 = vpack.c.b16 %v1642, %v1641
        %v1672 = vpack.c.b16 %v1644, %v1643
        %v1673 = vpack.c.b16 %v1646, %v1645
        %v1674 = vpack.c.b16 %v1648, %v1647
        %v1675 = vpack.c.b16 %v1650, %v1649
        %v1676 = vpack.c.b16 %v1652, %v1651
        %1701 = vmatprep.subr.bf16.mxu0 0
        %1702 = vmatpush1.bf16.msra.mxu0 %v1653
        %1703 = vmatprep.subr.bf16.mxu0 0
        %1704 = vmatpush1.bf16.msra.mxu0 %v1654
        %1705 = vmatprep.subr.bf16.mxu0 0
        %1706 = vmatpush1.bf16.msra.mxu0 %v1655
        %1707 = vmatprep.subr.bf16.mxu0 0
        %1708 = vmatpush1.bf16.msra.mxu0 %v1656
        %1709 = vmatprep.subr.bf16.mxu0 0
        %1710 = vmatpush1.bf16.msra.mxu0 %v1657
        %1711 = vmatprep.subr.bf16.mxu0 0
        %1712 = vmatpush1.bf16.msra.mxu0 %v1658
        %1713 = vmatprep.subr.bf16.mxu0 0
        %1714 = vmatpush1.bf16.msra.mxu0 %v1659
        %1715 = vmatprep.subr.bf16.mxu0 0
        %1716 = vmatpush1.bf16.msra.mxu0 %v1660
        %1717 = vmatprep.subr.bf16.mxu0 0
        %1718 = vmatpush1.bf16.msra.mxu0 %v1661
        %1719 = vmatprep.subr.bf16.mxu0 0
        %1720 = vmatpush1.bf16.msra.mxu0 %v1662
        %1721 = vmatprep.subr.bf16.mxu0 0
        %1722 = vmatpush1.bf16.msra.mxu0 %v1663
        %1723 = vmatprep.subr.bf16.mxu0 0
        %1724 = vmatpush1.bf16.msra.mxu0 %v1664
        %1725 = vmatprep.subr.bf16.mxu0 0
        %1726 = vmatpush1.bf16.msra.mxu0 %v1665
        %1727 = vmatprep.subr.bf16.mxu0 0
        %1728 = vmatpush1.bf16.msra.mxu0 %v1666
        %1729 = vmatprep.subr.bf16.mxu0 0
        %1730 = vmatpush1.bf16.msra.mxu0 %v1667
        %1731 = vmatprep.subr.bf16.mxu0 0
        %1732 = vmatpush1.bf16.msra.mxu0 %v1668
        %1733 = vmatprep.mubr.bf16.mxu0 %v1546
        %1734 = vmatmul.mubr.bf16.gmra.mrb[0].mxu0 %v1545
        %v1735 = vpop.f32.mrb[0].mxu0
        %v1736 = vadd.f32 0.0, %v1735
        %v1737 = vpop.f32.mrb[0].mxu0
        %v1738 = vpop.f32.mrb[0].mxu0
        %v1739 = vadd.f32 0.0, %v1738
        %v1740 = vpop.f32.mrb[0].mxu0
        %1741 = vmatprep.mubr.bf16.mxu0 %v1549
        %1742 = vmatmul.mubr.bf16.gmra.mrb[0].mxu0 %v1548
        %v1743 = vpop.f32.mrb[0].mxu0
        %v1744 = vadd.f32 0.0, %v1743
        %v1745 = vpop.f32.mrb[0].mxu0
        %v1746 = vpop.f32.mrb[0].mxu0
        %v1747 = vadd.f32 0.0, %v1746
        %v1748 = vpop.f32.mrb[0].mxu0
        %1749 = vdwg.mxu0
        %1750 = vmatprep.subr.bf16.mxu0 0
        %1751 = vmatpush1.bf16.msra.mxu0 %v1669
        %1752 = vmatprep.subr.bf16.mxu0 0
        %1753 = vmatpush1.bf16.msra.mxu0 %v1670
        %1754 = vmatprep.subr.bf16.mxu0 0
        %1755 = vmatpush1.bf16.msra.mxu0 %v1671
        %1756 = vmatprep.subr.bf16.mxu0 0
        %1757 = vmatpush1.bf16.msra.mxu0 %v1672
        %1758 = vmatprep.subr.bf16.mxu0 0
        %1759 = vmatpush1.bf16.msra.mxu0 %v1673
        %1760 = vmatprep.subr.bf16.mxu0 0
        %1761 = vmatpush1.bf16.msra.mxu0 %v1674
        %1762 = vmatprep.subr.bf16.mxu0 0
        %1763 = vmatpush1.bf16.msra.mxu0 %v1675
        %1764 = vmatprep.subr.bf16.mxu0 0
        %1765 = vmatpush1.bf16.msra.mxu0 %v1676
        %1766 = vmatprep.subr.bf16.mxu0 0
        %1767 = vmatpush1.bf16.msra.mxu0 0
        %1768 = vmatprep.subr.bf16.mxu0 0
        %1769 = vmatpush1.bf16.msra.mxu0 0
        %1770 = vmatprep.subr.bf16.mxu0 0
        %1771 = vmatpush1.bf16.msra.mxu0 0
        %1772 = vmatprep.subr.bf16.mxu0 0
        %1773 = vmatpush1.bf16.msra.mxu0 0
        %1774 = vmatprep.subr.bf16.mxu0 0
        %1775 = vmatpush1.bf16.msra.mxu0 0
        %1776 = vmatprep.subr.bf16.mxu0 0
        %1777 = vmatpush1.bf16.msra.mxu0 0
        %1778 = vmatprep.subr.bf16.mxu0 0
        %1779 = vmatpush1.bf16.msra.mxu0 0
        %1780 = vmatprep.subr.bf16.mxu0 0
        %1781 = vmatpush1.bf16.msra.mxu0 0
        %1782 = vmatprep.mubr.bf16.mxu0 0
        %1783 = vmatmul.mubr.bf16.gmra.mrb[0].mxu0 %v1547
        %v1784 = vpop.f32.mrb[0].mxu0
        %v1785 = vadd.f32 %v1736, %v1784
        %v1786 = vpop.f32.mrb[0].mxu0
        %v1787 = vpop.f32.mrb[0].mxu0
        %v1788 = vadd.f32 %v1739, %v1787
        %v1789 = vpop.f32.mrb[0].mxu0
        %1790 = vmatprep.mubr.bf16.mxu0 0
        %1791 = vmatmul.mubr.bf16.gmra.mrb[0].mxu0 %v1550
        %v1792 = vpop.f32.mrb[0].mxu0
        %v1793 = vadd.f32 %v1744, %v1792
        %v1794 = vpop.f32.mrb[0].mxu0
        %v1795 = vpop.f32.mrb[0].mxu0
        %v1796 = vadd.f32 %v1747, %v1795
        %v1797 = vpop.f32.mrb[0].mxu0
        %1798 = vdwg.mxu0
        %v1799 = vadd.f32 %v1454, %v1785
        %v1800 = vadd.f32 %v1457, %v1788
        %v1801 = vadd.f32 %v1462, %v1793
        %v1802 = vadd.f32 %v1465, %v1796
        %v1803 = vld [vmem:[%s825] sm:$0x1]
        %v1805 = vlaneseq
        %v1806 = vshrl.u32 %v1805, 7
        %v1807 = vsub.s32 0, %v1806
        %v1808 = vrot.slane %v1803, %v1807
        %v1810 = vadd.f32 %v1799, %v1808
        %v1811 = vadd.f32 %v1800, %v1808
        %v1812 = vadd.f32 %v1801, %v1808
        %v1813 = vadd.f32 %v1802, %v1808
        %v1814 = vmax.f32 %v1810, 0.0
        %v1815 = vmax.f32 %v1811, 0.0
        %v1816 = vmax.f32 %v1812, 0.0
        %v1817 = vmax.f32 %v1813, 0.0
        %v1818 = vpack.c.bf16 %v1815, %v1814
        %v1819 = vpack.c.bf16 %v1817, %v1816
        %v1822 = vunpack.c.l.b16 %v1818
        %v1823 = vunpack.c.h.b16 %v1818
        %v1824 = vunpack.c.l.b16 %v1819
        %v1825 = vunpack.c.h.b16 %v1819
        %v1826 = vpack.c.b16 %v1822, %v1822
        %v1827 = vpack.c.b16 %v1823, %v1823
        %v1828 = vpack.c.b16 %v1824, %v1824
        %v1829 = vpack.c.b16 %v1825, %v1825
        %1834 = vst [vmem:[%s817] sm:$0xf] %v1826
        %1835 = vst [vmem:[%s817 + $0x4] sm:$0xf] %v1827
        %1836 = vst [vmem:[%s817 + $0x8] sm:$0xf] %v1828
        %1837 = vst [vmem:[%s817 + $0xc] sm:$0xf] %v1829
        %s1838 = sand.u32 %s114, 1
        %s1839 = sand.u32 %s114, 1
        %s1840 = smul.addr %s1839, 16
        %s1841 = scalar_lea.vmem [#allocation3], %s1840
        // Predicated region
        $region74: #{vgg_forward.10} parent=68 // pred_check
          %p1842 = pneg %p124
        $region75: #{vgg_forward.10} parent=68 // pred_check_branch
          %1844 = sbr.rel (%p1842) target = $region77
        $region76: #{vgg_forward.10} parent=68 // pred_region
          %s1845 = smul.addr %s18, 16
          %s1846 = sadd.s32 %s19, %s1845
          %s1847 = smul.addr %s1846, 4
          %s1848 = scalar_lea.vmem %s3, %s1847
          // Predicated region
          $region78: #{vgg_forward.10} parent=76 // pred_check
            _
          $region79: #{vgg_forward.10} parent=76 // pred_check_branch
            %1850 = sbr.rel (0) target = $region81
          $region80: #{vgg_forward.10} parent=76 // pred_region
            // Predicated region
            $region82: #{vgg_forward.10} parent=80 // pred_check
              _
            $region83: #{vgg_forward.10} parent=80 // pred_check_branch
              %1852 = sbr.rel target = $region85
            $region84: #{vgg_forward.10} parent=80 // pred_region
              // Predicated region
              $region97: #{vgg_forward.10} parent=84 // pred_check
                _
              $region98: #{vgg_forward.10} parent=84 // pred_check_branch
                %1873 = sbr.rel (0) target = $region100
              $region99: #{vgg_forward.10} parent=84 // pred_region
                loop: start=0, step=1, limit=1
                $region101: #{vgg_forward.10} parent=99 // loop_pre_header
                  _
                $region102: #{vgg_forward.10} parent=99 // loop_header
                  %s1875 = sphi 0, %s1879
                  %p1876 = scmp.ge.s32.totalorder %s1875, 1
                  %s1880 = sphi %s1841, %s1841
                  %s1881 = sphi %s1848, %s1848
                $region103: #{vgg_forward.10} parent=99 // loop_header_branch
                  %1878 = sbr.rel (%p1876) target = $region107
                $region104: #{vgg_forward.10} parent=99 // loop_body
                  _
                $region105: #{vgg_forward.10} parent=99 // loop_footer
                  %s1879 = sadd.s32 1, %s1875
                $region106: #{vgg_forward.10} parent=99 // loop_footer_branch
                  %1874 = sbr.rel target = $region102
                $region107: #{vgg_forward.10} parent=99 // loop_exit
                  _
                loop: start=0, step=1, limit=1
                $region108: #{vgg_forward.10} parent=99 // loop_pre_header
                  _
                $region109: #{vgg_forward.10} parent=99 // loop_header
                  %s1884 = sphi 0, %s1888
                  %p1885 = scmp.ge.s32.totalorder %s1884, 1
                  %s1889 = sphi %s1841, %s1841
                  %s1890 = sphi %s1848, %s1848
                $region110: #{vgg_forward.10} parent=99 // loop_header_branch
                  %1887 = sbr.rel (%p1885) target = $region114
                $region111: #{vgg_forward.10} parent=99 // loop_body
                  %v1891 = vld [vmem:[%s1889] sm:$0xf]
                  %1892 = vst [vmem:[%s1890] sm:$0xf] %v1891
                  %v1893 = vld [vmem:[%s1889 + $0x4] sm:$0xf]
                  %1894 = vst [vmem:[%s1890 + $0x10] sm:$0xf] %v1893
                  %v1895 = vld [vmem:[%s1889 + $0x8] sm:$0xf]
                  %1896 = vst [vmem:[%s1890 + $0x20] sm:$0xf] %v1895
                  %v1897 = vld [vmem:[%s1889 + $0xc] sm:$0xf]
                  %1898 = vst [vmem:[%s1890 + $0x30] sm:$0xf] %v1897
                $region112: #{vgg_forward.10} parent=99 // loop_footer
                  %s1888 = sadd.s32 1, %s1884
                $region113: #{vgg_forward.10} parent=99 // loop_footer_branch
                  %1883 = sbr.rel target = $region109
                $region114: #{vgg_forward.10} parent=99 // loop_exit
                  _
              $region100: #{vgg_forward.10} parent=84 // pred_fallthru
                _
            $region85: #{vgg_forward.10} parent=80 // pred_fallthru
              _
            // Predicated region
            $region86: #{vgg_forward.10} parent=80 // pred_check
              _
            $region87: #{vgg_forward.10} parent=80 // pred_check_branch
              %1854 = sbr.rel (0) target = $region89
            $region88: #{vgg_forward.10} parent=80 // pred_region
              loop: start=0, step=1, limit=1
              $region90: #{vgg_forward.10} parent=88 // loop_pre_header
                _
              $region91: #{vgg_forward.10} parent=88 // loop_header
                %s1857 = sphi 0, %s1861
                %p1858 = scmp.ge.s32.totalorder %s1857, 1
                %s1862 = sphi %s1841, %s1841
                %s1863 = sphi %s1848, %s1848
              $region92: #{vgg_forward.10} parent=88 // loop_header_branch
                %1860 = sbr.rel (%p1858) target = $region96
              $region93: #{vgg_forward.10} parent=88 // loop_body
                %v1864 = vld [vmem:[%s1862] sm:$0xf]
                %1865 = vst [vmem:[%s1863] sm:$0xf] %v1864
                %v1866 = vld [vmem:[%s1862 + $0x4] sm:$0xf]
                %1867 = vst [vmem:[%s1863 + $0x10] sm:$0xf] %v1866
                %v1868 = vld [vmem:[%s1862 + $0x8] sm:$0xf]
                %1869 = vst [vmem:[%s1863 + $0x20] sm:$0xf] %v1868
                %v1870 = vld [vmem:[%s1862 + $0xc] sm:$0xf]
                %1871 = vst [vmem:[%s1863 + $0x30] sm:$0xf] %v1870
              $region94: #{vgg_forward.10} parent=88 // loop_footer
                %s1861 = sadd.s32 1, %s1857
              $region95: #{vgg_forward.10} parent=88 // loop_footer_branch
                %1856 = sbr.rel target = $region91
              $region96: #{vgg_forward.10} parent=88 // loop_exit
                _
            $region89: #{vgg_forward.10} parent=80 // pred_fallthru
              _
          $region81: #{vgg_forward.10} parent=76 // pred_fallthru
            _
          %1899 = vnop
        $region77: #{vgg_forward.10} parent=68 // pred_fallthru
          _
      $region69: #{vgg_forward.10} parent=5 // pred_fallthru
        _
      %p1900 = scmp.le.s32.totalorder 2, %s9
      // Predicated region
      $region115: #{vgg_forward.10} parent=5 // pred_check
        %p1901 = pneg %p1900
      $region116: #{vgg_forward.10} parent=5 // pred_check_branch
        %1903 = sbr.rel (%p1901) target = $region118
      $region117: #{vgg_forward.10} parent=5 // pred_region
        %s1904 = ssub.s32 %s9, 2
        // Predicated region
        $region119: #{vgg_forward.10} parent=117 // pred_check
          %p1905 = pneg %p130
        $region120: #{vgg_forward.10} parent=117 // pred_check_branch
          %1907 = sbr.rel (%p1905) target = $region122
        $region121: #{vgg_forward.10} parent=117 // pred_region
          %s1908 = sand.u32 %s115, 1
          %s1909 = sand.u32 %s115, 1
          %s1910 = smul.addr %s1909, 16
          %s1911 = scalar_lea.vmem [#allocation3], %s1910
        $region122: #{vgg_forward.10} parent=117 // pred_fallthru
          _
      $region118: #{vgg_forward.10} parent=5 // pred_fallthru
        _
    $region6: #{vgg_forward.10} parent=1 // loop_footer
      %s13 = sadd.s32 1, %s9
    $region7: #{vgg_forward.10} parent=1 // loop_footer_branch
      %8 = sbr.rel target = $region3
    $region8: #{vgg_forward.10} parent=1 // loop_exit
      _

// kernel: vgg_forward.11
$region0: #{vgg_forward.11}
  #allocation0 [shape = 'u32[]', space=smem, size = 0x4, offset = 0x4, fixed_abs, tag = 'smem constant byte address 0x4 - core index']
  #allocation1 [shape = 'u32[144,128]{1,0:T(1,128)}', space=vmem, size = 0x12000, scoped, tag = 'internal scratch']
  %s0 = inlined_call_operand.vmem [shape: bf16[2,512], index: 0, kind: input, shape index: {}]
  %s1 = inlined_call_operand.vmem [shape: bf16[512,256], index: 1, kind: input, shape index: {}]
  %s2 = inlined_call_operand.vmem [shape: f32[1,256], index: 2, kind: input, shape index: {}]
  %s3 = inlined_call_operand.vmem [shape: bf16[256,256], index: 3, kind: input, shape index: {}]
  %s4 = inlined_call_operand.vmem [shape: f32[1,256], index: 4, kind: input, shape index: {}]
  %s5 = inlined_call_operand.vmem [shape: bf16[256,128], index: 5, kind: input, shape index: {}]
  %s6 = inlined_call_operand.vmem [shape: f32[1,128], index: 6, kind: input, shape index: {}]
  %s7 = inlined_call_operand.hbm [shape: f32[2,128], index: 7, kind: output, shape index: {}]
  %s8 = sld [smem:[#allocation0]]
  $region38: #{vgg_forward.11} parent=0
    _
  %s10 = ssub.s32 1, %s8
  %s11 = scalar_select 0, %s10, %s8
  $region1: #{vgg_forward.11} parent=0
    #allocation2 [shape = 'u8[1024]{0}', space=vmem, size = 0x400, scoped, tag = 'output window, operand 0, single buffered']
    #allocation3 [shape = 's32[1]{0}', space=sflag, size = 0x4, scoped, tag = 'scoped memory for vgg_forward.11']
    %12 = vsyncpa [#allocation3], 0
    // Predicated region
    $region2: #{vgg_forward.11} parent=1 // pred_check
      _
    $region3: #{vgg_forward.11} parent=1 // pred_check_branch
      %14 = sbr.rel (0) target = $region5
    $region4: #{vgg_forward.11} parent=1 // pred_region
      _
    $region5: #{vgg_forward.11} parent=1 // pred_fallthru
      _
    // Predicated region
    $region6: #{vgg_forward.11} parent=1 // pred_check
      _
    $region7: #{vgg_forward.11} parent=1 // pred_check_branch
      %16 = sbr.rel (0) target = $region9
    $region8: #{vgg_forward.11} parent=1 // pred_region
      _
    $region9: #{vgg_forward.11} parent=1 // pred_fallthru
      _
    // Predicated region
    $region10: #{vgg_forward.11} parent=1 // pred_check
      _
    $region11: #{vgg_forward.11} parent=1 // pred_check_branch
      %18 = sbr.rel (0) target = $region13
    $region12: #{vgg_forward.11} parent=1 // pred_region
      _
    $region13: #{vgg_forward.11} parent=1 // pred_fallthru
      _
    // Predicated region
    $region14: #{vgg_forward.11} parent=1 // pred_check
      _
    $region15: #{vgg_forward.11} parent=1 // pred_check_branch
      %20 = sbr.rel (0) target = $region17
    $region16: #{vgg_forward.11} parent=1 // pred_region
      _
    $region17: #{vgg_forward.11} parent=1 // pred_fallthru
      _
    // Predicated region
    $region18: #{vgg_forward.11} parent=1 // pred_check
      _
    $region19: #{vgg_forward.11} parent=1 // pred_check_branch
      %22 = sbr.rel (0) target = $region21
    $region20: #{vgg_forward.11} parent=1 // pred_region
      _
    $region21: #{vgg_forward.11} parent=1 // pred_fallthru
      _
    // Predicated region
    $region22: #{vgg_forward.11} parent=1 // pred_check
      _
    $region23: #{vgg_forward.11} parent=1 // pred_check_branch
      %24 = sbr.rel (0) target = $region25
    $region24: #{vgg_forward.11} parent=1 // pred_region
      _
    $region25: #{vgg_forward.11} parent=1 // pred_fallthru
      _
    // Predicated region
    $region26: #{vgg_forward.11} parent=1 // pred_check
      _
    $region27: #{vgg_forward.11} parent=1 // pred_check_branch
      %26 = sbr.rel (0) target = $region29
    $region28: #{vgg_forward.11} parent=1 // pred_region
      _
    $region29: #{vgg_forward.11} parent=1 // pred_fallthru
      _
    %v28 = vld [vmem:[%s0] sm:$0xf]
    %v29 = vld [vmem:[%s1] sm:$0xff]
    %v30 = vld [vmem:[%s1 + $0x8] sm:$0xff]
    %v31 = vld [vmem:[%s1 + $0x10] sm:$0xff]
    %v32 = vld [vmem:[%s1 + $0x18] sm:$0xff]
    %v33 = vld [vmem:[%s1 + $0x20] sm:$0xff]
    %v34 = vld [vmem:[%s1 + $0x28] sm:$0xff]
    %v35 = vld [vmem:[%s1 + $0x30] sm:$0xff]
    %v36 = vld [vmem:[%s1 + $0x38] sm:$0xff]
    %v37 = vld [vmem:[%s1 + $0x40] sm:$0xff]
    %v38 = vld [vmem:[%s1 + $0x48] sm:$0xff]
    %v39 = vld [vmem:[%s1 + $0x50] sm:$0xff]
    %v40 = vld [vmem:[%s1 + $0x58] sm:$0xff]
    %v41 = vld [vmem:[%s1 + $0x60] sm:$0xff]
    %v42 = vld [vmem:[%s1 + $0x68] sm:$0xff]
    %v43 = vld [vmem:[%s1 + $0x70] sm:$0xff]
    %v44 = vld [vmem:[%s1 + $0x78] sm:$0xff]
    %v45 = vld [vmem:[%s1 + $0x80] sm:$0xff]
    %v46 = vld [vmem:[%s1 + $0x88] sm:$0xff]
    %v47 = vld [vmem:[%s1 + $0x90] sm:$0xff]
    %v48 = vld [vmem:[%s1 + $0x98] sm:$0xff]
    %v49 = vld [vmem:[%s1 + $0xa0] sm:$0xff]
    %v50 = vld [vmem:[%s1 + $0xa8] sm:$0xff]
    %v51 = vld [vmem:[%s1 + $0xb0] sm:$0xff]
    %v52 = vld [vmem:[%s1 + $0xb8] sm:$0xff]
    %v53 = vld [vmem:[%s1 + $0xc0] sm:$0xff]
    %v54 = vld [vmem:[%s1 + $0xc8] sm:$0xff]
    %v55 = vld [vmem:[%s1 + $0xd0] sm:$0xff]
    %v56 = vld [vmem:[%s1 + $0xd8] sm:$0xff]
    %v57 = vld [vmem:[%s1 + $0xe0] sm:$0xff]
    %v58 = vld [vmem:[%s1 + $0xe8] sm:$0xff]
    %v59 = vld [vmem:[%s1 + $0xf0] sm:$0xff]
    %v60 = vld [vmem:[%s1 + $0xf8] sm:$0xff]
    %v61 = vld [vmem:[%s1 + $0x100] sm:$0xff]
    %v62 = vld [vmem:[%s1 + $0x108] sm:$0xff]
    %v63 = vld [vmem:[%s1 + $0x110] sm:$0xff]
    %v64 = vld [vmem:[%s1 + $0x118] sm:$0xff]
    %v65 = vld [vmem:[%s1 + $0x120] sm:$0xff]
    %v66 = vld [vmem:[%s1 + $0x128] sm:$0xff]
    %v67 = vld [vmem:[%s1 + $0x130] sm:$0xff]
    %v68 = vld [vmem:[%s1 + $0x138] sm:$0xff]
    %v69 = vld [vmem:[%s1 + $0x140] sm:$0xff]
    %v70 = vld [vmem:[%s1 + $0x148] sm:$0xff]
    %v71 = vld [vmem:[%s1 + $0x150] sm:$0xff]
    %v72 = vld [vmem:[%s1 + $0x158] sm:$0xff]
    %v73 = vld [vmem:[%s1 + $0x160] sm:$0xff]
    %v74 = vld [vmem:[%s1 + $0x168] sm:$0xff]
    %v75 = vld [vmem:[%s1 + $0x170] sm:$0xff]
    %v76 = vld [vmem:[%s1 + $0x178] sm:$0xff]
    %v77 = vld [vmem:[%s1 + $0x180] sm:$0xff]
    %v78 = vld [vmem:[%s1 + $0x188] sm:$0xff]
    %v79 = vld [vmem:[%s1 + $0x190] sm:$0xff]
    %v80 = vld [vmem:[%s1 + $0x198] sm:$0xff]
    %v81 = vld [vmem:[%s1 + $0x1a0] sm:$0xff]
    %v82 = vld [vmem:[%s1 + $0x1a8] sm:$0xff]
    %v83 = vld [vmem:[%s1 + $0x1b0] sm:$0xff]
    %v84 = vld [vmem:[%s1 + $0x1b8] sm:$0xff]
    %v85 = vld [vmem:[%s1 + $0x1c0] sm:$0xff]
    %v86 = vld [vmem:[%s1 + $0x1c8] sm:$0xff]
    %v87 = vld [vmem:[%s1 + $0x1d0] sm:$0xff]
    %v88 = vld [vmem:[%s1 + $0x1d8] sm:$0xff]
    %v89 = vld [vmem:[%s1 + $0x1e0] sm:$0xff]
    %v90 = vld [vmem:[%s1 + $0x1e8] sm:$0xff]
    %v91 = vld [vmem:[%s1 + $0x1f0] sm:$0xff]
    %v92 = vld [vmem:[%s1 + $0x1f8] sm:$0xff]
    %v93 = vld [vmem:[%s2] sm:$0x3]
    %v95 = vlaneseq
    %v96 = vshrl.u32 %v95, 7
    %v97 = vsub.s32 0, %v96
    %v98 = vrot.slane %v93, %v97
    %v99 = vlaneseq
    %v100 = vshrl.u32 %v99, 7
    %v101 = vsub.s32 1, %v100
    %v102 = vrot.slane %v93, %v101
    %v107 = vunpack.c.l.s4 1966171168
    %v108 = vunpack.c.0.s8 %v107
    %v109 = vlaneseq
    %v110 = vshrl.u32 %v109, 7
    %v111 = vsub.s32 %v108, %v110
    %v112 = vrot.slane %v28, %v111
    %v113 = vcombine.high %v112, %v112
    %v115 = vunpack.c.l.s4 1966171168
    %v116 = vunpack.c.0.s8 %v115
    %v117 = vlaneseq
    %v118 = vshrl.u32 %v117, 7
    %v119 = vsub.s32 %v116, %v118
    %v120 = vrot.slane %v112, %v119
    %v122 = vunpack.c.l.s4 1966171168
    %v123 = vunpack.c.0.s8 %v122
    %v124 = vlaneseq
    %v125 = vshrl.u32 %v124, 7
    %v126 = vsub.s32 %v123, %v125
    %v127 = vrot.slane %v113, %v126
    %v128 = vcombine.high %v120, %v120
    %v129 = vcombine.high %v127, %v127
    %v198 = vunpack.c.l.b16 %v29
    %v199 = vunpack.c.h.b16 %v29
    %v200 = vunpack.c.l.b16 %v30
    %v201 = vunpack.c.h.b16 %v30
    %v202 = vunpack.c.l.b16 %v31
    %v203 = vunpack.c.h.b16 %v31
    %v204 = vunpack.c.l.b16 %v32
    %v205 = vunpack.c.h.b16 %v32
    %v206 = vunpack.c.l.b16 %v33
    %v207 = vunpack.c.h.b16 %v33
    %v208 = vunpack.c.l.b16 %v34
    %v209 = vunpack.c.h.b16 %v34
    %v210 = vunpack.c.l.b16 %v35
    %v211 = vunpack.c.h.b16 %v35
    %v212 = vunpack.c.l.b16 %v36
    %v213 = vunpack.c.h.b16 %v36
    %v214 = vunpack.c.l.b16 %v37
    %v215 = vunpack.c.h.b16 %v37
    %v216 = vunpack.c.l.b16 %v38
    %v217 = vunpack.c.h.b16 %v38
    %v218 = vunpack.c.l.b16 %v39
    %v219 = vunpack.c.h.b16 %v39
    %v220 = vunpack.c.l.b16 %v40
    %v221 = vunpack.c.h.b16 %v40
    %v222 = vunpack.c.l.b16 %v41
    %v223 = vunpack.c.h.b16 %v41
    %v224 = vunpack.c.l.b16 %v42
    %v225 = vunpack.c.h.b16 %v42
    %v226 = vunpack.c.l.b16 %v43
    %v227 = vunpack.c.h.b16 %v43
    %v228 = vunpack.c.l.b16 %v44
    %v229 = vunpack.c.h.b16 %v44
    %v230 = vunpack.c.l.b16 %v45
    %v231 = vunpack.c.h.b16 %v45
    %v232 = vunpack.c.l.b16 %v46
    %v233 = vunpack.c.h.b16 %v46
    %v234 = vunpack.c.l.b16 %v47
    %v235 = vunpack.c.h.b16 %v47
    %v236 = vunpack.c.l.b16 %v48
    %v237 = vunpack.c.h.b16 %v48
    %v238 = vunpack.c.l.b16 %v49
    %v239 = vunpack.c.h.b16 %v49
    %v240 = vunpack.c.l.b16 %v50
    %v241 = vunpack.c.h.b16 %v50
    %v242 = vunpack.c.l.b16 %v51
    %v243 = vunpack.c.h.b16 %v51
    %v244 = vunpack.c.l.b16 %v52
    %v245 = vunpack.c.h.b16 %v52
    %v246 = vunpack.c.l.b16 %v53
    %v247 = vunpack.c.h.b16 %v53
    %v248 = vunpack.c.l.b16 %v54
    %v249 = vunpack.c.h.b16 %v54
    %v250 = vunpack.c.l.b16 %v55
    %v251 = vunpack.c.h.b16 %v55
    %v252 = vunpack.c.l.b16 %v56
    %v253 = vunpack.c.h.b16 %v56
    %v254 = vunpack.c.l.b16 %v57
    %v255 = vunpack.c.h.b16 %v57
    %v256 = vunpack.c.l.b16 %v58
    %v257 = vunpack.c.h.b16 %v58
    %v258 = vunpack.c.l.b16 %v59
    %v259 = vunpack.c.h.b16 %v59
    %v260 = vunpack.c.l.b16 %v60
    %v261 = vunpack.c.h.b16 %v60
    %v262 = vunpack.c.l.b16 %v61
    %v263 = vunpack.c.h.b16 %v61
    %v264 = vunpack.c.l.b16 %v62
    %v265 = vunpack.c.h.b16 %v62
    %v266 = vunpack.c.l.b16 %v63
    %v267 = vunpack.c.h.b16 %v63
    %v268 = vunpack.c.l.b16 %v64
    %v269 = vunpack.c.h.b16 %v64
    %v270 = vunpack.c.l.b16 %v65
    %v271 = vunpack.c.h.b16 %v65
    %v272 = vunpack.c.l.b16 %v66
    %v273 = vunpack.c.h.b16 %v66
    %v274 = vunpack.c.l.b16 %v67
    %v275 = vunpack.c.h.b16 %v67
    %v276 = vunpack.c.l.b16 %v68
    %v277 = vunpack.c.h.b16 %v68
    %v278 = vunpack.c.l.b16 %v69
    %v279 = vunpack.c.h.b16 %v69
    %v280 = vunpack.c.l.b16 %v70
    %v281 = vunpack.c.h.b16 %v70
    %v282 = vunpack.c.l.b16 %v71
    %v283 = vunpack.c.h.b16 %v71
    %v284 = vunpack.c.l.b16 %v72
    %v285 = vunpack.c.h.b16 %v72
    %v286 = vunpack.c.l.b16 %v73
    %v287 = vunpack.c.h.b16 %v73
    %v288 = vunpack.c.l.b16 %v74
    %v289 = vunpack.c.h.b16 %v74
    %v290 = vunpack.c.l.b16 %v75
    %v291 = vunpack.c.h.b16 %v75
    %v292 = vunpack.c.l.b16 %v76
    %v293 = vunpack.c.h.b16 %v76
    %v294 = vunpack.c.l.b16 %v77
    %v295 = vunpack.c.h.b16 %v77
    %v296 = vunpack.c.l.b16 %v78
    %v297 = vunpack.c.h.b16 %v78
    %v298 = vunpack.c.l.b16 %v79
    %v299 = vunpack.c.h.b16 %v79
    %v300 = vunpack.c.l.b16 %v80
    %v301 = vunpack.c.h.b16 %v80
    %v302 = vunpack.c.l.b16 %v81
    %v303 = vunpack.c.h.b16 %v81
    %v304 = vunpack.c.l.b16 %v82
    %v305 = vunpack.c.h.b16 %v82
    %v306 = vunpack.c.l.b16 %v83
    %v307 = vunpack.c.h.b16 %v83
    %v308 = vunpack.c.l.b16 %v84
    %v309 = vunpack.c.h.b16 %v84
    %v310 = vunpack.c.l.b16 %v85
    %v311 = vunpack.c.h.b16 %v85
    %v312 = vunpack.c.l.b16 %v86
    %v313 = vunpack.c.h.b16 %v86
    %v314 = vunpack.c.l.b16 %v87
    %v315 = vunpack.c.h.b16 %v87
    %v316 = vunpack.c.l.b16 %v88
    %v317 = vunpack.c.h.b16 %v88
    %v318 = vunpack.c.l.b16 %v89
    %v319 = vunpack.c.h.b16 %v89
    %v320 = vunpack.c.l.b16 %v90
    %v321 = vunpack.c.h.b16 %v90
    %v322 = vunpack.c.l.b16 %v91
    %v323 = vunpack.c.h.b16 %v91
    %v324 = vunpack.c.l.b16 %v92
    %v325 = vunpack.c.h.b16 %v92
    %v326 = vpack.c.b16 %v200, %v198
    %v327 = vpack.c.b16 %v201, %v199
    %v328 = vpack.c.b16 %v204, %v202
    %v329 = vpack.c.b16 %v205, %v203
    %v330 = vpack.c.b16 %v208, %v206
    %v331 = vpack.c.b16 %v209, %v207
    %v332 = vpack.c.b16 %v212, %v210
    %v333 = vpack.c.b16 %v213, %v211
    %v334 = vpack.c.b16 %v216, %v214
    %v335 = vpack.c.b16 %v217, %v215
    %v336 = vpack.c.b16 %v220, %v218
    %v337 = vpack.c.b16 %v221, %v219
    %v338 = vpack.c.b16 %v224, %v222
    %v339 = vpack.c.b16 %v225, %v223
    %v340 = vpack.c.b16 %v228, %v226
    %v341 = vpack.c.b16 %v229, %v227
    %v342 = vpack.c.b16 %v232, %v230
    %v343 = vpack.c.b16 %v233, %v231
    %v344 = vpack.c.b16 %v236, %v234
    %v345 = vpack.c.b16 %v237, %v235
    %v346 = vpack.c.b16 %v240, %v238
    %v347 = vpack.c.b16 %v241, %v239
    %v348 = vpack.c.b16 %v244, %v242
    %v349 = vpack.c.b16 %v245, %v243
    %v350 = vpack.c.b16 %v248, %v246
    %v351 = vpack.c.b16 %v249, %v247
    %v352 = vpack.c.b16 %v252, %v250
    %v353 = vpack.c.b16 %v253, %v251
    %v354 = vpack.c.b16 %v256, %v254
    %v355 = vpack.c.b16 %v257, %v255
    %v356 = vpack.c.b16 %v260, %v258
    %v357 = vpack.c.b16 %v261, %v259
    %v358 = vpack.c.b16 %v264, %v262
    %v359 = vpack.c.b16 %v265, %v263
    %v360 = vpack.c.b16 %v268, %v266
    %v361 = vpack.c.b16 %v269, %v267
    %v362 = vpack.c.b16 %v272, %v270
    %v363 = vpack.c.b16 %v273, %v271
    %v364 = vpack.c.b16 %v276, %v274
    %v365 = vpack.c.b16 %v277, %v275
    %v366 = vpack.c.b16 %v280, %v278
    %v367 = vpack.c.b16 %v281, %v279
    %v368 = vpack.c.b16 %v284, %v282
    %v369 = vpack.c.b16 %v285, %v283
    %v370 = vpack.c.b16 %v288, %v286
    %v371 = vpack.c.b16 %v289, %v287
    %v372 = vpack.c.b16 %v292, %v290
    %v373 = vpack.c.b16 %v293, %v291
    %v374 = vpack.c.b16 %v296, %v294
    %v375 = vpack.c.b16 %v297, %v295
    %v376 = vpack.c.b16 %v300, %v298
    %v377 = vpack.c.b16 %v301, %v299
    %v378 = vpack.c.b16 %v304, %v302
    %v379 = vpack.c.b16 %v305, %v303
    %v380 = vpack.c.b16 %v308, %v306
    %v381 = vpack.c.b16 %v309, %v307
    %v382 = vpack.c.b16 %v312, %v310
    %v383 = vpack.c.b16 %v313, %v311
    %v384 = vpack.c.b16 %v316, %v314
    %v385 = vpack.c.b16 %v317, %v315
    %v386 = vpack.c.b16 %v320, %v318
    %v387 = vpack.c.b16 %v321, %v319
    %v388 = vpack.c.b16 %v324, %v322
    %v389 = vpack.c.b16 %v325, %v323
    %454 = vmatprep.subr.bf16.mxu0 %v327
    %455 = vmatpush1.bf16.msra.mxu0 %v326
    %456 = vmatprep.subr.bf16.mxu0 %v329
    %457 = vmatpush1.bf16.msra.mxu0 %v328
    %458 = vmatprep.subr.bf16.mxu0 %v331
    %459 = vmatpush1.bf16.msra.mxu0 %v330
    %460 = vmatprep.subr.bf16.mxu0 %v333
    %461 = vmatpush1.bf16.msra.mxu0 %v332
    %462 = vmatprep.subr.bf16.mxu0 %v335
    %463 = vmatpush1.bf16.msra.mxu0 %v334
    %464 = vmatprep.subr.bf16.mxu0 %v337
    %465 = vmatpush1.bf16.msra.mxu0 %v336
    %466 = vmatprep.subr.bf16.mxu0 %v339
    %467 = vmatpush1.bf16.msra.mxu0 %v338
    %468 = vmatprep.subr.bf16.mxu0 %v341
    %469 = vmatpush1.bf16.msra.mxu0 %v340
    %470 = vmatprep.subr.bf16.mxu0 %v343
    %471 = vmatpush1.bf16.msra.mxu0 %v342
    %472 = vmatprep.subr.bf16.mxu0 %v345
    %473 = vmatpush1.bf16.msra.mxu0 %v344
    %474 = vmatprep.subr.bf16.mxu0 %v347
    %475 = vmatpush1.bf16.msra.mxu0 %v346
    %476 = vmatprep.subr.bf16.mxu0 %v349
    %477 = vmatpush1.bf16.msra.mxu0 %v348
    %478 = vmatprep.subr.bf16.mxu0 %v351
    %479 = vmatpush1.bf16.msra.mxu0 %v350
    %480 = vmatprep.subr.bf16.mxu0 %v353
    %481 = vmatpush1.bf16.msra.mxu0 %v352
    %482 = vmatprep.subr.bf16.mxu0 %v355
    %483 = vmatpush1.bf16.msra.mxu0 %v354
    %484 = vmatprep.subr.bf16.mxu0 %v357
    %485 = vmatpush1.bf16.msra.mxu0 %v356
    %486 = vmatprep.mubr.bf16.mxu0 %v127
    %487 = vmatmul.mubr.bf16.gmra.mrb[0].mxu0 %v120
    %v488 = vpop.f32.mrb[0].mxu0
    %v489 = vadd.f32 %v98, %v488
    %v490 = vpop.f32.mrb[0].mxu0
    %v491 = vadd.f32 %v102, %v490
    %v492 = vpop.f32.mrb[0].mxu0
    %v493 = vpop.f32.mrb[0].mxu0
    %494 = vdwg.mxu0
    %495 = vmatprep.subr.bf16.mxu0 %v359
    %496 = vmatpush1.bf16.msra.mxu0 %v358
    %497 = vmatprep.subr.bf16.mxu0 %v361
    %498 = vmatpush1.bf16.msra.mxu0 %v360
    %499 = vmatprep.subr.bf16.mxu0 %v363
    %500 = vmatpush1.bf16.msra.mxu0 %v362
    %501 = vmatprep.subr.bf16.mxu0 %v365
    %502 = vmatpush1.bf16.msra.mxu0 %v364
    %503 = vmatprep.subr.bf16.mxu0 %v367
    %504 = vmatpush1.bf16.msra.mxu0 %v366
    %505 = vmatprep.subr.bf16.mxu0 %v369
    %506 = vmatpush1.bf16.msra.mxu0 %v368
    %507 = vmatprep.subr.bf16.mxu0 %v371
    %508 = vmatpush1.bf16.msra.mxu0 %v370
    %509 = vmatprep.subr.bf16.mxu0 %v373
    %510 = vmatpush1.bf16.msra.mxu0 %v372
    %511 = vmatprep.subr.bf16.mxu0 %v375
    %512 = vmatpush1.bf16.msra.mxu0 %v374
    %513 = vmatprep.subr.bf16.mxu0 %v377
    %514 = vmatpush1.bf16.msra.mxu0 %v376
    %515 = vmatprep.subr.bf16.mxu0 %v379
    %516 = vmatpush1.bf16.msra.mxu0 %v378
    %517 = vmatprep.subr.bf16.mxu0 %v381
    %518 = vmatpush1.bf16.msra.mxu0 %v380
    %519 = vmatprep.subr.bf16.mxu0 %v383
    %520 = vmatpush1.bf16.msra.mxu0 %v382
    %521 = vmatprep.subr.bf16.mxu0 %v385
    %522 = vmatpush1.bf16.msra.mxu0 %v384
    %523 = vmatprep.subr.bf16.mxu0 %v387
    %524 = vmatpush1.bf16.msra.mxu0 %v386
    %525 = vmatprep.subr.bf16.mxu0 %v389
    %526 = vmatpush1.bf16.msra.mxu0 %v388
    %527 = vmatprep.mubr.bf16.mxu0 %v129
    %528 = vmatmul.mubr.bf16.gmra.mrb[0].mxu0 %v128
    %v529 = vpop.f32.mrb[0].mxu0
    %v530 = vadd.f32 %v489, %v529
    %v531 = vpop.f32.mrb[0].mxu0
    %v532 = vadd.f32 %v491, %v531
    %v533 = vpop.f32.mrb[0].mxu0
    %v534 = vpop.f32.mrb[0].mxu0
    %535 = vdwg.mxu0
    %v536 = vmax.f32 %v530, 0.0
    %v537 = vmax.f32 %v532, 0.0
    %v538 = vpack.c.bf16 %v536, %v536
    %v539 = vpack.c.bf16 %v537, %v537
    %v540 = vld [vmem:[%s3] sm:$0xff]
    %v541 = vld [vmem:[%s3 + $0x8] sm:$0xff]
    %v542 = vld [vmem:[%s3 + $0x10] sm:$0xff]
    %v543 = vld [vmem:[%s3 + $0x18] sm:$0xff]
    %v544 = vld [vmem:[%s3 + $0x20] sm:$0xff]
    %v545 = vld [vmem:[%s3 + $0x28] sm:$0xff]
    %v546 = vld [vmem:[%s3 + $0x30] sm:$0xff]
    %v547 = vld [vmem:[%s3 + $0x38] sm:$0xff]
    %v548 = vld [vmem:[%s3 + $0x40] sm:$0xff]
    %v549 = vld [vmem:[%s3 + $0x48] sm:$0xff]
    %v550 = vld [vmem:[%s3 + $0x50] sm:$0xff]
    %v551 = vld [vmem:[%s3 + $0x58] sm:$0xff]
    %v552 = vld [vmem:[%s3 + $0x60] sm:$0xff]
    %v553 = vld [vmem:[%s3 + $0x68] sm:$0xff]
    %v554 = vld [vmem:[%s3 + $0x70] sm:$0xff]
    %v555 = vld [vmem:[%s3 + $0x78] sm:$0xff]
    %v556 = vld [vmem:[%s3 + $0x80] sm:$0xff]
    %v557 = vld [vmem:[%s3 + $0x88] sm:$0xff]
    %v558 = vld [vmem:[%s3 + $0x90] sm:$0xff]
    %v559 = vld [vmem:[%s3 + $0x98] sm:$0xff]
    %v560 = vld [vmem:[%s3 + $0xa0] sm:$0xff]
    %v561 = vld [vmem:[%s3 + $0xa8] sm:$0xff]
    %v562 = vld [vmem:[%s3 + $0xb0] sm:$0xff]
    %v563 = vld [vmem:[%s3 + $0xb8] sm:$0xff]
    %v564 = vld [vmem:[%s3 + $0xc0] sm:$0xff]
    %v565 = vld [vmem:[%s3 + $0xc8] sm:$0xff]
    %v566 = vld [vmem:[%s3 + $0xd0] sm:$0xff]
    %v567 = vld [vmem:[%s3 + $0xd8] sm:$0xff]
    %v568 = vld [vmem:[%s3 + $0xe0] sm:$0xff]
    %v569 = vld [vmem:[%s3 + $0xe8] sm:$0xff]
    %v570 = vld [vmem:[%s3 + $0xf0] sm:$0xff]
    %v571 = vld [vmem:[%s3 + $0xf8] sm:$0xff]
    %v572 = vld [vmem:[%s4] sm:$0x3]
    %v574 = vlaneseq
    %v575 = vshrl.u32 %v574, 7
    %v576 = vsub.s32 0, %v575
    %v577 = vrot.slane %v572, %v576
    %v578 = vlaneseq
    %v579 = vshrl.u32 %v578, 7
    %v580 = vsub.s32 1, %v579
    %v581 = vrot.slane %v572, %v580
    %v616 = vunpack.c.l.b16 %v540
    %v617 = vunpack.c.h.b16 %v540
    %v618 = vunpack.c.l.b16 %v541
    %v619 = vunpack.c.h.b16 %v541
    %v620 = vunpack.c.l.b16 %v542
    %v621 = vunpack.c.h.b16 %v542
    %v622 = vunpack.c.l.b16 %v543
    %v623 = vunpack.c.h.b16 %v543
    %v624 = vunpack.c.l.b16 %v544
    %v625 = vunpack.c.h.b16 %v544
    %v626 = vunpack.c.l.b16 %v545
    %v627 = vunpack.c.h.b16 %v545
    %v628 = vunpack.c.l.b16 %v546
    %v629 = vunpack.c.h.b16 %v546
    %v630 = vunpack.c.l.b16 %v547
    %v631 = vunpack.c.h.b16 %v547
    %v632 = vunpack.c.l.b16 %v548
    %v633 = vunpack.c.h.b16 %v548
    %v634 = vunpack.c.l.b16 %v549
    %v635 = vunpack.c.h.b16 %v549
    %v636 = vunpack.c.l.b16 %v550
    %v637 = vunpack.c.h.b16 %v550
    %v638 = vunpack.c.l.b16 %v551
    %v639 = vunpack.c.h.b16 %v551
    %v640 = vunpack.c.l.b16 %v552
    %v641 = vunpack.c.h.b16 %v552
    %v642 = vunpack.c.l.b16 %v553
    %v643 = vunpack.c.h.b16 %v553
    %v644 = vunpack.c.l.b16 %v554
    %v645 = vunpack.c.h.b16 %v554
    %v646 = vunpack.c.l.b16 %v555
    %v647 = vunpack.c.h.b16 %v555
    %v648 = vunpack.c.l.b16 %v556
    %v649 = vunpack.c.h.b16 %v556
    %v650 = vunpack.c.l.b16 %v557
    %v651 = vunpack.c.h.b16 %v557
    %v652 = vunpack.c.l.b16 %v558
    %v653 = vunpack.c.h.b16 %v558
    %v654 = vunpack.c.l.b16 %v559
    %v655 = vunpack.c.h.b16 %v559
    %v656 = vunpack.c.l.b16 %v560
    %v657 = vunpack.c.h.b16 %v560
    %v658 = vunpack.c.l.b16 %v561
    %v659 = vunpack.c.h.b16 %v561
    %v660 = vunpack.c.l.b16 %v562
    %v661 = vunpack.c.h.b16 %v562
    %v662 = vunpack.c.l.b16 %v563
    %v663 = vunpack.c.h.b16 %v563
    %v664 = vunpack.c.l.b16 %v564
    %v665 = vunpack.c.h.b16 %v564
    %v666 = vunpack.c.l.b16 %v565
    %v667 = vunpack.c.h.b16 %v565
    %v668 = vunpack.c.l.b16 %v566
    %v669 = vunpack.c.h.b16 %v566
    %v670 = vunpack.c.l.b16 %v567
    %v671 = vunpack.c.h.b16 %v567
    %v672 = vunpack.c.l.b16 %v568
    %v673 = vunpack.c.h.b16 %v568
    %v674 = vunpack.c.l.b16 %v569
    %v675 = vunpack.c.h.b16 %v569
    %v676 = vunpack.c.l.b16 %v570
    %v677 = vunpack.c.h.b16 %v570
    %v678 = vunpack.c.l.b16 %v571
    %v679 = vunpack.c.h.b16 %v571
    %v680 = vpack.c.b16 %v618, %v616
    %v681 = vpack.c.b16 %v619, %v617
    %v682 = vpack.c.b16 %v622, %v620
    %v683 = vpack.c.b16 %v623, %v621
    %v684 = vpack.c.b16 %v626, %v624
    %v685 = vpack.c.b16 %v627, %v625
    %v686 = vpack.c.b16 %v630, %v628
    %v687 = vpack.c.b16 %v631, %v629
    %v688 = vpack.c.b16 %v634, %v632
    %v689 = vpack.c.b16 %v635, %v633
    %v690 = vpack.c.b16 %v638, %v636
    %v691 = vpack.c.b16 %v639, %v637
    %v692 = vpack.c.b16 %v642, %v640
    %v693 = vpack.c.b16 %v643, %v641
    %v694 = vpack.c.b16 %v646, %v644
    %v695 = vpack.c.b16 %v647, %v645
    %v696 = vpack.c.b16 %v650, %v648
    %v697 = vpack.c.b16 %v651, %v649
    %v698 = vpack.c.b16 %v654, %v652
    %v699 = vpack.c.b16 %v655, %v653
    %v700 = vpack.c.b16 %v658, %v656
    %v701 = vpack.c.b16 %v659, %v657
    %v702 = vpack.c.b16 %v662, %v660
    %v703 = vpack.c.b16 %v663, %v661
    %v704 = vpack.c.b16 %v666, %v664
    %v705 = vpack.c.b16 %v667, %v665
    %v706 = vpack.c.b16 %v670, %v668
    %v707 = vpack.c.b16 %v671, %v669
    %v708 = vpack.c.b16 %v674, %v672
    %v709 = vpack.c.b16 %v675, %v673
    %v710 = vpack.c.b16 %v678, %v676
    %v711 = vpack.c.b16 %v679, %v677
    %744 = vmatprep.subr.bf16.mxu0 %v681
    %745 = vmatpush1.bf16.msra.mxu0 %v680
    %746 = vmatprep.subr.bf16.mxu0 %v683
    %747 = vmatpush1.bf16.msra.mxu0 %v682
    %748 = vmatprep.subr.bf16.mxu0 %v685
    %749 = vmatpush1.bf16.msra.mxu0 %v684
    %750 = vmatprep.subr.bf16.mxu0 %v687
    %751 = vmatpush1.bf16.msra.mxu0 %v686
    %752 = vmatprep.subr.bf16.mxu0 %v689
    %753 = vmatpush1.bf16.msra.mxu0 %v688
    %754 = vmatprep.subr.bf16.mxu0 %v691
    %755 = vmatpush1.bf16.msra.mxu0 %v690
    %756 = vmatprep.subr.bf16.mxu0 %v693
    %757 = vmatpush1.bf16.msra.mxu0 %v692
    %758 = vmatprep.subr.bf16.mxu0 %v695
    %759 = vmatpush1.bf16.msra.mxu0 %v694
    %760 = vmatprep.subr.bf16.mxu0 %v697
    %761 = vmatpush1.bf16.msra.mxu0 %v696
    %762 = vmatprep.subr.bf16.mxu0 %v699
    %763 = vmatpush1.bf16.msra.mxu0 %v698
    %764 = vmatprep.subr.bf16.mxu0 %v701
    %765 = vmatpush1.bf16.msra.mxu0 %v700
    %766 = vmatprep.subr.bf16.mxu0 %v703
    %767 = vmatpush1.bf16.msra.mxu0 %v702
    %768 = vmatprep.subr.bf16.mxu0 %v705
    %769 = vmatpush1.bf16.msra.mxu0 %v704
    %770 = vmatprep.subr.bf16.mxu0 %v707
    %771 = vmatpush1.bf16.msra.mxu0 %v706
    %772 = vmatprep.subr.bf16.mxu0 %v709
    %773 = vmatpush1.bf16.msra.mxu0 %v708
    %774 = vmatprep.subr.bf16.mxu0 %v711
    %775 = vmatpush1.bf16.msra.mxu0 %v710
    %776 = vmatprep.mubr.bf16.mxu0 %v539
    %777 = vmatmul.mubr.bf16.gmra.mrb[0].mxu0 %v538
    %v778 = vpop.f32.mrb[0].mxu0
    %v779 = vadd.f32 %v577, %v778
    %v780 = vpop.f32.mrb[0].mxu0
    %v781 = vadd.f32 %v581, %v780
    %v782 = vpop.f32.mrb[0].mxu0
    %v783 = vpop.f32.mrb[0].mxu0
    %784 = vdwg.mxu0
    %v785 = vmax.f32 %v779, 0.0
    %v786 = vmax.f32 %v781, 0.0
    %v787 = vpack.c.bf16 %v785, %v785
    %v788 = vpack.c.bf16 %v786, %v786
    %v789 = vld [vmem:[%s5] sm:$0xf]
    %v790 = vld [vmem:[%s5 + $0x4] sm:$0xf]
    %v791 = vld [vmem:[%s5 + $0x8] sm:$0xf]
    %v792 = vld [vmem:[%s5 + $0xc] sm:$0xf]
    %v793 = vld [vmem:[%s5 + $0x10] sm:$0xf]
    %v794 = vld [vmem:[%s5 + $0x14] sm:$0xf]
    %v795 = vld [vmem:[%s5 + $0x18] sm:$0xf]
    %v796 = vld [vmem:[%s5 + $0x1c] sm:$0xf]
    %v797 = vld [vmem:[%s5 + $0x20] sm:$0xf]
    %v798 = vld [vmem:[%s5 + $0x24] sm:$0xf]
    %v799 = vld [vmem:[%s5 + $0x28] sm:$0xf]
    %v800 = vld [vmem:[%s5 + $0x2c] sm:$0xf]
    %v801 = vld [vmem:[%s5 + $0x30] sm:$0xf]
    %v802 = vld [vmem:[%s5 + $0x34] sm:$0xf]
    %v803 = vld [vmem:[%s5 + $0x38] sm:$0xf]
    %v804 = vld [vmem:[%s5 + $0x3c] sm:$0xf]
    %v805 = vld [vmem:[%s5 + $0x40] sm:$0xf]
    %v806 = vld [vmem:[%s5 + $0x44] sm:$0xf]
    %v807 = vld [vmem:[%s5 + $0x48] sm:$0xf]
    %v808 = vld [vmem:[%s5 + $0x4c] sm:$0xf]
    %v809 = vld [vmem:[%s5 + $0x50] sm:$0xf]
    %v810 = vld [vmem:[%s5 + $0x54] sm:$0xf]
    %v811 = vld [vmem:[%s5 + $0x58] sm:$0xf]
    %v812 = vld [vmem:[%s5 + $0x5c] sm:$0xf]
    %v813 = vld [vmem:[%s5 + $0x60] sm:$0xf]
    %v814 = vld [vmem:[%s5 + $0x64] sm:$0xf]
    %v815 = vld [vmem:[%s5 + $0x68] sm:$0xf]
    %v816 = vld [vmem:[%s5 + $0x6c] sm:$0xf]
    %v817 = vld [vmem:[%s5 + $0x70] sm:$0xf]
    %v818 = vld [vmem:[%s5 + $0x74] sm:$0xf]
    %v819 = vld [vmem:[%s5 + $0x78] sm:$0xf]
    %v820 = vld [vmem:[%s5 + $0x7c] sm:$0xf]
    %v821 = vld [vmem:[%s6] sm:$0x1]
    %v823 = vlaneseq
    %v824 = vshrl.u32 %v823, 7
    %v825 = vsub.s32 0, %v824
    %v826 = vrot.slane %v821, %v825
    %v860 = vunpack.c.l.b16 %v789
    %v861 = vunpack.c.l.b16 %v790
    %v862 = vunpack.c.l.b16 %v791
    %v863 = vunpack.c.l.b16 %v792
    %v864 = vunpack.c.l.b16 %v793
    %v865 = vunpack.c.l.b16 %v794
    %v866 = vunpack.c.l.b16 %v795
    %v867 = vunpack.c.l.b16 %v796
    %v868 = vunpack.c.l.b16 %v797
    %v869 = vunpack.c.l.b16 %v798
    %v870 = vunpack.c.l.b16 %v799
    %v871 = vunpack.c.l.b16 %v800
    %v872 = vunpack.c.l.b16 %v801
    %v873 = vunpack.c.l.b16 %v802
    %v874 = vunpack.c.l.b16 %v803
    %v875 = vunpack.c.l.b16 %v804
    %v876 = vunpack.c.l.b16 %v805
    %v877 = vunpack.c.l.b16 %v806
    %v878 = vunpack.c.l.b16 %v807
    %v879 = vunpack.c.l.b16 %v808
    %v880 = vunpack.c.l.b16 %v809
    %v881 = vunpack.c.l.b16 %v810
    %v882 = vunpack.c.l.b16 %v811
    %v883 = vunpack.c.l.b16 %v812
    %v884 = vunpack.c.l.b16 %v813
    %v885 = vunpack.c.l.b16 %v814
    %v886 = vunpack.c.l.b16 %v815
    %v887 = vunpack.c.l.b16 %v816
    %v888 = vunpack.c.l.b16 %v817
    %v889 = vunpack.c.l.b16 %v818
    %v890 = vunpack.c.l.b16 %v819
    %v891 = vunpack.c.l.b16 %v820
    %v892 = vpack.c.b16 %v861, %v860
    %v893 = vpack.c.b16 %v863, %v862
    %v894 = vpack.c.b16 %v865, %v864
    %v895 = vpack.c.b16 %v867, %v866
    %v896 = vpack.c.b16 %v869, %v868
    %v897 = vpack.c.b16 %v871, %v870
    %v898 = vpack.c.b16 %v873, %v872
    %v899 = vpack.c.b16 %v875, %v874
    %v900 = vpack.c.b16 %v877, %v876
    %v901 = vpack.c.b16 %v879, %v878
    %v902 = vpack.c.b16 %v881, %v880
    %v903 = vpack.c.b16 %v883, %v882
    %v904 = vpack.c.b16 %v885, %v884
    %v905 = vpack.c.b16 %v887, %v886
    %v906 = vpack.c.b16 %v889, %v888
    %v907 = vpack.c.b16 %v891, %v890
    %924 = vmatprep.subr.bf16.mxu0 0
    %925 = vmatpush1.bf16.msra.mxu0 %v892
    %926 = vmatprep.subr.bf16.mxu0 0
    %927 = vmatpush1.bf16.msra.mxu0 %v893
    %928 = vmatprep.subr.bf16.mxu0 0
    %929 = vmatpush1.bf16.msra.mxu0 %v894
    %930 = vmatprep.subr.bf16.mxu0 0
    %931 = vmatpush1.bf16.msra.mxu0 %v895
    %932 = vmatprep.subr.bf16.mxu0 0
    %933 = vmatpush1.bf16.msra.mxu0 %v896
    %934 = vmatprep.subr.bf16.mxu0 0
    %935 = vmatpush1.bf16.msra.mxu0 %v897
    %936 = vmatprep.subr.bf16.mxu0 0
    %937 = vmatpush1.bf16.msra.mxu0 %v898
    %938 = vmatprep.subr.bf16.mxu0 0
    %939 = vmatpush1.bf16.msra.mxu0 %v899
    %940 = vmatprep.subr.bf16.mxu0 0
    %941 = vmatpush1.bf16.msra.mxu0 %v900
    %942 = vmatprep.subr.bf16.mxu0 0
    %943 = vmatpush1.bf16.msra.mxu0 %v901
    %944 = vmatprep.subr.bf16.mxu0 0
    %945 = vmatpush1.bf16.msra.mxu0 %v902
    %946 = vmatprep.subr.bf16.mxu0 0
    %947 = vmatpush1.bf16.msra.mxu0 %v903
    %948 = vmatprep.subr.bf16.mxu0 0
    %949 = vmatpush1.bf16.msra.mxu0 %v904
    %950 = vmatprep.subr.bf16.mxu0 0
    %951 = vmatpush1.bf16.msra.mxu0 %v905
    %952 = vmatprep.subr.bf16.mxu0 0
    %953 = vmatpush1.bf16.msra.mxu0 %v906
    %954 = vmatprep.subr.bf16.mxu0 0
    %955 = vmatpush1.bf16.msra.mxu0 %v907
    %956 = vmatprep.mubr.bf16.mxu0 %v788
    %957 = vmatmul.mubr.bf16.gmra.mrb[0].mxu0 %v787
    %v958 = vpop.f32.mrb[0].mxu0
    %v959 = vadd.f32 %v826, %v958
    %v960 = vpop.f32.mrb[0].mxu0
    %v961 = vpop.f32.mrb[0].mxu0
    %v962 = vpop.f32.mrb[0].mxu0
    %963 = vdwg.mxu0
    %964 = vst [vmem:[#allocation2] sm:$0x3] %v959
    // Predicated region
    $region30: #{vgg_forward.11} parent=1 // pred_check
      _
    $region31: #{vgg_forward.11} parent=1 // pred_check_branch
      %966 = sbr.rel (0) target = $region33
    $region32: #{vgg_forward.11} parent=1 // pred_region
      %s968 = ssub.s32 32, 32
      %969 = vsyncadd [#allocation3], %s968
      %s971 = sshll.u32 [#allocation2], 4
      %s972 = int_to_ptr.vmem [resolvable:$true] %s971
      %974 = dma.vmem_to_hbm [thread:$0]  %s972, 32, %s7, [#allocation3]
    $region33: #{vgg_forward.11} parent=1 // pred_fallthru
      _
    // Predicated region
    $region34: #{vgg_forward.11} parent=1 // pred_check
      _
    $region35: #{vgg_forward.11} parent=1 // pred_check_branch
      %976 = sbr.rel (0) target = $region37
    $region36: #{vgg_forward.11} parent=1 // pred_region
      %977 = dma.done [#allocation3], 32
    $region37: #{vgg_forward.11} parent=1 // pred_fallthru
      _
    %978 = vsyncpa [#allocation3], 1

</llo_original>
